<compile_context>
chip_gen: v7x
topology: tpu7x:2x2x1
jax: 0.10.0
libtpu: 0.0.40
codegen_flags: <defaults>
</compile_context>

<pallas_src>
import jax
import jax.numpy as jnp
from jax.experimental import pallas as pl
from jax.experimental.pallas import tpu as pltpu

BN_EPS = 1e-5


def _gelu_tanh(x):
    # TODO(synk): PyTorch nn.GELU() is exact (erf-based); the tanh approximation
    # is used because erf has no guaranteed Mosaic lowering (max abs err ~1e-3).
    c = jnp.sqrt(2.0 / jnp.pi).astype(x.dtype)
    return 0.5 * x * (1.0 + jnp.tanh(c * (x + 0.044715 * x * x * x)))


def _conv_out(s):  # kernel 3, stride 2, VALID
    return (s - 3) // 2 + 1


def _round_up(v, m):
    return ((v + m - 1) // m) * m


def _class_layout(h1, w1, n):
    """Row layout of the conv1 activation slab.

    Rows are grouped by conv1-output coordinate parity class (oh%2, ow%2);
    inside a class there is one row group per oh//2 holding (ow//2, batch)
    entries, zero-padded to a multiple of 8 sublanes so every conv2 im2col
    read starts vreg-aligned.  With this ordering every conv2 window (per
    kernel offset, per output row) is a contiguous unit-stride row slice.
    Returns ({class: (offset, ha, wb, group_stride)}, padded_rows, true_rows).
    """
    info = {}
    off = 0
    for pi in (0, 1):
        ha = (h1 - pi + 1) // 2
        for pj in (0, 1):
            wb = (w1 - pj + 1) // 2
            gs = _round_up(wb * n, 8)          # padded per-output-row stride
            info[(pi, pj)] = (off, ha, wb, gs)
            off += ha * gs
    return info, off, n * h1 * w1


def _build_conv1_patches(x_nhwc, h1, w1, cls):
    """im2col for conv1 (wrapper side), rows ordered (parity class, oh//2,
    [ow//2, batch] zero-padded to the group stride), features (kh, kw, cin).
    ~2.25x the input bytes, NOT the 9x of a naive im2col."""
    n, _, _, c = x_nhwc.shape
    blocks = []
    for pi in (0, 1):
        for pj in (0, 1):
            _, ha, wb, gs = cls[(pi, pj)]
            feats = []
            for i in range(3):
                for j in range(3):
                    r0, c0 = 2 * pi + i, 2 * pj + j
                    feats.append(x_nhwc[:, r0:r0 + 4 * (ha - 1) + 1:4,
                                           c0:c0 + 4 * (wb - 1) + 1:4, :])
            pat = jnp.concatenate(feats, axis=-1)          # (N, Ha, Wb, 9C)
            pat = jnp.transpose(pat, (1, 2, 0, 3))         # (Ha, Wb, N, 9C)
            pat = pat.reshape(ha, wb * n, 9 * c)
            pat = jnp.pad(pat, ((0, 0), (0, gs - wb * n), (0, 0)))
            blocks.append(pat.reshape(ha * gs, 9 * c))
    return jnp.concatenate(blocks, axis=0)                 # (m1_pad, 9C)


@jax.jit
def mlp_forward(x_nchw, p):
    n, cin, h, w = x_nchw.shape
    h1, w1 = _conv_out(h), _conv_out(w)
    h2, w2 = _conv_out(h1), _conv_out(w1)
    assert h1 >= 3 and w1 >= 3
    s_sp = h2 * w2                      # conv2 spatial size
    c1, c2 = 16, 32
    out_ch = p["wf2k"].shape[1]
    wn = w2 * n                         # rows per conv2 output row (ow2, batch)
    m2 = h2 * wn                        # conv2 rows, ordered (oh2, ow2, batch)

    cls, m1_pad, m1_true = _class_layout(h1, w1, n)

    # TODO(synk): the conv1 im2col stays in XLA on the wrapper side (a 2.25x
    # HBM round trip); fold it into the kernel via index_map/pl.ds only once
    # batch is large enough for it to matter (review: low priority here).
    x = jnp.transpose(x_nchw, (0, 2, 3, 1)).astype(jnp.float32)      # NHWC
    p1 = _build_conv1_patches(x, h1, w1, cls).astype(jnp.bfloat16)

    def kernel(p1_ref, w1_ref, g1_ref, be1_ref, w2_ref, g2_ref, be2_ref,
               wf1_ref, bf1_ref, wf2_ref, bf2_ref, o_ref,
               a1_ref, pat2_ref, a2_ref):
        # ---- conv1 (bias dropped: cancelled by training-mode BN) + BN1 + ReLU
        y1 = jnp.dot(p1_ref[...], w1_ref[...],
                     preferred_element_type=jnp.float32)             # (m1_pad, 16)
        inv1 = 1.0 / float(m1_true)        # padded rows are exactly zero
        mu1 = jnp.sum(y1, axis=0, keepdims=True) * inv1
        ex1 = jnp.sum(y1 * y1, axis=0, keepdims=True) * inv1
        var1 = jnp.maximum(ex1 - mu1 * mu1, 0.0)
        a1 = g1_ref[...] * (y1 - mu1) * jax.lax.rsqrt(var1 + BN_EPS) + be1_ref[...]
        a1_ref[...] = jnp.maximum(a1, 0.0).astype(jnp.bfloat16)

        # ---- conv2 im2col assembled entirely in VMEM ------------------------
        # Parity-grouped, sublane-padded conv1 rows: every copy reads a
        # contiguous, (mostly) 8-aligned row slice and writes at lane offset 0.
        for i2 in range(3):
            for j2 in range(3):
                g = i2 * 3 + j2
                off, _, _, gs = cls[(i2 % 2, j2 % 2)]
                for oh2 in range(h2):
                    r0 = off + (oh2 + i2 // 2) * gs + (j2 // 2) * n
                    pat2_ref[g, oh2 * wn:(oh2 + 1) * wn, :] = a1_ref[r0:r0 + wn, :]

        # ---- conv2 as 9 accumulated K=16 dots + BN2 + ReLU ------------------
        y2 = jnp.zeros((m2, c2), jnp.float32)
        for g in range(9):
            y2 = y2 + jnp.dot(pat2_ref[g], w2_ref[g],
                              preferred_element_type=jnp.float32)    # (m2, 32)
        inv2 = 1.0 / float(m2)
        mu2 = jnp.sum(y2, axis=0, keepdims=True) * inv2
        ex2 = jnp.sum(y2 * y2, axis=0, keepdims=True) * inv2
        var2 = jnp.maximum(ex2 - mu2 * mu2, 0.0)
        a2 = g2_ref[...] * (y2 - mu2) * jax.lax.rsqrt(var2 + BN_EPS) + be2_ref[...]
        a2_ref[...] = jnp.maximum(a2, 0.0).astype(jnp.bfloat16)

        # ---- fc1 with the NCHW flatten folded into wf1k ---------------------
        # hid[b,:] = sum_s a2[(s,b),:] @ wf1k[s]  (no flat slab / scatter loop)
        hid = jnp.zeros((n, 128), jnp.float32)
        for s in range(s_sp):
            hid = hid + jnp.dot(a2_ref[s * n:(s + 1) * n, :], wf1_ref[s],
                                preferred_element_type=jnp.float32)
        hid = _gelu_tanh(hid + bf1_ref[...])

        # ---- fc2 ------------------------------------------------------------
        o_ref[...] = jnp.dot(hid.astype(jnp.bfloat16), wf2_ref[...],
                             preferred_element_type=jnp.float32) + bf2_ref[...]

    vmem = pl.BlockSpec(memory_space=pltpu.MemorySpace.VMEM)
    # TODO(synk): at large batch, grid over batch rows with a two-phase BN
    # (accumulate sum/sumsq over an "arbitrary" axis, normalize in a finalize
    # phase) and dimension_semantics=("parallel",...) so work shards across
    # v7x's two TensorCores and bf16 scratch stays under its 64 MiB VMEM; at
    # this size everything is whole-array resident (<0.3 MiB) and one
    # un-gridded invocation is fastest.
    return pl.pallas_call(
        kernel,
        out_shape=jax.ShapeDtypeStruct((n, out_ch), jnp.float32),
        in_specs=[vmem] * 11,
        out_specs=vmem,
        scratch_shapes=[
            pltpu.VMEM((m1_pad, c1), jnp.bfloat16),   # conv1 activation (padded rows)
            pltpu.VMEM((9, m2, c1), jnp.bfloat16),    # conv2 im2col patches
            pltpu.VMEM((m2, c2), jnp.bfloat16),       # conv2 activation (bf16 staging)
        ],
    )(p1, p["w1k"], p["g1"], p["beta1"], p["w2k"], p["g2"], p["beta2"],
      p["wf1k"], p["bf1"], p["wf2k"], p["bf2"])


def init_params(key, input_size, in_channel, out_channel):
    h1, w1 = _conv_out(input_size[0]), _conv_out(input_size[1])
    h2, w2 = _conv_out(h1), _conv_out(w1)
    s_sp = h2 * w2
    lin_in = s_sp * 32

    ks = jax.random.split(key, 12)
    p = {}
    # PyTorch-layout parameters (used by the pure-JAX reference).
    p["w1_4d"] = 0.1 * jax.random.normal(ks[0], (3, 3, in_channel, 16), jnp.float32)
    p["b1"] = 0.1 * jax.random.normal(ks[1], (16,), jnp.float32)
    p["g1"] = (1.0 + 0.1 * jax.random.normal(ks[2], (16,), jnp.float32)).reshape(1, 16)
    p["beta1"] = (0.1 * jax.random.normal(ks[3], (16,), jnp.float32)).reshape(1, 16)
    p["w2_4d"] = 0.1 * jax.random.normal(ks[4], (3, 3, 16, 32), jnp.float32)
    p["b2"] = 0.1 * jax.random.normal(ks[5], (32,), jnp.float32)
    p["g2"] = (1.0 + 0.1 * jax.random.normal(ks[6], (32,), jnp.float32)).reshape(1, 32)
    p["beta2"] = (0.1 * jax.random.normal(ks[7], (32,), jnp.float32)).reshape(1, 32)
    p["wf1"] = 0.05 * jax.random.normal(ks[8], (lin_in, 128), jnp.float32)
    p["bf1"] = 0.05 * jax.random.normal(ks[9], (1, 128), jnp.float32)
    p["wf2"] = 0.05 * jax.random.normal(ks[10], (128, out_channel), jnp.float32)
    p["bf2"] = 0.05 * jax.random.normal(ks[11], (1, out_channel), jnp.float32)

    # Kernel-side weights: bf16 MXU operands; conv biases dropped (exactly
    # cancelled by training-mode BatchNorm's mean subtraction).
    p["w1k"] = p["w1_4d"].reshape(9 * in_channel, 16).astype(jnp.bfloat16)
    # conv2 weight per kernel offset g = kh*3 + kw: (9, 16, 32)
    p["w2k"] = p["w2_4d"].reshape(9, 16, 32).astype(jnp.bfloat16)
    # fc1 weight with the NCHW flatten permutation folded in:
    #   wf1k[s, c, :] = wf1[c*s_sp + s, :]   -> (s_sp, 32, 128)
    p["wf1k"] = (p["wf1"].reshape(32, s_sp, 128).transpose(1, 0, 2)
                 .astype(jnp.bfloat16))
    p["wf2k"] = p["wf2"].astype(jnp.bfloat16)
    return p


def reference_forward(x_nchw, p):
    """Pure-JAX float32 replica of the PyTorch forward (exact erf GELU,
    conv biases included -- they cancel through training-mode BN)."""
    n = x_nchw.shape[0]
    x = jnp.transpose(x_nchw, (0, 2, 3, 1)).astype(jnp.float32)

    def conv(a, w4, b):
        y = jax.lax.conv_general_dilated(
            a, w4, window_strides=(2, 2), padding="VALID",
            dimension_numbers=("NHWC", "HWIO", "NHWC"))
        return y + b.reshape(1, 1, 1, -1)

    def bn_relu(y, g, be):
        mean = jnp.mean(y, axis=(0, 1, 2))
        var = jnp.mean((y - mean) ** 2, axis=(0, 1, 2))
        yn = g.reshape(-1) * (y - mean) * jax.lax.rsqrt(var + BN_EPS) + be.reshape(-1)
        return jnp.maximum(yn, 0.0)

    a1 = bn_relu(conv(x, p["w1_4d"], p["b1"]), p["g1"], p["beta1"])
    a2 = bn_relu(conv(a1, p["w2_4d"], p["b2"]), p["g2"], p["beta2"])
    flat = jnp.transpose(a2, (0, 3, 1, 2)).reshape(n, -1)
    hid = jax.nn.gelu(flat @ p["wf1"] + p["bf1"], approximate=False)
    return hid @ p["wf2"] + p["bf2"]


if __name__ == "__main__":
    key = jax.random.PRNGKey(0)
    kx, kp = jax.random.split(key)

    # Small shapes consistent with the module's conv arithmetic.
    input_size = (30, 30)      # conv1: 14x14, conv2: 6x6, fc1 in = 6*6*32 = 1152
    N, CIN, COUT = 4, 3, 8     # batch 4 -> conv2 row blocks are 8-sublane multiples

    x = jax.random.normal(kx, (N, CIN) + input_size, jnp.float32)
    params = init_params(kp, input_size, CIN, COUT)

    out = jax.block_until_ready(mlp_forward(x, params))
    ref = jax.block_until_ready(reference_forward(x, params))

    assert out.shape == (N, COUT), out.shape
    assert bool(jnp.all(jnp.isfinite(out)))
    err = float(jnp.max(jnp.abs(out - ref)))
    # bf16 matmul operands + tanh-GELU vs the f32 / exact-erf reference.
    assert bool(jnp.allclose(out, ref, atol=5e-2, rtol=5e-2)), (
        "max abs err = %f" % err)
    print("KERNEL_OK")
</pallas_src>

<mosaic_0001>
module attributes {stable_mosaic.version = 11 : i64} {
  func.func @kernel(%arg0: memref<896x27xbf16, #tpu.memory_space<vmem>>, %arg1: memref<27x16xbf16, #tpu.memory_space<vmem>>, %arg2: memref<1x16xf32, #tpu.memory_space<vmem>>, %arg3: memref<1x16xf32, #tpu.memory_space<vmem>>, %arg4: memref<9x16x32xbf16, #tpu.memory_space<vmem>>, %arg5: memref<1x32xf32, #tpu.memory_space<vmem>>, %arg6: memref<1x32xf32, #tpu.memory_space<vmem>>, %arg7: memref<36x32x128xbf16, #tpu.memory_space<vmem>>, %arg8: memref<1x128xf32, #tpu.memory_space<vmem>>, %arg9: memref<128x8xbf16, #tpu.memory_space<vmem>>, %arg10: memref<1x8xf32, #tpu.memory_space<vmem>>, %arg11: memref<4x8xf32, #tpu.memory_space<vmem>>, %arg12: memref<896x16xbf16, #tpu.memory_space<vmem>>, %arg13: memref<9x144x16xbf16, #tpu.memory_space<vmem>>, %arg14: memref<144x32xbf16, #tpu.memory_space<vmem>>) attributes {dimension_semantics = [], scalar_prefetch = 0 : i64, scratch_operands = 3 : i64, tpu.core_type = #tpu.core_type<tc>} {
    %c0 = arith.constant 0 : index
    %c0_0 = arith.constant 0 : index
    %0 = vector.load %arg0[%c0, %c0_0] : memref<896x27xbf16, #tpu.memory_space<vmem>>, vector<896x27xbf16>
    %c0_1 = arith.constant 0 : index
    %c0_2 = arith.constant 0 : index
    %1 = vector.load %arg1[%c0_1, %c0_2] : memref<27x16xbf16, #tpu.memory_space<vmem>>, vector<27x16xbf16>
    %cst = arith.constant dense<0.000000e+00> : vector<896x16xf32>
    %2 = tpu.matmul %0, %1, %cst {dimension_numbers = #tpu.dot_dimension_numbers<[1], [0], [0], [1], [0, 0, 1, 1], [], []>} : vector<896x27xbf16>, vector<27x16xbf16>, vector<896x16xf32> -> vector<896x16xf32>
    %cst_3 = arith.constant dense<0.000000e+00> : vector<16xf32>
    %3 = vector.multi_reduction <add>, %2, %cst_3 [0] : vector<896x16xf32> to vector<16xf32>
    %4 = vector.shape_cast %3 : vector<16xf32> to vector<1x16xf32>
    %cst_4 = arith.constant 0.00127551018 : f32
    %5 = vector.broadcast %cst_4 : f32 to vector<1x16xf32>
    %6 = arith.mulf %4, %5 : vector<1x16xf32>
    %7 = arith.mulf %2, %2 : vector<896x16xf32>
    %cst_5 = arith.constant dense<0.000000e+00> : vector<16xf32>
    %8 = vector.multi_reduction <add>, %7, %cst_5 [0] : vector<896x16xf32> to vector<16xf32>
    %9 = vector.shape_cast %8 : vector<16xf32> to vector<1x16xf32>
    %cst_6 = arith.constant 0.00127551018 : f32
    %10 = vector.broadcast %cst_6 : f32 to vector<1x16xf32>
    %11 = arith.mulf %9, %10 : vector<1x16xf32>
    %12 = arith.mulf %6, %6 : vector<1x16xf32>
    %13 = arith.subf %11, %12 : vector<1x16xf32>
    %cst_7 = arith.constant 0.000000e+00 : f32
    %14 = vector.broadcast %cst_7 : f32 to vector<1x16xf32>
    %15 = arith.maximumf %13, %14 : vector<1x16xf32>
    %c0_8 = arith.constant 0 : index
    %c0_9 = arith.constant 0 : index
    %16 = vector.load %arg2[%c0_8, %c0_9] : memref<1x16xf32, #tpu.memory_space<vmem>>, vector<1x16xf32>
    %17 = vector.broadcast %6 : vector<1x16xf32> to vector<896x16xf32>
    %18 = arith.subf %2, %17 : vector<896x16xf32>
    %19 = vector.broadcast %16 : vector<1x16xf32> to vector<896x16xf32>
    %20 = arith.mulf %19, %18 : vector<896x16xf32>
    %cst_10 = arith.constant 9.99999974E-6 : f32
    %21 = vector.broadcast %cst_10 : f32 to vector<1x16xf32>
    %22 = arith.addf %15, %21 : vector<1x16xf32>
    %23 = math.rsqrt %22 : vector<1x16xf32>
    %24 = vector.broadcast %23 : vector<1x16xf32> to vector<896x16xf32>
    %25 = arith.mulf %20, %24 : vector<896x16xf32>
    %c0_11 = arith.constant 0 : index
    %c0_12 = arith.constant 0 : index
    %26 = vector.load %arg3[%c0_11, %c0_12] : memref<1x16xf32, #tpu.memory_space<vmem>>, vector<1x16xf32>
    %27 = vector.broadcast %26 : vector<1x16xf32> to vector<896x16xf32>
    %28 = arith.addf %25, %27 : vector<896x16xf32>
    %cst_13 = arith.constant 0.000000e+00 : f32
    %29 = vector.broadcast %cst_13 : f32 to vector<896x16xf32>
    %30 = arith.maximumf %28, %29 : vector<896x16xf32>
    %31 = arith.truncf %30 : vector<896x16xf32> to vector<896x16xbf16>
    %c0_14 = arith.constant 0 : index
    %c0_15 = arith.constant 0 : index
    %32 = vector.load %arg12[%c0_14, %c0_15] : memref<896x16xbf16, #tpu.memory_space<vmem>>, vector<896x16xbf16>
    tpu.vector_store %arg12[%c0_14, %c0_15], %31 {strides = array<i32>} : memref<896x16xbf16, #tpu.memory_space<vmem>>, vector<896x16xbf16>,
    %c0_16 = arith.constant 0 : index
    %c0_17 = arith.constant 0 : index
    %33 = vector.load %arg12[%c0_16, %c0_17] : memref<896x16xbf16, #tpu.memory_space<vmem>>, vector<24x16xbf16>
    %c0_18 = arith.constant 0 : index
    %c0_19 = arith.constant 0 : index
    %c0_20 = arith.constant 0 : index
    %34 = vector.load %arg13[%c0_18, %c0_19, %c0_20] : memref<9x144x16xbf16, #tpu.memory_space<vmem>>, vector<1x24x16xbf16>
    %35 = vector.shape_cast %34 : vector<1x24x16xbf16> to vector<24x16xbf16>
    %36 = vector.shape_cast %33 : vector<24x16xbf16> to vector<1x24x16xbf16>
    tpu.vector_store %arg13[%c0_18, %c0_19, %c0_20], %36 {strides = array<i32>} : memref<9x144x16xbf16, #tpu.memory_space<vmem>>, vector<1x24x16xbf16>,
    %c32 = arith.constant 32 : index
    %c0_21 = arith.constant 0 : index
    %37 = vector.load %arg12[%c32, %c0_21] : memref<896x16xbf16, #tpu.memory_space<vmem>>, vector<24x16xbf16>
    %c0_22 = arith.constant 0 : index
    %c24 = arith.constant 24 : index
    %c0_23 = arith.constant 0 : index
    %38 = vector.load %arg13[%c0_22, %c24, %c0_23] : memref<9x144x16xbf16, #tpu.memory_space<vmem>>, vector<1x24x16xbf16>
    %39 = vector.shape_cast %38 : vector<1x24x16xbf16> to vector<24x16xbf16>
    %40 = vector.shape_cast %37 : vector<24x16xbf16> to vector<1x24x16xbf16>
    tpu.vector_store %arg13[%c0_22, %c24, %c0_23], %40 {strides = array<i32>} : memref<9x144x16xbf16, #tpu.memory_space<vmem>>, vector<1x24x16xbf16>,
    %c64 = arith.constant 64 : index
    %c0_24 = arith.constant 0 : index
    %41 = vector.load %arg12[%c64, %c0_24] : memref<896x16xbf16, #tpu.memory_space<vmem>>, vector<24x16xbf16>
    %c0_25 = arith.constant 0 : index
    %c48 = arith.constant 48 : index
    %c0_26 = arith.constant 0 : index
    %42 = vector.load %arg13[%c0_25, %c48, %c0_26] : memref<9x144x16xbf16, #tpu.memory_space<vmem>>, vector<1x24x16xbf16>
    %43 = vector.shape_cast %42 : vector<1x24x16xbf16> to vector<24x16xbf16>
    %44 = vector.shape_cast %41 : vector<24x16xbf16> to vector<1x24x16xbf16>
    tpu.vector_store %arg13[%c0_25, %c48, %c0_26], %44 {strides = array<i32>} : memref<9x144x16xbf16, #tpu.memory_space<vmem>>, vector<1x24x16xbf16>,
    %c96 = arith.constant 96 : index
    %c0_27 = arith.constant 0 : index
    %45 = vector.load %arg12[%c96, %c0_27] : memref<896x16xbf16, #tpu.memory_space<vmem>>, vector<24x16xbf16>
    %c0_28 = arith.constant 0 : index
    %c72 = arith.constant 72 : index
    %c0_29 = arith.constant 0 : index
    %46 = vector.load %arg13[%c0_28, %c72, %c0_29] : memref<9x144x16xbf16, #tpu.memory_space<vmem>>, vector<1x24x16xbf16>
    %47 = vector.shape_cast %46 : vector<1x24x16xbf16> to vector<24x16xbf16>
    %48 = vector.shape_cast %45 : vector<24x16xbf16> to vector<1x24x16xbf16>
    tpu.vector_store %arg13[%c0_28, %c72, %c0_29], %48 {strides = array<i32>} : memref<9x144x16xbf16, #tpu.memory_space<vmem>>, vector<1x24x16xbf16>,
    %c128 = arith.constant 128 : index
    %c0_30 = arith.constant 0 : index
    %49 = vector.load %arg12[%c128, %c0_30] : memref<896x16xbf16, #tpu.memory_space<vmem>>, vector<24x16xbf16>
    %c0_31 = arith.constant 0 : index
    %c96_32 = arith.constant 96 : index
    %c0_33 = arith.constant 0 : index
    %50 = vector.load %arg13[%c0_31, %c96_32, %c0_33] : memref<9x144x16xbf16, #tpu.memory_space<vmem>>, vector<1x24x16xbf16>
    %51 = vector.shape_cast %50 : vector<1x24x16xbf16> to vector<24x16xbf16>
    %52 = vector.shape_cast %49 : vector<24x16xbf16> to vector<1x24x16xbf16>
    tpu.vector_store %arg13[%c0_31, %c96_32, %c0_33], %52 {strides = array<i32>} : memref<9x144x16xbf16, #tpu.memory_space<vmem>>, vector<1x24x16xbf16>,
    %c160 = arith.constant 160 : index
    %c0_34 = arith.constant 0 : index
    %53 = vector.load %arg12[%c160, %c0_34] : memref<896x16xbf16, #tpu.memory_space<vmem>>, vector<24x16xbf16>
    %c0_35 = arith.constant 0 : index
    %c120 = arith.constant 120 : index
    %c0_36 = arith.constant 0 : index
    %54 = vector.load %arg13[%c0_35, %c120, %c0_36] : memref<9x144x16xbf16, #tpu.memory_space<vmem>>, vector<1x24x16xbf16>
    %55 = vector.shape_cast %54 : vector<1x24x16xbf16> to vector<24x16xbf16>
    %56 = vector.shape_cast %53 : vector<24x16xbf16> to vector<1x24x16xbf16>
    tpu.vector_store %arg13[%c0_35, %c120, %c0_36], %56 {strides = array<i32>} : memref<9x144x16xbf16, #tpu.memory_space<vmem>>, vector<1x24x16xbf16>,
    %c224 = arith.constant 224 : index
    %c0_37 = arith.constant 0 : index
    %57 = vector.load %arg12[%c224, %c0_37] : memref<896x16xbf16, #tpu.memory_space<vmem>>, vector<24x16xbf16>
    %c1 = arith.constant 1 : index
    %c0_38 = arith.constant 0 : index
    %c0_39 = arith.constant 0 : index
    %58 = vector.load %arg13[%c1, %c0_38, %c0_39] : memref<9x144x16xbf16, #tpu.memory_space<vmem>>, vector<1x24x16xbf16>
    %59 = vector.shape_cast %58 : vector<1x24x16xbf16> to vector<24x16xbf16>
    %60 = vector.shape_cast %57 : vector<24x16xbf16> to vector<1x24x16xbf16>
    tpu.vector_store %arg13[%c1, %c0_38, %c0_39], %60 {strides = array<i32>} : memref<9x144x16xbf16, #tpu.memory_space<vmem>>, vector<1x24x16xbf16>,
    %c256 = arith.constant 256 : index
    %c0_40 = arith.constant 0 : index
    %61 = vector.load %arg12[%c256, %c0_40] : memref<896x16xbf16, #tpu.memory_space<vmem>>, vector<24x16xbf16>
    %c1_41 = arith.constant 1 : index
    %c24_42 = arith.constant 24 : index
    %c0_43 = arith.constant 0 : index
    %62 = vector.load %arg13[%c1_41, %c24_42, %c0_43] : memref<9x144x16xbf16, #tpu.memory_space<vmem>>, vector<1x24x16xbf16>
    %63 = vector.shape_cast %62 : vector<1x24x16xbf16> to vector<24x16xbf16>
    %64 = vector.shape_cast %61 : vector<24x16xbf16> to vector<1x24x16xbf16>
    tpu.vector_store %arg13[%c1_41, %c24_42, %c0_43], %64 {strides = array<i32>} : memref<9x144x16xbf16, #tpu.memory_space<vmem>>, vector<1x24x16xbf16>,
    %c288 = arith.constant 288 : index
    %c0_44 = arith.constant 0 : index
    %65 = vector.load %arg12[%c288, %c0_44] : memref<896x16xbf16, #tpu.memory_space<vmem>>, vector<24x16xbf16>
    %c1_45 = arith.constant 1 : index
    %c48_46 = arith.constant 48 : index
    %c0_47 = arith.constant 0 : index
    %66 = vector.load %arg13[%c1_45, %c48_46, %c0_47] : memref<9x144x16xbf16, #tpu.memory_space<vmem>>, vector<1x24x16xbf16>
    %67 = vector.shape_cast %66 : vector<1x24x16xbf16> to vector<24x16xbf16>
    %68 = vector.shape_cast %65 : vector<24x16xbf16> to vector<1x24x16xbf16>
    tpu.vector_store %arg13[%c1_45, %c48_46, %c0_47], %68 {strides = array<i32>} : memref<9x144x16xbf16, #tpu.memory_space<vmem>>, vector<1x24x16xbf16>,
    %c320 = arith.constant 320 : index
    %c0_48 = arith.constant 0 : index
    %69 = vector.load %arg12[%c320, %c0_48] : memref<896x16xbf16, #tpu.memory_space<vmem>>, vector<24x16xbf16>
    %c1_49 = arith.constant 1 : index
    %c72_50 = arith.constant 72 : index
    %c0_51 = arith.constant 0 : index
    %70 = vector.load %arg13[%c1_49, %c72_50, %c0_51] : memref<9x144x16xbf16, #tpu.memory_space<vmem>>, vector<1x24x16xbf16>
    %71 = vector.shape_cast %70 : vector<1x24x16xbf16> to vector<24x16xbf16>
    %72 = vector.shape_cast %69 : vector<24x16xbf16> to vector<1x24x16xbf16>
    tpu.vector_store %arg13[%c1_49, %c72_50, %c0_51], %72 {strides = array<i32>} : memref<9x144x16xbf16, #tpu.memory_space<vmem>>, vector<1x24x16xbf16>,
    %c352 = arith.constant 352 : index
    %c0_52 = arith.constant 0 : index
    %73 = vector.load %arg12[%c352, %c0_52] : memref<896x16xbf16, #tpu.memory_space<vmem>>, vector<24x16xbf16>
    %c1_53 = arith.constant 1 : index
    %c96_54 = arith.constant 96 : index
    %c0_55 = arith.constant 0 : index
    %74 = vector.load %arg13[%c1_53, %c96_54, %c0_55] : memref<9x144x16xbf16, #tpu.memory_space<vmem>>, vector<1x24x16xbf16>
    %75 = vector.shape_cast %74 : vector<1x24x16xbf16> to vector<24x16xbf16>
    %76 = vector.shape_cast %73 : vector<24x16xbf16> to vector<1x24x16xbf16>
    tpu.vector_store %arg13[%c1_53, %c96_54, %c0_55], %76 {strides = array<i32>} : memref<9x144x16xbf16, #tpu.memory_space<vmem>>, vector<1x24x16xbf16>,
    %c384 = arith.constant 384 : index
    %c0_56 = arith.constant 0 : index
    %77 = vector.load %arg12[%c384, %c0_56] : memref<896x16xbf16, #tpu.memory_space<vmem>>, vector<24x16xbf16>
    %c1_57 = arith.constant 1 : index
    %c120_58 = arith.constant 120 : index
    %c0_59 = arith.constant 0 : index
    %78 = vector.load %arg13[%c1_57, %c120_58, %c0_59] : memref<9x144x16xbf16, #tpu.memory_space<vmem>>, vector<1x24x16xbf16>
    %79 = vector.shape_cast %78 : vector<1x24x16xbf16> to vector<24x16xbf16>
    %80 = vector.shape_cast %77 : vector<24x16xbf16> to vector<1x24x16xbf16>
    tpu.vector_store %arg13[%c1_57, %c120_58, %c0_59], %80 {strides = array<i32>} : memref<9x144x16xbf16, #tpu.memory_space<vmem>>, vector<1x24x16xbf16>,
    %c4 = arith.constant 4 : index
    %c0_60 = arith.constant 0 : index
    %81 = vector.load %arg12[%c4, %c0_60] : memref<896x16xbf16, #tpu.memory_space<vmem>>, vector<24x16xbf16>
    %c2 = arith.constant 2 : index
    %c0_61 = arith.constant 0 : index
    %c0_62 = arith.constant 0 : index
    %82 = vector.load %arg13[%c2, %c0_61, %c0_62] : memref<9x144x16xbf16, #tpu.memory_space<vmem>>, vector<1x24x16xbf16>
    %83 = vector.shape_cast %82 : vector<1x24x16xbf16> to vector<24x16xbf16>
    %84 = vector.shape_cast %81 : vector<24x16xbf16> to vector<1x24x16xbf16>
    tpu.vector_store %arg13[%c2, %c0_61, %c0_62], %84 {strides = array<i32>} : memref<9x144x16xbf16, #tpu.memory_space<vmem>>, vector<1x24x16xbf16>,
    %c36 = arith.constant 36 : index
    %c0_63 = arith.constant 0 : index
    %85 = vector.load %arg12[%c36, %c0_63] : memref<896x16xbf16, #tpu.memory_space<vmem>>, vector<24x16xbf16>
    %c2_64 = arith.constant 2 : index
    %c24_65 = arith.constant 24 : index
    %c0_66 = arith.constant 0 : index
    %86 = vector.load %arg13[%c2_64, %c24_65, %c0_66] : memref<9x144x16xbf16, #tpu.memory_space<vmem>>, vector<1x24x16xbf16>
    %87 = vector.shape_cast %86 : vector<1x24x16xbf16> to vector<24x16xbf16>
    %88 = vector.shape_cast %85 : vector<24x16xbf16> to vector<1x24x16xbf16>
    tpu.vector_store %arg13[%c2_64, %c24_65, %c0_66], %88 {strides = array<i32>} : memref<9x144x16xbf16, #tpu.memory_space<vmem>>, vector<1x24x16xbf16>,
    %c68 = arith.constant 68 : index
    %c0_67 = arith.constant 0 : index
    %89 = vector.load %arg12[%c68, %c0_67] : memref<896x16xbf16, #tpu.memory_space<vmem>>, vector<24x16xbf16>
    %c2_68 = arith.constant 2 : index
    %c48_69 = arith.constant 48 : index
    %c0_70 = arith.constant 0 : index
    %90 = vector.load %arg13[%c2_68, %c48_69, %c0_70] : memref<9x144x16xbf16, #tpu.memory_space<vmem>>, vector<1x24x16xbf16>
    %91 = vector.shape_cast %90 : vector<1x24x16xbf16> to vector<24x16xbf16>
    %92 = vector.shape_cast %89 : vector<24x16xbf16> to vector<1x24x16xbf16>
    tpu.vector_store %arg13[%c2_68, %c48_69, %c0_70], %92 {strides = array<i32>} : memref<9x144x16xbf16, #tpu.memory_space<vmem>>, vector<1x24x16xbf16>,
    %c100 = arith.constant 100 : index
    %c0_71 = arith.constant 0 : index
    %93 = vector.load %arg12[%c100, %c0_71] : memref<896x16xbf16, #tpu.memory_space<vmem>>, vector<24x16xbf16>
    %c2_72 = arith.constant 2 : index
    %c72_73 = arith.constant 72 : index
    %c0_74 = arith.constant 0 : index
    %94 = vector.load %arg13[%c2_72, %c72_73, %c0_74] : memref<9x144x16xbf16, #tpu.memory_space<vmem>>, vector<1x24x16xbf16>
    %95 = vector.shape_cast %94 : vector<1x24x16xbf16> to vector<24x16xbf16>
    %96 = vector.shape_cast %93 : vector<24x16xbf16> to vector<1x24x16xbf16>
    tpu.vector_store %arg13[%c2_72, %c72_73, %c0_74], %96 {strides = array<i32>} : memref<9x144x16xbf16, #tpu.memory_space<vmem>>, vector<1x24x16xbf16>,
    %c132 = arith.constant 132 : index
    %c0_75 = arith.constant 0 : index
    %97 = vector.load %arg12[%c132, %c0_75] : memref<896x16xbf16, #tpu.memory_space<vmem>>, vector<24x16xbf16>
    %c2_76 = arith.constant 2 : index
    %c96_77 = arith.constant 96 : index
    %c0_78 = arith.constant 0 : index
    %98 = vector.load %arg13[%c2_76, %c96_77, %c0_78] : memref<9x144x16xbf16, #tpu.memory_space<vmem>>, vector<1x24x16xbf16>
    %99 = vector.shape_cast %98 : vector<1x24x16xbf16> to vector<24x16xbf16>
    %100 = vector.shape_cast %97 : vector<24x16xbf16> to vector<1x24x16xbf16>
    tpu.vector_store %arg13[%c2_76, %c96_77, %c0_78], %100 {strides = array<i32>} : memref<9x144x16xbf16, #tpu.memory_space<vmem>>, vector<1x24x16xbf16>,
    %c164 = arith.constant 164 : index
    %c0_79 = arith.constant 0 : index
    %101 = vector.load %arg12[%c164, %c0_79] : memref<896x16xbf16, #tpu.memory_space<vmem>>, vector<24x16xbf16>
    %c2_80 = arith.constant 2 : index
    %c120_81 = arith.constant 120 : index
    %c0_82 = arith.constant 0 : index
    %102 = vector.load %arg13[%c2_80, %c120_81, %c0_82] : memref<9x144x16xbf16, #tpu.memory_space<vmem>>, vector<1x24x16xbf16>
    %103 = vector.shape_cast %102 : vector<1x24x16xbf16> to vector<24x16xbf16>
    %104 = vector.shape_cast %101 : vector<24x16xbf16> to vector<1x24x16xbf16>
    tpu.vector_store %arg13[%c2_80, %c120_81, %c0_82], %104 {strides = array<i32>} : memref<9x144x16xbf16, #tpu.memory_space<vmem>>, vector<1x24x16xbf16>,
    %c448 = arith.constant 448 : index
    %c0_83 = arith.constant 0 : index
    %105 = vector.load %arg12[%c448, %c0_83] : memref<896x16xbf16, #tpu.memory_space<vmem>>, vector<24x16xbf16>
    %c3 = arith.constant 3 : index
    %c0_84 = arith.constant 0 : index
    %c0_85 = arith.constant 0 : index
    %106 = vector.load %arg13[%c3, %c0_84, %c0_85] : memref<9x144x16xbf16, #tpu.memory_space<vmem>>, vector<1x24x16xbf16>
    %107 = vector.shape_cast %106 : vector<1x24x16xbf16> to vector<24x16xbf16>
    %108 = vector.shape_cast %105 : vector<24x16xbf16> to vector<1x24x16xbf16>
    tpu.vector_store %arg13[%c3, %c0_84, %c0_85], %108 {strides = array<i32>} : memref<9x144x16xbf16, #tpu.memory_space<vmem>>, vector<1x24x16xbf16>,
    %c480 = arith.constant 480 : index
    %c0_86 = arith.constant 0 : index
    %109 = vector.load %arg12[%c480, %c0_86] : memref<896x16xbf16, #tpu.memory_space<vmem>>, vector<24x16xbf16>
    %c3_87 = arith.constant 3 : index
    %c24_88 = arith.constant 24 : index
    %c0_89 = arith.constant 0 : index
    %110 = vector.load %arg13[%c3_87, %c24_88, %c0_89] : memref<9x144x16xbf16, #tpu.memory_space<vmem>>, vector<1x24x16xbf16>
    %111 = vector.shape_cast %110 : vector<1x24x16xbf16> to vector<24x16xbf16>
    %112 = vector.shape_cast %109 : vector<24x16xbf16> to vector<1x24x16xbf16>
    tpu.vector_store %arg13[%c3_87, %c24_88, %c0_89], %112 {strides = array<i32>} : memref<9x144x16xbf16, #tpu.memory_space<vmem>>, vector<1x24x16xbf16>,
    %c512 = arith.constant 512 : index
    %c0_90 = arith.constant 0 : index
    %113 = vector.load %arg12[%c512, %c0_90] : memref<896x16xbf16, #tpu.memory_space<vmem>>, vector<24x16xbf16>
    %c3_91 = arith.constant 3 : index
    %c48_92 = arith.constant 48 : index
    %c0_93 = arith.constant 0 : index
    %114 = vector.load %arg13[%c3_91, %c48_92, %c0_93] : memref<9x144x16xbf16, #tpu.memory_space<vmem>>, vector<1x24x16xbf16>
    %115 = vector.shape_cast %114 : vector<1x24x16xbf16> to vector<24x16xbf16>
    %116 = vector.shape_cast %113 : vector<24x16xbf16> to vector<1x24x16xbf16>
    tpu.vector_store %arg13[%c3_91, %c48_92, %c0_93], %116 {strides = array<i32>} : memref<9x144x16xbf16, #tpu.memory_space<vmem>>, vector<1x24x16xbf16>,
    %c544 = arith.constant 544 : index
    %c0_94 = arith.constant 0 : index
    %117 = vector.load %arg12[%c544, %c0_94] : memref<896x16xbf16, #tpu.memory_space<vmem>>, vector<24x16xbf16>
    %c3_95 = arith.constant 3 : index
    %c72_96 = arith.constant 72 : index
    %c0_97 = arith.constant 0 : index
    %118 = vector.load %arg13[%c3_95, %c72_96, %c0_97] : memref<9x144x16xbf16, #tpu.memory_space<vmem>>, vector<1x24x16xbf16>
    %119 = vector.shape_cast %118 : vector<1x24x16xbf16> to vector<24x16xbf16>
    %120 = vector.shape_cast %117 : vector<24x16xbf16> to vector<1x24x16xbf16>
    tpu.vector_store %arg13[%c3_95, %c72_96, %c0_97], %120 {strides = array<i32>} : memref<9x144x16xbf16, #tpu.memory_space<vmem>>, vector<1x24x16xbf16>,
    %c576 = arith.constant 576 : index
    %c0_98 = arith.constant 0 : index
    %121 = vector.load %arg12[%c576, %c0_98] : memref<896x16xbf16, #tpu.memory_space<vmem>>, vector<24x16xbf16>
    %c3_99 = arith.constant 3 : index
    %c96_100 = arith.constant 96 : index
    %c0_101 = arith.constant 0 : index
    %122 = vector.load %arg13[%c3_99, %c96_100, %c0_101] : memref<9x144x16xbf16, #tpu.memory_space<vmem>>, vector<1x24x16xbf16>
    %123 = vector.shape_cast %122 : vector<1x24x16xbf16> to vector<24x16xbf16>
    %124 = vector.shape_cast %121 : vector<24x16xbf16> to vector<1x24x16xbf16>
    tpu.vector_store %arg13[%c3_99, %c96_100, %c0_101], %124 {strides = array<i32>} : memref<9x144x16xbf16, #tpu.memory_space<vmem>>, vector<1x24x16xbf16>,
    %c608 = arith.constant 608 : index
    %c0_102 = arith.constant 0 : index
    %125 = vector.load %arg12[%c608, %c0_102] : memref<896x16xbf16, #tpu.memory_space<vmem>>, vector<24x16xbf16>
    %c3_103 = arith.constant 3 : index
    %c120_104 = arith.constant 120 : index
    %c0_105 = arith.constant 0 : index
    %126 = vector.load %arg13[%c3_103, %c120_104, %c0_105] : memref<9x144x16xbf16, #tpu.memory_space<vmem>>, vector<1x24x16xbf16>
    %127 = vector.shape_cast %126 : vector<1x24x16xbf16> to vector<24x16xbf16>
    %128 = vector.shape_cast %125 : vector<24x16xbf16> to vector<1x24x16xbf16>
    tpu.vector_store %arg13[%c3_103, %c120_104, %c0_105], %128 {strides = array<i32>} : memref<9x144x16xbf16, #tpu.memory_space<vmem>>, vector<1x24x16xbf16>,
    %c672 = arith.constant 672 : index
    %c0_106 = arith.constant 0 : index
    %129 = vector.load %arg12[%c672, %c0_106] : memref<896x16xbf16, #tpu.memory_space<vmem>>, vector<24x16xbf16>
    %c4_107 = arith.constant 4 : index
    %c0_108 = arith.constant 0 : index
    %c0_109 = arith.constant 0 : index
    %130 = vector.load %arg13[%c4_107, %c0_108, %c0_109] : memref<9x144x16xbf16, #tpu.memory_space<vmem>>, vector<1x24x16xbf16>
    %131 = vector.shape_cast %130 : vector<1x24x16xbf16> to vector<24x16xbf16>
    %132 = vector.shape_cast %129 : vector<24x16xbf16> to vector<1x24x16xbf16>
    tpu.vector_store %arg13[%c4_107, %c0_108, %c0_109], %132 {strides = array<i32>} : memref<9x144x16xbf16, #tpu.memory_space<vmem>>, vector<1x24x16xbf16>,
    %c704 = arith.constant 704 : index
    %c0_110 = arith.constant 0 : index
    %133 = vector.load %arg12[%c704, %c0_110] : memref<896x16xbf16, #tpu.memory_space<vmem>>, vector<24x16xbf16>
    %c4_111 = arith.constant 4 : index
    %c24_112 = arith.constant 24 : index
    %c0_113 = arith.constant 0 : index
    %134 = vector.load %arg13[%c4_111, %c24_112, %c0_113] : memref<9x144x16xbf16, #tpu.memory_space<vmem>>, vector<1x24x16xbf16>
    %135 = vector.shape_cast %134 : vector<1x24x16xbf16> to vector<24x16xbf16>
    %136 = vector.shape_cast %133 : vector<24x16xbf16> to vector<1x24x16xbf16>
    tpu.vector_store %arg13[%c4_111, %c24_112, %c0_113], %136 {strides = array<i32>} : memref<9x144x16xbf16, #tpu.memory_space<vmem>>, vector<1x24x16xbf16>,
    %c736 = arith.constant 736 : index
    %c0_114 = arith.constant 0 : index
    %137 = vector.load %arg12[%c736, %c0_114] : memref<896x16xbf16, #tpu.memory_space<vmem>>, vector<24x16xbf16>
    %c4_115 = arith.constant 4 : index
    %c48_116 = arith.constant 48 : index
    %c0_117 = arith.constant 0 : index
    %138 = vector.load %arg13[%c4_115, %c48_116, %c0_117] : memref<9x144x16xbf16, #tpu.memory_space<vmem>>, vector<1x24x16xbf16>
    %139 = vector.shape_cast %138 : vector<1x24x16xbf16> to vector<24x16xbf16>
    %140 = vector.shape_cast %137 : vector<24x16xbf16> to vector<1x24x16xbf16>
    tpu.vector_store %arg13[%c4_115, %c48_116, %c0_117], %140 {strides = array<i32>} : memref<9x144x16xbf16, #tpu.memory_space<vmem>>, vector<1x24x16xbf16>,
    %c768 = arith.constant 768 : index
    %c0_118 = arith.constant 0 : index
    %141 = vector.load %arg12[%c768, %c0_118] : memref<896x16xbf16, #tpu.memory_space<vmem>>, vector<24x16xbf16>
    %c4_119 = arith.constant 4 : index
    %c72_120 = arith.constant 72 : index
    %c0_121 = arith.constant 0 : index
    %142 = vector.load %arg13[%c4_119, %c72_120, %c0_121] : memref<9x144x16xbf16, #tpu.memory_space<vmem>>, vector<1x24x16xbf16>
    %143 = vector.shape_cast %142 : vector<1x24x16xbf16> to vector<24x16xbf16>
    %144 = vector.shape_cast %141 : vector<24x16xbf16> to vector<1x24x16xbf16>
    tpu.vector_store %arg13[%c4_119, %c72_120, %c0_121], %144 {strides = array<i32>} : memref<9x144x16xbf16, #tpu.memory_space<vmem>>, vector<1x24x16xbf16>,
    %c800 = arith.constant 800 : index
    %c0_122 = arith.constant 0 : index
    %145 = vector.load %arg12[%c800, %c0_122] : memref<896x16xbf16, #tpu.memory_space<vmem>>, vector<24x16xbf16>
    %c4_123 = arith.constant 4 : index
    %c96_124 = arith.constant 96 : index
    %c0_125 = arith.constant 0 : index
    %146 = vector.load %arg13[%c4_123, %c96_124, %c0_125] : memref<9x144x16xbf16, #tpu.memory_space<vmem>>, vector<1x24x16xbf16>
    %147 = vector.shape_cast %146 : vector<1x24x16xbf16> to vector<24x16xbf16>
    %148 = vector.shape_cast %145 : vector<24x16xbf16> to vector<1x24x16xbf16>
    tpu.vector_store %arg13[%c4_123, %c96_124, %c0_125], %148 {strides = array<i32>} : memref<9x144x16xbf16, #tpu.memory_space<vmem>>, vector<1x24x16xbf16>,
    %c832 = arith.constant 832 : index
    %c0_126 = arith.constant 0 : index
    %149 = vector.load %arg12[%c832, %c0_126] : memref<896x16xbf16, #tpu.memory_space<vmem>>, vector<24x16xbf16>
    %c4_127 = arith.constant 4 : index
    %c120_128 = arith.constant 120 : index
    %c0_129 = arith.constant 0 : index
    %150 = vector.load %arg13[%c4_127, %c120_128, %c0_129] : memref<9x144x16xbf16, #tpu.memory_space<vmem>>, vector<1x24x16xbf16>
    %151 = vector.shape_cast %150 : vector<1x24x16xbf16> to vector<24x16xbf16>
    %152 = vector.shape_cast %149 : vector<24x16xbf16> to vector<1x24x16xbf16>
    tpu.vector_store %arg13[%c4_127, %c120_128, %c0_129], %152 {strides = array<i32>} : memref<9x144x16xbf16, #tpu.memory_space<vmem>>, vector<1x24x16xbf16>,
    %c452 = arith.constant 452 : index
    %c0_130 = arith.constant 0 : index
    %153 = vector.load %arg12[%c452, %c0_130] : memref<896x16xbf16, #tpu.memory_space<vmem>>, vector<24x16xbf16>
    %c5 = arith.constant 5 : index
    %c0_131 = arith.constant 0 : index
    %c0_132 = arith.constant 0 : index
    %154 = vector.load %arg13[%c5, %c0_131, %c0_132] : memref<9x144x16xbf16, #tpu.memory_space<vmem>>, vector<1x24x16xbf16>
    %155 = vector.shape_cast %154 : vector<1x24x16xbf16> to vector<24x16xbf16>
    %156 = vector.shape_cast %153 : vector<24x16xbf16> to vector<1x24x16xbf16>
    tpu.vector_store %arg13[%c5, %c0_131, %c0_132], %156 {strides = array<i32>} : memref<9x144x16xbf16, #tpu.memory_space<vmem>>, vector<1x24x16xbf16>,
    %c484 = arith.constant 484 : index
    %c0_133 = arith.constant 0 : index
    %157 = vector.load %arg12[%c484, %c0_133] : memref<896x16xbf16, #tpu.memory_space<vmem>>, vector<24x16xbf16>
    %c5_134 = arith.constant 5 : index
    %c24_135 = arith.constant 24 : index
    %c0_136 = arith.constant 0 : index
    %158 = vector.load %arg13[%c5_134, %c24_135, %c0_136] : memref<9x144x16xbf16, #tpu.memory_space<vmem>>, vector<1x24x16xbf16>
    %159 = vector.shape_cast %158 : vector<1x24x16xbf16> to vector<24x16xbf16>
    %160 = vector.shape_cast %157 : vector<24x16xbf16> to vector<1x24x16xbf16>
    tpu.vector_store %arg13[%c5_134, %c24_135, %c0_136], %160 {strides = array<i32>} : memref<9x144x16xbf16, #tpu.memory_space<vmem>>, vector<1x24x16xbf16>,
    %c516 = arith.constant 516 : index
    %c0_137 = arith.constant 0 : index
    %161 = vector.load %arg12[%c516, %c0_137] : memref<896x16xbf16, #tpu.memory_space<vmem>>, vector<24x16xbf16>
    %c5_138 = arith.constant 5 : index
    %c48_139 = arith.constant 48 : index
    %c0_140 = arith.constant 0 : index
    %162 = vector.load %arg13[%c5_138, %c48_139, %c0_140] : memref<9x144x16xbf16, #tpu.memory_space<vmem>>, vector<1x24x16xbf16>
    %163 = vector.shape_cast %162 : vector<1x24x16xbf16> to vector<24x16xbf16>
    %164 = vector.shape_cast %161 : vector<24x16xbf16> to vector<1x24x16xbf16>
    tpu.vector_store %arg13[%c5_138, %c48_139, %c0_140], %164 {strides = array<i32>} : memref<9x144x16xbf16, #tpu.memory_space<vmem>>, vector<1x24x16xbf16>,
    %c548 = arith.constant 548 : index
    %c0_141 = arith.constant 0 : index
    %165 = vector.load %arg12[%c548, %c0_141] : memref<896x16xbf16, #tpu.memory_space<vmem>>, vector<24x16xbf16>
    %c5_142 = arith.constant 5 : index
    %c72_143 = arith.constant 72 : index
    %c0_144 = arith.constant 0 : index
    %166 = vector.load %arg13[%c5_142, %c72_143, %c0_144] : memref<9x144x16xbf16, #tpu.memory_space<vmem>>, vector<1x24x16xbf16>
    %167 = vector.shape_cast %166 : vector<1x24x16xbf16> to vector<24x16xbf16>
    %168 = vector.shape_cast %165 : vector<24x16xbf16> to vector<1x24x16xbf16>
    tpu.vector_store %arg13[%c5_142, %c72_143, %c0_144], %168 {strides = array<i32>} : memref<9x144x16xbf16, #tpu.memory_space<vmem>>, vector<1x24x16xbf16>,
    %c580 = arith.constant 580 : index
    %c0_145 = arith.constant 0 : index
    %169 = vector.load %arg12[%c580, %c0_145] : memref<896x16xbf16, #tpu.memory_space<vmem>>, vector<24x16xbf16>
    %c5_146 = arith.constant 5 : index
    %c96_147 = arith.constant 96 : index
    %c0_148 = arith.constant 0 : index
    %170 = vector.load %arg13[%c5_146, %c96_147, %c0_148] : memref<9x144x16xbf16, #tpu.memory_space<vmem>>, vector<1x24x16xbf16>
    %171 = vector.shape_cast %170 : vector<1x24x16xbf16> to vector<24x16xbf16>
    %172 = vector.shape_cast %169 : vector<24x16xbf16> to vector<1x24x16xbf16>
    tpu.vector_store %arg13[%c5_146, %c96_147, %c0_148], %172 {strides = array<i32>} : memref<9x144x16xbf16, #tpu.memory_space<vmem>>, vector<1x24x16xbf16>,
    %c612 = arith.constant 612 : index
    %c0_149 = arith.constant 0 : index
    %173 = vector.load %arg12[%c612, %c0_149] : memref<896x16xbf16, #tpu.memory_space<vmem>>, vector<24x16xbf16>
    %c5_150 = arith.constant 5 : index
    %c120_151 = arith.constant 120 : index
    %c0_152 = arith.constant 0 : index
    %174 = vector.load %arg13[%c5_150, %c120_151, %c0_152] : memref<9x144x16xbf16, #tpu.memory_space<vmem>>, vector<1x24x16xbf16>
    %175 = vector.shape_cast %174 : vector<1x24x16xbf16> to vector<24x16xbf16>
    %176 = vector.shape_cast %173 : vector<24x16xbf16> to vector<1x24x16xbf16>
    tpu.vector_store %arg13[%c5_150, %c120_151, %c0_152], %176 {strides = array<i32>} : memref<9x144x16xbf16, #tpu.memory_space<vmem>>, vector<1x24x16xbf16>,
    %c32_153 = arith.constant 32 : index
    %c0_154 = arith.constant 0 : index
    %177 = vector.load %arg12[%c32_153, %c0_154] : memref<896x16xbf16, #tpu.memory_space<vmem>>, vector<24x16xbf16>
    %c6 = arith.constant 6 : index
    %c0_155 = arith.constant 0 : index
    %c0_156 = arith.constant 0 : index
    %178 = vector.load %arg13[%c6, %c0_155, %c0_156] : memref<9x144x16xbf16, #tpu.memory_space<vmem>>, vector<1x24x16xbf16>
    %179 = vector.shape_cast %178 : vector<1x24x16xbf16> to vector<24x16xbf16>
    %180 = vector.shape_cast %177 : vector<24x16xbf16> to vector<1x24x16xbf16>
    tpu.vector_store %arg13[%c6, %c0_155, %c0_156], %180 {strides = array<i32>} : memref<9x144x16xbf16, #tpu.memory_space<vmem>>, vector<1x24x16xbf16>,
    %c64_157 = arith.constant 64 : index
    %c0_158 = arith.constant 0 : index
    %181 = vector.load %arg12[%c64_157, %c0_158] : memref<896x16xbf16, #tpu.memory_space<vmem>>, vector<24x16xbf16>
    %c6_159 = arith.constant 6 : index
    %c24_160 = arith.constant 24 : index
    %c0_161 = arith.constant 0 : index
    %182 = vector.load %arg13[%c6_159, %c24_160, %c0_161] : memref<9x144x16xbf16, #tpu.memory_space<vmem>>, vector<1x24x16xbf16>
    %183 = vector.shape_cast %182 : vector<1x24x16xbf16> to vector<24x16xbf16>
    %184 = vector.shape_cast %181 : vector<24x16xbf16> to vector<1x24x16xbf16>
    tpu.vector_store %arg13[%c6_159, %c24_160, %c0_161], %184 {strides = array<i32>} : memref<9x144x16xbf16, #tpu.memory_space<vmem>>, vector<1x24x16xbf16>,
    %c96_162 = arith.constant 96 : index
    %c0_163 = arith.constant 0 : index
    %185 = vector.load %arg12[%c96_162, %c0_163] : memref<896x16xbf16, #tpu.memory_space<vmem>>, vector<24x16xbf16>
    %c6_164 = arith.constant 6 : index
    %c48_165 = arith.constant 48 : index
    %c0_166 = arith.constant 0 : index
    %186 = vector.load %arg13[%c6_164, %c48_165, %c0_166] : memref<9x144x16xbf16, #tpu.memory_space<vmem>>, vector<1x24x16xbf16>
    %187 = vector.shape_cast %186 : vector<1x24x16xbf16> to vector<24x16xbf16>
    %188 = vector.shape_cast %185 : vector<24x16xbf16> to vector<1x24x16xbf16>
    tpu.vector_store %arg13[%c6_164, %c48_165, %c0_166], %188 {strides = array<i32>} : memref<9x144x16xbf16, #tpu.memory_space<vmem>>, vector<1x24x16xbf16>,
    %c128_167 = arith.constant 128 : index
    %c0_168 = arith.constant 0 : index
    %189 = vector.load %arg12[%c128_167, %c0_168] : memref<896x16xbf16, #tpu.memory_space<vmem>>, vector<24x16xbf16>
    %c6_169 = arith.constant 6 : index
    %c72_170 = arith.constant 72 : index
    %c0_171 = arith.constant 0 : index
    %190 = vector.load %arg13[%c6_169, %c72_170, %c0_171] : memref<9x144x16xbf16, #tpu.memory_space<vmem>>, vector<1x24x16xbf16>
    %191 = vector.shape_cast %190 : vector<1x24x16xbf16> to vector<24x16xbf16>
    %192 = vector.shape_cast %189 : vector<24x16xbf16> to vector<1x24x16xbf16>
    tpu.vector_store %arg13[%c6_169, %c72_170, %c0_171], %192 {strides = array<i32>} : memref<9x144x16xbf16, #tpu.memory_space<vmem>>, vector<1x24x16xbf16>,
    %c160_172 = arith.constant 160 : index
    %c0_173 = arith.constant 0 : index
    %193 = vector.load %arg12[%c160_172, %c0_173] : memref<896x16xbf16, #tpu.memory_space<vmem>>, vector<24x16xbf16>
    %c6_174 = arith.constant 6 : index
    %c96_175 = arith.constant 96 : index
    %c0_176 = arith.constant 0 : index
    %194 = vector.load %arg13[%c6_174, %c96_175, %c0_176] : memref<9x144x16xbf16, #tpu.memory_space<vmem>>, vector<1x24x16xbf16>
    %195 = vector.shape_cast %194 : vector<1x24x16xbf16> to vector<24x16xbf16>
    %196 = vector.shape_cast %193 : vector<24x16xbf16> to vector<1x24x16xbf16>
    tpu.vector_store %arg13[%c6_174, %c96_175, %c0_176], %196 {strides = array<i32>} : memref<9x144x16xbf16, #tpu.memory_space<vmem>>, vector<1x24x16xbf16>,
    %c192 = arith.constant 192 : index
    %c0_177 = arith.constant 0 : index
    %197 = vector.load %arg12[%c192, %c0_177] : memref<896x16xbf16, #tpu.memory_space<vmem>>, vector<24x16xbf16>
    %c6_178 = arith.constant 6 : index
    %c120_179 = arith.constant 120 : index
    %c0_180 = arith.constant 0 : index
    %198 = vector.load %arg13[%c6_178, %c120_179, %c0_180] : memref<9x144x16xbf16, #tpu.memory_space<vmem>>, vector<1x24x16xbf16>
    %199 = vector.shape_cast %198 : vector<1x24x16xbf16> to vector<24x16xbf16>
    %200 = vector.shape_cast %197 : vector<24x16xbf16> to vector<1x24x16xbf16>
    tpu.vector_store %arg13[%c6_178, %c120_179, %c0_180], %200 {strides = array<i32>} : memref<9x144x16xbf16, #tpu.memory_space<vmem>>, vector<1x24x16xbf16>,
    %c256_181 = arith.constant 256 : index
    %c0_182 = arith.constant 0 : index
    %201 = vector.load %arg12[%c256_181, %c0_182] : memref<896x16xbf16, #tpu.memory_space<vmem>>, vector<24x16xbf16>
    %c7 = arith.constant 7 : index
    %c0_183 = arith.constant 0 : index
    %c0_184 = arith.constant 0 : index
    %202 = vector.load %arg13[%c7, %c0_183, %c0_184] : memref<9x144x16xbf16, #tpu.memory_space<vmem>>, vector<1x24x16xbf16>
    %203 = vector.shape_cast %202 : vector<1x24x16xbf16> to vector<24x16xbf16>
    %204 = vector.shape_cast %201 : vector<24x16xbf16> to vector<1x24x16xbf16>
    tpu.vector_store %arg13[%c7, %c0_183, %c0_184], %204 {strides = array<i32>} : memref<9x144x16xbf16, #tpu.memory_space<vmem>>, vector<1x24x16xbf16>,
    %c288_185 = arith.constant 288 : index
    %c0_186 = arith.constant 0 : index
    %205 = vector.load %arg12[%c288_185, %c0_186] : memref<896x16xbf16, #tpu.memory_space<vmem>>, vector<24x16xbf16>
    %c7_187 = arith.constant 7 : index
    %c24_188 = arith.constant 24 : index
    %c0_189 = arith.constant 0 : index
    %206 = vector.load %arg13[%c7_187, %c24_188, %c0_189] : memref<9x144x16xbf16, #tpu.memory_space<vmem>>, vector<1x24x16xbf16>
    %207 = vector.shape_cast %206 : vector<1x24x16xbf16> to vector<24x16xbf16>
    %208 = vector.shape_cast %205 : vector<24x16xbf16> to vector<1x24x16xbf16>
    tpu.vector_store %arg13[%c7_187, %c24_188, %c0_189], %208 {strides = array<i32>} : memref<9x144x16xbf16, #tpu.memory_space<vmem>>, vector<1x24x16xbf16>,
    %c320_190 = arith.constant 320 : index
    %c0_191 = arith.constant 0 : index
    %209 = vector.load %arg12[%c320_190, %c0_191] : memref<896x16xbf16, #tpu.memory_space<vmem>>, vector<24x16xbf16>
    %c7_192 = arith.constant 7 : index
    %c48_193 = arith.constant 48 : index
    %c0_194 = arith.constant 0 : index
    %210 = vector.load %arg13[%c7_192, %c48_193, %c0_194] : memref<9x144x16xbf16, #tpu.memory_space<vmem>>, vector<1x24x16xbf16>
    %211 = vector.shape_cast %210 : vector<1x24x16xbf16> to vector<24x16xbf16>
    %212 = vector.shape_cast %209 : vector<24x16xbf16> to vector<1x24x16xbf16>
    tpu.vector_store %arg13[%c7_192, %c48_193, %c0_194], %212 {strides = array<i32>} : memref<9x144x16xbf16, #tpu.memory_space<vmem>>, vector<1x24x16xbf16>,
    %c352_195 = arith.constant 352 : index
    %c0_196 = arith.constant 0 : index
    %213 = vector.load %arg12[%c352_195, %c0_196] : memref<896x16xbf16, #tpu.memory_space<vmem>>, vector<24x16xbf16>
    %c7_197 = arith.constant 7 : index
    %c72_198 = arith.constant 72 : index
    %c0_199 = arith.constant 0 : index
    %214 = vector.load %arg13[%c7_197, %c72_198, %c0_199] : memref<9x144x16xbf16, #tpu.memory_space<vmem>>, vector<1x24x16xbf16>
    %215 = vector.shape_cast %214 : vector<1x24x16xbf16> to vector<24x16xbf16>
    %216 = vector.shape_cast %213 : vector<24x16xbf16> to vector<1x24x16xbf16>
    tpu.vector_store %arg13[%c7_197, %c72_198, %c0_199], %216 {strides = array<i32>} : memref<9x144x16xbf16, #tpu.memory_space<vmem>>, vector<1x24x16xbf16>,
    %c384_200 = arith.constant 384 : index
    %c0_201 = arith.constant 0 : index
    %217 = vector.load %arg12[%c384_200, %c0_201] : memref<896x16xbf16, #tpu.memory_space<vmem>>, vector<24x16xbf16>
    %c7_202 = arith.constant 7 : index
    %c96_203 = arith.constant 96 : index
    %c0_204 = arith.constant 0 : index
    %218 = vector.load %arg13[%c7_202, %c96_203, %c0_204] : memref<9x144x16xbf16, #tpu.memory_space<vmem>>, vector<1x24x16xbf16>
    %219 = vector.shape_cast %218 : vector<1x24x16xbf16> to vector<24x16xbf16>
    %220 = vector.shape_cast %217 : vector<24x16xbf16> to vector<1x24x16xbf16>
    tpu.vector_store %arg13[%c7_202, %c96_203, %c0_204], %220 {strides = array<i32>} : memref<9x144x16xbf16, #tpu.memory_space<vmem>>, vector<1x24x16xbf16>,
    %c416 = arith.constant 416 : index
    %c0_205 = arith.constant 0 : index
    %221 = vector.load %arg12[%c416, %c0_205] : memref<896x16xbf16, #tpu.memory_space<vmem>>, vector<24x16xbf16>
    %c7_206 = arith.constant 7 : index
    %c120_207 = arith.constant 120 : index
    %c0_208 = arith.constant 0 : index
    %222 = vector.load %arg13[%c7_206, %c120_207, %c0_208] : memref<9x144x16xbf16, #tpu.memory_space<vmem>>, vector<1x24x16xbf16>
    %223 = vector.shape_cast %222 : vector<1x24x16xbf16> to vector<24x16xbf16>
    %224 = vector.shape_cast %221 : vector<24x16xbf16> to vector<1x24x16xbf16>
    tpu.vector_store %arg13[%c7_206, %c120_207, %c0_208], %224 {strides = array<i32>} : memref<9x144x16xbf16, #tpu.memory_space<vmem>>, vector<1x24x16xbf16>,
    %c36_209 = arith.constant 36 : index
    %c0_210 = arith.constant 0 : index
    %225 = vector.load %arg12[%c36_209, %c0_210] : memref<896x16xbf16, #tpu.memory_space<vmem>>, vector<24x16xbf16>
    %c8 = arith.constant 8 : index
    %c0_211 = arith.constant 0 : index
    %c0_212 = arith.constant 0 : index
    %226 = vector.load %arg13[%c8, %c0_211, %c0_212] : memref<9x144x16xbf16, #tpu.memory_space<vmem>>, vector<1x24x16xbf16>
    %227 = vector.shape_cast %226 : vector<1x24x16xbf16> to vector<24x16xbf16>
    %228 = vector.shape_cast %225 : vector<24x16xbf16> to vector<1x24x16xbf16>
    tpu.vector_store %arg13[%c8, %c0_211, %c0_212], %228 {strides = array<i32>} : memref<9x144x16xbf16, #tpu.memory_space<vmem>>, vector<1x24x16xbf16>,
    %c68_213 = arith.constant 68 : index
    %c0_214 = arith.constant 0 : index
    %229 = vector.load %arg12[%c68_213, %c0_214] : memref<896x16xbf16, #tpu.memory_space<vmem>>, vector<24x16xbf16>
    %c8_215 = arith.constant 8 : index
    %c24_216 = arith.constant 24 : index
    %c0_217 = arith.constant 0 : index
    %230 = vector.load %arg13[%c8_215, %c24_216, %c0_217] : memref<9x144x16xbf16, #tpu.memory_space<vmem>>, vector<1x24x16xbf16>
    %231 = vector.shape_cast %230 : vector<1x24x16xbf16> to vector<24x16xbf16>
    %232 = vector.shape_cast %229 : vector<24x16xbf16> to vector<1x24x16xbf16>
    tpu.vector_store %arg13[%c8_215, %c24_216, %c0_217], %232 {strides = array<i32>} : memref<9x144x16xbf16, #tpu.memory_space<vmem>>, vector<1x24x16xbf16>,
    %c100_218 = arith.constant 100 : index
    %c0_219 = arith.constant 0 : index
    %233 = vector.load %arg12[%c100_218, %c0_219] : memref<896x16xbf16, #tpu.memory_space<vmem>>, vector<24x16xbf16>
    %c8_220 = arith.constant 8 : index
    %c48_221 = arith.constant 48 : index
    %c0_222 = arith.constant 0 : index
    %234 = vector.load %arg13[%c8_220, %c48_221, %c0_222] : memref<9x144x16xbf16, #tpu.memory_space<vmem>>, vector<1x24x16xbf16>
    %235 = vector.shape_cast %234 : vector<1x24x16xbf16> to vector<24x16xbf16>
    %236 = vector.shape_cast %233 : vector<24x16xbf16> to vector<1x24x16xbf16>
    tpu.vector_store %arg13[%c8_220, %c48_221, %c0_222], %236 {strides = array<i32>} : memref<9x144x16xbf16, #tpu.memory_space<vmem>>, vector<1x24x16xbf16>,
    %c132_223 = arith.constant 132 : index
    %c0_224 = arith.constant 0 : index
    %237 = vector.load %arg12[%c132_223, %c0_224] : memref<896x16xbf16, #tpu.memory_space<vmem>>, vector<24x16xbf16>
    %c8_225 = arith.constant 8 : index
    %c72_226 = arith.constant 72 : index
    %c0_227 = arith.constant 0 : index
    %238 = vector.load %arg13[%c8_225, %c72_226, %c0_227] : memref<9x144x16xbf16, #tpu.memory_space<vmem>>, vector<1x24x16xbf16>
    %239 = vector.shape_cast %238 : vector<1x24x16xbf16> to vector<24x16xbf16>
    %240 = vector.shape_cast %237 : vector<24x16xbf16> to vector<1x24x16xbf16>
    tpu.vector_store %arg13[%c8_225, %c72_226, %c0_227], %240 {strides = array<i32>} : memref<9x144x16xbf16, #tpu.memory_space<vmem>>, vector<1x24x16xbf16>,
    %c164_228 = arith.constant 164 : index
    %c0_229 = arith.constant 0 : index
    %241 = vector.load %arg12[%c164_228, %c0_229] : memref<896x16xbf16, #tpu.memory_space<vmem>>, vector<24x16xbf16>
    %c8_230 = arith.constant 8 : index
    %c96_231 = arith.constant 96 : index
    %c0_232 = arith.constant 0 : index
    %242 = vector.load %arg13[%c8_230, %c96_231, %c0_232] : memref<9x144x16xbf16, #tpu.memory_space<vmem>>, vector<1x24x16xbf16>
    %243 = vector.shape_cast %242 : vector<1x24x16xbf16> to vector<24x16xbf16>
    %244 = vector.shape_cast %241 : vector<24x16xbf16> to vector<1x24x16xbf16>
    tpu.vector_store %arg13[%c8_230, %c96_231, %c0_232], %244 {strides = array<i32>} : memref<9x144x16xbf16, #tpu.memory_space<vmem>>, vector<1x24x16xbf16>,
    %c196 = arith.constant 196 : index
    %c0_233 = arith.constant 0 : index
    %245 = vector.load %arg12[%c196, %c0_233] : memref<896x16xbf16, #tpu.memory_space<vmem>>, vector<24x16xbf16>
    %c8_234 = arith.constant 8 : index
    %c120_235 = arith.constant 120 : index
    %c0_236 = arith.constant 0 : index
    %246 = vector.load %arg13[%c8_234, %c120_235, %c0_236] : memref<9x144x16xbf16, #tpu.memory_space<vmem>>, vector<1x24x16xbf16>
    %247 = vector.shape_cast %246 : vector<1x24x16xbf16> to vector<24x16xbf16>
    %248 = vector.shape_cast %245 : vector<24x16xbf16> to vector<1x24x16xbf16>
    tpu.vector_store %arg13[%c8_234, %c120_235, %c0_236], %248 {strides = array<i32>} : memref<9x144x16xbf16, #tpu.memory_space<vmem>>, vector<1x24x16xbf16>,
    %cst_237 = arith.constant 0.000000e+00 : f32
    %249 = vector.broadcast %cst_237 : f32 to vector<144x32xf32>
    %c0_238 = arith.constant 0 : index
    %c0_239 = arith.constant 0 : index
    %c0_240 = arith.constant 0 : index
    %250 = vector.load %arg13[%c0_238, %c0_239, %c0_240] : memref<9x144x16xbf16, #tpu.memory_space<vmem>>, vector<1x144x16xbf16>
    %251 = vector.shape_cast %250 : vector<1x144x16xbf16> to vector<144x16xbf16>
    %c0_241 = arith.constant 0 : index
    %c0_242 = arith.constant 0 : index
    %c0_243 = arith.constant 0 : index
    %252 = vector.load %arg4[%c0_241, %c0_242, %c0_243] : memref<9x16x32xbf16, #tpu.memory_space<vmem>>, vector<1x16x32xbf16>
    %253 = vector.shape_cast %252 : vector<1x16x32xbf16> to vector<16x32xbf16>
    %cst_244 = arith.constant dense<0.000000e+00> : vector<144x32xf32>
    %254 = tpu.matmul %251, %253, %cst_244 {dimension_numbers = #tpu.dot_dimension_numbers<[1], [0], [0], [1], [0, 0, 1, 1], [], []>} : vector<144x16xbf16>, vector<16x32xbf16>, vector<144x32xf32> -> vector<144x32xf32>
    %255 = arith.addf %249, %254 : vector<144x32xf32>
    %c1_245 = arith.constant 1 : index
    %c0_246 = arith.constant 0 : index
    %c0_247 = arith.constant 0 : index
    %256 = vector.load %arg13[%c1_245, %c0_246, %c0_247] : memref<9x144x16xbf16, #tpu.memory_space<vmem>>, vector<1x144x16xbf16>
    %257 = vector.shape_cast %256 : vector<1x144x16xbf16> to vector<144x16xbf16>
    %c1_248 = arith.constant 1 : index
    %c0_249 = arith.constant 0 : index
    %c0_250 = arith.constant 0 : index
    %258 = vector.load %arg4[%c1_248, %c0_249, %c0_250] : memref<9x16x32xbf16, #tpu.memory_space<vmem>>, vector<1x16x32xbf16>
    %259 = vector.shape_cast %258 : vector<1x16x32xbf16> to vector<16x32xbf16>
    %cst_251 = arith.constant dense<0.000000e+00> : vector<144x32xf32>
    %260 = tpu.matmul %257, %259, %cst_251 {dimension_numbers = #tpu.dot_dimension_numbers<[1], [0], [0], [1], [0, 0, 1, 1], [], []>} : vector<144x16xbf16>, vector<16x32xbf16>, vector<144x32xf32> -> vector<144x32xf32>
    %261 = arith.addf %255, %260 : vector<144x32xf32>
    %c2_252 = arith.constant 2 : index
    %c0_253 = arith.constant 0 : index
    %c0_254 = arith.constant 0 : index
    %262 = vector.load %arg13[%c2_252, %c0_253, %c0_254] : memref<9x144x16xbf16, #tpu.memory_space<vmem>>, vector<1x144x16xbf16>
    %263 = vector.shape_cast %262 : vector<1x144x16xbf16> to vector<144x16xbf16>
    %c2_255 = arith.constant 2 : index
    %c0_256 = arith.constant 0 : index
    %c0_257 = arith.constant 0 : index
    %264 = vector.load %arg4[%c2_255, %c0_256, %c0_257] : memref<9x16x32xbf16, #tpu.memory_space<vmem>>, vector<1x16x32xbf16>
    %265 = vector.shape_cast %264 : vector<1x16x32xbf16> to vector<16x32xbf16>
    %cst_258 = arith.constant dense<0.000000e+00> : vector<144x32xf32>
    %266 = tpu.matmul %263, %265, %cst_258 {dimension_numbers = #tpu.dot_dimension_numbers<[1], [0], [0], [1], [0, 0, 1, 1], [], []>} : vector<144x16xbf16>, vector<16x32xbf16>, vector<144x32xf32> -> vector<144x32xf32>
    %267 = arith.addf %261, %266 : vector<144x32xf32>
    %c3_259 = arith.constant 3 : index
    %c0_260 = arith.constant 0 : index
    %c0_261 = arith.constant 0 : index
    %268 = vector.load %arg13[%c3_259, %c0_260, %c0_261] : memref<9x144x16xbf16, #tpu.memory_space<vmem>>, vector<1x144x16xbf16>
    %269 = vector.shape_cast %268 : vector<1x144x16xbf16> to vector<144x16xbf16>
    %c3_262 = arith.constant 3 : index
    %c0_263 = arith.constant 0 : index
    %c0_264 = arith.constant 0 : index
    %270 = vector.load %arg4[%c3_262, %c0_263, %c0_264] : memref<9x16x32xbf16, #tpu.memory_space<vmem>>, vector<1x16x32xbf16>
    %271 = vector.shape_cast %270 : vector<1x16x32xbf16> to vector<16x32xbf16>
    %cst_265 = arith.constant dense<0.000000e+00> : vector<144x32xf32>
    %272 = tpu.matmul %269, %271, %cst_265 {dimension_numbers = #tpu.dot_dimension_numbers<[1], [0], [0], [1], [0, 0, 1, 1], [], []>} : vector<144x16xbf16>, vector<16x32xbf16>, vector<144x32xf32> -> vector<144x32xf32>
    %273 = arith.addf %267, %272 : vector<144x32xf32>
    %c4_266 = arith.constant 4 : index
    %c0_267 = arith.constant 0 : index
    %c0_268 = arith.constant 0 : index
    %274 = vector.load %arg13[%c4_266, %c0_267, %c0_268] : memref<9x144x16xbf16, #tpu.memory_space<vmem>>, vector<1x144x16xbf16>
    %275 = vector.shape_cast %274 : vector<1x144x16xbf16> to vector<144x16xbf16>
    %c4_269 = arith.constant 4 : index
    %c0_270 = arith.constant 0 : index
    %c0_271 = arith.constant 0 : index
    %276 = vector.load %arg4[%c4_269, %c0_270, %c0_271] : memref<9x16x32xbf16, #tpu.memory_space<vmem>>, vector<1x16x32xbf16>
    %277 = vector.shape_cast %276 : vector<1x16x32xbf16> to vector<16x32xbf16>
    %cst_272 = arith.constant dense<0.000000e+00> : vector<144x32xf32>
    %278 = tpu.matmul %275, %277, %cst_272 {dimension_numbers = #tpu.dot_dimension_numbers<[1], [0], [0], [1], [0, 0, 1, 1], [], []>} : vector<144x16xbf16>, vector<16x32xbf16>, vector<144x32xf32> -> vector<144x32xf32>
    %279 = arith.addf %273, %278 : vector<144x32xf32>
    %c5_273 = arith.constant 5 : index
    %c0_274 = arith.constant 0 : index
    %c0_275 = arith.constant 0 : index
    %280 = vector.load %arg13[%c5_273, %c0_274, %c0_275] : memref<9x144x16xbf16, #tpu.memory_space<vmem>>, vector<1x144x16xbf16>
    %281 = vector.shape_cast %280 : vector<1x144x16xbf16> to vector<144x16xbf16>
    %c5_276 = arith.constant 5 : index
    %c0_277 = arith.constant 0 : index
    %c0_278 = arith.constant 0 : index
    %282 = vector.load %arg4[%c5_276, %c0_277, %c0_278] : memref<9x16x32xbf16, #tpu.memory_space<vmem>>, vector<1x16x32xbf16>
    %283 = vector.shape_cast %282 : vector<1x16x32xbf16> to vector<16x32xbf16>
    %cst_279 = arith.constant dense<0.000000e+00> : vector<144x32xf32>
    %284 = tpu.matmul %281, %283, %cst_279 {dimension_numbers = #tpu.dot_dimension_numbers<[1], [0], [0], [1], [0, 0, 1, 1], [], []>} : vector<144x16xbf16>, vector<16x32xbf16>, vector<144x32xf32> -> vector<144x32xf32>
    %285 = arith.addf %279, %284 : vector<144x32xf32>
    %c6_280 = arith.constant 6 : index
    %c0_281 = arith.constant 0 : index
    %c0_282 = arith.constant 0 : index
    %286 = vector.load %arg13[%c6_280, %c0_281, %c0_282] : memref<9x144x16xbf16, #tpu.memory_space<vmem>>, vector<1x144x16xbf16>
    %287 = vector.shape_cast %286 : vector<1x144x16xbf16> to vector<144x16xbf16>
    %c6_283 = arith.constant 6 : index
    %c0_284 = arith.constant 0 : index
    %c0_285 = arith.constant 0 : index
    %288 = vector.load %arg4[%c6_283, %c0_284, %c0_285] : memref<9x16x32xbf16, #tpu.memory_space<vmem>>, vector<1x16x32xbf16>
    %289 = vector.shape_cast %288 : vector<1x16x32xbf16> to vector<16x32xbf16>
    %cst_286 = arith.constant dense<0.000000e+00> : vector<144x32xf32>
    %290 = tpu.matmul %287, %289, %cst_286 {dimension_numbers = #tpu.dot_dimension_numbers<[1], [0], [0], [1], [0, 0, 1, 1], [], []>} : vector<144x16xbf16>, vector<16x32xbf16>, vector<144x32xf32> -> vector<144x32xf32>
    %291 = arith.addf %285, %290 : vector<144x32xf32>
    %c7_287 = arith.constant 7 : index
    %c0_288 = arith.constant 0 : index
    %c0_289 = arith.constant 0 : index
    %292 = vector.load %arg13[%c7_287, %c0_288, %c0_289] : memref<9x144x16xbf16, #tpu.memory_space<vmem>>, vector<1x144x16xbf16>
    %293 = vector.shape_cast %292 : vector<1x144x16xbf16> to vector<144x16xbf16>
    %c7_290 = arith.constant 7 : index
    %c0_291 = arith.constant 0 : index
    %c0_292 = arith.constant 0 : index
    %294 = vector.load %arg4[%c7_290, %c0_291, %c0_292] : memref<9x16x32xbf16, #tpu.memory_space<vmem>>, vector<1x16x32xbf16>
    %295 = vector.shape_cast %294 : vector<1x16x32xbf16> to vector<16x32xbf16>
    %cst_293 = arith.constant dense<0.000000e+00> : vector<144x32xf32>
    %296 = tpu.matmul %293, %295, %cst_293 {dimension_numbers = #tpu.dot_dimension_numbers<[1], [0], [0], [1], [0, 0, 1, 1], [], []>} : vector<144x16xbf16>, vector<16x32xbf16>, vector<144x32xf32> -> vector<144x32xf32>
    %297 = arith.addf %291, %296 : vector<144x32xf32>
    %c8_294 = arith.constant 8 : index
    %c0_295 = arith.constant 0 : index
    %c0_296 = arith.constant 0 : index
    %298 = vector.load %arg13[%c8_294, %c0_295, %c0_296] : memref<9x144x16xbf16, #tpu.memory_space<vmem>>, vector<1x144x16xbf16>
    %299 = vector.shape_cast %298 : vector<1x144x16xbf16> to vector<144x16xbf16>
    %c8_297 = arith.constant 8 : index
    %c0_298 = arith.constant 0 : index
    %c0_299 = arith.constant 0 : index
    %300 = vector.load %arg4[%c8_297, %c0_298, %c0_299] : memref<9x16x32xbf16, #tpu.memory_space<vmem>>, vector<1x16x32xbf16>
    %301 = vector.shape_cast %300 : vector<1x16x32xbf16> to vector<16x32xbf16>
    %cst_300 = arith.constant dense<0.000000e+00> : vector<144x32xf32>
    %302 = tpu.matmul %299, %301, %cst_300 {dimension_numbers = #tpu.dot_dimension_numbers<[1], [0], [0], [1], [0, 0, 1, 1], [], []>} : vector<144x16xbf16>, vector<16x32xbf16>, vector<144x32xf32> -> vector<144x32xf32>
    %303 = arith.addf %297, %302 : vector<144x32xf32>
    %cst_301 = arith.constant dense<0.000000e+00> : vector<32xf32>
    %304 = vector.multi_reduction <add>, %303, %cst_301 [0] : vector<144x32xf32> to vector<32xf32>
    %305 = vector.shape_cast %304 : vector<32xf32> to vector<1x32xf32>
    %cst_302 = arith.constant 0.0069444445 : f32
    %306 = vector.broadcast %cst_302 : f32 to vector<1x32xf32>
    %307 = arith.mulf %305, %306 : vector<1x32xf32>
    %308 = arith.mulf %303, %303 : vector<144x32xf32>
    %cst_303 = arith.constant dense<0.000000e+00> : vector<32xf32>
    %309 = vector.multi_reduction <add>, %308, %cst_303 [0] : vector<144x32xf32> to vector<32xf32>
    %310 = vector.shape_cast %309 : vector<32xf32> to vector<1x32xf32>
    %cst_304 = arith.constant 0.0069444445 : f32
    %311 = vector.broadcast %cst_304 : f32 to vector<1x32xf32>
    %312 = arith.mulf %310, %311 : vector<1x32xf32>
    %313 = arith.mulf %307, %307 : vector<1x32xf32>
    %314 = arith.subf %312, %313 : vector<1x32xf32>
    %cst_305 = arith.constant 0.000000e+00 : f32
    %315 = vector.broadcast %cst_305 : f32 to vector<1x32xf32>
    %316 = arith.maximumf %314, %315 : vector<1x32xf32>
    %c0_306 = arith.constant 0 : index
    %c0_307 = arith.constant 0 : index
    %317 = vector.load %arg5[%c0_306, %c0_307] : memref<1x32xf32, #tpu.memory_space<vmem>>, vector<1x32xf32>
    %318 = vector.broadcast %307 : vector<1x32xf32> to vector<144x32xf32>
    %319 = arith.subf %303, %318 : vector<144x32xf32>
    %320 = vector.broadcast %317 : vector<1x32xf32> to vector<144x32xf32>
    %321 = arith.mulf %320, %319 : vector<144x32xf32>
    %cst_308 = arith.constant 9.99999974E-6 : f32
    %322 = vector.broadcast %cst_308 : f32 to vector<1x32xf32>
    %323 = arith.addf %316, %322 : vector<1x32xf32>
    %324 = math.rsqrt %323 : vector<1x32xf32>
    %325 = vector.broadcast %324 : vector<1x32xf32> to vector<144x32xf32>
    %326 = arith.mulf %321, %325 : vector<144x32xf32>
    %c0_309 = arith.constant 0 : index
    %c0_310 = arith.constant 0 : index
    %327 = vector.load %arg6[%c0_309, %c0_310] : memref<1x32xf32, #tpu.memory_space<vmem>>, vector<1x32xf32>
    %328 = vector.broadcast %327 : vector<1x32xf32> to vector<144x32xf32>
    %329 = arith.addf %326, %328 : vector<144x32xf32>
    %cst_311 = arith.constant 0.000000e+00 : f32
    %330 = vector.broadcast %cst_311 : f32 to vector<144x32xf32>
    %331 = arith.maximumf %329, %330 : vector<144x32xf32>
    %332 = arith.truncf %331 : vector<144x32xf32> to vector<144x32xbf16>
    %c0_312 = arith.constant 0 : index
    %c0_313 = arith.constant 0 : index
    %333 = vector.load %arg14[%c0_312, %c0_313] : memref<144x32xbf16, #tpu.memory_space<vmem>>, vector<144x32xbf16>
    tpu.vector_store %arg14[%c0_312, %c0_313], %332 {strides = array<i32>} : memref<144x32xbf16, #tpu.memory_space<vmem>>, vector<144x32xbf16>,
    %cst_314 = arith.constant 0.000000e+00 : f32
    %334 = vector.broadcast %cst_314 : f32 to vector<4x128xf32>
    %c0_315 = arith.constant 0 : index
    %c0_316 = arith.constant 0 : index
    %335 = vector.load %arg14[%c0_315, %c0_316] : memref<144x32xbf16, #tpu.memory_space<vmem>>, vector<4x32xbf16>
    %c0_317 = arith.constant 0 : index
    %c0_318 = arith.constant 0 : index
    %c0_319 = arith.constant 0 : index
    %336 = vector.load %arg7[%c0_317, %c0_318, %c0_319] : memref<36x32x128xbf16, #tpu.memory_space<vmem>>, vector<1x32x128xbf16>
    %337 = vector.shape_cast %336 : vector<1x32x128xbf16> to vector<32x128xbf16>
    %cst_320 = arith.constant dense<0.000000e+00> : vector<4x128xf32>
    %338 = tpu.matmul %335, %337, %cst_320 {dimension_numbers = #tpu.dot_dimension_numbers<[1], [0], [0], [1], [0, 0, 1, 1], [], []>} : vector<4x32xbf16>, vector<32x128xbf16>, vector<4x128xf32> -> vector<4x128xf32>
    %339 = arith.addf %334, %338 : vector<4x128xf32>
    %c4_321 = arith.constant 4 : index
    %c0_322 = arith.constant 0 : index
    %340 = vector.load %arg14[%c4_321, %c0_322] : memref<144x32xbf16, #tpu.memory_space<vmem>>, vector<4x32xbf16>
    %c1_323 = arith.constant 1 : index
    %c0_324 = arith.constant 0 : index
    %c0_325 = arith.constant 0 : index
    %341 = vector.load %arg7[%c1_323, %c0_324, %c0_325] : memref<36x32x128xbf16, #tpu.memory_space<vmem>>, vector<1x32x128xbf16>
    %342 = vector.shape_cast %341 : vector<1x32x128xbf16> to vector<32x128xbf16>
    %cst_326 = arith.constant dense<0.000000e+00> : vector<4x128xf32>
    %343 = tpu.matmul %340, %342, %cst_326 {dimension_numbers = #tpu.dot_dimension_numbers<[1], [0], [0], [1], [0, 0, 1, 1], [], []>} : vector<4x32xbf16>, vector<32x128xbf16>, vector<4x128xf32> -> vector<4x128xf32>
    %344 = arith.addf %339, %343 : vector<4x128xf32>
    %c8_327 = arith.constant 8 : index
    %c0_328 = arith.constant 0 : index
    %345 = vector.load %arg14[%c8_327, %c0_328] : memref<144x32xbf16, #tpu.memory_space<vmem>>, vector<4x32xbf16>
    %c2_329 = arith.constant 2 : index
    %c0_330 = arith.constant 0 : index
    %c0_331 = arith.constant 0 : index
    %346 = vector.load %arg7[%c2_329, %c0_330, %c0_331] : memref<36x32x128xbf16, #tpu.memory_space<vmem>>, vector<1x32x128xbf16>
    %347 = vector.shape_cast %346 : vector<1x32x128xbf16> to vector<32x128xbf16>
    %cst_332 = arith.constant dense<0.000000e+00> : vector<4x128xf32>
    %348 = tpu.matmul %345, %347, %cst_332 {dimension_numbers = #tpu.dot_dimension_numbers<[1], [0], [0], [1], [0, 0, 1, 1], [], []>} : vector<4x32xbf16>, vector<32x128xbf16>, vector<4x128xf32> -> vector<4x128xf32>
    %349 = arith.addf %344, %348 : vector<4x128xf32>
    %c12 = arith.constant 12 : index
    %c0_333 = arith.constant 0 : index
    %350 = vector.load %arg14[%c12, %c0_333] : memref<144x32xbf16, #tpu.memory_space<vmem>>, vector<4x32xbf16>
    %c3_334 = arith.constant 3 : index
    %c0_335 = arith.constant 0 : index
    %c0_336 = arith.constant 0 : index
    %351 = vector.load %arg7[%c3_334, %c0_335, %c0_336] : memref<36x32x128xbf16, #tpu.memory_space<vmem>>, vector<1x32x128xbf16>
    %352 = vector.shape_cast %351 : vector<1x32x128xbf16> to vector<32x128xbf16>
    %cst_337 = arith.constant dense<0.000000e+00> : vector<4x128xf32>
    %353 = tpu.matmul %350, %352, %cst_337 {dimension_numbers = #tpu.dot_dimension_numbers<[1], [0], [0], [1], [0, 0, 1, 1], [], []>} : vector<4x32xbf16>, vector<32x128xbf16>, vector<4x128xf32> -> vector<4x128xf32>
    %354 = arith.addf %349, %353 : vector<4x128xf32>
    %c16 = arith.constant 16 : index
    %c0_338 = arith.constant 0 : index
    %355 = vector.load %arg14[%c16, %c0_338] : memref<144x32xbf16, #tpu.memory_space<vmem>>, vector<4x32xbf16>
    %c4_339 = arith.constant 4 : index
    %c0_340 = arith.constant 0 : index
    %c0_341 = arith.constant 0 : index
    %356 = vector.load %arg7[%c4_339, %c0_340, %c0_341] : memref<36x32x128xbf16, #tpu.memory_space<vmem>>, vector<1x32x128xbf16>
    %357 = vector.shape_cast %356 : vector<1x32x128xbf16> to vector<32x128xbf16>
    %cst_342 = arith.constant dense<0.000000e+00> : vector<4x128xf32>
    %358 = tpu.matmul %355, %357, %cst_342 {dimension_numbers = #tpu.dot_dimension_numbers<[1], [0], [0], [1], [0, 0, 1, 1], [], []>} : vector<4x32xbf16>, vector<32x128xbf16>, vector<4x128xf32> -> vector<4x128xf32>
    %359 = arith.addf %354, %358 : vector<4x128xf32>
    %c20 = arith.constant 20 : index
    %c0_343 = arith.constant 0 : index
    %360 = vector.load %arg14[%c20, %c0_343] : memref<144x32xbf16, #tpu.memory_space<vmem>>, vector<4x32xbf16>
    %c5_344 = arith.constant 5 : index
    %c0_345 = arith.constant 0 : index
    %c0_346 = arith.constant 0 : index
    %361 = vector.load %arg7[%c5_344, %c0_345, %c0_346] : memref<36x32x128xbf16, #tpu.memory_space<vmem>>, vector<1x32x128xbf16>
    %362 = vector.shape_cast %361 : vector<1x32x128xbf16> to vector<32x128xbf16>
    %cst_347 = arith.constant dense<0.000000e+00> : vector<4x128xf32>
    %363 = tpu.matmul %360, %362, %cst_347 {dimension_numbers = #tpu.dot_dimension_numbers<[1], [0], [0], [1], [0, 0, 1, 1], [], []>} : vector<4x32xbf16>, vector<32x128xbf16>, vector<4x128xf32> -> vector<4x128xf32>
    %364 = arith.addf %359, %363 : vector<4x128xf32>
    %c24_348 = arith.constant 24 : index
    %c0_349 = arith.constant 0 : index
    %365 = vector.load %arg14[%c24_348, %c0_349] : memref<144x32xbf16, #tpu.memory_space<vmem>>, vector<4x32xbf16>
    %c6_350 = arith.constant 6 : index
    %c0_351 = arith.constant 0 : index
    %c0_352 = arith.constant 0 : index
    %366 = vector.load %arg7[%c6_350, %c0_351, %c0_352] : memref<36x32x128xbf16, #tpu.memory_space<vmem>>, vector<1x32x128xbf16>
    %367 = vector.shape_cast %366 : vector<1x32x128xbf16> to vector<32x128xbf16>
    %cst_353 = arith.constant dense<0.000000e+00> : vector<4x128xf32>
    %368 = tpu.matmul %365, %367, %cst_353 {dimension_numbers = #tpu.dot_dimension_numbers<[1], [0], [0], [1], [0, 0, 1, 1], [], []>} : vector<4x32xbf16>, vector<32x128xbf16>, vector<4x128xf32> -> vector<4x128xf32>
    %369 = arith.addf %364, %368 : vector<4x128xf32>
    %c28 = arith.constant 28 : index
    %c0_354 = arith.constant 0 : index
    %370 = vector.load %arg14[%c28, %c0_354] : memref<144x32xbf16, #tpu.memory_space<vmem>>, vector<4x32xbf16>
    %c7_355 = arith.constant 7 : index
    %c0_356 = arith.constant 0 : index
    %c0_357 = arith.constant 0 : index
    %371 = vector.load %arg7[%c7_355, %c0_356, %c0_357] : memref<36x32x128xbf16, #tpu.memory_space<vmem>>, vector<1x32x128xbf16>
    %372 = vector.shape_cast %371 : vector<1x32x128xbf16> to vector<32x128xbf16>
    %cst_358 = arith.constant dense<0.000000e+00> : vector<4x128xf32>
    %373 = tpu.matmul %370, %372, %cst_358 {dimension_numbers = #tpu.dot_dimension_numbers<[1], [0], [0], [1], [0, 0, 1, 1], [], []>} : vector<4x32xbf16>, vector<32x128xbf16>, vector<4x128xf32> -> vector<4x128xf32>
    %374 = arith.addf %369, %373 : vector<4x128xf32>
    %c32_359 = arith.constant 32 : index
    %c0_360 = arith.constant 0 : index
    %375 = vector.load %arg14[%c32_359, %c0_360] : memref<144x32xbf16, #tpu.memory_space<vmem>>, vector<4x32xbf16>
    %c8_361 = arith.constant 8 : index
    %c0_362 = arith.constant 0 : index
    %c0_363 = arith.constant 0 : index
    %376 = vector.load %arg7[%c8_361, %c0_362, %c0_363] : memref<36x32x128xbf16, #tpu.memory_space<vmem>>, vector<1x32x128xbf16>
    %377 = vector.shape_cast %376 : vector<1x32x128xbf16> to vector<32x128xbf16>
    %cst_364 = arith.constant dense<0.000000e+00> : vector<4x128xf32>
    %378 = tpu.matmul %375, %377, %cst_364 {dimension_numbers = #tpu.dot_dimension_numbers<[1], [0], [0], [1], [0, 0, 1, 1], [], []>} : vector<4x32xbf16>, vector<32x128xbf16>, vector<4x128xf32> -> vector<4x128xf32>
    %379 = arith.addf %374, %378 : vector<4x128xf32>
    %c36_365 = arith.constant 36 : index
    %c0_366 = arith.constant 0 : index
    %380 = vector.load %arg14[%c36_365, %c0_366] : memref<144x32xbf16, #tpu.memory_space<vmem>>, vector<4x32xbf16>
    %c9 = arith.constant 9 : index
    %c0_367 = arith.constant 0 : index
    %c0_368 = arith.constant 0 : index
    %381 = vector.load %arg7[%c9, %c0_367, %c0_368] : memref<36x32x128xbf16, #tpu.memory_space<vmem>>, vector<1x32x128xbf16>
    %382 = vector.shape_cast %381 : vector<1x32x128xbf16> to vector<32x128xbf16>
    %cst_369 = arith.constant dense<0.000000e+00> : vector<4x128xf32>
    %383 = tpu.matmul %380, %382, %cst_369 {dimension_numbers = #tpu.dot_dimension_numbers<[1], [0], [0], [1], [0, 0, 1, 1], [], []>} : vector<4x32xbf16>, vector<32x128xbf16>, vector<4x128xf32> -> vector<4x128xf32>
    %384 = arith.addf %379, %383 : vector<4x128xf32>
    %c40 = arith.constant 40 : index
    %c0_370 = arith.constant 0 : index
    %385 = vector.load %arg14[%c40, %c0_370] : memref<144x32xbf16, #tpu.memory_space<vmem>>, vector<4x32xbf16>
    %c10 = arith.constant 10 : index
    %c0_371 = arith.constant 0 : index
    %c0_372 = arith.constant 0 : index
    %386 = vector.load %arg7[%c10, %c0_371, %c0_372] : memref<36x32x128xbf16, #tpu.memory_space<vmem>>, vector<1x32x128xbf16>
    %387 = vector.shape_cast %386 : vector<1x32x128xbf16> to vector<32x128xbf16>
    %cst_373 = arith.constant dense<0.000000e+00> : vector<4x128xf32>
    %388 = tpu.matmul %385, %387, %cst_373 {dimension_numbers = #tpu.dot_dimension_numbers<[1], [0], [0], [1], [0, 0, 1, 1], [], []>} : vector<4x32xbf16>, vector<32x128xbf16>, vector<4x128xf32> -> vector<4x128xf32>
    %389 = arith.addf %384, %388 : vector<4x128xf32>
    %c44 = arith.constant 44 : index
    %c0_374 = arith.constant 0 : index
    %390 = vector.load %arg14[%c44, %c0_374] : memref<144x32xbf16, #tpu.memory_space<vmem>>, vector<4x32xbf16>
    %c11 = arith.constant 11 : index
    %c0_375 = arith.constant 0 : index
    %c0_376 = arith.constant 0 : index
    %391 = vector.load %arg7[%c11, %c0_375, %c0_376] : memref<36x32x128xbf16, #tpu.memory_space<vmem>>, vector<1x32x128xbf16>
    %392 = vector.shape_cast %391 : vector<1x32x128xbf16> to vector<32x128xbf16>
    %cst_377 = arith.constant dense<0.000000e+00> : vector<4x128xf32>
    %393 = tpu.matmul %390, %392, %cst_377 {dimension_numbers = #tpu.dot_dimension_numbers<[1], [0], [0], [1], [0, 0, 1, 1], [], []>} : vector<4x32xbf16>, vector<32x128xbf16>, vector<4x128xf32> -> vector<4x128xf32>
    %394 = arith.addf %389, %393 : vector<4x128xf32>
    %c48_378 = arith.constant 48 : index
    %c0_379 = arith.constant 0 : index
    %395 = vector.load %arg14[%c48_378, %c0_379] : memref<144x32xbf16, #tpu.memory_space<vmem>>, vector<4x32xbf16>
    %c12_380 = arith.constant 12 : index
    %c0_381 = arith.constant 0 : index
    %c0_382 = arith.constant 0 : index
    %396 = vector.load %arg7[%c12_380, %c0_381, %c0_382] : memref<36x32x128xbf16, #tpu.memory_space<vmem>>, vector<1x32x128xbf16>
    %397 = vector.shape_cast %396 : vector<1x32x128xbf16> to vector<32x128xbf16>
    %cst_383 = arith.constant dense<0.000000e+00> : vector<4x128xf32>
    %398 = tpu.matmul %395, %397, %cst_383 {dimension_numbers = #tpu.dot_dimension_numbers<[1], [0], [0], [1], [0, 0, 1, 1], [], []>} : vector<4x32xbf16>, vector<32x128xbf16>, vector<4x128xf32> -> vector<4x128xf32>
    %399 = arith.addf %394, %398 : vector<4x128xf32>
    %c52 = arith.constant 52 : index
    %c0_384 = arith.constant 0 : index
    %400 = vector.load %arg14[%c52, %c0_384] : memref<144x32xbf16, #tpu.memory_space<vmem>>, vector<4x32xbf16>
    %c13 = arith.constant 13 : index
    %c0_385 = arith.constant 0 : index
    %c0_386 = arith.constant 0 : index
    %401 = vector.load %arg7[%c13, %c0_385, %c0_386] : memref<36x32x128xbf16, #tpu.memory_space<vmem>>, vector<1x32x128xbf16>
    %402 = vector.shape_cast %401 : vector<1x32x128xbf16> to vector<32x128xbf16>
    %cst_387 = arith.constant dense<0.000000e+00> : vector<4x128xf32>
    %403 = tpu.matmul %400, %402, %cst_387 {dimension_numbers = #tpu.dot_dimension_numbers<[1], [0], [0], [1], [0, 0, 1, 1], [], []>} : vector<4x32xbf16>, vector<32x128xbf16>, vector<4x128xf32> -> vector<4x128xf32>
    %404 = arith.addf %399, %403 : vector<4x128xf32>
    %c56 = arith.constant 56 : index
    %c0_388 = arith.constant 0 : index
    %405 = vector.load %arg14[%c56, %c0_388] : memref<144x32xbf16, #tpu.memory_space<vmem>>, vector<4x32xbf16>
    %c14 = arith.constant 14 : index
    %c0_389 = arith.constant 0 : index
    %c0_390 = arith.constant 0 : index
    %406 = vector.load %arg7[%c14, %c0_389, %c0_390] : memref<36x32x128xbf16, #tpu.memory_space<vmem>>, vector<1x32x128xbf16>
    %407 = vector.shape_cast %406 : vector<1x32x128xbf16> to vector<32x128xbf16>
    %cst_391 = arith.constant dense<0.000000e+00> : vector<4x128xf32>
    %408 = tpu.matmul %405, %407, %cst_391 {dimension_numbers = #tpu.dot_dimension_numbers<[1], [0], [0], [1], [0, 0, 1, 1], [], []>} : vector<4x32xbf16>, vector<32x128xbf16>, vector<4x128xf32> -> vector<4x128xf32>
    %409 = arith.addf %404, %408 : vector<4x128xf32>
    %c60 = arith.constant 60 : index
    %c0_392 = arith.constant 0 : index
    %410 = vector.load %arg14[%c60, %c0_392] : memref<144x32xbf16, #tpu.memory_space<vmem>>, vector<4x32xbf16>
    %c15 = arith.constant 15 : index
    %c0_393 = arith.constant 0 : index
    %c0_394 = arith.constant 0 : index
    %411 = vector.load %arg7[%c15, %c0_393, %c0_394] : memref<36x32x128xbf16, #tpu.memory_space<vmem>>, vector<1x32x128xbf16>
    %412 = vector.shape_cast %411 : vector<1x32x128xbf16> to vector<32x128xbf16>
    %cst_395 = arith.constant dense<0.000000e+00> : vector<4x128xf32>
    %413 = tpu.matmul %410, %412, %cst_395 {dimension_numbers = #tpu.dot_dimension_numbers<[1], [0], [0], [1], [0, 0, 1, 1], [], []>} : vector<4x32xbf16>, vector<32x128xbf16>, vector<4x128xf32> -> vector<4x128xf32>
    %414 = arith.addf %409, %413 : vector<4x128xf32>
    %c64_396 = arith.constant 64 : index
    %c0_397 = arith.constant 0 : index
    %415 = vector.load %arg14[%c64_396, %c0_397] : memref<144x32xbf16, #tpu.memory_space<vmem>>, vector<4x32xbf16>
    %c16_398 = arith.constant 16 : index
    %c0_399 = arith.constant 0 : index
    %c0_400 = arith.constant 0 : index
    %416 = vector.load %arg7[%c16_398, %c0_399, %c0_400] : memref<36x32x128xbf16, #tpu.memory_space<vmem>>, vector<1x32x128xbf16>
    %417 = vector.shape_cast %416 : vector<1x32x128xbf16> to vector<32x128xbf16>
    %cst_401 = arith.constant dense<0.000000e+00> : vector<4x128xf32>
    %418 = tpu.matmul %415, %417, %cst_401 {dimension_numbers = #tpu.dot_dimension_numbers<[1], [0], [0], [1], [0, 0, 1, 1], [], []>} : vector<4x32xbf16>, vector<32x128xbf16>, vector<4x128xf32> -> vector<4x128xf32>
    %419 = arith.addf %414, %418 : vector<4x128xf32>
    %c68_402 = arith.constant 68 : index
    %c0_403 = arith.constant 0 : index
    %420 = vector.load %arg14[%c68_402, %c0_403] : memref<144x32xbf16, #tpu.memory_space<vmem>>, vector<4x32xbf16>
    %c17 = arith.constant 17 : index
    %c0_404 = arith.constant 0 : index
    %c0_405 = arith.constant 0 : index
    %421 = vector.load %arg7[%c17, %c0_404, %c0_405] : memref<36x32x128xbf16, #tpu.memory_space<vmem>>, vector<1x32x128xbf16>
    %422 = vector.shape_cast %421 : vector<1x32x128xbf16> to vector<32x128xbf16>
    %cst_406 = arith.constant dense<0.000000e+00> : vector<4x128xf32>
    %423 = tpu.matmul %420, %422, %cst_406 {dimension_numbers = #tpu.dot_dimension_numbers<[1], [0], [0], [1], [0, 0, 1, 1], [], []>} : vector<4x32xbf16>, vector<32x128xbf16>, vector<4x128xf32> -> vector<4x128xf32>
    %424 = arith.addf %419, %423 : vector<4x128xf32>
    %c72_407 = arith.constant 72 : index
    %c0_408 = arith.constant 0 : index
    %425 = vector.load %arg14[%c72_407, %c0_408] : memref<144x32xbf16, #tpu.memory_space<vmem>>, vector<4x32xbf16>
    %c18 = arith.constant 18 : index
    %c0_409 = arith.constant 0 : index
    %c0_410 = arith.constant 0 : index
    %426 = vector.load %arg7[%c18, %c0_409, %c0_410] : memref<36x32x128xbf16, #tpu.memory_space<vmem>>, vector<1x32x128xbf16>
    %427 = vector.shape_cast %426 : vector<1x32x128xbf16> to vector<32x128xbf16>
    %cst_411 = arith.constant dense<0.000000e+00> : vector<4x128xf32>
    %428 = tpu.matmul %425, %427, %cst_411 {dimension_numbers = #tpu.dot_dimension_numbers<[1], [0], [0], [1], [0, 0, 1, 1], [], []>} : vector<4x32xbf16>, vector<32x128xbf16>, vector<4x128xf32> -> vector<4x128xf32>
    %429 = arith.addf %424, %428 : vector<4x128xf32>
    %c76 = arith.constant 76 : index
    %c0_412 = arith.constant 0 : index
    %430 = vector.load %arg14[%c76, %c0_412] : memref<144x32xbf16, #tpu.memory_space<vmem>>, vector<4x32xbf16>
    %c19 = arith.constant 19 : index
    %c0_413 = arith.constant 0 : index
    %c0_414 = arith.constant 0 : index
    %431 = vector.load %arg7[%c19, %c0_413, %c0_414] : memref<36x32x128xbf16, #tpu.memory_space<vmem>>, vector<1x32x128xbf16>
    %432 = vector.shape_cast %431 : vector<1x32x128xbf16> to vector<32x128xbf16>
    %cst_415 = arith.constant dense<0.000000e+00> : vector<4x128xf32>
    %433 = tpu.matmul %430, %432, %cst_415 {dimension_numbers = #tpu.dot_dimension_numbers<[1], [0], [0], [1], [0, 0, 1, 1], [], []>} : vector<4x32xbf16>, vector<32x128xbf16>, vector<4x128xf32> -> vector<4x128xf32>
    %434 = arith.addf %429, %433 : vector<4x128xf32>
    %c80 = arith.constant 80 : index
    %c0_416 = arith.constant 0 : index
    %435 = vector.load %arg14[%c80, %c0_416] : memref<144x32xbf16, #tpu.memory_space<vmem>>, vector<4x32xbf16>
    %c20_417 = arith.constant 20 : index
    %c0_418 = arith.constant 0 : index
    %c0_419 = arith.constant 0 : index
    %436 = vector.load %arg7[%c20_417, %c0_418, %c0_419] : memref<36x32x128xbf16, #tpu.memory_space<vmem>>, vector<1x32x128xbf16>
    %437 = vector.shape_cast %436 : vector<1x32x128xbf16> to vector<32x128xbf16>
    %cst_420 = arith.constant dense<0.000000e+00> : vector<4x128xf32>
    %438 = tpu.matmul %435, %437, %cst_420 {dimension_numbers = #tpu.dot_dimension_numbers<[1], [0], [0], [1], [0, 0, 1, 1], [], []>} : vector<4x32xbf16>, vector<32x128xbf16>, vector<4x128xf32> -> vector<4x128xf32>
    %439 = arith.addf %434, %438 : vector<4x128xf32>
    %c84 = arith.constant 84 : index
    %c0_421 = arith.constant 0 : index
    %440 = vector.load %arg14[%c84, %c0_421] : memref<144x32xbf16, #tpu.memory_space<vmem>>, vector<4x32xbf16>
    %c21 = arith.constant 21 : index
    %c0_422 = arith.constant 0 : index
    %c0_423 = arith.constant 0 : index
    %441 = vector.load %arg7[%c21, %c0_422, %c0_423] : memref<36x32x128xbf16, #tpu.memory_space<vmem>>, vector<1x32x128xbf16>
    %442 = vector.shape_cast %441 : vector<1x32x128xbf16> to vector<32x128xbf16>
    %cst_424 = arith.constant dense<0.000000e+00> : vector<4x128xf32>
    %443 = tpu.matmul %440, %442, %cst_424 {dimension_numbers = #tpu.dot_dimension_numbers<[1], [0], [0], [1], [0, 0, 1, 1], [], []>} : vector<4x32xbf16>, vector<32x128xbf16>, vector<4x128xf32> -> vector<4x128xf32>
    %444 = arith.addf %439, %443 : vector<4x128xf32>
    %c88 = arith.constant 88 : index
    %c0_425 = arith.constant 0 : index
    %445 = vector.load %arg14[%c88, %c0_425] : memref<144x32xbf16, #tpu.memory_space<vmem>>, vector<4x32xbf16>
    %c22 = arith.constant 22 : index
    %c0_426 = arith.constant 0 : index
    %c0_427 = arith.constant 0 : index
    %446 = vector.load %arg7[%c22, %c0_426, %c0_427] : memref<36x32x128xbf16, #tpu.memory_space<vmem>>, vector<1x32x128xbf16>
    %447 = vector.shape_cast %446 : vector<1x32x128xbf16> to vector<32x128xbf16>
    %cst_428 = arith.constant dense<0.000000e+00> : vector<4x128xf32>
    %448 = tpu.matmul %445, %447, %cst_428 {dimension_numbers = #tpu.dot_dimension_numbers<[1], [0], [0], [1], [0, 0, 1, 1], [], []>} : vector<4x32xbf16>, vector<32x128xbf16>, vector<4x128xf32> -> vector<4x128xf32>
    %449 = arith.addf %444, %448 : vector<4x128xf32>
    %c92 = arith.constant 92 : index
    %c0_429 = arith.constant 0 : index
    %450 = vector.load %arg14[%c92, %c0_429] : memref<144x32xbf16, #tpu.memory_space<vmem>>, vector<4x32xbf16>
    %c23 = arith.constant 23 : index
    %c0_430 = arith.constant 0 : index
    %c0_431 = arith.constant 0 : index
    %451 = vector.load %arg7[%c23, %c0_430, %c0_431] : memref<36x32x128xbf16, #tpu.memory_space<vmem>>, vector<1x32x128xbf16>
    %452 = vector.shape_cast %451 : vector<1x32x128xbf16> to vector<32x128xbf16>
    %cst_432 = arith.constant dense<0.000000e+00> : vector<4x128xf32>
    %453 = tpu.matmul %450, %452, %cst_432 {dimension_numbers = #tpu.dot_dimension_numbers<[1], [0], [0], [1], [0, 0, 1, 1], [], []>} : vector<4x32xbf16>, vector<32x128xbf16>, vector<4x128xf32> -> vector<4x128xf32>
    %454 = arith.addf %449, %453 : vector<4x128xf32>
    %c96_433 = arith.constant 96 : index
    %c0_434 = arith.constant 0 : index
    %455 = vector.load %arg14[%c96_433, %c0_434] : memref<144x32xbf16, #tpu.memory_space<vmem>>, vector<4x32xbf16>
    %c24_435 = arith.constant 24 : index
    %c0_436 = arith.constant 0 : index
    %c0_437 = arith.constant 0 : index
    %456 = vector.load %arg7[%c24_435, %c0_436, %c0_437] : memref<36x32x128xbf16, #tpu.memory_space<vmem>>, vector<1x32x128xbf16>
    %457 = vector.shape_cast %456 : vector<1x32x128xbf16> to vector<32x128xbf16>
    %cst_438 = arith.constant dense<0.000000e+00> : vector<4x128xf32>
    %458 = tpu.matmul %455, %457, %cst_438 {dimension_numbers = #tpu.dot_dimension_numbers<[1], [0], [0], [1], [0, 0, 1, 1], [], []>} : vector<4x32xbf16>, vector<32x128xbf16>, vector<4x128xf32> -> vector<4x128xf32>
    %459 = arith.addf %454, %458 : vector<4x128xf32>
    %c100_439 = arith.constant 100 : index
    %c0_440 = arith.constant 0 : index
    %460 = vector.load %arg14[%c100_439, %c0_440] : memref<144x32xbf16, #tpu.memory_space<vmem>>, vector<4x32xbf16>
    %c25 = arith.constant 25 : index
    %c0_441 = arith.constant 0 : index
    %c0_442 = arith.constant 0 : index
    %461 = vector.load %arg7[%c25, %c0_441, %c0_442] : memref<36x32x128xbf16, #tpu.memory_space<vmem>>, vector<1x32x128xbf16>
    %462 = vector.shape_cast %461 : vector<1x32x128xbf16> to vector<32x128xbf16>
    %cst_443 = arith.constant dense<0.000000e+00> : vector<4x128xf32>
    %463 = tpu.matmul %460, %462, %cst_443 {dimension_numbers = #tpu.dot_dimension_numbers<[1], [0], [0], [1], [0, 0, 1, 1], [], []>} : vector<4x32xbf16>, vector<32x128xbf16>, vector<4x128xf32> -> vector<4x128xf32>
    %464 = arith.addf %459, %463 : vector<4x128xf32>
    %c104 = arith.constant 104 : index
    %c0_444 = arith.constant 0 : index
    %465 = vector.load %arg14[%c104, %c0_444] : memref<144x32xbf16, #tpu.memory_space<vmem>>, vector<4x32xbf16>
    %c26 = arith.constant 26 : index
    %c0_445 = arith.constant 0 : index
    %c0_446 = arith.constant 0 : index
    %466 = vector.load %arg7[%c26, %c0_445, %c0_446] : memref<36x32x128xbf16, #tpu.memory_space<vmem>>, vector<1x32x128xbf16>
    %467 = vector.shape_cast %466 : vector<1x32x128xbf16> to vector<32x128xbf16>
    %cst_447 = arith.constant dense<0.000000e+00> : vector<4x128xf32>
    %468 = tpu.matmul %465, %467, %cst_447 {dimension_numbers = #tpu.dot_dimension_numbers<[1], [0], [0], [1], [0, 0, 1, 1], [], []>} : vector<4x32xbf16>, vector<32x128xbf16>, vector<4x128xf32> -> vector<4x128xf32>
    %469 = arith.addf %464, %468 : vector<4x128xf32>
    %c108 = arith.constant 108 : index
    %c0_448 = arith.constant 0 : index
    %470 = vector.load %arg14[%c108, %c0_448] : memref<144x32xbf16, #tpu.memory_space<vmem>>, vector<4x32xbf16>
    %c27 = arith.constant 27 : index
    %c0_449 = arith.constant 0 : index
    %c0_450 = arith.constant 0 : index
    %471 = vector.load %arg7[%c27, %c0_449, %c0_450] : memref<36x32x128xbf16, #tpu.memory_space<vmem>>, vector<1x32x128xbf16>
    %472 = vector.shape_cast %471 : vector<1x32x128xbf16> to vector<32x128xbf16>
    %cst_451 = arith.constant dense<0.000000e+00> : vector<4x128xf32>
    %473 = tpu.matmul %470, %472, %cst_451 {dimension_numbers = #tpu.dot_dimension_numbers<[1], [0], [0], [1], [0, 0, 1, 1], [], []>} : vector<4x32xbf16>, vector<32x128xbf16>, vector<4x128xf32> -> vector<4x128xf32>
    %474 = arith.addf %469, %473 : vector<4x128xf32>
    %c112 = arith.constant 112 : index
    %c0_452 = arith.constant 0 : index
    %475 = vector.load %arg14[%c112, %c0_452] : memref<144x32xbf16, #tpu.memory_space<vmem>>, vector<4x32xbf16>
    %c28_453 = arith.constant 28 : index
    %c0_454 = arith.constant 0 : index
    %c0_455 = arith.constant 0 : index
    %476 = vector.load %arg7[%c28_453, %c0_454, %c0_455] : memref<36x32x128xbf16, #tpu.memory_space<vmem>>, vector<1x32x128xbf16>
    %477 = vector.shape_cast %476 : vector<1x32x128xbf16> to vector<32x128xbf16>
    %cst_456 = arith.constant dense<0.000000e+00> : vector<4x128xf32>
    %478 = tpu.matmul %475, %477, %cst_456 {dimension_numbers = #tpu.dot_dimension_numbers<[1], [0], [0], [1], [0, 0, 1, 1], [], []>} : vector<4x32xbf16>, vector<32x128xbf16>, vector<4x128xf32> -> vector<4x128xf32>
    %479 = arith.addf %474, %478 : vector<4x128xf32>
    %c116 = arith.constant 116 : index
    %c0_457 = arith.constant 0 : index
    %480 = vector.load %arg14[%c116, %c0_457] : memref<144x32xbf16, #tpu.memory_space<vmem>>, vector<4x32xbf16>
    %c29 = arith.constant 29 : index
    %c0_458 = arith.constant 0 : index
    %c0_459 = arith.constant 0 : index
    %481 = vector.load %arg7[%c29, %c0_458, %c0_459] : memref<36x32x128xbf16, #tpu.memory_space<vmem>>, vector<1x32x128xbf16>
    %482 = vector.shape_cast %481 : vector<1x32x128xbf16> to vector<32x128xbf16>
    %cst_460 = arith.constant dense<0.000000e+00> : vector<4x128xf32>
    %483 = tpu.matmul %480, %482, %cst_460 {dimension_numbers = #tpu.dot_dimension_numbers<[1], [0], [0], [1], [0, 0, 1, 1], [], []>} : vector<4x32xbf16>, vector<32x128xbf16>, vector<4x128xf32> -> vector<4x128xf32>
    %484 = arith.addf %479, %483 : vector<4x128xf32>
    %c120_461 = arith.constant 120 : index
    %c0_462 = arith.constant 0 : index
    %485 = vector.load %arg14[%c120_461, %c0_462] : memref<144x32xbf16, #tpu.memory_space<vmem>>, vector<4x32xbf16>
    %c30 = arith.constant 30 : index
    %c0_463 = arith.constant 0 : index
    %c0_464 = arith.constant 0 : index
    %486 = vector.load %arg7[%c30, %c0_463, %c0_464] : memref<36x32x128xbf16, #tpu.memory_space<vmem>>, vector<1x32x128xbf16>
    %487 = vector.shape_cast %486 : vector<1x32x128xbf16> to vector<32x128xbf16>
    %cst_465 = arith.constant dense<0.000000e+00> : vector<4x128xf32>
    %488 = tpu.matmul %485, %487, %cst_465 {dimension_numbers = #tpu.dot_dimension_numbers<[1], [0], [0], [1], [0, 0, 1, 1], [], []>} : vector<4x32xbf16>, vector<32x128xbf16>, vector<4x128xf32> -> vector<4x128xf32>
    %489 = arith.addf %484, %488 : vector<4x128xf32>
    %c124 = arith.constant 124 : index
    %c0_466 = arith.constant 0 : index
    %490 = vector.load %arg14[%c124, %c0_466] : memref<144x32xbf16, #tpu.memory_space<vmem>>, vector<4x32xbf16>
    %c31 = arith.constant 31 : index
    %c0_467 = arith.constant 0 : index
    %c0_468 = arith.constant 0 : index
    %491 = vector.load %arg7[%c31, %c0_467, %c0_468] : memref<36x32x128xbf16, #tpu.memory_space<vmem>>, vector<1x32x128xbf16>
    %492 = vector.shape_cast %491 : vector<1x32x128xbf16> to vector<32x128xbf16>
    %cst_469 = arith.constant dense<0.000000e+00> : vector<4x128xf32>
    %493 = tpu.matmul %490, %492, %cst_469 {dimension_numbers = #tpu.dot_dimension_numbers<[1], [0], [0], [1], [0, 0, 1, 1], [], []>} : vector<4x32xbf16>, vector<32x128xbf16>, vector<4x128xf32> -> vector<4x128xf32>
    %494 = arith.addf %489, %493 : vector<4x128xf32>
    %c128_470 = arith.constant 128 : index
    %c0_471 = arith.constant 0 : index
    %495 = vector.load %arg14[%c128_470, %c0_471] : memref<144x32xbf16, #tpu.memory_space<vmem>>, vector<4x32xbf16>
    %c32_472 = arith.constant 32 : index
    %c0_473 = arith.constant 0 : index
    %c0_474 = arith.constant 0 : index
    %496 = vector.load %arg7[%c32_472, %c0_473, %c0_474] : memref<36x32x128xbf16, #tpu.memory_space<vmem>>, vector<1x32x128xbf16>
    %497 = vector.shape_cast %496 : vector<1x32x128xbf16> to vector<32x128xbf16>
    %cst_475 = arith.constant dense<0.000000e+00> : vector<4x128xf32>
    %498 = tpu.matmul %495, %497, %cst_475 {dimension_numbers = #tpu.dot_dimension_numbers<[1], [0], [0], [1], [0, 0, 1, 1], [], []>} : vector<4x32xbf16>, vector<32x128xbf16>, vector<4x128xf32> -> vector<4x128xf32>
    %499 = arith.addf %494, %498 : vector<4x128xf32>
    %c132_476 = arith.constant 132 : index
    %c0_477 = arith.constant 0 : index
    %500 = vector.load %arg14[%c132_476, %c0_477] : memref<144x32xbf16, #tpu.memory_space<vmem>>, vector<4x32xbf16>
    %c33 = arith.constant 33 : index
    %c0_478 = arith.constant 0 : index
    %c0_479 = arith.constant 0 : index
    %501 = vector.load %arg7[%c33, %c0_478, %c0_479] : memref<36x32x128xbf16, #tpu.memory_space<vmem>>, vector<1x32x128xbf16>
    %502 = vector.shape_cast %501 : vector<1x32x128xbf16> to vector<32x128xbf16>
    %cst_480 = arith.constant dense<0.000000e+00> : vector<4x128xf32>
    %503 = tpu.matmul %500, %502, %cst_480 {dimension_numbers = #tpu.dot_dimension_numbers<[1], [0], [0], [1], [0, 0, 1, 1], [], []>} : vector<4x32xbf16>, vector<32x128xbf16>, vector<4x128xf32> -> vector<4x128xf32>
    %504 = arith.addf %499, %503 : vector<4x128xf32>
    %c136 = arith.constant 136 : index
    %c0_481 = arith.constant 0 : index
    %505 = vector.load %arg14[%c136, %c0_481] : memref<144x32xbf16, #tpu.memory_space<vmem>>, vector<4x32xbf16>
    %c34 = arith.constant 34 : index
    %c0_482 = arith.constant 0 : index
    %c0_483 = arith.constant 0 : index
    %506 = vector.load %arg7[%c34, %c0_482, %c0_483] : memref<36x32x128xbf16, #tpu.memory_space<vmem>>, vector<1x32x128xbf16>
    %507 = vector.shape_cast %506 : vector<1x32x128xbf16> to vector<32x128xbf16>
    %cst_484 = arith.constant dense<0.000000e+00> : vector<4x128xf32>
    %508 = tpu.matmul %505, %507, %cst_484 {dimension_numbers = #tpu.dot_dimension_numbers<[1], [0], [0], [1], [0, 0, 1, 1], [], []>} : vector<4x32xbf16>, vector<32x128xbf16>, vector<4x128xf32> -> vector<4x128xf32>
    %509 = arith.addf %504, %508 : vector<4x128xf32>
    %c140 = arith.constant 140 : index
    %c0_485 = arith.constant 0 : index
    %510 = vector.load %arg14[%c140, %c0_485] : memref<144x32xbf16, #tpu.memory_space<vmem>>, vector<4x32xbf16>
    %c35 = arith.constant 35 : index
    %c0_486 = arith.constant 0 : index
    %c0_487 = arith.constant 0 : index
    %511 = vector.load %arg7[%c35, %c0_486, %c0_487] : memref<36x32x128xbf16, #tpu.memory_space<vmem>>, vector<1x32x128xbf16>
    %512 = vector.shape_cast %511 : vector<1x32x128xbf16> to vector<32x128xbf16>
    %cst_488 = arith.constant dense<0.000000e+00> : vector<4x128xf32>
    %513 = tpu.matmul %510, %512, %cst_488 {dimension_numbers = #tpu.dot_dimension_numbers<[1], [0], [0], [1], [0, 0, 1, 1], [], []>} : vector<4x32xbf16>, vector<32x128xbf16>, vector<4x128xf32> -> vector<4x128xf32>
    %514 = arith.addf %509, %513 : vector<4x128xf32>
    %c0_489 = arith.constant 0 : index
    %c0_490 = arith.constant 0 : index
    %515 = vector.load %arg8[%c0_489, %c0_490] : memref<1x128xf32, #tpu.memory_space<vmem>>, vector<1x128xf32>
    %516 = vector.broadcast %515 : vector<1x128xf32> to vector<4x128xf32>
    %517 = arith.addf %514, %516 : vector<4x128xf32>
    %cst_491 = arith.constant 0.636619746 : f32
    %518 = math.sqrt %cst_491 : f32
    %cst_492 = arith.constant 5.000000e-01 : f32
    %519 = vector.broadcast %cst_492 : f32 to vector<4x128xf32>
    %520 = arith.mulf %519, %517 : vector<4x128xf32>
    %cst_493 = arith.constant 4.471500e-02 : f32
    %521 = vector.broadcast %cst_493 : f32 to vector<4x128xf32>
    %522 = arith.mulf %521, %517 : vector<4x128xf32>
    %523 = arith.mulf %522, %517 : vector<4x128xf32>
    %524 = arith.mulf %523, %517 : vector<4x128xf32>
    %525 = arith.addf %517, %524 : vector<4x128xf32>
    %526 = vector.broadcast %518 : f32 to vector<4x128xf32>
    %527 = arith.mulf %526, %525 : vector<4x128xf32>
    %528 = math.tanh %527 : vector<4x128xf32>
    %cst_494 = arith.constant 1.000000e+00 : f32
    %529 = vector.broadcast %cst_494 : f32 to vector<4x128xf32>
    %530 = arith.addf %529, %528 : vector<4x128xf32>
    %531 = arith.mulf %520, %530 : vector<4x128xf32>
    %532 = arith.truncf %531 : vector<4x128xf32> to vector<4x128xbf16>
    %c0_495 = arith.constant 0 : index
    %c0_496 = arith.constant 0 : index
    %533 = vector.load %arg9[%c0_495, %c0_496] : memref<128x8xbf16, #tpu.memory_space<vmem>>, vector<128x8xbf16>
    %cst_497 = arith.constant dense<0.000000e+00> : vector<4x8xf32>
    %534 = tpu.matmul %532, %533, %cst_497 {dimension_numbers = #tpu.dot_dimension_numbers<[1], [0], [0], [1], [0, 0, 1, 1], [], []>} : vector<4x128xbf16>, vector<128x8xbf16>, vector<4x8xf32> -> vector<4x8xf32>
    %c0_498 = arith.constant 0 : index
    %c0_499 = arith.constant 0 : index
    %535 = vector.load %arg10[%c0_498, %c0_499] : memref<1x8xf32, #tpu.memory_space<vmem>>, vector<1x8xf32>
    %536 = vector.broadcast %535 : vector<1x8xf32> to vector<4x8xf32>
    %537 = arith.addf %534, %536 : vector<4x8xf32>
    %c0_500 = arith.constant 0 : index
    %c0_501 = arith.constant 0 : index
    %538 = vector.load %arg11[%c0_500, %c0_501] : memref<4x8xf32, #tpu.memory_space<vmem>>, vector<4x8xf32>
    tpu.vector_store %arg11[%c0_500, %c0_501], %537 {strides = array<i32>} : memref<4x8xf32, #tpu.memory_space<vmem>>, vector<4x8xf32>,
    return
  }
}

</mosaic_0001>

<llo_original>
// kernel: mlp_forward.1
$region0: #{mlp_forward.1}
  #allocation0 [shape = 'u32[]', space=smem, size = 0x4, offset = 0x4, fixed_abs, tag = 'smem constant byte address 0x4 - core index']
  #allocation1 [shape = 'u32[144,128]{1,0:T(1,128)}', space=vmem, size = 0x12000, scoped, tag = 'internal scratch']
  #allocation2 [shape = 'bf16[896,16]{1,0:T(16,128)(2,1)}', space=vmem, size = 0x38000, scoped, tag = 'scratch operand']
  #allocation3 [shape = 'bf16[9,144,16]{2,1,0:T(16,128)(2,1)}', space=vmem, size = 0x51000, scoped, tag = 'scratch operand']
  #allocation4 [shape = 'bf16[144,32]{1,0:T(16,128)(2,1)}', space=vmem, size = 0x9000, scoped, tag = 'scratch operand']
  %s0 = inlined_call_operand.vmem [shape: bf16[896,27], index: 0, kind: input, shape index: {}]
  %s1 = inlined_call_operand.vmem [shape: bf16[27,16], index: 1, kind: input, shape index: {}]
  %s2 = inlined_call_operand.vmem [shape: f32[1,16], index: 2, kind: input, shape index: {}]
  %s3 = inlined_call_operand.vmem [shape: f32[1,16], index: 3, kind: input, shape index: {}]
  %s4 = inlined_call_operand.vmem [shape: bf16[9,16,32], index: 4, kind: input, shape index: {}]
  %s5 = inlined_call_operand.vmem [shape: f32[1,32], index: 5, kind: input, shape index: {}]
  %s6 = inlined_call_operand.vmem [shape: f32[1,32], index: 6, kind: input, shape index: {}]
  %s7 = inlined_call_operand.vmem [shape: bf16[36,32,128], index: 7, kind: input, shape index: {}]
  %s8 = inlined_call_operand.vmem [shape: f32[1,128], index: 8, kind: input, shape index: {}]
  %s9 = inlined_call_operand.vmem [shape: bf16[128,8], index: 9, kind: input, shape index: {}]
  %s10 = inlined_call_operand.vmem [shape: f32[1,8], index: 10, kind: input, shape index: {}]
  %s11 = inlined_call_operand.hbm [shape: f32[4,8], index: 11, kind: output, shape index: {}]
  %s12 = sld [smem:[#allocation0]]
  $region54: #{mlp_forward.1} parent=0
    _
  %s14 = ssub.s32 1, %s12
  %s15 = scalar_select 0, %s14, %s12
  $region1: #{mlp_forward.1} parent=0
    #allocation5 [shape = 'u8[2048]{0}', space=vmem, size = 0x800, scoped, tag = 'output window, operand 0, single buffered']
    #allocation6 [shape = 's32[1]{0}', space=sflag, size = 0x4, scoped, tag = 'scoped memory for mlp_forward.1']
    %16 = vsyncpa [#allocation6], 0
    // Predicated region
    $region2: #{mlp_forward.1} parent=1 // pred_check
      _
    $region3: #{mlp_forward.1} parent=1 // pred_check_branch
      %18 = sbr.rel (0) target = $region5
    $region4: #{mlp_forward.1} parent=1 // pred_region
      _
    $region5: #{mlp_forward.1} parent=1 // pred_fallthru
      _
    // Predicated region
    $region6: #{mlp_forward.1} parent=1 // pred_check
      _
    $region7: #{mlp_forward.1} parent=1 // pred_check_branch
      %20 = sbr.rel (0) target = $region9
    $region8: #{mlp_forward.1} parent=1 // pred_region
      _
    $region9: #{mlp_forward.1} parent=1 // pred_fallthru
      _
    // Predicated region
    $region10: #{mlp_forward.1} parent=1 // pred_check
      _
    $region11: #{mlp_forward.1} parent=1 // pred_check_branch
      %22 = sbr.rel (0) target = $region13
    $region12: #{mlp_forward.1} parent=1 // pred_region
      _
    $region13: #{mlp_forward.1} parent=1 // pred_fallthru
      _
    // Predicated region
    $region14: #{mlp_forward.1} parent=1 // pred_check
      _
    $region15: #{mlp_forward.1} parent=1 // pred_check_branch
      %24 = sbr.rel (0) target = $region17
    $region16: #{mlp_forward.1} parent=1 // pred_region
      _
    $region17: #{mlp_forward.1} parent=1 // pred_fallthru
      _
    // Predicated region
    $region18: #{mlp_forward.1} parent=1 // pred_check
      _
    $region19: #{mlp_forward.1} parent=1 // pred_check_branch
      %26 = sbr.rel (0) target = $region21
    $region20: #{mlp_forward.1} parent=1 // pred_region
      _
    $region21: #{mlp_forward.1} parent=1 // pred_fallthru
      _
    // Predicated region
    $region22: #{mlp_forward.1} parent=1 // pred_check
      _
    $region23: #{mlp_forward.1} parent=1 // pred_check_branch
      %28 = sbr.rel (0) target = $region25
    $region24: #{mlp_forward.1} parent=1 // pred_region
      _
    $region25: #{mlp_forward.1} parent=1 // pred_fallthru
      _
    // Predicated region
    $region26: #{mlp_forward.1} parent=1 // pred_check
      _
    $region27: #{mlp_forward.1} parent=1 // pred_check_branch
      %30 = sbr.rel (0) target = $region29
    $region28: #{mlp_forward.1} parent=1 // pred_region
      _
    $region29: #{mlp_forward.1} parent=1 // pred_fallthru
      _
    // Predicated region
    $region30: #{mlp_forward.1} parent=1 // pred_check
      _
    $region31: #{mlp_forward.1} parent=1 // pred_check_branch
      %32 = sbr.rel (0) target = $region33
    $region32: #{mlp_forward.1} parent=1 // pred_region
      _
    $region33: #{mlp_forward.1} parent=1 // pred_fallthru
      _
    // Predicated region
    $region34: #{mlp_forward.1} parent=1 // pred_check
      _
    $region35: #{mlp_forward.1} parent=1 // pred_check_branch
      %34 = sbr.rel (0) target = $region37
    $region36: #{mlp_forward.1} parent=1 // pred_region
      _
    $region37: #{mlp_forward.1} parent=1 // pred_fallthru
      _
    // Predicated region
    $region38: #{mlp_forward.1} parent=1 // pred_check
      _
    $region39: #{mlp_forward.1} parent=1 // pred_check_branch
      %36 = sbr.rel (0) target = $region41
    $region40: #{mlp_forward.1} parent=1 // pred_region
      _
    $region41: #{mlp_forward.1} parent=1 // pred_fallthru
      _
    // Predicated region
    $region42: #{mlp_forward.1} parent=1 // pred_check
      _
    $region43: #{mlp_forward.1} parent=1 // pred_check_branch
      %38 = sbr.rel (0) target = $region45
    $region44: #{mlp_forward.1} parent=1 // pred_region
      _
    $region45: #{mlp_forward.1} parent=1 // pred_fallthru
      _
    %v40 = vld [vmem:[%s0] sm:$0xf]
    %v41 = vld [vmem:[%s0 + $0x4] sm:$0xf]
    %v42 = vld [vmem:[%s0 + $0x8] sm:$0xf]
    %v43 = vld [vmem:[%s0 + $0xc] sm:$0xf]
    %v44 = vld [vmem:[%s0 + $0x10] sm:$0xf]
    %v45 = vld [vmem:[%s0 + $0x14] sm:$0xf]
    %v46 = vld [vmem:[%s0 + $0x18] sm:$0xf]
    %v47 = vld [vmem:[%s0 + $0x1c] sm:$0xf]
    %v48 = vld [vmem:[%s0 + $0x20] sm:$0xf]
    %v49 = vld [vmem:[%s0 + $0x24] sm:$0xf]
    %v50 = vld [vmem:[%s0 + $0x28] sm:$0xf]
    %v51 = vld [vmem:[%s0 + $0x2c] sm:$0xf]
    %v52 = vld [vmem:[%s0 + $0x30] sm:$0xf]
    %v53 = vld [vmem:[%s0 + $0x34] sm:$0xf]
    %v54 = vld [vmem:[%s0 + $0x38] sm:$0xf]
    %v55 = vld [vmem:[%s0 + $0x3c] sm:$0xf]
    %v56 = vld [vmem:[%s0 + $0x40] sm:$0xf]
    %v57 = vld [vmem:[%s0 + $0x44] sm:$0xf]
    %v58 = vld [vmem:[%s0 + $0x48] sm:$0xf]
    %v59 = vld [vmem:[%s0 + $0x4c] sm:$0xf]
    %v60 = vld [vmem:[%s0 + $0x50] sm:$0xf]
    %v61 = vld [vmem:[%s0 + $0x54] sm:$0xf]
    %v62 = vld [vmem:[%s0 + $0x58] sm:$0xf]
    %v63 = vld [vmem:[%s0 + $0x5c] sm:$0xf]
    %v64 = vld [vmem:[%s0 + $0x60] sm:$0xf]
    %v65 = vld [vmem:[%s0 + $0x64] sm:$0xf]
    %v66 = vld [vmem:[%s0 + $0x68] sm:$0xf]
    %v67 = vld [vmem:[%s0 + $0x6c] sm:$0xf]
    %v68 = vld [vmem:[%s0 + $0x70] sm:$0xf]
    %v69 = vld [vmem:[%s0 + $0x74] sm:$0xf]
    %v70 = vld [vmem:[%s0 + $0x78] sm:$0xf]
    %v71 = vld [vmem:[%s0 + $0x7c] sm:$0xf]
    %v72 = vld [vmem:[%s0 + $0x80] sm:$0xf]
    %v73 = vld [vmem:[%s0 + $0x84] sm:$0xf]
    %v74 = vld [vmem:[%s0 + $0x88] sm:$0xf]
    %v75 = vld [vmem:[%s0 + $0x8c] sm:$0xf]
    %v76 = vld [vmem:[%s0 + $0x90] sm:$0xf]
    %v77 = vld [vmem:[%s0 + $0x94] sm:$0xf]
    %v78 = vld [vmem:[%s0 + $0x98] sm:$0xf]
    %v79 = vld [vmem:[%s0 + $0x9c] sm:$0xf]
    %v80 = vld [vmem:[%s0 + $0xa0] sm:$0xf]
    %v81 = vld [vmem:[%s0 + $0xa4] sm:$0xf]
    %v82 = vld [vmem:[%s0 + $0xa8] sm:$0xf]
    %v83 = vld [vmem:[%s0 + $0xac] sm:$0xf]
    %v84 = vld [vmem:[%s0 + $0xb0] sm:$0xf]
    %v85 = vld [vmem:[%s0 + $0xb4] sm:$0xf]
    %v86 = vld [vmem:[%s0 + $0xb8] sm:$0xf]
    %v87 = vld [vmem:[%s0 + $0xbc] sm:$0xf]
    %v88 = vld [vmem:[%s0 + $0xc0] sm:$0xf]
    %v89 = vld [vmem:[%s0 + $0xc4] sm:$0xf]
    %v90 = vld [vmem:[%s0 + $0xc8] sm:$0xf]
    %v91 = vld [vmem:[%s0 + $0xcc] sm:$0xf]
    %v92 = vld [vmem:[%s0 + $0xd0] sm:$0xf]
    %v93 = vld [vmem:[%s0 + $0xd4] sm:$0xf]
    %v94 = vld [vmem:[%s0 + $0xd8] sm:$0xf]
    %v95 = vld [vmem:[%s0 + $0xdc] sm:$0xf]
    %v96 = vld [vmem:[%s0 + $0xe0] sm:$0xf]
    %v97 = vld [vmem:[%s0 + $0xe4] sm:$0xf]
    %v98 = vld [vmem:[%s0 + $0xe8] sm:$0xf]
    %v99 = vld [vmem:[%s0 + $0xec] sm:$0xf]
    %v100 = vld [vmem:[%s0 + $0xf0] sm:$0xf]
    %v101 = vld [vmem:[%s0 + $0xf4] sm:$0xf]
    %v102 = vld [vmem:[%s0 + $0xf8] sm:$0xf]
    %v103 = vld [vmem:[%s0 + $0xfc] sm:$0xf]
    %v104 = vld [vmem:[%s0 + $0x100] sm:$0xf]
    %v105 = vld [vmem:[%s0 + $0x104] sm:$0xf]
    %v106 = vld [vmem:[%s0 + $0x108] sm:$0xf]
    %v107 = vld [vmem:[%s0 + $0x10c] sm:$0xf]
    %v108 = vld [vmem:[%s0 + $0x110] sm:$0xf]
    %v109 = vld [vmem:[%s0 + $0x114] sm:$0xf]
    %v110 = vld [vmem:[%s0 + $0x118] sm:$0xf]
    %v111 = vld [vmem:[%s0 + $0x11c] sm:$0xf]
    %v112 = vld [vmem:[%s0 + $0x120] sm:$0xf]
    %v113 = vld [vmem:[%s0 + $0x124] sm:$0xf]
    %v114 = vld [vmem:[%s0 + $0x128] sm:$0xf]
    %v115 = vld [vmem:[%s0 + $0x12c] sm:$0xf]
    %v116 = vld [vmem:[%s0 + $0x130] sm:$0xf]
    %v117 = vld [vmem:[%s0 + $0x134] sm:$0xf]
    %v118 = vld [vmem:[%s0 + $0x138] sm:$0xf]
    %v119 = vld [vmem:[%s0 + $0x13c] sm:$0xf]
    %v120 = vld [vmem:[%s0 + $0x140] sm:$0xf]
    %v121 = vld [vmem:[%s0 + $0x144] sm:$0xf]
    %v122 = vld [vmem:[%s0 + $0x148] sm:$0xf]
    %v123 = vld [vmem:[%s0 + $0x14c] sm:$0xf]
    %v124 = vld [vmem:[%s0 + $0x150] sm:$0xf]
    %v125 = vld [vmem:[%s0 + $0x154] sm:$0xf]
    %v126 = vld [vmem:[%s0 + $0x158] sm:$0xf]
    %v127 = vld [vmem:[%s0 + $0x15c] sm:$0xf]
    %v128 = vld [vmem:[%s0 + $0x160] sm:$0xf]
    %v129 = vld [vmem:[%s0 + $0x164] sm:$0xf]
    %v130 = vld [vmem:[%s0 + $0x168] sm:$0xf]
    %v131 = vld [vmem:[%s0 + $0x16c] sm:$0xf]
    %v132 = vld [vmem:[%s0 + $0x170] sm:$0xf]
    %v133 = vld [vmem:[%s0 + $0x174] sm:$0xf]
    %v134 = vld [vmem:[%s0 + $0x178] sm:$0xf]
    %v135 = vld [vmem:[%s0 + $0x17c] sm:$0xf]
    %v136 = vld [vmem:[%s0 + $0x180] sm:$0xf]
    %v137 = vld [vmem:[%s0 + $0x184] sm:$0xf]
    %v138 = vld [vmem:[%s0 + $0x188] sm:$0xf]
    %v139 = vld [vmem:[%s0 + $0x18c] sm:$0xf]
    %v140 = vld [vmem:[%s0 + $0x190] sm:$0xf]
    %v141 = vld [vmem:[%s0 + $0x194] sm:$0xf]
    %v142 = vld [vmem:[%s0 + $0x198] sm:$0xf]
    %v143 = vld [vmem:[%s0 + $0x19c] sm:$0xf]
    %v144 = vld [vmem:[%s0 + $0x1a0] sm:$0xf]
    %v145 = vld [vmem:[%s0 + $0x1a4] sm:$0xf]
    %v146 = vld [vmem:[%s0 + $0x1a8] sm:$0xf]
    %v147 = vld [vmem:[%s0 + $0x1ac] sm:$0xf]
    %v148 = vld [vmem:[%s0 + $0x1b0] sm:$0xf]
    %v149 = vld [vmem:[%s0 + $0x1b4] sm:$0xf]
    %v150 = vld [vmem:[%s0 + $0x1b8] sm:$0xf]
    %v151 = vld [vmem:[%s0 + $0x1bc] sm:$0xf]
    %v152 = vld [vmem:[%s1] sm:$0xf]
    %v153 = vld [vmem:[%s1 + $0x4] sm:$0xf]
    %v154 = vld [vmem:[%s1 + $0x8] sm:$0xf]
    %v155 = vld [vmem:[%s1 + $0xc] sm:$0x3]
    %v268 = vunpack.c.l.b16 %v40
    %v269 = vunpack.c.l.b16 %v41
    %v270 = vunpack.c.l.b16 %v42
    %v271 = vunpack.c.l.b16 %v43
    %v272 = vunpack.c.l.b16 %v44
    %v273 = vunpack.c.l.b16 %v45
    %v274 = vunpack.c.l.b16 %v46
    %v275 = vunpack.c.l.b16 %v47
    %v276 = vunpack.c.l.b16 %v48
    %v277 = vunpack.c.l.b16 %v49
    %v278 = vunpack.c.l.b16 %v50
    %v279 = vunpack.c.l.b16 %v51
    %v280 = vunpack.c.l.b16 %v52
    %v281 = vunpack.c.l.b16 %v53
    %v282 = vunpack.c.l.b16 %v54
    %v283 = vunpack.c.l.b16 %v55
    %v284 = vunpack.c.l.b16 %v56
    %v285 = vunpack.c.l.b16 %v57
    %v286 = vunpack.c.l.b16 %v58
    %v287 = vunpack.c.l.b16 %v59
    %v288 = vunpack.c.l.b16 %v60
    %v289 = vunpack.c.l.b16 %v61
    %v290 = vunpack.c.l.b16 %v62
    %v291 = vunpack.c.l.b16 %v63
    %v292 = vunpack.c.l.b16 %v64
    %v293 = vunpack.c.l.b16 %v65
    %v294 = vunpack.c.l.b16 %v66
    %v295 = vunpack.c.l.b16 %v67
    %v296 = vunpack.c.l.b16 %v68
    %v297 = vunpack.c.l.b16 %v69
    %v298 = vunpack.c.l.b16 %v70
    %v299 = vunpack.c.l.b16 %v71
    %v300 = vunpack.c.l.b16 %v72
    %v301 = vunpack.c.l.b16 %v73
    %v302 = vunpack.c.l.b16 %v74
    %v303 = vunpack.c.l.b16 %v75
    %v304 = vunpack.c.l.b16 %v76
    %v305 = vunpack.c.l.b16 %v77
    %v306 = vunpack.c.l.b16 %v78
    %v307 = vunpack.c.l.b16 %v79
    %v308 = vunpack.c.l.b16 %v80
    %v309 = vunpack.c.l.b16 %v81
    %v310 = vunpack.c.l.b16 %v82
    %v311 = vunpack.c.l.b16 %v83
    %v312 = vunpack.c.l.b16 %v84
    %v313 = vunpack.c.l.b16 %v85
    %v314 = vunpack.c.l.b16 %v86
    %v315 = vunpack.c.l.b16 %v87
    %v316 = vunpack.c.l.b16 %v88
    %v317 = vunpack.c.l.b16 %v89
    %v318 = vunpack.c.l.b16 %v90
    %v319 = vunpack.c.l.b16 %v91
    %v320 = vunpack.c.l.b16 %v92
    %v321 = vunpack.c.l.b16 %v93
    %v322 = vunpack.c.l.b16 %v94
    %v323 = vunpack.c.l.b16 %v95
    %v324 = vunpack.c.l.b16 %v96
    %v325 = vunpack.c.l.b16 %v97
    %v326 = vunpack.c.l.b16 %v98
    %v327 = vunpack.c.l.b16 %v99
    %v328 = vunpack.c.l.b16 %v100
    %v329 = vunpack.c.l.b16 %v101
    %v330 = vunpack.c.l.b16 %v102
    %v331 = vunpack.c.l.b16 %v103
    %v332 = vunpack.c.l.b16 %v104
    %v333 = vunpack.c.l.b16 %v105
    %v334 = vunpack.c.l.b16 %v106
    %v335 = vunpack.c.l.b16 %v107
    %v336 = vunpack.c.l.b16 %v108
    %v337 = vunpack.c.l.b16 %v109
    %v338 = vunpack.c.l.b16 %v110
    %v339 = vunpack.c.l.b16 %v111
    %v340 = vunpack.c.l.b16 %v112
    %v341 = vunpack.c.l.b16 %v113
    %v342 = vunpack.c.l.b16 %v114
    %v343 = vunpack.c.l.b16 %v115
    %v344 = vunpack.c.l.b16 %v116
    %v345 = vunpack.c.l.b16 %v117
    %v346 = vunpack.c.l.b16 %v118
    %v347 = vunpack.c.l.b16 %v119
    %v348 = vunpack.c.l.b16 %v120
    %v349 = vunpack.c.l.b16 %v121
    %v350 = vunpack.c.l.b16 %v122
    %v351 = vunpack.c.l.b16 %v123
    %v352 = vunpack.c.l.b16 %v124
    %v353 = vunpack.c.l.b16 %v125
    %v354 = vunpack.c.l.b16 %v126
    %v355 = vunpack.c.l.b16 %v127
    %v356 = vunpack.c.l.b16 %v128
    %v357 = vunpack.c.l.b16 %v129
    %v358 = vunpack.c.l.b16 %v130
    %v359 = vunpack.c.l.b16 %v131
    %v360 = vunpack.c.l.b16 %v132
    %v361 = vunpack.c.l.b16 %v133
    %v362 = vunpack.c.l.b16 %v134
    %v363 = vunpack.c.l.b16 %v135
    %v364 = vunpack.c.l.b16 %v136
    %v365 = vunpack.c.l.b16 %v137
    %v366 = vunpack.c.l.b16 %v138
    %v367 = vunpack.c.l.b16 %v139
    %v368 = vunpack.c.l.b16 %v140
    %v369 = vunpack.c.l.b16 %v141
    %v370 = vunpack.c.l.b16 %v142
    %v371 = vunpack.c.l.b16 %v143
    %v372 = vunpack.c.l.b16 %v144
    %v373 = vunpack.c.l.b16 %v145
    %v374 = vunpack.c.l.b16 %v146
    %v375 = vunpack.c.l.b16 %v147
    %v376 = vunpack.c.l.b16 %v148
    %v377 = vunpack.c.l.b16 %v149
    %v378 = vunpack.c.l.b16 %v150
    %v379 = vunpack.c.l.b16 %v151
    %v380 = vpack.c.b16 %v269, %v268
    %v381 = vpack.c.b16 %v271, %v270
    %v382 = vpack.c.b16 %v273, %v272
    %v383 = vpack.c.b16 %v275, %v274
    %v384 = vpack.c.b16 %v277, %v276
    %v385 = vpack.c.b16 %v279, %v278
    %v386 = vpack.c.b16 %v281, %v280
    %v387 = vpack.c.b16 %v283, %v282
    %v388 = vpack.c.b16 %v285, %v284
    %v389 = vpack.c.b16 %v287, %v286
    %v390 = vpack.c.b16 %v289, %v288
    %v391 = vpack.c.b16 %v291, %v290
    %v392 = vpack.c.b16 %v293, %v292
    %v393 = vpack.c.b16 %v295, %v294
    %v394 = vpack.c.b16 %v297, %v296
    %v395 = vpack.c.b16 %v299, %v298
    %v396 = vpack.c.b16 %v301, %v300
    %v397 = vpack.c.b16 %v303, %v302
    %v398 = vpack.c.b16 %v305, %v304
    %v399 = vpack.c.b16 %v307, %v306
    %v400 = vpack.c.b16 %v309, %v308
    %v401 = vpack.c.b16 %v311, %v310
    %v402 = vpack.c.b16 %v313, %v312
    %v403 = vpack.c.b16 %v315, %v314
    %v404 = vpack.c.b16 %v317, %v316
    %v405 = vpack.c.b16 %v319, %v318
    %v406 = vpack.c.b16 %v321, %v320
    %v407 = vpack.c.b16 %v323, %v322
    %v408 = vpack.c.b16 %v325, %v324
    %v409 = vpack.c.b16 %v327, %v326
    %v410 = vpack.c.b16 %v329, %v328
    %v411 = vpack.c.b16 %v331, %v330
    %v412 = vpack.c.b16 %v333, %v332
    %v413 = vpack.c.b16 %v335, %v334
    %v414 = vpack.c.b16 %v337, %v336
    %v415 = vpack.c.b16 %v339, %v338
    %v416 = vpack.c.b16 %v341, %v340
    %v417 = vpack.c.b16 %v343, %v342
    %v418 = vpack.c.b16 %v345, %v344
    %v419 = vpack.c.b16 %v347, %v346
    %v420 = vpack.c.b16 %v349, %v348
    %v421 = vpack.c.b16 %v351, %v350
    %v422 = vpack.c.b16 %v353, %v352
    %v423 = vpack.c.b16 %v355, %v354
    %v424 = vpack.c.b16 %v357, %v356
    %v425 = vpack.c.b16 %v359, %v358
    %v426 = vpack.c.b16 %v361, %v360
    %v427 = vpack.c.b16 %v363, %v362
    %v428 = vpack.c.b16 %v365, %v364
    %v429 = vpack.c.b16 %v367, %v366
    %v430 = vpack.c.b16 %v369, %v368
    %v431 = vpack.c.b16 %v371, %v370
    %v432 = vpack.c.b16 %v373, %v372
    %v433 = vpack.c.b16 %v375, %v374
    %v434 = vpack.c.b16 %v377, %v376
    %v435 = vpack.c.b16 %v379, %v378
    %v440 = vunpack.c.l.b16 %v152
    %v441 = vunpack.c.l.b16 %v153
    %v442 = vunpack.c.l.b16 %v154
    %v443 = vunpack.c.l.b16 %v155
    %v444 = vpack.c.b16 %v441, %v440
    %v445 = vpack.c.b16 %v443, %v442
    %vm447 = vcmask 220160
    %v449 = vsel %vm447, %v380, 0
    %v452 = vsel %vm447, %v381, 0
    %v455 = vsel %vm447, %v382, 0
    %v458 = vsel %vm447, %v383, 0
    %v461 = vsel %vm447, %v384, 0
    %v464 = vsel %vm447, %v385, 0
    %v467 = vsel %vm447, %v386, 0
    %v470 = vsel %vm447, %v387, 0
    %v473 = vsel %vm447, %v388, 0
    %v476 = vsel %vm447, %v389, 0
    %v479 = vsel %vm447, %v390, 0
    %v482 = vsel %vm447, %v391, 0
    %v485 = vsel %vm447, %v392, 0
    %v488 = vsel %vm447, %v393, 0
    %v491 = vsel %vm447, %v394, 0
    %v494 = vsel %vm447, %v395, 0
    %v497 = vsel %vm447, %v396, 0
    %v500 = vsel %vm447, %v397, 0
    %v503 = vsel %vm447, %v398, 0
    %v506 = vsel %vm447, %v399, 0
    %v509 = vsel %vm447, %v400, 0
    %v512 = vsel %vm447, %v401, 0
    %v515 = vsel %vm447, %v402, 0
    %v518 = vsel %vm447, %v403, 0
    %v521 = vsel %vm447, %v404, 0
    %v524 = vsel %vm447, %v405, 0
    %v527 = vsel %vm447, %v406, 0
    %v530 = vsel %vm447, %v407, 0
    %v533 = vsel %vm447, %v408, 0
    %v536 = vsel %vm447, %v409, 0
    %v539 = vsel %vm447, %v410, 0
    %v542 = vsel %vm447, %v411, 0
    %v545 = vsel %vm447, %v412, 0
    %v548 = vsel %vm447, %v413, 0
    %v551 = vsel %vm447, %v414, 0
    %v554 = vsel %vm447, %v415, 0
    %v557 = vsel %vm447, %v416, 0
    %v560 = vsel %vm447, %v417, 0
    %v563 = vsel %vm447, %v418, 0
    %v566 = vsel %vm447, %v419, 0
    %v569 = vsel %vm447, %v420, 0
    %v572 = vsel %vm447, %v421, 0
    %v575 = vsel %vm447, %v422, 0
    %v578 = vsel %vm447, %v423, 0
    %v581 = vsel %vm447, %v424, 0
    %v584 = vsel %vm447, %v425, 0
    %v587 = vsel %vm447, %v426, 0
    %v590 = vsel %vm447, %v427, 0
    %v593 = vsel %vm447, %v428, 0
    %v596 = vsel %vm447, %v429, 0
    %v599 = vsel %vm447, %v430, 0
    %v602 = vsel %vm447, %v431, 0
    %v605 = vsel %vm447, %v432, 0
    %v608 = vsel %vm447, %v433, 0
    %v611 = vsel %vm447, %v434, 0
    %v614 = vsel %vm447, %v435, 0
    %vm616 = vcmask 1044480
    %vm617 = vcmask 1045504
    %v618 = vsel %vm616, 4294967295, 65535
    %v619 = vsel %vm617, %v618, 0
    %v621 = vand.u32 %v445, %v619
    %623 = vmatprep.subr.bf16.mxu0 0
    %624 = vmatpush1.bf16.msra.mxu0 %v444
    %625 = vmatprep.subr.bf16.mxu0 0
    %626 = vmatpush1.bf16.msra.mxu0 %v621
    %627 = vmatprep.subr.bf16.mxu0 0
    %628 = vmatpush1.bf16.msra.mxu0 0
    %629 = vmatprep.subr.bf16.mxu0 0
    %630 = vmatpush1.bf16.msra.mxu0 0
    %631 = vmatprep.subr.bf16.mxu0 0
    %632 = vmatpush1.bf16.msra.mxu0 0
    %633 = vmatprep.subr.bf16.mxu0 0
    %634 = vmatpush1.bf16.msra.mxu0 0
    %635 = vmatprep.subr.bf16.mxu0 0
    %636 = vmatpush1.bf16.msra.mxu0 0
    %637 = vmatprep.subr.bf16.mxu0 0
    %638 = vmatpush1.bf16.msra.mxu0 0
    %639 = vmatprep.subr.bf16.mxu0 0
    %640 = vmatpush1.bf16.msra.mxu0 0
    %641 = vmatprep.subr.bf16.mxu0 0
    %642 = vmatpush1.bf16.msra.mxu0 0
    %643 = vmatprep.subr.bf16.mxu0 0
    %644 = vmatpush1.bf16.msra.mxu0 0
    %645 = vmatprep.subr.bf16.mxu0 0
    %646 = vmatpush1.bf16.msra.mxu0 0
    %647 = vmatprep.subr.bf16.mxu0 0
    %648 = vmatpush1.bf16.msra.mxu0 0
    %649 = vmatprep.subr.bf16.mxu0 0
    %650 = vmatpush1.bf16.msra.mxu0 0
    %651 = vmatprep.subr.bf16.mxu0 0
    %652 = vmatpush1.bf16.msra.mxu0 0
    %653 = vmatprep.subr.bf16.mxu0 0
    %654 = vmatpush1.bf16.msra.mxu0 0
    %655 = vmatprep.mubr.bf16.mxu0 0
    %656 = vmatmul.mubr.bf16.gmra.mrb[0].mxu0 %v449
    %v657 = vpop.f32.mrb[0].mxu0
    %v658 = vadd.f32 0.0, %v657
    %v659 = vpop.f32.mrb[0].mxu0
    %v660 = vpop.f32.mrb[0].mxu0
    %v661 = vadd.f32 0.0, %v660
    %v662 = vpop.f32.mrb[0].mxu0
    %663 = vmatprep.mubr.bf16.mxu0 0
    %664 = vmatmul.mubr.bf16.gmra.mrb[0].mxu0 %v452
    %v665 = vpop.f32.mrb[0].mxu0
    %v666 = vadd.f32 0.0, %v665
    %v667 = vpop.f32.mrb[0].mxu0
    %v668 = vpop.f32.mrb[0].mxu0
    %v669 = vadd.f32 0.0, %v668
    %v670 = vpop.f32.mrb[0].mxu0
    %671 = vmatprep.mubr.bf16.mxu0 0
    %672 = vmatmul.mubr.bf16.gmra.mrb[0].mxu0 %v455
    %v673 = vpop.f32.mrb[0].mxu0
    %v674 = vadd.f32 0.0, %v673
    %v675 = vpop.f32.mrb[0].mxu0
    %v676 = vpop.f32.mrb[0].mxu0
    %v677 = vadd.f32 0.0, %v676
    %v678 = vpop.f32.mrb[0].mxu0
    %679 = vmatprep.mubr.bf16.mxu0 0
    %680 = vmatmul.mubr.bf16.gmra.mrb[0].mxu0 %v458
    %v681 = vpop.f32.mrb[0].mxu0
    %v682 = vadd.f32 0.0, %v681
    %v683 = vpop.f32.mrb[0].mxu0
    %v684 = vpop.f32.mrb[0].mxu0
    %v685 = vadd.f32 0.0, %v684
    %v686 = vpop.f32.mrb[0].mxu0
    %687 = vmatprep.mubr.bf16.mxu0 0
    %688 = vmatmul.mubr.bf16.gmra.mrb[0].mxu0 %v461
    %v689 = vpop.f32.mrb[0].mxu0
    %v690 = vadd.f32 0.0, %v689
    %v691 = vpop.f32.mrb[0].mxu0
    %v692 = vpop.f32.mrb[0].mxu0
    %v693 = vadd.f32 0.0, %v692
    %v694 = vpop.f32.mrb[0].mxu0
    %695 = vmatprep.mubr.bf16.mxu0 0
    %696 = vmatmul.mubr.bf16.gmra.mrb[0].mxu0 %v464
    %v697 = vpop.f32.mrb[0].mxu0
    %v698 = vadd.f32 0.0, %v697
    %v699 = vpop.f32.mrb[0].mxu0
    %v700 = vpop.f32.mrb[0].mxu0
    %v701 = vadd.f32 0.0, %v700
    %v702 = vpop.f32.mrb[0].mxu0
    %703 = vmatprep.mubr.bf16.mxu0 0
    %704 = vmatmul.mubr.bf16.gmra.mrb[0].mxu0 %v467
    %v705 = vpop.f32.mrb[0].mxu0
    %v706 = vadd.f32 0.0, %v705
    %v707 = vpop.f32.mrb[0].mxu0
    %v708 = vpop.f32.mrb[0].mxu0
    %v709 = vadd.f32 0.0, %v708
    %v710 = vpop.f32.mrb[0].mxu0
    %711 = vmatprep.mubr.bf16.mxu0 0
    %712 = vmatmul.mubr.bf16.gmra.mrb[0].mxu0 %v470
    %v713 = vpop.f32.mrb[0].mxu0
    %v714 = vadd.f32 0.0, %v713
    %v715 = vpop.f32.mrb[0].mxu0
    %v716 = vpop.f32.mrb[0].mxu0
    %v717 = vadd.f32 0.0, %v716
    %v718 = vpop.f32.mrb[0].mxu0
    %719 = vmatprep.mubr.bf16.mxu0 0
    %720 = vmatmul.mubr.bf16.gmra.mrb[0].mxu0 %v473
    %v721 = vpop.f32.mrb[0].mxu0
    %v722 = vadd.f32 0.0, %v721
    %v723 = vpop.f32.mrb[0].mxu0
    %v724 = vpop.f32.mrb[0].mxu0
    %v725 = vadd.f32 0.0, %v724
    %v726 = vpop.f32.mrb[0].mxu0
    %727 = vmatprep.mubr.bf16.mxu0 0
    %728 = vmatmul.mubr.bf16.gmra.mrb[0].mxu0 %v476
    %v729 = vpop.f32.mrb[0].mxu0
    %v730 = vadd.f32 0.0, %v729
    %v731 = vpop.f32.mrb[0].mxu0
    %v732 = vpop.f32.mrb[0].mxu0
    %v733 = vadd.f32 0.0, %v732
    %v734 = vpop.f32.mrb[0].mxu0
    %735 = vmatprep.mubr.bf16.mxu0 0
    %736 = vmatmul.mubr.bf16.gmra.mrb[0].mxu0 %v479
    %v737 = vpop.f32.mrb[0].mxu0
    %v738 = vadd.f32 0.0, %v737
    %v739 = vpop.f32.mrb[0].mxu0
    %v740 = vpop.f32.mrb[0].mxu0
    %v741 = vadd.f32 0.0, %v740
    %v742 = vpop.f32.mrb[0].mxu0
    %743 = vmatprep.mubr.bf16.mxu0 0
    %744 = vmatmul.mubr.bf16.gmra.mrb[0].mxu0 %v482
    %v745 = vpop.f32.mrb[0].mxu0
    %v746 = vadd.f32 0.0, %v745
    %v747 = vpop.f32.mrb[0].mxu0
    %v748 = vpop.f32.mrb[0].mxu0
    %v749 = vadd.f32 0.0, %v748
    %v750 = vpop.f32.mrb[0].mxu0
    %751 = vmatprep.mubr.bf16.mxu0 0
    %752 = vmatmul.mubr.bf16.gmra.mrb[0].mxu0 %v485
    %v753 = vpop.f32.mrb[0].mxu0
    %v754 = vadd.f32 0.0, %v753
    %v755 = vpop.f32.mrb[0].mxu0
    %v756 = vpop.f32.mrb[0].mxu0
    %v757 = vadd.f32 0.0, %v756
    %v758 = vpop.f32.mrb[0].mxu0
    %759 = vmatprep.mubr.bf16.mxu0 0
    %760 = vmatmul.mubr.bf16.gmra.mrb[0].mxu0 %v488
    %v761 = vpop.f32.mrb[0].mxu0
    %v762 = vadd.f32 0.0, %v761
    %v763 = vpop.f32.mrb[0].mxu0
    %v764 = vpop.f32.mrb[0].mxu0
    %v765 = vadd.f32 0.0, %v764
    %v766 = vpop.f32.mrb[0].mxu0
    %767 = vmatprep.mubr.bf16.mxu0 0
    %768 = vmatmul.mubr.bf16.gmra.mrb[0].mxu0 %v491
    %v769 = vpop.f32.mrb[0].mxu0
    %v770 = vadd.f32 0.0, %v769
    %v771 = vpop.f32.mrb[0].mxu0
    %v772 = vpop.f32.mrb[0].mxu0
    %v773 = vadd.f32 0.0, %v772
    %v774 = vpop.f32.mrb[0].mxu0
    %775 = vmatprep.mubr.bf16.mxu0 0
    %776 = vmatmul.mubr.bf16.gmra.mrb[0].mxu0 %v494
    %v777 = vpop.f32.mrb[0].mxu0
    %v778 = vadd.f32 0.0, %v777
    %v779 = vpop.f32.mrb[0].mxu0
    %v780 = vpop.f32.mrb[0].mxu0
    %v781 = vadd.f32 0.0, %v780
    %v782 = vpop.f32.mrb[0].mxu0
    %783 = vmatprep.mubr.bf16.mxu0 0
    %784 = vmatmul.mubr.bf16.gmra.mrb[0].mxu0 %v497
    %v785 = vpop.f32.mrb[0].mxu0
    %v786 = vadd.f32 0.0, %v785
    %v787 = vpop.f32.mrb[0].mxu0
    %v788 = vpop.f32.mrb[0].mxu0
    %v789 = vadd.f32 0.0, %v788
    %v790 = vpop.f32.mrb[0].mxu0
    %791 = vmatprep.mubr.bf16.mxu0 0
    %792 = vmatmul.mubr.bf16.gmra.mrb[0].mxu0 %v500
    %v793 = vpop.f32.mrb[0].mxu0
    %v794 = vadd.f32 0.0, %v793
    %v795 = vpop.f32.mrb[0].mxu0
    %v796 = vpop.f32.mrb[0].mxu0
    %v797 = vadd.f32 0.0, %v796
    %v798 = vpop.f32.mrb[0].mxu0
    %799 = vmatprep.mubr.bf16.mxu0 0
    %800 = vmatmul.mubr.bf16.gmra.mrb[0].mxu0 %v503
    %v801 = vpop.f32.mrb[0].mxu0
    %v802 = vadd.f32 0.0, %v801
    %v803 = vpop.f32.mrb[0].mxu0
    %v804 = vpop.f32.mrb[0].mxu0
    %v805 = vadd.f32 0.0, %v804
    %v806 = vpop.f32.mrb[0].mxu0
    %807 = vmatprep.mubr.bf16.mxu0 0
    %808 = vmatmul.mubr.bf16.gmra.mrb[0].mxu0 %v506
    %v809 = vpop.f32.mrb[0].mxu0
    %v810 = vadd.f32 0.0, %v809
    %v811 = vpop.f32.mrb[0].mxu0
    %v812 = vpop.f32.mrb[0].mxu0
    %v813 = vadd.f32 0.0, %v812
    %v814 = vpop.f32.mrb[0].mxu0
    %815 = vmatprep.mubr.bf16.mxu0 0
    %816 = vmatmul.mubr.bf16.gmra.mrb[0].mxu0 %v509
    %v817 = vpop.f32.mrb[0].mxu0
    %v818 = vadd.f32 0.0, %v817
    %v819 = vpop.f32.mrb[0].mxu0
    %v820 = vpop.f32.mrb[0].mxu0
    %v821 = vadd.f32 0.0, %v820
    %v822 = vpop.f32.mrb[0].mxu0
    %823 = vmatprep.mubr.bf16.mxu0 0
    %824 = vmatmul.mubr.bf16.gmra.mrb[0].mxu0 %v512
    %v825 = vpop.f32.mrb[0].mxu0
    %v826 = vadd.f32 0.0, %v825
    %v827 = vpop.f32.mrb[0].mxu0
    %v828 = vpop.f32.mrb[0].mxu0
    %v829 = vadd.f32 0.0, %v828
    %v830 = vpop.f32.mrb[0].mxu0
    %831 = vmatprep.mubr.bf16.mxu0 0
    %832 = vmatmul.mubr.bf16.gmra.mrb[0].mxu0 %v515
    %v833 = vpop.f32.mrb[0].mxu0
    %v834 = vadd.f32 0.0, %v833
    %v835 = vpop.f32.mrb[0].mxu0
    %v836 = vpop.f32.mrb[0].mxu0
    %v837 = vadd.f32 0.0, %v836
    %v838 = vpop.f32.mrb[0].mxu0
    %839 = vmatprep.mubr.bf16.mxu0 0
    %840 = vmatmul.mubr.bf16.gmra.mrb[0].mxu0 %v518
    %v841 = vpop.f32.mrb[0].mxu0
    %v842 = vadd.f32 0.0, %v841
    %v843 = vpop.f32.mrb[0].mxu0
    %v844 = vpop.f32.mrb[0].mxu0
    %v845 = vadd.f32 0.0, %v844
    %v846 = vpop.f32.mrb[0].mxu0
    %847 = vmatprep.mubr.bf16.mxu0 0
    %848 = vmatmul.mubr.bf16.gmra.mrb[0].mxu0 %v521
    %v849 = vpop.f32.mrb[0].mxu0
    %v850 = vadd.f32 0.0, %v849
    %v851 = vpop.f32.mrb[0].mxu0
    %v852 = vpop.f32.mrb[0].mxu0
    %v853 = vadd.f32 0.0, %v852
    %v854 = vpop.f32.mrb[0].mxu0
    %855 = vmatprep.mubr.bf16.mxu0 0
    %856 = vmatmul.mubr.bf16.gmra.mrb[0].mxu0 %v524
    %v857 = vpop.f32.mrb[0].mxu0
    %v858 = vadd.f32 0.0, %v857
    %v859 = vpop.f32.mrb[0].mxu0
    %v860 = vpop.f32.mrb[0].mxu0
    %v861 = vadd.f32 0.0, %v860
    %v862 = vpop.f32.mrb[0].mxu0
    %863 = vmatprep.mubr.bf16.mxu0 0
    %864 = vmatmul.mubr.bf16.gmra.mrb[0].mxu0 %v527
    %v865 = vpop.f32.mrb[0].mxu0
    %v866 = vadd.f32 0.0, %v865
    %v867 = vpop.f32.mrb[0].mxu0
    %v868 = vpop.f32.mrb[0].mxu0
    %v869 = vadd.f32 0.0, %v868
    %v870 = vpop.f32.mrb[0].mxu0
    %871 = vmatprep.mubr.bf16.mxu0 0
    %872 = vmatmul.mubr.bf16.gmra.mrb[0].mxu0 %v530
    %v873 = vpop.f32.mrb[0].mxu0
    %v874 = vadd.f32 0.0, %v873
    %v875 = vpop.f32.mrb[0].mxu0
    %v876 = vpop.f32.mrb[0].mxu0
    %v877 = vadd.f32 0.0, %v876
    %v878 = vpop.f32.mrb[0].mxu0
    %879 = vmatprep.mubr.bf16.mxu0 0
    %880 = vmatmul.mubr.bf16.gmra.mrb[0].mxu0 %v533
    %v881 = vpop.f32.mrb[0].mxu0
    %v882 = vadd.f32 0.0, %v881
    %v883 = vpop.f32.mrb[0].mxu0
    %v884 = vpop.f32.mrb[0].mxu0
    %v885 = vadd.f32 0.0, %v884
    %v886 = vpop.f32.mrb[0].mxu0
    %887 = vmatprep.mubr.bf16.mxu0 0
    %888 = vmatmul.mubr.bf16.gmra.mrb[0].mxu0 %v536
    %v889 = vpop.f32.mrb[0].mxu0
    %v890 = vadd.f32 0.0, %v889
    %v891 = vpop.f32.mrb[0].mxu0
    %v892 = vpop.f32.mrb[0].mxu0
    %v893 = vadd.f32 0.0, %v892
    %v894 = vpop.f32.mrb[0].mxu0
    %895 = vmatprep.mubr.bf16.mxu0 0
    %896 = vmatmul.mubr.bf16.gmra.mrb[0].mxu0 %v539
    %v897 = vpop.f32.mrb[0].mxu0
    %v898 = vadd.f32 0.0, %v897
    %v899 = vpop.f32.mrb[0].mxu0
    %v900 = vpop.f32.mrb[0].mxu0
    %v901 = vadd.f32 0.0, %v900
    %v902 = vpop.f32.mrb[0].mxu0
    %903 = vmatprep.mubr.bf16.mxu0 0
    %904 = vmatmul.mubr.bf16.gmra.mrb[0].mxu0 %v542
    %v905 = vpop.f32.mrb[0].mxu0
    %v906 = vadd.f32 0.0, %v905
    %v907 = vpop.f32.mrb[0].mxu0
    %v908 = vpop.f32.mrb[0].mxu0
    %v909 = vadd.f32 0.0, %v908
    %v910 = vpop.f32.mrb[0].mxu0
    %911 = vmatprep.mubr.bf16.mxu0 0
    %912 = vmatmul.mubr.bf16.gmra.mrb[0].mxu0 %v545
    %v913 = vpop.f32.mrb[0].mxu0
    %v914 = vadd.f32 0.0, %v913
    %v915 = vpop.f32.mrb[0].mxu0
    %v916 = vpop.f32.mrb[0].mxu0
    %v917 = vadd.f32 0.0, %v916
    %v918 = vpop.f32.mrb[0].mxu0
    %919 = vmatprep.mubr.bf16.mxu0 0
    %920 = vmatmul.mubr.bf16.gmra.mrb[0].mxu0 %v548
    %v921 = vpop.f32.mrb[0].mxu0
    %v922 = vadd.f32 0.0, %v921
    %v923 = vpop.f32.mrb[0].mxu0
    %v924 = vpop.f32.mrb[0].mxu0
    %v925 = vadd.f32 0.0, %v924
    %v926 = vpop.f32.mrb[0].mxu0
    %927 = vmatprep.mubr.bf16.mxu0 0
    %928 = vmatmul.mubr.bf16.gmra.mrb[0].mxu0 %v551
    %v929 = vpop.f32.mrb[0].mxu0
    %v930 = vadd.f32 0.0, %v929
    %v931 = vpop.f32.mrb[0].mxu0
    %v932 = vpop.f32.mrb[0].mxu0
    %v933 = vadd.f32 0.0, %v932
    %v934 = vpop.f32.mrb[0].mxu0
    %935 = vmatprep.mubr.bf16.mxu0 0
    %936 = vmatmul.mubr.bf16.gmra.mrb[0].mxu0 %v554
    %v937 = vpop.f32.mrb[0].mxu0
    %v938 = vadd.f32 0.0, %v937
    %v939 = vpop.f32.mrb[0].mxu0
    %v940 = vpop.f32.mrb[0].mxu0
    %v941 = vadd.f32 0.0, %v940
    %v942 = vpop.f32.mrb[0].mxu0
    %943 = vmatprep.mubr.bf16.mxu0 0
    %944 = vmatmul.mubr.bf16.gmra.mrb[0].mxu0 %v557
    %v945 = vpop.f32.mrb[0].mxu0
    %v946 = vadd.f32 0.0, %v945
    %v947 = vpop.f32.mrb[0].mxu0
    %v948 = vpop.f32.mrb[0].mxu0
    %v949 = vadd.f32 0.0, %v948
    %v950 = vpop.f32.mrb[0].mxu0
    %951 = vmatprep.mubr.bf16.mxu0 0
    %952 = vmatmul.mubr.bf16.gmra.mrb[0].mxu0 %v560
    %v953 = vpop.f32.mrb[0].mxu0
    %v954 = vadd.f32 0.0, %v953
    %v955 = vpop.f32.mrb[0].mxu0
    %v956 = vpop.f32.mrb[0].mxu0
    %v957 = vadd.f32 0.0, %v956
    %v958 = vpop.f32.mrb[0].mxu0
    %959 = vmatprep.mubr.bf16.mxu0 0
    %960 = vmatmul.mubr.bf16.gmra.mrb[0].mxu0 %v563
    %v961 = vpop.f32.mrb[0].mxu0
    %v962 = vadd.f32 0.0, %v961
    %v963 = vpop.f32.mrb[0].mxu0
    %v964 = vpop.f32.mrb[0].mxu0
    %v965 = vadd.f32 0.0, %v964
    %v966 = vpop.f32.mrb[0].mxu0
    %967 = vmatprep.mubr.bf16.mxu0 0
    %968 = vmatmul.mubr.bf16.gmra.mrb[0].mxu0 %v566
    %v969 = vpop.f32.mrb[0].mxu0
    %v970 = vadd.f32 0.0, %v969
    %v971 = vpop.f32.mrb[0].mxu0
    %v972 = vpop.f32.mrb[0].mxu0
    %v973 = vadd.f32 0.0, %v972
    %v974 = vpop.f32.mrb[0].mxu0
    %975 = vmatprep.mubr.bf16.mxu0 0
    %976 = vmatmul.mubr.bf16.gmra.mrb[0].mxu0 %v569
    %v977 = vpop.f32.mrb[0].mxu0
    %v978 = vadd.f32 0.0, %v977
    %v979 = vpop.f32.mrb[0].mxu0
    %v980 = vpop.f32.mrb[0].mxu0
    %v981 = vadd.f32 0.0, %v980
    %v982 = vpop.f32.mrb[0].mxu0
    %983 = vmatprep.mubr.bf16.mxu0 0
    %984 = vmatmul.mubr.bf16.gmra.mrb[0].mxu0 %v572
    %v985 = vpop.f32.mrb[0].mxu0
    %v986 = vadd.f32 0.0, %v985
    %v987 = vpop.f32.mrb[0].mxu0
    %v988 = vpop.f32.mrb[0].mxu0
    %v989 = vadd.f32 0.0, %v988
    %v990 = vpop.f32.mrb[0].mxu0
    %991 = vmatprep.mubr.bf16.mxu0 0
    %992 = vmatmul.mubr.bf16.gmra.mrb[0].mxu0 %v575
    %v993 = vpop.f32.mrb[0].mxu0
    %v994 = vadd.f32 0.0, %v993
    %v995 = vpop.f32.mrb[0].mxu0
    %v996 = vpop.f32.mrb[0].mxu0
    %v997 = vadd.f32 0.0, %v996
    %v998 = vpop.f32.mrb[0].mxu0
    %999 = vmatprep.mubr.bf16.mxu0 0
    %1000 = vmatmul.mubr.bf16.gmra.mrb[0].mxu0 %v578
    %v1001 = vpop.f32.mrb[0].mxu0
    %v1002 = vadd.f32 0.0, %v1001
    %v1003 = vpop.f32.mrb[0].mxu0
    %v1004 = vpop.f32.mrb[0].mxu0
    %v1005 = vadd.f32 0.0, %v1004
    %v1006 = vpop.f32.mrb[0].mxu0
    %1007 = vmatprep.mubr.bf16.mxu0 0
    %1008 = vmatmul.mubr.bf16.gmra.mrb[0].mxu0 %v581
    %v1009 = vpop.f32.mrb[0].mxu0
    %v1010 = vadd.f32 0.0, %v1009
    %v1011 = vpop.f32.mrb[0].mxu0
    %v1012 = vpop.f32.mrb[0].mxu0
    %v1013 = vadd.f32 0.0, %v1012
    %v1014 = vpop.f32.mrb[0].mxu0
    %1015 = vmatprep.mubr.bf16.mxu0 0
    %1016 = vmatmul.mubr.bf16.gmra.mrb[0].mxu0 %v584
    %v1017 = vpop.f32.mrb[0].mxu0
    %v1018 = vadd.f32 0.0, %v1017
    %v1019 = vpop.f32.mrb[0].mxu0
    %v1020 = vpop.f32.mrb[0].mxu0
    %v1021 = vadd.f32 0.0, %v1020
    %v1022 = vpop.f32.mrb[0].mxu0
    %1023 = vmatprep.mubr.bf16.mxu0 0
    %1024 = vmatmul.mubr.bf16.gmra.mrb[0].mxu0 %v587
    %v1025 = vpop.f32.mrb[0].mxu0
    %v1026 = vadd.f32 0.0, %v1025
    %v1027 = vpop.f32.mrb[0].mxu0
    %v1028 = vpop.f32.mrb[0].mxu0
    %v1029 = vadd.f32 0.0, %v1028
    %v1030 = vpop.f32.mrb[0].mxu0
    %1031 = vmatprep.mubr.bf16.mxu0 0
    %1032 = vmatmul.mubr.bf16.gmra.mrb[0].mxu0 %v590
    %v1033 = vpop.f32.mrb[0].mxu0
    %v1034 = vadd.f32 0.0, %v1033
    %v1035 = vpop.f32.mrb[0].mxu0
    %v1036 = vpop.f32.mrb[0].mxu0
    %v1037 = vadd.f32 0.0, %v1036
    %v1038 = vpop.f32.mrb[0].mxu0
    %1039 = vmatprep.mubr.bf16.mxu0 0
    %1040 = vmatmul.mubr.bf16.gmra.mrb[0].mxu0 %v593
    %v1041 = vpop.f32.mrb[0].mxu0
    %v1042 = vadd.f32 0.0, %v1041
    %v1043 = vpop.f32.mrb[0].mxu0
    %v1044 = vpop.f32.mrb[0].mxu0
    %v1045 = vadd.f32 0.0, %v1044
    %v1046 = vpop.f32.mrb[0].mxu0
    %1047 = vmatprep.mubr.bf16.mxu0 0
    %1048 = vmatmul.mubr.bf16.gmra.mrb[0].mxu0 %v596
    %v1049 = vpop.f32.mrb[0].mxu0
    %v1050 = vadd.f32 0.0, %v1049
    %v1051 = vpop.f32.mrb[0].mxu0
    %v1052 = vpop.f32.mrb[0].mxu0
    %v1053 = vadd.f32 0.0, %v1052
    %v1054 = vpop.f32.mrb[0].mxu0
    %1055 = vmatprep.mubr.bf16.mxu0 0
    %1056 = vmatmul.mubr.bf16.gmra.mrb[0].mxu0 %v599
    %v1057 = vpop.f32.mrb[0].mxu0
    %v1058 = vadd.f32 0.0, %v1057
    %v1059 = vpop.f32.mrb[0].mxu0
    %v1060 = vpop.f32.mrb[0].mxu0
    %v1061 = vadd.f32 0.0, %v1060
    %v1062 = vpop.f32.mrb[0].mxu0
    %1063 = vmatprep.mubr.bf16.mxu0 0
    %1064 = vmatmul.mubr.bf16.gmra.mrb[0].mxu0 %v602
    %v1065 = vpop.f32.mrb[0].mxu0
    %v1066 = vadd.f32 0.0, %v1065
    %v1067 = vpop.f32.mrb[0].mxu0
    %v1068 = vpop.f32.mrb[0].mxu0
    %v1069 = vadd.f32 0.0, %v1068
    %v1070 = vpop.f32.mrb[0].mxu0
    %1071 = vmatprep.mubr.bf16.mxu0 0
    %1072 = vmatmul.mubr.bf16.gmra.mrb[0].mxu0 %v605
    %v1073 = vpop.f32.mrb[0].mxu0
    %v1074 = vadd.f32 0.0, %v1073
    %v1075 = vpop.f32.mrb[0].mxu0
    %v1076 = vpop.f32.mrb[0].mxu0
    %v1077 = vadd.f32 0.0, %v1076
    %v1078 = vpop.f32.mrb[0].mxu0
    %1079 = vmatprep.mubr.bf16.mxu0 0
    %1080 = vmatmul.mubr.bf16.gmra.mrb[0].mxu0 %v608
    %v1081 = vpop.f32.mrb[0].mxu0
    %v1082 = vadd.f32 0.0, %v1081
    %v1083 = vpop.f32.mrb[0].mxu0
    %v1084 = vpop.f32.mrb[0].mxu0
    %v1085 = vadd.f32 0.0, %v1084
    %v1086 = vpop.f32.mrb[0].mxu0
    %1087 = vmatprep.mubr.bf16.mxu0 0
    %1088 = vmatmul.mubr.bf16.gmra.mrb[0].mxu0 %v611
    %v1089 = vpop.f32.mrb[0].mxu0
    %v1090 = vadd.f32 0.0, %v1089
    %v1091 = vpop.f32.mrb[0].mxu0
    %v1092 = vpop.f32.mrb[0].mxu0
    %v1093 = vadd.f32 0.0, %v1092
    %v1094 = vpop.f32.mrb[0].mxu0
    %1095 = vmatprep.mubr.bf16.mxu0 0
    %1096 = vmatmul.mubr.bf16.gmra.mrb[0].mxu0 %v614
    %v1097 = vpop.f32.mrb[0].mxu0
    %v1098 = vadd.f32 0.0, %v1097
    %v1099 = vpop.f32.mrb[0].mxu0
    %v1100 = vpop.f32.mrb[0].mxu0
    %v1101 = vadd.f32 0.0, %v1100
    %v1102 = vpop.f32.mrb[0].mxu0
    %1103 = vdwg.mxu0
    %vm1104 = vcmask 130048
    %v1105 = vsel %vm1104, %v658, 0.0
    %v1106 = vsel %vm1104, %v661, 0.0
    %v1107 = vadd.f32 %v1105, %v1106
    %v1108 = vsel %vm1104, %v666, 0.0
    %v1109 = vadd.f32 %v1107, %v1108
    %v1110 = vsel %vm1104, %v669, 0.0
    %v1111 = vadd.f32 %v1109, %v1110
    %v1112 = vsel %vm1104, %v674, 0.0
    %v1113 = vadd.f32 %v1111, %v1112
    %v1114 = vsel %vm1104, %v677, 0.0
    %v1115 = vadd.f32 %v1113, %v1114
    %v1116 = vsel %vm1104, %v682, 0.0
    %v1117 = vadd.f32 %v1115, %v1116
    %v1118 = vsel %vm1104, %v685, 0.0
    %v1119 = vadd.f32 %v1117, %v1118
    %v1120 = vsel %vm1104, %v690, 0.0
    %v1121 = vadd.f32 %v1119, %v1120
    %v1122 = vsel %vm1104, %v693, 0.0
    %v1123 = vadd.f32 %v1121, %v1122
    %v1124 = vsel %vm1104, %v698, 0.0
    %v1125 = vadd.f32 %v1123, %v1124
    %v1126 = vsel %vm1104, %v701, 0.0
    %v1127 = vadd.f32 %v1125, %v1126
    %v1128 = vsel %vm1104, %v706, 0.0
    %v1129 = vadd.f32 %v1127, %v1128
    %v1130 = vsel %vm1104, %v709, 0.0
    %v1131 = vadd.f32 %v1129, %v1130
    %v1132 = vsel %vm1104, %v714, 0.0
    %v1133 = vadd.f32 %v1131, %v1132
    %v1134 = vsel %vm1104, %v717, 0.0
    %v1135 = vadd.f32 %v1133, %v1134
    %v1136 = vsel %vm1104, %v722, 0.0
    %v1137 = vadd.f32 %v1135, %v1136
    %v1138 = vsel %vm1104, %v725, 0.0
    %v1139 = vadd.f32 %v1137, %v1138
    %v1140 = vsel %vm1104, %v730, 0.0
    %v1141 = vadd.f32 %v1139, %v1140
    %v1142 = vsel %vm1104, %v733, 0.0
    %v1143 = vadd.f32 %v1141, %v1142
    %v1144 = vsel %vm1104, %v738, 0.0
    %v1145 = vadd.f32 %v1143, %v1144
    %v1146 = vsel %vm1104, %v741, 0.0
    %v1147 = vadd.f32 %v1145, %v1146
    %v1148 = vsel %vm1104, %v746, 0.0
    %v1149 = vadd.f32 %v1147, %v1148
    %v1150 = vsel %vm1104, %v749, 0.0
    %v1151 = vadd.f32 %v1149, %v1150
    %v1152 = vsel %vm1104, %v754, 0.0
    %v1153 = vadd.f32 %v1151, %v1152
    %v1154 = vsel %vm1104, %v757, 0.0
    %v1155 = vadd.f32 %v1153, %v1154
    %v1156 = vsel %vm1104, %v762, 0.0
    %v1157 = vadd.f32 %v1155, %v1156
    %v1158 = vsel %vm1104, %v765, 0.0
    %v1159 = vadd.f32 %v1157, %v1158
    %v1160 = vsel %vm1104, %v770, 0.0
    %v1161 = vadd.f32 %v1159, %v1160
    %v1162 = vsel %vm1104, %v773, 0.0
    %v1163 = vadd.f32 %v1161, %v1162
    %v1164 = vsel %vm1104, %v778, 0.0
    %v1165 = vadd.f32 %v1163, %v1164
    %v1166 = vsel %vm1104, %v781, 0.0
    %v1167 = vadd.f32 %v1165, %v1166
    %v1168 = vsel %vm1104, %v786, 0.0
    %v1169 = vadd.f32 %v1167, %v1168
    %v1170 = vsel %vm1104, %v789, 0.0
    %v1171 = vadd.f32 %v1169, %v1170
    %v1172 = vsel %vm1104, %v794, 0.0
    %v1173 = vadd.f32 %v1171, %v1172
    %v1174 = vsel %vm1104, %v797, 0.0
    %v1175 = vadd.f32 %v1173, %v1174
    %v1176 = vsel %vm1104, %v802, 0.0
    %v1177 = vadd.f32 %v1175, %v1176
    %v1178 = vsel %vm1104, %v805, 0.0
    %v1179 = vadd.f32 %v1177, %v1178
    %v1180 = vsel %vm1104, %v810, 0.0
    %v1181 = vadd.f32 %v1179, %v1180
    %v1182 = vsel %vm1104, %v813, 0.0
    %v1183 = vadd.f32 %v1181, %v1182
    %v1184 = vsel %vm1104, %v818, 0.0
    %v1185 = vadd.f32 %v1183, %v1184
    %v1186 = vsel %vm1104, %v821, 0.0
    %v1187 = vadd.f32 %v1185, %v1186
    %v1188 = vsel %vm1104, %v826, 0.0
    %v1189 = vadd.f32 %v1187, %v1188
    %v1190 = vsel %vm1104, %v829, 0.0
    %v1191 = vadd.f32 %v1189, %v1190
    %v1192 = vsel %vm1104, %v834, 0.0
    %v1193 = vadd.f32 %v1191, %v1192
    %v1194 = vsel %vm1104, %v837, 0.0
    %v1195 = vadd.f32 %v1193, %v1194
    %v1196 = vsel %vm1104, %v842, 0.0
    %v1197 = vadd.f32 %v1195, %v1196
    %v1198 = vsel %vm1104, %v845, 0.0
    %v1199 = vadd.f32 %v1197, %v1198
    %v1200 = vsel %vm1104, %v850, 0.0
    %v1201 = vadd.f32 %v1199, %v1200
    %v1202 = vsel %vm1104, %v853, 0.0
    %v1203 = vadd.f32 %v1201, %v1202
    %v1204 = vsel %vm1104, %v858, 0.0
    %v1205 = vadd.f32 %v1203, %v1204
    %v1206 = vsel %vm1104, %v861, 0.0
    %v1207 = vadd.f32 %v1205, %v1206
    %v1208 = vsel %vm1104, %v866, 0.0
    %v1209 = vadd.f32 %v1207, %v1208
    %v1210 = vsel %vm1104, %v869, 0.0
    %v1211 = vadd.f32 %v1209, %v1210
    %v1212 = vsel %vm1104, %v874, 0.0
    %v1213 = vadd.f32 %v1211, %v1212
    %v1214 = vsel %vm1104, %v877, 0.0
    %v1215 = vadd.f32 %v1213, %v1214
    %v1216 = vsel %vm1104, %v882, 0.0
    %v1217 = vadd.f32 %v1215, %v1216
    %v1218 = vsel %vm1104, %v885, 0.0
    %v1219 = vadd.f32 %v1217, %v1218
    %v1220 = vsel %vm1104, %v890, 0.0
    %v1221 = vadd.f32 %v1219, %v1220
    %v1222 = vsel %vm1104, %v893, 0.0
    %v1223 = vadd.f32 %v1221, %v1222
    %v1224 = vsel %vm1104, %v898, 0.0
    %v1225 = vadd.f32 %v1223, %v1224
    %v1226 = vsel %vm1104, %v901, 0.0
    %v1227 = vadd.f32 %v1225, %v1226
    %v1228 = vsel %vm1104, %v906, 0.0
    %v1229 = vadd.f32 %v1227, %v1228
    %v1230 = vsel %vm1104, %v909, 0.0
    %v1231 = vadd.f32 %v1229, %v1230
    %v1232 = vsel %vm1104, %v914, 0.0
    %v1233 = vadd.f32 %v1231, %v1232
    %v1234 = vsel %vm1104, %v917, 0.0
    %v1235 = vadd.f32 %v1233, %v1234
    %v1236 = vsel %vm1104, %v922, 0.0
    %v1237 = vadd.f32 %v1235, %v1236
    %v1238 = vsel %vm1104, %v925, 0.0
    %v1239 = vadd.f32 %v1237, %v1238
    %v1240 = vsel %vm1104, %v930, 0.0
    %v1241 = vadd.f32 %v1239, %v1240
    %v1242 = vsel %vm1104, %v933, 0.0
    %v1243 = vadd.f32 %v1241, %v1242
    %v1244 = vsel %vm1104, %v938, 0.0
    %v1245 = vadd.f32 %v1243, %v1244
    %v1246 = vsel %vm1104, %v941, 0.0
    %v1247 = vadd.f32 %v1245, %v1246
    %v1248 = vsel %vm1104, %v946, 0.0
    %v1249 = vadd.f32 %v1247, %v1248
    %v1250 = vsel %vm1104, %v949, 0.0
    %v1251 = vadd.f32 %v1249, %v1250
    %v1252 = vsel %vm1104, %v954, 0.0
    %v1253 = vadd.f32 %v1251, %v1252
    %v1254 = vsel %vm1104, %v957, 0.0
    %v1255 = vadd.f32 %v1253, %v1254
    %v1256 = vsel %vm1104, %v962, 0.0
    %v1257 = vadd.f32 %v1255, %v1256
    %v1258 = vsel %vm1104, %v965, 0.0
    %v1259 = vadd.f32 %v1257, %v1258
    %v1260 = vsel %vm1104, %v970, 0.0
    %v1261 = vadd.f32 %v1259, %v1260
    %v1262 = vsel %vm1104, %v973, 0.0
    %v1263 = vadd.f32 %v1261, %v1262
    %v1264 = vsel %vm1104, %v978, 0.0
    %v1265 = vadd.f32 %v1263, %v1264
    %v1266 = vsel %vm1104, %v981, 0.0
    %v1267 = vadd.f32 %v1265, %v1266
    %v1268 = vsel %vm1104, %v986, 0.0
    %v1269 = vadd.f32 %v1267, %v1268
    %v1270 = vsel %vm1104, %v989, 0.0
    %v1271 = vadd.f32 %v1269, %v1270
    %v1272 = vsel %vm1104, %v994, 0.0
    %v1273 = vadd.f32 %v1271, %v1272
    %v1274 = vsel %vm1104, %v997, 0.0
    %v1275 = vadd.f32 %v1273, %v1274
    %v1276 = vsel %vm1104, %v1002, 0.0
    %v1277 = vadd.f32 %v1275, %v1276
    %v1278 = vsel %vm1104, %v1005, 0.0
    %v1279 = vadd.f32 %v1277, %v1278
    %v1280 = vsel %vm1104, %v1010, 0.0
    %v1281 = vadd.f32 %v1279, %v1280
    %v1282 = vsel %vm1104, %v1013, 0.0
    %v1283 = vadd.f32 %v1281, %v1282
    %v1284 = vsel %vm1104, %v1018, 0.0
    %v1285 = vadd.f32 %v1283, %v1284
    %v1286 = vsel %vm1104, %v1021, 0.0
    %v1287 = vadd.f32 %v1285, %v1286
    %v1288 = vsel %vm1104, %v1026, 0.0
    %v1289 = vadd.f32 %v1287, %v1288
    %v1290 = vsel %vm1104, %v1029, 0.0
    %v1291 = vadd.f32 %v1289, %v1290
    %v1292 = vsel %vm1104, %v1034, 0.0
    %v1293 = vadd.f32 %v1291, %v1292
    %v1294 = vsel %vm1104, %v1037, 0.0
    %v1295 = vadd.f32 %v1293, %v1294
    %v1296 = vsel %vm1104, %v1042, 0.0
    %v1297 = vadd.f32 %v1295, %v1296
    %v1298 = vsel %vm1104, %v1045, 0.0
    %v1299 = vadd.f32 %v1297, %v1298
    %v1300 = vsel %vm1104, %v1050, 0.0
    %v1301 = vadd.f32 %v1299, %v1300
    %v1302 = vsel %vm1104, %v1053, 0.0
    %v1303 = vadd.f32 %v1301, %v1302
    %v1304 = vsel %vm1104, %v1058, 0.0
    %v1305 = vadd.f32 %v1303, %v1304
    %v1306 = vsel %vm1104, %v1061, 0.0
    %v1307 = vadd.f32 %v1305, %v1306
    %v1308 = vsel %vm1104, %v1066, 0.0
    %v1309 = vadd.f32 %v1307, %v1308
    %v1310 = vsel %vm1104, %v1069, 0.0
    %v1311 = vadd.f32 %v1309, %v1310
    %v1312 = vsel %vm1104, %v1074, 0.0
    %v1313 = vadd.f32 %v1311, %v1312
    %v1314 = vsel %vm1104, %v1077, 0.0
    %v1315 = vadd.f32 %v1313, %v1314
    %v1316 = vsel %vm1104, %v1082, 0.0
    %v1317 = vadd.f32 %v1315, %v1316
    %v1318 = vsel %vm1104, %v1085, 0.0
    %v1319 = vadd.f32 %v1317, %v1318
    %v1320 = vsel %vm1104, %v1090, 0.0
    %v1321 = vadd.f32 %v1319, %v1320
    %v1322 = vsel %vm1104, %v1093, 0.0
    %v1323 = vadd.f32 %v1321, %v1322
    %v1324 = vsel %vm1104, %v1098, 0.0
    %v1325 = vadd.f32 %v1323, %v1324
    %v1326 = vsel %vm1104, %v1101, 0.0
    %v1327 = vadd.f32 %v1325, %v1326
    %v1328 = vrot.slane %v1327, 4
    %v1329 = vadd.f32 %v1327, %v1328
    %v1330 = vrot.slane %v1329, 2
    %v1331 = vadd.f32 %v1329, %v1330
    %v1332 = vrot.slane %v1331, 1
    %v1333 = vadd.f32 %v1331, %v1332
    %v1334 = vmul.f32 %v1333, 0.0012755102
    %v1335 = vmul.f32 %v658, %v658
    %v1336 = vmul.f32 %v661, %v661
    %v1337 = vmul.f32 %v666, %v666
    %v1338 = vmul.f32 %v669, %v669
    %v1339 = vmul.f32 %v674, %v674
    %v1340 = vmul.f32 %v677, %v677
    %v1341 = vmul.f32 %v682, %v682
    %v1342 = vmul.f32 %v685, %v685
    %v1343 = vmul.f32 %v690, %v690
    %v1344 = vmul.f32 %v693, %v693
    %v1345 = vmul.f32 %v698, %v698
    %v1346 = vmul.f32 %v701, %v701
    %v1347 = vmul.f32 %v706, %v706
    %v1348 = vmul.f32 %v709, %v709
    %v1349 = vmul.f32 %v714, %v714
    %v1350 = vmul.f32 %v717, %v717
    %v1351 = vmul.f32 %v722, %v722
    %v1352 = vmul.f32 %v725, %v725
    %v1353 = vmul.f32 %v730, %v730
    %v1354 = vmul.f32 %v733, %v733
    %v1355 = vmul.f32 %v738, %v738
    %v1356 = vmul.f32 %v741, %v741
    %v1357 = vmul.f32 %v746, %v746
    %v1358 = vmul.f32 %v749, %v749
    %v1359 = vmul.f32 %v754, %v754
    %v1360 = vmul.f32 %v757, %v757
    %v1361 = vmul.f32 %v762, %v762
    %v1362 = vmul.f32 %v765, %v765
    %v1363 = vmul.f32 %v770, %v770
    %v1364 = vmul.f32 %v773, %v773
    %v1365 = vmul.f32 %v778, %v778
    %v1366 = vmul.f32 %v781, %v781
    %v1367 = vmul.f32 %v786, %v786
    %v1368 = vmul.f32 %v789, %v789
    %v1369 = vmul.f32 %v794, %v794
    %v1370 = vmul.f32 %v797, %v797
    %v1371 = vmul.f32 %v802, %v802
    %v1372 = vmul.f32 %v805, %v805
    %v1373 = vmul.f32 %v810, %v810
    %v1374 = vmul.f32 %v813, %v813
    %v1375 = vmul.f32 %v818, %v818
    %v1376 = vmul.f32 %v821, %v821
    %v1377 = vmul.f32 %v826, %v826
    %v1378 = vmul.f32 %v829, %v829
    %v1379 = vmul.f32 %v834, %v834
    %v1380 = vmul.f32 %v837, %v837
    %v1381 = vmul.f32 %v842, %v842
    %v1382 = vmul.f32 %v845, %v845
    %v1383 = vmul.f32 %v850, %v850
    %v1384 = vmul.f32 %v853, %v853
    %v1385 = vmul.f32 %v858, %v858
    %v1386 = vmul.f32 %v861, %v861
    %v1387 = vmul.f32 %v866, %v866
    %v1388 = vmul.f32 %v869, %v869
    %v1389 = vmul.f32 %v874, %v874
    %v1390 = vmul.f32 %v877, %v877
    %v1391 = vmul.f32 %v882, %v882
    %v1392 = vmul.f32 %v885, %v885
    %v1393 = vmul.f32 %v890, %v890
    %v1394 = vmul.f32 %v893, %v893
    %v1395 = vmul.f32 %v898, %v898
    %v1396 = vmul.f32 %v901, %v901
    %v1397 = vmul.f32 %v906, %v906
    %v1398 = vmul.f32 %v909, %v909
    %v1399 = vmul.f32 %v914, %v914
    %v1400 = vmul.f32 %v917, %v917
    %v1401 = vmul.f32 %v922, %v922
    %v1402 = vmul.f32 %v925, %v925
    %v1403 = vmul.f32 %v930, %v930
    %v1404 = vmul.f32 %v933, %v933
    %v1405 = vmul.f32 %v938, %v938
    %v1406 = vmul.f32 %v941, %v941
    %v1407 = vmul.f32 %v946, %v946
    %v1408 = vmul.f32 %v949, %v949
    %v1409 = vmul.f32 %v954, %v954
    %v1410 = vmul.f32 %v957, %v957
    %v1411 = vmul.f32 %v962, %v962
    %v1412 = vmul.f32 %v965, %v965
    %v1413 = vmul.f32 %v970, %v970
    %v1414 = vmul.f32 %v973, %v973
    %v1415 = vmul.f32 %v978, %v978
    %v1416 = vmul.f32 %v981, %v981
    %v1417 = vmul.f32 %v986, %v986
    %v1418 = vmul.f32 %v989, %v989
    %v1419 = vmul.f32 %v994, %v994
    %v1420 = vmul.f32 %v997, %v997
    %v1421 = vmul.f32 %v1002, %v1002
    %v1422 = vmul.f32 %v1005, %v1005
    %v1423 = vmul.f32 %v1010, %v1010
    %v1424 = vmul.f32 %v1013, %v1013
    %v1425 = vmul.f32 %v1018, %v1018
    %v1426 = vmul.f32 %v1021, %v1021
    %v1427 = vmul.f32 %v1026, %v1026
    %v1428 = vmul.f32 %v1029, %v1029
    %v1429 = vmul.f32 %v1034, %v1034
    %v1430 = vmul.f32 %v1037, %v1037
    %v1431 = vmul.f32 %v1042, %v1042
    %v1432 = vmul.f32 %v1045, %v1045
    %v1433 = vmul.f32 %v1050, %v1050
    %v1434 = vmul.f32 %v1053, %v1053
    %v1435 = vmul.f32 %v1058, %v1058
    %v1436 = vmul.f32 %v1061, %v1061
    %v1437 = vmul.f32 %v1066, %v1066
    %v1438 = vmul.f32 %v1069, %v1069
    %v1439 = vmul.f32 %v1074, %v1074
    %v1440 = vmul.f32 %v1077, %v1077
    %v1441 = vmul.f32 %v1082, %v1082
    %v1442 = vmul.f32 %v1085, %v1085
    %v1443 = vmul.f32 %v1090, %v1090
    %v1444 = vmul.f32 %v1093, %v1093
    %v1445 = vmul.f32 %v1098, %v1098
    %v1446 = vmul.f32 %v1101, %v1101
    %v1447 = vsel %vm1104, %v1335, 0.0
    %v1448 = vsel %vm1104, %v1336, 0.0
    %v1449 = vadd.f32 %v1447, %v1448
    %v1450 = vsel %vm1104, %v1337, 0.0
    %v1451 = vadd.f32 %v1449, %v1450
    %v1452 = vsel %vm1104, %v1338, 0.0
    %v1453 = vadd.f32 %v1451, %v1452
    %v1454 = vsel %vm1104, %v1339, 0.0
    %v1455 = vadd.f32 %v1453, %v1454
    %v1456 = vsel %vm1104, %v1340, 0.0
    %v1457 = vadd.f32 %v1455, %v1456
    %v1458 = vsel %vm1104, %v1341, 0.0
    %v1459 = vadd.f32 %v1457, %v1458
    %v1460 = vsel %vm1104, %v1342, 0.0
    %v1461 = vadd.f32 %v1459, %v1460
    %v1462 = vsel %vm1104, %v1343, 0.0
    %v1463 = vadd.f32 %v1461, %v1462
    %v1464 = vsel %vm1104, %v1344, 0.0
    %v1465 = vadd.f32 %v1463, %v1464
    %v1466 = vsel %vm1104, %v1345, 0.0
    %v1467 = vadd.f32 %v1465, %v1466
    %v1468 = vsel %vm1104, %v1346, 0.0
    %v1469 = vadd.f32 %v1467, %v1468
    %v1470 = vsel %vm1104, %v1347, 0.0
    %v1471 = vadd.f32 %v1469, %v1470
    %v1472 = vsel %vm1104, %v1348, 0.0
    %v1473 = vadd.f32 %v1471, %v1472
    %v1474 = vsel %vm1104, %v1349, 0.0
    %v1475 = vadd.f32 %v1473, %v1474
    %v1476 = vsel %vm1104, %v1350, 0.0
    %v1477 = vadd.f32 %v1475, %v1476
    %v1478 = vsel %vm1104, %v1351, 0.0
    %v1479 = vadd.f32 %v1477, %v1478
    %v1480 = vsel %vm1104, %v1352, 0.0
    %v1481 = vadd.f32 %v1479, %v1480
    %v1482 = vsel %vm1104, %v1353, 0.0
    %v1483 = vadd.f32 %v1481, %v1482
    %v1484 = vsel %vm1104, %v1354, 0.0
    %v1485 = vadd.f32 %v1483, %v1484
    %v1486 = vsel %vm1104, %v1355, 0.0
    %v1487 = vadd.f32 %v1485, %v1486
    %v1488 = vsel %vm1104, %v1356, 0.0
    %v1489 = vadd.f32 %v1487, %v1488
    %v1490 = vsel %vm1104, %v1357, 0.0
    %v1491 = vadd.f32 %v1489, %v1490
    %v1492 = vsel %vm1104, %v1358, 0.0
    %v1493 = vadd.f32 %v1491, %v1492
    %v1494 = vsel %vm1104, %v1359, 0.0
    %v1495 = vadd.f32 %v1493, %v1494
    %v1496 = vsel %vm1104, %v1360, 0.0
    %v1497 = vadd.f32 %v1495, %v1496
    %v1498 = vsel %vm1104, %v1361, 0.0
    %v1499 = vadd.f32 %v1497, %v1498
    %v1500 = vsel %vm1104, %v1362, 0.0
    %v1501 = vadd.f32 %v1499, %v1500
    %v1502 = vsel %vm1104, %v1363, 0.0
    %v1503 = vadd.f32 %v1501, %v1502
    %v1504 = vsel %vm1104, %v1364, 0.0
    %v1505 = vadd.f32 %v1503, %v1504
    %v1506 = vsel %vm1104, %v1365, 0.0
    %v1507 = vadd.f32 %v1505, %v1506
    %v1508 = vsel %vm1104, %v1366, 0.0
    %v1509 = vadd.f32 %v1507, %v1508
    %v1510 = vsel %vm1104, %v1367, 0.0
    %v1511 = vadd.f32 %v1509, %v1510
    %v1512 = vsel %vm1104, %v1368, 0.0
    %v1513 = vadd.f32 %v1511, %v1512
    %v1514 = vsel %vm1104, %v1369, 0.0
    %v1515 = vadd.f32 %v1513, %v1514
    %v1516 = vsel %vm1104, %v1370, 0.0
    %v1517 = vadd.f32 %v1515, %v1516
    %v1518 = vsel %vm1104, %v1371, 0.0
    %v1519 = vadd.f32 %v1517, %v1518
    %v1520 = vsel %vm1104, %v1372, 0.0
    %v1521 = vadd.f32 %v1519, %v1520
    %v1522 = vsel %vm1104, %v1373, 0.0
    %v1523 = vadd.f32 %v1521, %v1522
    %v1524 = vsel %vm1104, %v1374, 0.0
    %v1525 = vadd.f32 %v1523, %v1524
    %v1526 = vsel %vm1104, %v1375, 0.0
    %v1527 = vadd.f32 %v1525, %v1526
    %v1528 = vsel %vm1104, %v1376, 0.0
    %v1529 = vadd.f32 %v1527, %v1528
    %v1530 = vsel %vm1104, %v1377, 0.0
    %v1531 = vadd.f32 %v1529, %v1530
    %v1532 = vsel %vm1104, %v1378, 0.0
    %v1533 = vadd.f32 %v1531, %v1532
    %v1534 = vsel %vm1104, %v1379, 0.0
    %v1535 = vadd.f32 %v1533, %v1534
    %v1536 = vsel %vm1104, %v1380, 0.0
    %v1537 = vadd.f32 %v1535, %v1536
    %v1538 = vsel %vm1104, %v1381, 0.0
    %v1539 = vadd.f32 %v1537, %v1538
    %v1540 = vsel %vm1104, %v1382, 0.0
    %v1541 = vadd.f32 %v1539, %v1540
    %v1542 = vsel %vm1104, %v1383, 0.0
    %v1543 = vadd.f32 %v1541, %v1542
    %v1544 = vsel %vm1104, %v1384, 0.0
    %v1545 = vadd.f32 %v1543, %v1544
    %v1546 = vsel %vm1104, %v1385, 0.0
    %v1547 = vadd.f32 %v1545, %v1546
    %v1548 = vsel %vm1104, %v1386, 0.0
    %v1549 = vadd.f32 %v1547, %v1548
    %v1550 = vsel %vm1104, %v1387, 0.0
    %v1551 = vadd.f32 %v1549, %v1550
    %v1552 = vsel %vm1104, %v1388, 0.0
    %v1553 = vadd.f32 %v1551, %v1552
    %v1554 = vsel %vm1104, %v1389, 0.0
    %v1555 = vadd.f32 %v1553, %v1554
    %v1556 = vsel %vm1104, %v1390, 0.0
    %v1557 = vadd.f32 %v1555, %v1556
    %v1558 = vsel %vm1104, %v1391, 0.0
    %v1559 = vadd.f32 %v1557, %v1558
    %v1560 = vsel %vm1104, %v1392, 0.0
    %v1561 = vadd.f32 %v1559, %v1560
    %v1562 = vsel %vm1104, %v1393, 0.0
    %v1563 = vadd.f32 %v1561, %v1562
    %v1564 = vsel %vm1104, %v1394, 0.0
    %v1565 = vadd.f32 %v1563, %v1564
    %v1566 = vsel %vm1104, %v1395, 0.0
    %v1567 = vadd.f32 %v1565, %v1566
    %v1568 = vsel %vm1104, %v1396, 0.0
    %v1569 = vadd.f32 %v1567, %v1568
    %v1570 = vsel %vm1104, %v1397, 0.0
    %v1571 = vadd.f32 %v1569, %v1570
    %v1572 = vsel %vm1104, %v1398, 0.0
    %v1573 = vadd.f32 %v1571, %v1572
    %v1574 = vsel %vm1104, %v1399, 0.0
    %v1575 = vadd.f32 %v1573, %v1574
    %v1576 = vsel %vm1104, %v1400, 0.0
    %v1577 = vadd.f32 %v1575, %v1576
    %v1578 = vsel %vm1104, %v1401, 0.0
    %v1579 = vadd.f32 %v1577, %v1578
    %v1580 = vsel %vm1104, %v1402, 0.0
    %v1581 = vadd.f32 %v1579, %v1580
    %v1582 = vsel %vm1104, %v1403, 0.0
    %v1583 = vadd.f32 %v1581, %v1582
    %v1584 = vsel %vm1104, %v1404, 0.0
    %v1585 = vadd.f32 %v1583, %v1584
    %v1586 = vsel %vm1104, %v1405, 0.0
    %v1587 = vadd.f32 %v1585, %v1586
    %v1588 = vsel %vm1104, %v1406, 0.0
    %v1589 = vadd.f32 %v1587, %v1588
    %v1590 = vsel %vm1104, %v1407, 0.0
    %v1591 = vadd.f32 %v1589, %v1590
    %v1592 = vsel %vm1104, %v1408, 0.0
    %v1593 = vadd.f32 %v1591, %v1592
    %v1594 = vsel %vm1104, %v1409, 0.0
    %v1595 = vadd.f32 %v1593, %v1594
    %v1596 = vsel %vm1104, %v1410, 0.0
    %v1597 = vadd.f32 %v1595, %v1596
    %v1598 = vsel %vm1104, %v1411, 0.0
    %v1599 = vadd.f32 %v1597, %v1598
    %v1600 = vsel %vm1104, %v1412, 0.0
    %v1601 = vadd.f32 %v1599, %v1600
    %v1602 = vsel %vm1104, %v1413, 0.0
    %v1603 = vadd.f32 %v1601, %v1602
    %v1604 = vsel %vm1104, %v1414, 0.0
    %v1605 = vadd.f32 %v1603, %v1604
    %v1606 = vsel %vm1104, %v1415, 0.0
    %v1607 = vadd.f32 %v1605, %v1606
    %v1608 = vsel %vm1104, %v1416, 0.0
    %v1609 = vadd.f32 %v1607, %v1608
    %v1610 = vsel %vm1104, %v1417, 0.0
    %v1611 = vadd.f32 %v1609, %v1610
    %v1612 = vsel %vm1104, %v1418, 0.0
    %v1613 = vadd.f32 %v1611, %v1612
    %v1614 = vsel %vm1104, %v1419, 0.0
    %v1615 = vadd.f32 %v1613, %v1614
    %v1616 = vsel %vm1104, %v1420, 0.0
    %v1617 = vadd.f32 %v1615, %v1616
    %v1618 = vsel %vm1104, %v1421, 0.0
    %v1619 = vadd.f32 %v1617, %v1618
    %v1620 = vsel %vm1104, %v1422, 0.0
    %v1621 = vadd.f32 %v1619, %v1620
    %v1622 = vsel %vm1104, %v1423, 0.0
    %v1623 = vadd.f32 %v1621, %v1622
    %v1624 = vsel %vm1104, %v1424, 0.0
    %v1625 = vadd.f32 %v1623, %v1624
    %v1626 = vsel %vm1104, %v1425, 0.0
    %v1627 = vadd.f32 %v1625, %v1626
    %v1628 = vsel %vm1104, %v1426, 0.0
    %v1629 = vadd.f32 %v1627, %v1628
    %v1630 = vsel %vm1104, %v1427, 0.0
    %v1631 = vadd.f32 %v1629, %v1630
    %v1632 = vsel %vm1104, %v1428, 0.0
    %v1633 = vadd.f32 %v1631, %v1632
    %v1634 = vsel %vm1104, %v1429, 0.0
    %v1635 = vadd.f32 %v1633, %v1634
    %v1636 = vsel %vm1104, %v1430, 0.0
    %v1637 = vadd.f32 %v1635, %v1636
    %v1638 = vsel %vm1104, %v1431, 0.0
    %v1639 = vadd.f32 %v1637, %v1638
    %v1640 = vsel %vm1104, %v1432, 0.0
    %v1641 = vadd.f32 %v1639, %v1640
    %v1642 = vsel %vm1104, %v1433, 0.0
    %v1643 = vadd.f32 %v1641, %v1642
    %v1644 = vsel %vm1104, %v1434, 0.0
    %v1645 = vadd.f32 %v1643, %v1644
    %v1646 = vsel %vm1104, %v1435, 0.0
    %v1647 = vadd.f32 %v1645, %v1646
    %v1648 = vsel %vm1104, %v1436, 0.0
    %v1649 = vadd.f32 %v1647, %v1648
    %v1650 = vsel %vm1104, %v1437, 0.0
    %v1651 = vadd.f32 %v1649, %v1650
    %v1652 = vsel %vm1104, %v1438, 0.0
    %v1653 = vadd.f32 %v1651, %v1652
    %v1654 = vsel %vm1104, %v1439, 0.0
    %v1655 = vadd.f32 %v1653, %v1654
    %v1656 = vsel %vm1104, %v1440, 0.0
    %v1657 = vadd.f32 %v1655, %v1656
    %v1658 = vsel %vm1104, %v1441, 0.0
    %v1659 = vadd.f32 %v1657, %v1658
    %v1660 = vsel %vm1104, %v1442, 0.0
    %v1661 = vadd.f32 %v1659, %v1660
    %v1662 = vsel %vm1104, %v1443, 0.0
    %v1663 = vadd.f32 %v1661, %v1662
    %v1664 = vsel %vm1104, %v1444, 0.0
    %v1665 = vadd.f32 %v1663, %v1664
    %v1666 = vsel %vm1104, %v1445, 0.0
    %v1667 = vadd.f32 %v1665, %v1666
    %v1668 = vsel %vm1104, %v1446, 0.0
    %v1669 = vadd.f32 %v1667, %v1668
    %v1670 = vrot.slane %v1669, 4
    %v1671 = vadd.f32 %v1669, %v1670
    %v1672 = vrot.slane %v1671, 2
    %v1673 = vadd.f32 %v1671, %v1672
    %v1674 = vrot.slane %v1673, 1
    %v1675 = vadd.f32 %v1673, %v1674
    %v1676 = vmul.f32 %v1675, 0.0012755102
    %v1677 = vmul.f32 %v1334, %v1334
    %v1678 = vsub.f32 %v1676, %v1677
    %v1679 = vmax.f32 %v1678, 0.0
    %v1680 = vld [vmem:[%s2] sm:$0x1]
    %v1681 = vsub.f32 %v658, %v1334
    %v1682 = vsub.f32 %v661, %v1334
    %v1683 = vsub.f32 %v666, %v1334
    %v1684 = vsub.f32 %v669, %v1334
    %v1685 = vsub.f32 %v674, %v1334
    %v1686 = vsub.f32 %v677, %v1334
    %v1687 = vsub.f32 %v682, %v1334
    %v1688 = vsub.f32 %v685, %v1334
    %v1689 = vsub.f32 %v690, %v1334
    %v1690 = vsub.f32 %v693, %v1334
    %v1691 = vsub.f32 %v698, %v1334
    %v1692 = vsub.f32 %v701, %v1334
    %v1693 = vsub.f32 %v706, %v1334
    %v1694 = vsub.f32 %v709, %v1334
    %v1695 = vsub.f32 %v714, %v1334
    %v1696 = vsub.f32 %v717, %v1334
    %v1697 = vsub.f32 %v722, %v1334
    %v1698 = vsub.f32 %v725, %v1334
    %v1699 = vsub.f32 %v730, %v1334
    %v1700 = vsub.f32 %v733, %v1334
    %v1701 = vsub.f32 %v738, %v1334
    %v1702 = vsub.f32 %v741, %v1334
    %v1703 = vsub.f32 %v746, %v1334
    %v1704 = vsub.f32 %v749, %v1334
    %v1705 = vsub.f32 %v754, %v1334
    %v1706 = vsub.f32 %v757, %v1334
    %v1707 = vsub.f32 %v762, %v1334
    %v1708 = vsub.f32 %v765, %v1334
    %v1709 = vsub.f32 %v770, %v1334
    %v1710 = vsub.f32 %v773, %v1334
    %v1711 = vsub.f32 %v778, %v1334
    %v1712 = vsub.f32 %v781, %v1334
    %v1713 = vsub.f32 %v786, %v1334
    %v1714 = vsub.f32 %v789, %v1334
    %v1715 = vsub.f32 %v794, %v1334
    %v1716 = vsub.f32 %v797, %v1334
    %v1717 = vsub.f32 %v802, %v1334
    %v1718 = vsub.f32 %v805, %v1334
    %v1719 = vsub.f32 %v810, %v1334
    %v1720 = vsub.f32 %v813, %v1334
    %v1721 = vsub.f32 %v818, %v1334
    %v1722 = vsub.f32 %v821, %v1334
    %v1723 = vsub.f32 %v826, %v1334
    %v1724 = vsub.f32 %v829, %v1334
    %v1725 = vsub.f32 %v834, %v1334
    %v1726 = vsub.f32 %v837, %v1334
    %v1727 = vsub.f32 %v842, %v1334
    %v1728 = vsub.f32 %v845, %v1334
    %v1729 = vsub.f32 %v850, %v1334
    %v1730 = vsub.f32 %v853, %v1334
    %v1731 = vsub.f32 %v858, %v1334
    %v1732 = vsub.f32 %v861, %v1334
    %v1733 = vsub.f32 %v866, %v1334
    %v1734 = vsub.f32 %v869, %v1334
    %v1735 = vsub.f32 %v874, %v1334
    %v1736 = vsub.f32 %v877, %v1334
    %v1737 = vsub.f32 %v882, %v1334
    %v1738 = vsub.f32 %v885, %v1334
    %v1739 = vsub.f32 %v890, %v1334
    %v1740 = vsub.f32 %v893, %v1334
    %v1741 = vsub.f32 %v898, %v1334
    %v1742 = vsub.f32 %v901, %v1334
    %v1743 = vsub.f32 %v906, %v1334
    %v1744 = vsub.f32 %v909, %v1334
    %v1745 = vsub.f32 %v914, %v1334
    %v1746 = vsub.f32 %v917, %v1334
    %v1747 = vsub.f32 %v922, %v1334
    %v1748 = vsub.f32 %v925, %v1334
    %v1749 = vsub.f32 %v930, %v1334
    %v1750 = vsub.f32 %v933, %v1334
    %v1751 = vsub.f32 %v938, %v1334
    %v1752 = vsub.f32 %v941, %v1334
    %v1753 = vsub.f32 %v946, %v1334
    %v1754 = vsub.f32 %v949, %v1334
    %v1755 = vsub.f32 %v954, %v1334
    %v1756 = vsub.f32 %v957, %v1334
    %v1757 = vsub.f32 %v962, %v1334
    %v1758 = vsub.f32 %v965, %v1334
    %v1759 = vsub.f32 %v970, %v1334
    %v1760 = vsub.f32 %v973, %v1334
    %v1761 = vsub.f32 %v978, %v1334
    %v1762 = vsub.f32 %v981, %v1334
    %v1763 = vsub.f32 %v986, %v1334
    %v1764 = vsub.f32 %v989, %v1334
    %v1765 = vsub.f32 %v994, %v1334
    %v1766 = vsub.f32 %v997, %v1334
    %v1767 = vsub.f32 %v1002, %v1334
    %v1768 = vsub.f32 %v1005, %v1334
    %v1769 = vsub.f32 %v1010, %v1334
    %v1770 = vsub.f32 %v1013, %v1334
    %v1771 = vsub.f32 %v1018, %v1334
    %v1772 = vsub.f32 %v1021, %v1334
    %v1773 = vsub.f32 %v1026, %v1334
    %v1774 = vsub.f32 %v1029, %v1334
    %v1775 = vsub.f32 %v1034, %v1334
    %v1776 = vsub.f32 %v1037, %v1334
    %v1777 = vsub.f32 %v1042, %v1334
    %v1778 = vsub.f32 %v1045, %v1334
    %v1779 = vsub.f32 %v1050, %v1334
    %v1780 = vsub.f32 %v1053, %v1334
    %v1781 = vsub.f32 %v1058, %v1334
    %v1782 = vsub.f32 %v1061, %v1334
    %v1783 = vsub.f32 %v1066, %v1334
    %v1784 = vsub.f32 %v1069, %v1334
    %v1785 = vsub.f32 %v1074, %v1334
    %v1786 = vsub.f32 %v1077, %v1334
    %v1787 = vsub.f32 %v1082, %v1334
    %v1788 = vsub.f32 %v1085, %v1334
    %v1789 = vsub.f32 %v1090, %v1334
    %v1790 = vsub.f32 %v1093, %v1334
    %v1791 = vsub.f32 %v1098, %v1334
    %v1792 = vsub.f32 %v1101, %v1334
    %v1794 = vlaneseq
    %v1795 = vshrl.u32 %v1794, 7
    %v1796 = vsub.s32 0, %v1795
    %v1797 = vrot.slane %v1680, %v1796
    %v1799 = vmul.f32 %v1797, %v1681
    %v1800 = vmul.f32 %v1797, %v1682
    %v1801 = vmul.f32 %v1797, %v1683
    %v1802 = vmul.f32 %v1797, %v1684
    %v1803 = vmul.f32 %v1797, %v1685
    %v1804 = vmul.f32 %v1797, %v1686
    %v1805 = vmul.f32 %v1797, %v1687
    %v1806 = vmul.f32 %v1797, %v1688
    %v1807 = vmul.f32 %v1797, %v1689
    %v1808 = vmul.f32 %v1797, %v1690
    %v1809 = vmul.f32 %v1797, %v1691
    %v1810 = vmul.f32 %v1797, %v1692
    %v1811 = vmul.f32 %v1797, %v1693
    %v1812 = vmul.f32 %v1797, %v1694
    %v1813 = vmul.f32 %v1797, %v1695
    %v1814 = vmul.f32 %v1797, %v1696
    %v1815 = vmul.f32 %v1797, %v1697
    %v1816 = vmul.f32 %v1797, %v1698
    %v1817 = vmul.f32 %v1797, %v1699
    %v1818 = vmul.f32 %v1797, %v1700
    %v1819 = vmul.f32 %v1797, %v1701
    %v1820 = vmul.f32 %v1797, %v1702
    %v1821 = vmul.f32 %v1797, %v1703
    %v1822 = vmul.f32 %v1797, %v1704
    %v1823 = vmul.f32 %v1797, %v1705
    %v1824 = vmul.f32 %v1797, %v1706
    %v1825 = vmul.f32 %v1797, %v1707
    %v1826 = vmul.f32 %v1797, %v1708
    %v1827 = vmul.f32 %v1797, %v1709
    %v1828 = vmul.f32 %v1797, %v1710
    %v1829 = vmul.f32 %v1797, %v1711
    %v1830 = vmul.f32 %v1797, %v1712
    %v1831 = vmul.f32 %v1797, %v1713
    %v1832 = vmul.f32 %v1797, %v1714
    %v1833 = vmul.f32 %v1797, %v1715
    %v1834 = vmul.f32 %v1797, %v1716
    %v1835 = vmul.f32 %v1797, %v1717
    %v1836 = vmul.f32 %v1797, %v1718
    %v1837 = vmul.f32 %v1797, %v1719
    %v1838 = vmul.f32 %v1797, %v1720
    %v1839 = vmul.f32 %v1797, %v1721
    %v1840 = vmul.f32 %v1797, %v1722
    %v1841 = vmul.f32 %v1797, %v1723
    %v1842 = vmul.f32 %v1797, %v1724
    %v1843 = vmul.f32 %v1797, %v1725
    %v1844 = vmul.f32 %v1797, %v1726
    %v1845 = vmul.f32 %v1797, %v1727
    %v1846 = vmul.f32 %v1797, %v1728
    %v1847 = vmul.f32 %v1797, %v1729
    %v1848 = vmul.f32 %v1797, %v1730
    %v1849 = vmul.f32 %v1797, %v1731
    %v1850 = vmul.f32 %v1797, %v1732
    %v1851 = vmul.f32 %v1797, %v1733
    %v1852 = vmul.f32 %v1797, %v1734
    %v1853 = vmul.f32 %v1797, %v1735
    %v1854 = vmul.f32 %v1797, %v1736
    %v1855 = vmul.f32 %v1797, %v1737
    %v1856 = vmul.f32 %v1797, %v1738
    %v1857 = vmul.f32 %v1797, %v1739
    %v1858 = vmul.f32 %v1797, %v1740
    %v1859 = vmul.f32 %v1797, %v1741
    %v1860 = vmul.f32 %v1797, %v1742
    %v1861 = vmul.f32 %v1797, %v1743
    %v1862 = vmul.f32 %v1797, %v1744
    %v1863 = vmul.f32 %v1797, %v1745
    %v1864 = vmul.f32 %v1797, %v1746
    %v1865 = vmul.f32 %v1797, %v1747
    %v1866 = vmul.f32 %v1797, %v1748
    %v1867 = vmul.f32 %v1797, %v1749
    %v1868 = vmul.f32 %v1797, %v1750
    %v1869 = vmul.f32 %v1797, %v1751
    %v1870 = vmul.f32 %v1797, %v1752
    %v1871 = vmul.f32 %v1797, %v1753
    %v1872 = vmul.f32 %v1797, %v1754
    %v1873 = vmul.f32 %v1797, %v1755
    %v1874 = vmul.f32 %v1797, %v1756
    %v1875 = vmul.f32 %v1797, %v1757
    %v1876 = vmul.f32 %v1797, %v1758
    %v1877 = vmul.f32 %v1797, %v1759
    %v1878 = vmul.f32 %v1797, %v1760
    %v1879 = vmul.f32 %v1797, %v1761
    %v1880 = vmul.f32 %v1797, %v1762
    %v1881 = vmul.f32 %v1797, %v1763
    %v1882 = vmul.f32 %v1797, %v1764
    %v1883 = vmul.f32 %v1797, %v1765
    %v1884 = vmul.f32 %v1797, %v1766
    %v1885 = vmul.f32 %v1797, %v1767
    %v1886 = vmul.f32 %v1797, %v1768
    %v1887 = vmul.f32 %v1797, %v1769
    %v1888 = vmul.f32 %v1797, %v1770
    %v1889 = vmul.f32 %v1797, %v1771
    %v1890 = vmul.f32 %v1797, %v1772
    %v1891 = vmul.f32 %v1797, %v1773
    %v1892 = vmul.f32 %v1797, %v1774
    %v1893 = vmul.f32 %v1797, %v1775
    %v1894 = vmul.f32 %v1797, %v1776
    %v1895 = vmul.f32 %v1797, %v1777
    %v1896 = vmul.f32 %v1797, %v1778
    %v1897 = vmul.f32 %v1797, %v1779
    %v1898 = vmul.f32 %v1797, %v1780
    %v1899 = vmul.f32 %v1797, %v1781
    %v1900 = vmul.f32 %v1797, %v1782
    %v1901 = vmul.f32 %v1797, %v1783
    %v1902 = vmul.f32 %v1797, %v1784
    %v1903 = vmul.f32 %v1797, %v1785
    %v1904 = vmul.f32 %v1797, %v1786
    %v1905 = vmul.f32 %v1797, %v1787
    %v1906 = vmul.f32 %v1797, %v1788
    %v1907 = vmul.f32 %v1797, %v1789
    %v1908 = vmul.f32 %v1797, %v1790
    %v1909 = vmul.f32 %v1797, %v1791
    %v1910 = vmul.f32 %v1797, %v1792
    %v1911 = vadd.f32 %v1679, 1e-05
    %v1912 = vrsqrt.pop %v1911
    %v1913 = vmul.f32 %v1799, %v1912
    %v1914 = vmul.f32 %v1800, %v1912
    %v1915 = vmul.f32 %v1801, %v1912
    %v1916 = vmul.f32 %v1802, %v1912
    %v1917 = vmul.f32 %v1803, %v1912
    %v1918 = vmul.f32 %v1804, %v1912
    %v1919 = vmul.f32 %v1805, %v1912
    %v1920 = vmul.f32 %v1806, %v1912
    %v1921 = vmul.f32 %v1807, %v1912
    %v1922 = vmul.f32 %v1808, %v1912
    %v1923 = vmul.f32 %v1809, %v1912
    %v1924 = vmul.f32 %v1810, %v1912
    %v1925 = vmul.f32 %v1811, %v1912
    %v1926 = vmul.f32 %v1812, %v1912
    %v1927 = vmul.f32 %v1813, %v1912
    %v1928 = vmul.f32 %v1814, %v1912
    %v1929 = vmul.f32 %v1815, %v1912
    %v1930 = vmul.f32 %v1816, %v1912
    %v1931 = vmul.f32 %v1817, %v1912
    %v1932 = vmul.f32 %v1818, %v1912
    %v1933 = vmul.f32 %v1819, %v1912
    %v1934 = vmul.f32 %v1820, %v1912
    %v1935 = vmul.f32 %v1821, %v1912
    %v1936 = vmul.f32 %v1822, %v1912
    %v1937 = vmul.f32 %v1823, %v1912
    %v1938 = vmul.f32 %v1824, %v1912
    %v1939 = vmul.f32 %v1825, %v1912
    %v1940 = vmul.f32 %v1826, %v1912
    %v1941 = vmul.f32 %v1827, %v1912
    %v1942 = vmul.f32 %v1828, %v1912
    %v1943 = vmul.f32 %v1829, %v1912
    %v1944 = vmul.f32 %v1830, %v1912
    %v1945 = vmul.f32 %v1831, %v1912
    %v1946 = vmul.f32 %v1832, %v1912
    %v1947 = vmul.f32 %v1833, %v1912
    %v1948 = vmul.f32 %v1834, %v1912
    %v1949 = vmul.f32 %v1835, %v1912
    %v1950 = vmul.f32 %v1836, %v1912
    %v1951 = vmul.f32 %v1837, %v1912
    %v1952 = vmul.f32 %v1838, %v1912
    %v1953 = vmul.f32 %v1839, %v1912
    %v1954 = vmul.f32 %v1840, %v1912
    %v1955 = vmul.f32 %v1841, %v1912
    %v1956 = vmul.f32 %v1842, %v1912
    %v1957 = vmul.f32 %v1843, %v1912
    %v1958 = vmul.f32 %v1844, %v1912
    %v1959 = vmul.f32 %v1845, %v1912
    %v1960 = vmul.f32 %v1846, %v1912
    %v1961 = vmul.f32 %v1847, %v1912
    %v1962 = vmul.f32 %v1848, %v1912
    %v1963 = vmul.f32 %v1849, %v1912
    %v1964 = vmul.f32 %v1850, %v1912
    %v1965 = vmul.f32 %v1851, %v1912
    %v1966 = vmul.f32 %v1852, %v1912
    %v1967 = vmul.f32 %v1853, %v1912
    %v1968 = vmul.f32 %v1854, %v1912
    %v1969 = vmul.f32 %v1855, %v1912
    %v1970 = vmul.f32 %v1856, %v1912
    %v1971 = vmul.f32 %v1857, %v1912
    %v1972 = vmul.f32 %v1858, %v1912
    %v1973 = vmul.f32 %v1859, %v1912
    %v1974 = vmul.f32 %v1860, %v1912
    %v1975 = vmul.f32 %v1861, %v1912
    %v1976 = vmul.f32 %v1862, %v1912
    %v1977 = vmul.f32 %v1863, %v1912
    %v1978 = vmul.f32 %v1864, %v1912
    %v1979 = vmul.f32 %v1865, %v1912
    %v1980 = vmul.f32 %v1866, %v1912
    %v1981 = vmul.f32 %v1867, %v1912
    %v1982 = vmul.f32 %v1868, %v1912
    %v1983 = vmul.f32 %v1869, %v1912
    %v1984 = vmul.f32 %v1870, %v1912
    %v1985 = vmul.f32 %v1871, %v1912
    %v1986 = vmul.f32 %v1872, %v1912
    %v1987 = vmul.f32 %v1873, %v1912
    %v1988 = vmul.f32 %v1874, %v1912
    %v1989 = vmul.f32 %v1875, %v1912
    %v1990 = vmul.f32 %v1876, %v1912
    %v1991 = vmul.f32 %v1877, %v1912
    %v1992 = vmul.f32 %v1878, %v1912
    %v1993 = vmul.f32 %v1879, %v1912
    %v1994 = vmul.f32 %v1880, %v1912
    %v1995 = vmul.f32 %v1881, %v1912
    %v1996 = vmul.f32 %v1882, %v1912
    %v1997 = vmul.f32 %v1883, %v1912
    %v1998 = vmul.f32 %v1884, %v1912
    %v1999 = vmul.f32 %v1885, %v1912
    %v2000 = vmul.f32 %v1886, %v1912
    %v2001 = vmul.f32 %v1887, %v1912
    %v2002 = vmul.f32 %v1888, %v1912
    %v2003 = vmul.f32 %v1889, %v1912
    %v2004 = vmul.f32 %v1890, %v1912
    %v2005 = vmul.f32 %v1891, %v1912
    %v2006 = vmul.f32 %v1892, %v1912
    %v2007 = vmul.f32 %v1893, %v1912
    %v2008 = vmul.f32 %v1894, %v1912
    %v2009 = vmul.f32 %v1895, %v1912
    %v2010 = vmul.f32 %v1896, %v1912
    %v2011 = vmul.f32 %v1897, %v1912
    %v2012 = vmul.f32 %v1898, %v1912
    %v2013 = vmul.f32 %v1899, %v1912
    %v2014 = vmul.f32 %v1900, %v1912
    %v2015 = vmul.f32 %v1901, %v1912
    %v2016 = vmul.f32 %v1902, %v1912
    %v2017 = vmul.f32 %v1903, %v1912
    %v2018 = vmul.f32 %v1904, %v1912
    %v2019 = vmul.f32 %v1905, %v1912
    %v2020 = vmul.f32 %v1906, %v1912
    %v2021 = vmul.f32 %v1907, %v1912
    %v2022 = vmul.f32 %v1908, %v1912
    %v2023 = vmul.f32 %v1909, %v1912
    %v2024 = vmul.f32 %v1910, %v1912
    %v2025 = vld [vmem:[%s3] sm:$0x1]
    %v2027 = vlaneseq
    %v2028 = vshrl.u32 %v2027, 7
    %v2029 = vsub.s32 0, %v2028
    %v2030 = vrot.slane %v2025, %v2029
    %v2032 = vadd.f32 %v1913, %v2030
    %v2033 = vadd.f32 %v1914, %v2030
    %v2034 = vadd.f32 %v1915, %v2030
    %v2035 = vadd.f32 %v1916, %v2030
    %v2036 = vadd.f32 %v1917, %v2030
    %v2037 = vadd.f32 %v1918, %v2030
    %v2038 = vadd.f32 %v1919, %v2030
    %v2039 = vadd.f32 %v1920, %v2030
    %v2040 = vadd.f32 %v1921, %v2030
    %v2041 = vadd.f32 %v1922, %v2030
    %v2042 = vadd.f32 %v1923, %v2030
    %v2043 = vadd.f32 %v1924, %v2030
    %v2044 = vadd.f32 %v1925, %v2030
    %v2045 = vadd.f32 %v1926, %v2030
    %v2046 = vadd.f32 %v1927, %v2030
    %v2047 = vadd.f32 %v1928, %v2030
    %v2048 = vadd.f32 %v1929, %v2030
    %v2049 = vadd.f32 %v1930, %v2030
    %v2050 = vadd.f32 %v1931, %v2030
    %v2051 = vadd.f32 %v1932, %v2030
    %v2052 = vadd.f32 %v1933, %v2030
    %v2053 = vadd.f32 %v1934, %v2030
    %v2054 = vadd.f32 %v1935, %v2030
    %v2055 = vadd.f32 %v1936, %v2030
    %v2056 = vadd.f32 %v1937, %v2030
    %v2057 = vadd.f32 %v1938, %v2030
    %v2058 = vadd.f32 %v1939, %v2030
    %v2059 = vadd.f32 %v1940, %v2030
    %v2060 = vadd.f32 %v1941, %v2030
    %v2061 = vadd.f32 %v1942, %v2030
    %v2062 = vadd.f32 %v1943, %v2030
    %v2063 = vadd.f32 %v1944, %v2030
    %v2064 = vadd.f32 %v1945, %v2030
    %v2065 = vadd.f32 %v1946, %v2030
    %v2066 = vadd.f32 %v1947, %v2030
    %v2067 = vadd.f32 %v1948, %v2030
    %v2068 = vadd.f32 %v1949, %v2030
    %v2069 = vadd.f32 %v1950, %v2030
    %v2070 = vadd.f32 %v1951, %v2030
    %v2071 = vadd.f32 %v1952, %v2030
    %v2072 = vadd.f32 %v1953, %v2030
    %v2073 = vadd.f32 %v1954, %v2030
    %v2074 = vadd.f32 %v1955, %v2030
    %v2075 = vadd.f32 %v1956, %v2030
    %v2076 = vadd.f32 %v1957, %v2030
    %v2077 = vadd.f32 %v1958, %v2030
    %v2078 = vadd.f32 %v1959, %v2030
    %v2079 = vadd.f32 %v1960, %v2030
    %v2080 = vadd.f32 %v1961, %v2030
    %v2081 = vadd.f32 %v1962, %v2030
    %v2082 = vadd.f32 %v1963, %v2030
    %v2083 = vadd.f32 %v1964, %v2030
    %v2084 = vadd.f32 %v1965, %v2030
    %v2085 = vadd.f32 %v1966, %v2030
    %v2086 = vadd.f32 %v1967, %v2030
    %v2087 = vadd.f32 %v1968, %v2030
    %v2088 = vadd.f32 %v1969, %v2030
    %v2089 = vadd.f32 %v1970, %v2030
    %v2090 = vadd.f32 %v1971, %v2030
    %v2091 = vadd.f32 %v1972, %v2030
    %v2092 = vadd.f32 %v1973, %v2030
    %v2093 = vadd.f32 %v1974, %v2030
    %v2094 = vadd.f32 %v1975, %v2030
    %v2095 = vadd.f32 %v1976, %v2030
    %v2096 = vadd.f32 %v1977, %v2030
    %v2097 = vadd.f32 %v1978, %v2030
    %v2098 = vadd.f32 %v1979, %v2030
    %v2099 = vadd.f32 %v1980, %v2030
    %v2100 = vadd.f32 %v1981, %v2030
    %v2101 = vadd.f32 %v1982, %v2030
    %v2102 = vadd.f32 %v1983, %v2030
    %v2103 = vadd.f32 %v1984, %v2030
    %v2104 = vadd.f32 %v1985, %v2030
    %v2105 = vadd.f32 %v1986, %v2030
    %v2106 = vadd.f32 %v1987, %v2030
    %v2107 = vadd.f32 %v1988, %v2030
    %v2108 = vadd.f32 %v1989, %v2030
    %v2109 = vadd.f32 %v1990, %v2030
    %v2110 = vadd.f32 %v1991, %v2030
    %v2111 = vadd.f32 %v1992, %v2030
    %v2112 = vadd.f32 %v1993, %v2030
    %v2113 = vadd.f32 %v1994, %v2030
    %v2114 = vadd.f32 %v1995, %v2030
    %v2115 = vadd.f32 %v1996, %v2030
    %v2116 = vadd.f32 %v1997, %v2030
    %v2117 = vadd.f32 %v1998, %v2030
    %v2118 = vadd.f32 %v1999, %v2030
    %v2119 = vadd.f32 %v2000, %v2030
    %v2120 = vadd.f32 %v2001, %v2030
    %v2121 = vadd.f32 %v2002, %v2030
    %v2122 = vadd.f32 %v2003, %v2030
    %v2123 = vadd.f32 %v2004, %v2030
    %v2124 = vadd.f32 %v2005, %v2030
    %v2125 = vadd.f32 %v2006, %v2030
    %v2126 = vadd.f32 %v2007, %v2030
    %v2127 = vadd.f32 %v2008, %v2030
    %v2128 = vadd.f32 %v2009, %v2030
    %v2129 = vadd.f32 %v2010, %v2030
    %v2130 = vadd.f32 %v2011, %v2030
    %v2131 = vadd.f32 %v2012, %v2030
    %v2132 = vadd.f32 %v2013, %v2030
    %v2133 = vadd.f32 %v2014, %v2030
    %v2134 = vadd.f32 %v2015, %v2030
    %v2135 = vadd.f32 %v2016, %v2030
    %v2136 = vadd.f32 %v2017, %v2030
    %v2137 = vadd.f32 %v2018, %v2030
    %v2138 = vadd.f32 %v2019, %v2030
    %v2139 = vadd.f32 %v2020, %v2030
    %v2140 = vadd.f32 %v2021, %v2030
    %v2141 = vadd.f32 %v2022, %v2030
    %v2142 = vadd.f32 %v2023, %v2030
    %v2143 = vadd.f32 %v2024, %v2030
    %v2144 = vmax.f32 %v2032, 0.0
    %v2145 = vmax.f32 %v2033, 0.0
    %v2146 = vmax.f32 %v2034, 0.0
    %v2147 = vmax.f32 %v2035, 0.0
    %v2148 = vmax.f32 %v2036, 0.0
    %v2149 = vmax.f32 %v2037, 0.0
    %v2150 = vmax.f32 %v2038, 0.0
    %v2151 = vmax.f32 %v2039, 0.0
    %v2152 = vmax.f32 %v2040, 0.0
    %v2153 = vmax.f32 %v2041, 0.0
    %v2154 = vmax.f32 %v2042, 0.0
    %v2155 = vmax.f32 %v2043, 0.0
    %v2156 = vmax.f32 %v2044, 0.0
    %v2157 = vmax.f32 %v2045, 0.0
    %v2158 = vmax.f32 %v2046, 0.0
    %v2159 = vmax.f32 %v2047, 0.0
    %v2160 = vmax.f32 %v2048, 0.0
    %v2161 = vmax.f32 %v2049, 0.0
    %v2162 = vmax.f32 %v2050, 0.0
    %v2163 = vmax.f32 %v2051, 0.0
    %v2164 = vmax.f32 %v2052, 0.0
    %v2165 = vmax.f32 %v2053, 0.0
    %v2166 = vmax.f32 %v2054, 0.0
    %v2167 = vmax.f32 %v2055, 0.0
    %v2168 = vmax.f32 %v2056, 0.0
    %v2169 = vmax.f32 %v2057, 0.0
    %v2170 = vmax.f32 %v2058, 0.0
    %v2171 = vmax.f32 %v2059, 0.0
    %v2172 = vmax.f32 %v2060, 0.0
    %v2173 = vmax.f32 %v2061, 0.0
    %v2174 = vmax.f32 %v2062, 0.0
    %v2175 = vmax.f32 %v2063, 0.0
    %v2176 = vmax.f32 %v2064, 0.0
    %v2177 = vmax.f32 %v2065, 0.0
    %v2178 = vmax.f32 %v2066, 0.0
    %v2179 = vmax.f32 %v2067, 0.0
    %v2180 = vmax.f32 %v2068, 0.0
    %v2181 = vmax.f32 %v2069, 0.0
    %v2182 = vmax.f32 %v2070, 0.0
    %v2183 = vmax.f32 %v2071, 0.0
    %v2184 = vmax.f32 %v2072, 0.0
    %v2185 = vmax.f32 %v2073, 0.0
    %v2186 = vmax.f32 %v2074, 0.0
    %v2187 = vmax.f32 %v2075, 0.0
    %v2188 = vmax.f32 %v2076, 0.0
    %v2189 = vmax.f32 %v2077, 0.0
    %v2190 = vmax.f32 %v2078, 0.0
    %v2191 = vmax.f32 %v2079, 0.0
    %v2192 = vmax.f32 %v2080, 0.0
    %v2193 = vmax.f32 %v2081, 0.0
    %v2194 = vmax.f32 %v2082, 0.0
    %v2195 = vmax.f32 %v2083, 0.0
    %v2196 = vmax.f32 %v2084, 0.0
    %v2197 = vmax.f32 %v2085, 0.0
    %v2198 = vmax.f32 %v2086, 0.0
    %v2199 = vmax.f32 %v2087, 0.0
    %v2200 = vmax.f32 %v2088, 0.0
    %v2201 = vmax.f32 %v2089, 0.0
    %v2202 = vmax.f32 %v2090, 0.0
    %v2203 = vmax.f32 %v2091, 0.0
    %v2204 = vmax.f32 %v2092, 0.0
    %v2205 = vmax.f32 %v2093, 0.0
    %v2206 = vmax.f32 %v2094, 0.0
    %v2207 = vmax.f32 %v2095, 0.0
    %v2208 = vmax.f32 %v2096, 0.0
    %v2209 = vmax.f32 %v2097, 0.0
    %v2210 = vmax.f32 %v2098, 0.0
    %v2211 = vmax.f32 %v2099, 0.0
    %v2212 = vmax.f32 %v2100, 0.0
    %v2213 = vmax.f32 %v2101, 0.0
    %v2214 = vmax.f32 %v2102, 0.0
    %v2215 = vmax.f32 %v2103, 0.0
    %v2216 = vmax.f32 %v2104, 0.0
    %v2217 = vmax.f32 %v2105, 0.0
    %v2218 = vmax.f32 %v2106, 0.0
    %v2219 = vmax.f32 %v2107, 0.0
    %v2220 = vmax.f32 %v2108, 0.0
    %v2221 = vmax.f32 %v2109, 0.0
    %v2222 = vmax.f32 %v2110, 0.0
    %v2223 = vmax.f32 %v2111, 0.0
    %v2224 = vmax.f32 %v2112, 0.0
    %v2225 = vmax.f32 %v2113, 0.0
    %v2226 = vmax.f32 %v2114, 0.0
    %v2227 = vmax.f32 %v2115, 0.0
    %v2228 = vmax.f32 %v2116, 0.0
    %v2229 = vmax.f32 %v2117, 0.0
    %v2230 = vmax.f32 %v2118, 0.0
    %v2231 = vmax.f32 %v2119, 0.0
    %v2232 = vmax.f32 %v2120, 0.0
    %v2233 = vmax.f32 %v2121, 0.0
    %v2234 = vmax.f32 %v2122, 0.0
    %v2235 = vmax.f32 %v2123, 0.0
    %v2236 = vmax.f32 %v2124, 0.0
    %v2237 = vmax.f32 %v2125, 0.0
    %v2238 = vmax.f32 %v2126, 0.0
    %v2239 = vmax.f32 %v2127, 0.0
    %v2240 = vmax.f32 %v2128, 0.0
    %v2241 = vmax.f32 %v2129, 0.0
    %v2242 = vmax.f32 %v2130, 0.0
    %v2243 = vmax.f32 %v2131, 0.0
    %v2244 = vmax.f32 %v2132, 0.0
    %v2245 = vmax.f32 %v2133, 0.0
    %v2246 = vmax.f32 %v2134, 0.0
    %v2247 = vmax.f32 %v2135, 0.0
    %v2248 = vmax.f32 %v2136, 0.0
    %v2249 = vmax.f32 %v2137, 0.0
    %v2250 = vmax.f32 %v2138, 0.0
    %v2251 = vmax.f32 %v2139, 0.0
    %v2252 = vmax.f32 %v2140, 0.0
    %v2253 = vmax.f32 %v2141, 0.0
    %v2254 = vmax.f32 %v2142, 0.0
    %v2255 = vmax.f32 %v2143, 0.0
    %v2256 = vpack.c.bf16 %v2145, %v2144
    %v2257 = vpack.c.bf16 %v2147, %v2146
    %v2258 = vpack.c.bf16 %v2149, %v2148
    %v2259 = vpack.c.bf16 %v2151, %v2150
    %v2260 = vpack.c.bf16 %v2153, %v2152
    %v2261 = vpack.c.bf16 %v2155, %v2154
    %v2262 = vpack.c.bf16 %v2157, %v2156
    %v2263 = vpack.c.bf16 %v2159, %v2158
    %v2264 = vpack.c.bf16 %v2161, %v2160
    %v2265 = vpack.c.bf16 %v2163, %v2162
    %v2266 = vpack.c.bf16 %v2165, %v2164
    %v2267 = vpack.c.bf16 %v2167, %v2166
    %v2268 = vpack.c.bf16 %v2169, %v2168
    %v2269 = vpack.c.bf16 %v2171, %v2170
    %v2270 = vpack.c.bf16 %v2173, %v2172
    %v2271 = vpack.c.bf16 %v2175, %v2174
    %v2272 = vpack.c.bf16 %v2177, %v2176
    %v2273 = vpack.c.bf16 %v2179, %v2178
    %v2274 = vpack.c.bf16 %v2181, %v2180
    %v2275 = vpack.c.bf16 %v2183, %v2182
    %v2276 = vpack.c.bf16 %v2185, %v2184
    %v2277 = vpack.c.bf16 %v2187, %v2186
    %v2278 = vpack.c.bf16 %v2189, %v2188
    %v2279 = vpack.c.bf16 %v2191, %v2190
    %v2280 = vpack.c.bf16 %v2193, %v2192
    %v2281 = vpack.c.bf16 %v2195, %v2194
    %v2282 = vpack.c.bf16 %v2197, %v2196
    %v2283 = vpack.c.bf16 %v2199, %v2198
    %v2284 = vpack.c.bf16 %v2201, %v2200
    %v2285 = vpack.c.bf16 %v2203, %v2202
    %v2286 = vpack.c.bf16 %v2205, %v2204
    %v2287 = vpack.c.bf16 %v2207, %v2206
    %v2288 = vpack.c.bf16 %v2209, %v2208
    %v2289 = vpack.c.bf16 %v2211, %v2210
    %v2290 = vpack.c.bf16 %v2213, %v2212
    %v2291 = vpack.c.bf16 %v2215, %v2214
    %v2292 = vpack.c.bf16 %v2217, %v2216
    %v2293 = vpack.c.bf16 %v2219, %v2218
    %v2294 = vpack.c.bf16 %v2221, %v2220
    %v2295 = vpack.c.bf16 %v2223, %v2222
    %v2296 = vpack.c.bf16 %v2225, %v2224
    %v2297 = vpack.c.bf16 %v2227, %v2226
    %v2298 = vpack.c.bf16 %v2229, %v2228
    %v2299 = vpack.c.bf16 %v2231, %v2230
    %v2300 = vpack.c.bf16 %v2233, %v2232
    %v2301 = vpack.c.bf16 %v2235, %v2234
    %v2302 = vpack.c.bf16 %v2237, %v2236
    %v2303 = vpack.c.bf16 %v2239, %v2238
    %v2304 = vpack.c.bf16 %v2241, %v2240
    %v2305 = vpack.c.bf16 %v2243, %v2242
    %v2306 = vpack.c.bf16 %v2245, %v2244
    %v2307 = vpack.c.bf16 %v2247, %v2246
    %v2308 = vpack.c.bf16 %v2249, %v2248
    %v2309 = vpack.c.bf16 %v2251, %v2250
    %v2310 = vpack.c.bf16 %v2253, %v2252
    %v2311 = vpack.c.bf16 %v2255, %v2254
    %2312 = vst.msk [vmem:[#allocation2] sm:$0xff] %vm1104, %v2256
    %2313 = vst.msk [vmem:[#allocation2 + $0x8] sm:$0xff] %vm1104, %v2257
    %2314 = vst.msk [vmem:[#allocation2 + $0x10] sm:$0xff] %vm1104, %v2258
    %2315 = vst.msk [vmem:[#allocation2 + $0x18] sm:$0xff] %vm1104, %v2259
    %2316 = vst.msk [vmem:[#allocation2 + $0x20] sm:$0xff] %vm1104, %v2260
    %2317 = vst.msk [vmem:[#allocation2 + $0x28] sm:$0xff] %vm1104, %v2261
    %2318 = vst.msk [vmem:[#allocation2 + $0x30] sm:$0xff] %vm1104, %v2262
    %2319 = vst.msk [vmem:[#allocation2 + $0x38] sm:$0xff] %vm1104, %v2263
    %2320 = vst.msk [vmem:[#allocation2 + $0x40] sm:$0xff] %vm1104, %v2264
    %2321 = vst.msk [vmem:[#allocation2 + $0x48] sm:$0xff] %vm1104, %v2265
    %2322 = vst.msk [vmem:[#allocation2 + $0x50] sm:$0xff] %vm1104, %v2266
    %2323 = vst.msk [vmem:[#allocation2 + $0x58] sm:$0xff] %vm1104, %v2267
    %2324 = vst.msk [vmem:[#allocation2 + $0x60] sm:$0xff] %vm1104, %v2268
    %2325 = vst.msk [vmem:[#allocation2 + $0x68] sm:$0xff] %vm1104, %v2269
    %2326 = vst.msk [vmem:[#allocation2 + $0x70] sm:$0xff] %vm1104, %v2270
    %2327 = vst.msk [vmem:[#allocation2 + $0x78] sm:$0xff] %vm1104, %v2271
    %2328 = vst.msk [vmem:[#allocation2 + $0x80] sm:$0xff] %vm1104, %v2272
    %2329 = vst.msk [vmem:[#allocation2 + $0x88] sm:$0xff] %vm1104, %v2273
    %2330 = vst.msk [vmem:[#allocation2 + $0x90] sm:$0xff] %vm1104, %v2274
    %2331 = vst.msk [vmem:[#allocation2 + $0x98] sm:$0xff] %vm1104, %v2275
    %2332 = vst.msk [vmem:[#allocation2 + $0xa0] sm:$0xff] %vm1104, %v2276
    %2333 = vst.msk [vmem:[#allocation2 + $0xa8] sm:$0xff] %vm1104, %v2277
    %2334 = vst.msk [vmem:[#allocation2 + $0xb0] sm:$0xff] %vm1104, %v2278
    %2335 = vst.msk [vmem:[#allocation2 + $0xb8] sm:$0xff] %vm1104, %v2279
    %2336 = vst.msk [vmem:[#allocation2 + $0xc0] sm:$0xff] %vm1104, %v2280
    %2337 = vst.msk [vmem:[#allocation2 + $0xc8] sm:$0xff] %vm1104, %v2281
    %2338 = vst.msk [vmem:[#allocation2 + $0xd0] sm:$0xff] %vm1104, %v2282
    %2339 = vst.msk [vmem:[#allocation2 + $0xd8] sm:$0xff] %vm1104, %v2283
    %2340 = vst.msk [vmem:[#allocation2 + $0xe0] sm:$0xff] %vm1104, %v2284
    %2341 = vst.msk [vmem:[#allocation2 + $0xe8] sm:$0xff] %vm1104, %v2285
    %2342 = vst.msk [vmem:[#allocation2 + $0xf0] sm:$0xff] %vm1104, %v2286
    %2343 = vst.msk [vmem:[#allocation2 + $0xf8] sm:$0xff] %vm1104, %v2287
    %2344 = vst.msk [vmem:[#allocation2 + $0x100] sm:$0xff] %vm1104, %v2288
    %2345 = vst.msk [vmem:[#allocation2 + $0x108] sm:$0xff] %vm1104, %v2289
    %2346 = vst.msk [vmem:[#allocation2 + $0x110] sm:$0xff] %vm1104, %v2290
    %2347 = vst.msk [vmem:[#allocation2 + $0x118] sm:$0xff] %vm1104, %v2291
    %2348 = vst.msk [vmem:[#allocation2 + $0x120] sm:$0xff] %vm1104, %v2292
    %2349 = vst.msk [vmem:[#allocation2 + $0x128] sm:$0xff] %vm1104, %v2293
    %2350 = vst.msk [vmem:[#allocation2 + $0x130] sm:$0xff] %vm1104, %v2294
    %2351 = vst.msk [vmem:[#allocation2 + $0x138] sm:$0xff] %vm1104, %v2295
    %2352 = vst.msk [vmem:[#allocation2 + $0x140] sm:$0xff] %vm1104, %v2296
    %2353 = vst.msk [vmem:[#allocation2 + $0x148] sm:$0xff] %vm1104, %v2297
    %2354 = vst.msk [vmem:[#allocation2 + $0x150] sm:$0xff] %vm1104, %v2298
    %2355 = vst.msk [vmem:[#allocation2 + $0x158] sm:$0xff] %vm1104, %v2299
    %2356 = vst.msk [vmem:[#allocation2 + $0x160] sm:$0xff] %vm1104, %v2300
    %2357 = vst.msk [vmem:[#allocation2 + $0x168] sm:$0xff] %vm1104, %v2301
    %2358 = vst.msk [vmem:[#allocation2 + $0x170] sm:$0xff] %vm1104, %v2302
    %2359 = vst.msk [vmem:[#allocation2 + $0x178] sm:$0xff] %vm1104, %v2303
    %2360 = vst.msk [vmem:[#allocation2 + $0x180] sm:$0xff] %vm1104, %v2304
    %2361 = vst.msk [vmem:[#allocation2 + $0x188] sm:$0xff] %vm1104, %v2305
    %2362 = vst.msk [vmem:[#allocation2 + $0x190] sm:$0xff] %vm1104, %v2306
    %2363 = vst.msk [vmem:[#allocation2 + $0x198] sm:$0xff] %vm1104, %v2307
    %2364 = vst.msk [vmem:[#allocation2 + $0x1a0] sm:$0xff] %vm1104, %v2308
    %2365 = vst.msk [vmem:[#allocation2 + $0x1a8] sm:$0xff] %vm1104, %v2309
    %2366 = vst.msk [vmem:[#allocation2 + $0x1b0] sm:$0xff] %vm1104, %v2310
    %2367 = vst.msk [vmem:[#allocation2 + $0x1b8] sm:$0xff] %vm1104, %v2311
    %v2368 = vld [vmem:[#allocation2] sm:$0xff]
    %v2369 = vld [vmem:[#allocation2 + $0x8] sm:$0xf]
    %2370 = vst.msk [vmem:[#allocation3] sm:$0xff] %vm1104, %v2368
    %vm2371 = vcmask 125952
    %2372 = vst.msk [vmem:[#allocation3 + $0x8] sm:$0xf] %vm2371, %v2369
    %v2373 = vld [vmem:[#allocation2 + $0x10] sm:$0xff]
    %v2374 = vld [vmem:[#allocation2 + $0x18] sm:$0xf]
    %vm2377 = vcmask 1043456
    %v2378 = vrot.slane %v2373, 4
    %v2379 = vrot.slane %v2374, 4
    %v2380 = vsel %vm2377, %v2378, %v2379
    %vm2383 = vcmask 130052
    %2384 = vst.msk [vmem:[#allocation3 + $0x8] sm:$0xf0] %vm2383, %v2378
    %2385 = vst.msk [vmem:[#allocation3 + $0x10] sm:$0xff] %vm1104, %v2380
    %v2386 = vld [vmem:[#allocation2 + $0x20] sm:$0xff]
    %v2387 = vld [vmem:[#allocation2 + $0x28] sm:$0xf]
    %2388 = vst.msk [vmem:[#allocation3 + $0x18] sm:$0xff] %vm1104, %v2386
    %2389 = vst.msk [vmem:[#allocation3 + $0x20] sm:$0xf] %vm2371, %v2387
    %v2390 = vld [vmem:[#allocation2 + $0x30] sm:$0xff]
    %v2391 = vld [vmem:[#allocation2 + $0x38] sm:$0xf]
    %v2394 = vrot.slane %v2390, 4
    %v2395 = vrot.slane %v2391, 4
    %v2396 = vsel %vm2377, %v2394, %v2395
    %2399 = vst.msk [vmem:[#allocation3 + $0x20] sm:$0xf0] %vm2383, %v2394
    %2400 = vst.msk [vmem:[#allocation3 + $0x28] sm:$0xff] %vm1104, %v2396
    %v2401 = vld [vmem:[#allocation2 + $0x40] sm:$0xff]
    %v2402 = vld [vmem:[#allocation2 + $0x48] sm:$0xf]
    %2403 = vst.msk [vmem:[#allocation3 + $0x30] sm:$0xff] %vm1104, %v2401
    %2404 = vst.msk [vmem:[#allocation3 + $0x38] sm:$0xf] %vm2371, %v2402
    %v2405 = vld [vmem:[#allocation2 + $0x50] sm:$0xff]
    %v2406 = vld [vmem:[#allocation2 + $0x58] sm:$0xf]
    %v2409 = vrot.slane %v2405, 4
    %v2410 = vrot.slane %v2406, 4
    %v2411 = vsel %vm2377, %v2409, %v2410
    %2414 = vst.msk [vmem:[#allocation3 + $0x38] sm:$0xf0] %vm2383, %v2409
    %2415 = vst.msk [vmem:[#allocation3 + $0x40] sm:$0xff] %vm1104, %v2411
    %v2416 = vld [vmem:[#allocation2 + $0x70] sm:$0xff]
    %v2417 = vld [vmem:[#allocation2 + $0x78] sm:$0xf]
    %s2418 = scalar_lea.vmem [#allocation3], 72
    %2419 = vst.msk [vmem:[%s2418] sm:$0xff] %vm1104, %v2416
    %2420 = vst.msk [vmem:[%s2418 + $0x8] sm:$0xf] %vm2371, %v2417
    %v2421 = vld [vmem:[#allocation2 + $0x80] sm:$0xff]
    %v2422 = vld [vmem:[#allocation2 + $0x88] sm:$0xf]
    %v2425 = vrot.slane %v2421, 4
    %v2426 = vrot.slane %v2422, 4
    %v2427 = vsel %vm2377, %v2425, %v2426
    %2430 = vst.msk [vmem:[%s2418 + $0x8] sm:$0xf0] %vm2383, %v2425
    %2431 = vst.msk [vmem:[%s2418 + $0x10] sm:$0xff] %vm1104, %v2427
    %v2432 = vld [vmem:[#allocation2 + $0x90] sm:$0xff]
    %v2433 = vld [vmem:[#allocation2 + $0x98] sm:$0xf]
    %2434 = vst.msk [vmem:[%s2418 + $0x18] sm:$0xff] %vm1104, %v2432
    %2435 = vst.msk [vmem:[%s2418 + $0x20] sm:$0xf] %vm2371, %v2433
    %v2436 = vld [vmem:[#allocation2 + $0xa0] sm:$0xff]
    %v2437 = vld [vmem:[#allocation2 + $0xa8] sm:$0xf]
    %v2440 = vrot.slane %v2436, 4
    %v2441 = vrot.slane %v2437, 4
    %v2442 = vsel %vm2377, %v2440, %v2441
    %2445 = vst.msk [vmem:[%s2418 + $0x20] sm:$0xf0] %vm2383, %v2440
    %2446 = vst.msk [vmem:[%s2418 + $0x28] sm:$0xff] %vm1104, %v2442
    %v2447 = vld [vmem:[#allocation2 + $0xb0] sm:$0xff]
    %v2448 = vld [vmem:[#allocation2 + $0xb8] sm:$0xf]
    %2449 = vst.msk [vmem:[%s2418 + $0x30] sm:$0xff] %vm1104, %v2447
    %2450 = vst.msk [vmem:[%s2418 + $0x38] sm:$0xf] %vm2371, %v2448
    %v2451 = vld [vmem:[#allocation2 + $0xc0] sm:$0xff]
    %v2452 = vld [vmem:[#allocation2 + $0xc8] sm:$0xf]
    %v2455 = vrot.slane %v2451, 4
    %v2456 = vrot.slane %v2452, 4
    %v2457 = vsel %vm2377, %v2455, %v2456
    %2460 = vst.msk [vmem:[%s2418 + $0x38] sm:$0xf0] %vm2383, %v2455
    %2461 = vst.msk [vmem:[%s2418 + $0x40] sm:$0xff] %vm1104, %v2457
    %v2462 = vld [vmem:[#allocation2] sm:$0xfc]
    %v2463 = vld [vmem:[#allocation2 + $0x8] sm:$0x3f]
    %vm2466 = vcmask 1045504
    %v2467 = vrot.slane %v2462, 2
    %v2468 = vrot.slane %v2463, 2
    %v2469 = vsel %vm2466, %v2467, %v2468
    %s2472 = scalar_lea.vmem [#allocation3], 144
    %2473 = vst.msk [vmem:[%s2472] sm:$0xff] %vm1104, %v2469
    %2474 = vst.msk [vmem:[%s2472 + $0x8] sm:$0xf] %vm2371, %v2468
    %v2475 = vld [vmem:[#allocation2 + $0x10] sm:$0xfc]
    %v2476 = vld [vmem:[#allocation2 + $0x18] sm:$0x3f]
    %vm2479 = vcmask 1041408
    %v2480 = vrot.slane %v2475, 6
    %v2481 = vrot.slane %v2476, 6
    %v2482 = vsel %vm2479, %v2480, %v2481
    %2485 = vst.msk [vmem:[%s2472 + $0x8] sm:$0xf0] %vm2383, %v2480
    %2486 = vst.msk [vmem:[%s2472 + $0x10] sm:$0xff] %vm1104, %v2482
    %v2487 = vld [vmem:[#allocation2 + $0x20] sm:$0xfc]
    %v2488 = vld [vmem:[#allocation2 + $0x28] sm:$0x3f]
    %v2491 = vrot.slane %v2487, 2
    %v2492 = vrot.slane %v2488, 2
    %v2493 = vsel %vm2466, %v2491, %v2492
    %2496 = vst.msk [vmem:[%s2472 + $0x18] sm:$0xff] %vm1104, %v2493
    %2497 = vst.msk [vmem:[%s2472 + $0x20] sm:$0xf] %vm2371, %v2492
    %v2498 = vld [vmem:[#allocation2 + $0x30] sm:$0xfc]
    %v2499 = vld [vmem:[#allocation2 + $0x38] sm:$0x3f]
    %v2502 = vrot.slane %v2498, 6
    %v2503 = vrot.slane %v2499, 6
    %v2504 = vsel %vm2479, %v2502, %v2503
    %2507 = vst.msk [vmem:[%s2472 + $0x20] sm:$0xf0] %vm2383, %v2502
    %2508 = vst.msk [vmem:[%s2472 + $0x28] sm:$0xff] %vm1104, %v2504
    %v2509 = vld [vmem:[#allocation2 + $0x40] sm:$0xfc]
    %v2510 = vld [vmem:[#allocation2 + $0x48] sm:$0x3f]
    %v2513 = vrot.slane %v2509, 2
    %v2514 = vrot.slane %v2510, 2
    %v2515 = vsel %vm2466, %v2513, %v2514
    %2518 = vst.msk [vmem:[%s2472 + $0x30] sm:$0xff] %vm1104, %v2515
    %2519 = vst.msk [vmem:[%s2472 + $0x38] sm:$0xf] %vm2371, %v2514
    %v2520 = vld [vmem:[#allocation2 + $0x50] sm:$0xfc]
    %v2521 = vld [vmem:[#allocation2 + $0x58] sm:$0x3f]
    %v2524 = vrot.slane %v2520, 6
    %v2525 = vrot.slane %v2521, 6
    %v2526 = vsel %vm2479, %v2524, %v2525
    %2529 = vst.msk [vmem:[%s2472 + $0x38] sm:$0xf0] %vm2383, %v2524
    %2530 = vst.msk [vmem:[%s2472 + $0x40] sm:$0xff] %vm1104, %v2526
    %v2531 = vld [vmem:[#allocation2 + $0xe0] sm:$0xff]
    %v2532 = vld [vmem:[#allocation2 + $0xe8] sm:$0xf]
    %s2533 = scalar_lea.vmem [#allocation3], 216
    %2534 = vst.msk [vmem:[%s2533] sm:$0xff] %vm1104, %v2531
    %2535 = vst.msk [vmem:[%s2533 + $0x8] sm:$0xf] %vm2371, %v2532
    %v2536 = vld [vmem:[#allocation2 + $0xf0] sm:$0xff]
    %v2537 = vld [vmem:[#allocation2 + $0xf8] sm:$0xf]
    %v2540 = vrot.slane %v2536, 4
    %v2541 = vrot.slane %v2537, 4
    %v2542 = vsel %vm2377, %v2540, %v2541
    %2545 = vst.msk [vmem:[%s2533 + $0x8] sm:$0xf0] %vm2383, %v2540
    %2546 = vst.msk [vmem:[%s2533 + $0x10] sm:$0xff] %vm1104, %v2542
    %v2547 = vld [vmem:[#allocation2 + $0x100] sm:$0xff]
    %v2548 = vld [vmem:[#allocation2 + $0x108] sm:$0xf]
    %2549 = vst.msk [vmem:[%s2533 + $0x18] sm:$0xff] %vm1104, %v2547
    %2550 = vst.msk [vmem:[%s2533 + $0x20] sm:$0xf] %vm2371, %v2548
    %v2551 = vld [vmem:[#allocation2 + $0x110] sm:$0xff]
    %v2552 = vld [vmem:[#allocation2 + $0x118] sm:$0xf]
    %v2555 = vrot.slane %v2551, 4
    %v2556 = vrot.slane %v2552, 4
    %v2557 = vsel %vm2377, %v2555, %v2556
    %2560 = vst.msk [vmem:[%s2533 + $0x20] sm:$0xf0] %vm2383, %v2555
    %2561 = vst.msk [vmem:[%s2533 + $0x28] sm:$0xff] %vm1104, %v2557
    %v2562 = vld [vmem:[#allocation2 + $0x120] sm:$0xff]
    %v2563 = vld [vmem:[#allocation2 + $0x128] sm:$0xf]
    %2564 = vst.msk [vmem:[%s2533 + $0x30] sm:$0xff] %vm1104, %v2562
    %2565 = vst.msk [vmem:[%s2533 + $0x38] sm:$0xf] %vm2371, %v2563
    %v2566 = vld [vmem:[#allocation2 + $0x130] sm:$0xff]
    %v2567 = vld [vmem:[#allocation2 + $0x138] sm:$0xf]
    %v2570 = vrot.slane %v2566, 4
    %v2571 = vrot.slane %v2567, 4
    %v2572 = vsel %vm2377, %v2570, %v2571
    %2575 = vst.msk [vmem:[%s2533 + $0x38] sm:$0xf0] %vm2383, %v2570
    %2576 = vst.msk [vmem:[%s2533 + $0x40] sm:$0xff] %vm1104, %v2572
    %v2577 = vld [vmem:[#allocation2 + $0x150] sm:$0xff]
    %v2578 = vld [vmem:[#allocation2 + $0x158] sm:$0xf]
    %s2579 = scalar_lea.vmem [#allocation3], 288
    %2580 = vst.msk [vmem:[%s2579] sm:$0xff] %vm1104, %v2577
    %2581 = vst.msk [vmem:[%s2579 + $0x8] sm:$0xf] %vm2371, %v2578
    %v2582 = vld [vmem:[#allocation2 + $0x160] sm:$0xff]
    %v2583 = vld [vmem:[#allocation2 + $0x168] sm:$0xf]
    %v2586 = vrot.slane %v2582, 4
    %v2587 = vrot.slane %v2583, 4
    %v2588 = vsel %vm2377, %v2586, %v2587
    %2591 = vst.msk [vmem:[%s2579 + $0x8] sm:$0xf0] %vm2383, %v2586
    %2592 = vst.msk [vmem:[%s2579 + $0x10] sm:$0xff] %vm1104, %v2588
    %v2593 = vld [vmem:[#allocation2 + $0x170] sm:$0xff]
    %v2594 = vld [vmem:[#allocation2 + $0x178] sm:$0xf]
    %2595 = vst.msk [vmem:[%s2579 + $0x18] sm:$0xff] %vm1104, %v2593
    %2596 = vst.msk [vmem:[%s2579 + $0x20] sm:$0xf] %vm2371, %v2594
    %v2597 = vld [vmem:[#allocation2 + $0x180] sm:$0xff]
    %v2598 = vld [vmem:[#allocation2 + $0x188] sm:$0xf]
    %v2601 = vrot.slane %v2597, 4
    %v2602 = vrot.slane %v2598, 4
    %v2603 = vsel %vm2377, %v2601, %v2602
    %2606 = vst.msk [vmem:[%s2579 + $0x20] sm:$0xf0] %vm2383, %v2601
    %2607 = vst.msk [vmem:[%s2579 + $0x28] sm:$0xff] %vm1104, %v2603
    %v2608 = vld [vmem:[#allocation2 + $0x190] sm:$0xff]
    %v2609 = vld [vmem:[#allocation2 + $0x198] sm:$0xf]
    %2610 = vst.msk [vmem:[%s2579 + $0x30] sm:$0xff] %vm1104, %v2608
    %2611 = vst.msk [vmem:[%s2579 + $0x38] sm:$0xf] %vm2371, %v2609
    %v2612 = vld [vmem:[#allocation2 + $0x1a0] sm:$0xff]
    %v2613 = vld [vmem:[#allocation2 + $0x1a8] sm:$0xf]
    %v2616 = vrot.slane %v2612, 4
    %v2617 = vrot.slane %v2613, 4
    %v2618 = vsel %vm2377, %v2616, %v2617
    %2621 = vst.msk [vmem:[%s2579 + $0x38] sm:$0xf0] %vm2383, %v2616
    %2622 = vst.msk [vmem:[%s2579 + $0x40] sm:$0xff] %vm1104, %v2618
    %v2623 = vld [vmem:[#allocation2 + $0xe0] sm:$0xfc]
    %v2624 = vld [vmem:[#allocation2 + $0xe8] sm:$0x3f]
    %v2627 = vrot.slane %v2623, 2
    %v2628 = vrot.slane %v2624, 2
    %v2629 = vsel %vm2466, %v2627, %v2628
    %s2632 = scalar_lea.vmem [#allocation3], 360
    %2633 = vst.msk [vmem:[%s2632] sm:$0xff] %vm1104, %v2629
    %2634 = vst.msk [vmem:[%s2632 + $0x8] sm:$0xf] %vm2371, %v2628
    %v2635 = vld [vmem:[#allocation2 + $0xf0] sm:$0xfc]
    %v2636 = vld [vmem:[#allocation2 + $0xf8] sm:$0x3f]
    %v2639 = vrot.slane %v2635, 6
    %v2640 = vrot.slane %v2636, 6
    %v2641 = vsel %vm2479, %v2639, %v2640
    %2644 = vst.msk [vmem:[%s2632 + $0x8] sm:$0xf0] %vm2383, %v2639
    %2645 = vst.msk [vmem:[%s2632 + $0x10] sm:$0xff] %vm1104, %v2641
    %v2646 = vld [vmem:[#allocation2 + $0x100] sm:$0xfc]
    %v2647 = vld [vmem:[#allocation2 + $0x108] sm:$0x3f]
    %v2650 = vrot.slane %v2646, 2
    %v2651 = vrot.slane %v2647, 2
    %v2652 = vsel %vm2466, %v2650, %v2651
    %2655 = vst.msk [vmem:[%s2632 + $0x18] sm:$0xff] %vm1104, %v2652
    %2656 = vst.msk [vmem:[%s2632 + $0x20] sm:$0xf] %vm2371, %v2651
    %v2657 = vld [vmem:[#allocation2 + $0x110] sm:$0xfc]
    %v2658 = vld [vmem:[#allocation2 + $0x118] sm:$0x3f]
    %v2661 = vrot.slane %v2657, 6
    %v2662 = vrot.slane %v2658, 6
    %v2663 = vsel %vm2479, %v2661, %v2662
    %2666 = vst.msk [vmem:[%s2632 + $0x20] sm:$0xf0] %vm2383, %v2661
    %2667 = vst.msk [vmem:[%s2632 + $0x28] sm:$0xff] %vm1104, %v2663
    %v2668 = vld [vmem:[#allocation2 + $0x120] sm:$0xfc]
    %v2669 = vld [vmem:[#allocation2 + $0x128] sm:$0x3f]
    %v2672 = vrot.slane %v2668, 2
    %v2673 = vrot.slane %v2669, 2
    %v2674 = vsel %vm2466, %v2672, %v2673
    %2677 = vst.msk [vmem:[%s2632 + $0x30] sm:$0xff] %vm1104, %v2674
    %2678 = vst.msk [vmem:[%s2632 + $0x38] sm:$0xf] %vm2371, %v2673
    %v2679 = vld [vmem:[#allocation2 + $0x130] sm:$0xfc]
    %v2680 = vld [vmem:[#allocation2 + $0x138] sm:$0x3f]
    %v2683 = vrot.slane %v2679, 6
    %v2684 = vrot.slane %v2680, 6
    %v2685 = vsel %vm2479, %v2683, %v2684
    %2688 = vst.msk [vmem:[%s2632 + $0x38] sm:$0xf0] %vm2383, %v2683
    %2689 = vst.msk [vmem:[%s2632 + $0x40] sm:$0xff] %vm1104, %v2685
    %v2690 = vld [vmem:[#allocation2 + $0x10] sm:$0xff]
    %v2691 = vld [vmem:[#allocation2 + $0x18] sm:$0xf]
    %s2692 = scalar_lea.vmem [#allocation3], 432
    %2693 = vst.msk [vmem:[%s2692] sm:$0xff] %vm1104, %v2690
    %2694 = vst.msk [vmem:[%s2692 + $0x8] sm:$0xf] %vm2371, %v2691
    %v2695 = vld [vmem:[#allocation2 + $0x20] sm:$0xff]
    %v2696 = vld [vmem:[#allocation2 + $0x28] sm:$0xf]
    %v2699 = vrot.slane %v2695, 4
    %v2700 = vrot.slane %v2696, 4
    %v2701 = vsel %vm2377, %v2699, %v2700
    %2704 = vst.msk [vmem:[%s2692 + $0x8] sm:$0xf0] %vm2383, %v2699
    %2705 = vst.msk [vmem:[%s2692 + $0x10] sm:$0xff] %vm1104, %v2701
    %v2706 = vld [vmem:[#allocation2 + $0x30] sm:$0xff]
    %v2707 = vld [vmem:[#allocation2 + $0x38] sm:$0xf]
    %2708 = vst.msk [vmem:[%s2692 + $0x18] sm:$0xff] %vm1104, %v2706
    %2709 = vst.msk [vmem:[%s2692 + $0x20] sm:$0xf] %vm2371, %v2707
    %v2710 = vld [vmem:[#allocation2 + $0x40] sm:$0xff]
    %v2711 = vld [vmem:[#allocation2 + $0x48] sm:$0xf]
    %v2714 = vrot.slane %v2710, 4
    %v2715 = vrot.slane %v2711, 4
    %v2716 = vsel %vm2377, %v2714, %v2715
    %2719 = vst.msk [vmem:[%s2692 + $0x20] sm:$0xf0] %vm2383, %v2714
    %2720 = vst.msk [vmem:[%s2692 + $0x28] sm:$0xff] %vm1104, %v2716
    %v2721 = vld [vmem:[#allocation2 + $0x50] sm:$0xff]
    %v2722 = vld [vmem:[#allocation2 + $0x58] sm:$0xf]
    %2723 = vst.msk [vmem:[%s2692 + $0x30] sm:$0xff] %vm1104, %v2721
    %2724 = vst.msk [vmem:[%s2692 + $0x38] sm:$0xf] %vm2371, %v2722
    %v2725 = vld [vmem:[#allocation2 + $0x60] sm:$0xff]
    %v2726 = vld [vmem:[#allocation2 + $0x68] sm:$0xf]
    %v2729 = vrot.slane %v2725, 4
    %v2730 = vrot.slane %v2726, 4
    %v2731 = vsel %vm2377, %v2729, %v2730
    %2734 = vst.msk [vmem:[%s2692 + $0x38] sm:$0xf0] %vm2383, %v2729
    %2735 = vst.msk [vmem:[%s2692 + $0x40] sm:$0xff] %vm1104, %v2731
    %v2736 = vld [vmem:[#allocation2 + $0x80] sm:$0xff]
    %v2737 = vld [vmem:[#allocation2 + $0x88] sm:$0xf]
    %s2738 = scalar_lea.vmem [#allocation3], 504
    %2739 = vst.msk [vmem:[%s2738] sm:$0xff] %vm1104, %v2736
    %2740 = vst.msk [vmem:[%s2738 + $0x8] sm:$0xf] %vm2371, %v2737
    %v2741 = vld [vmem:[#allocation2 + $0x90] sm:$0xff]
    %v2742 = vld [vmem:[#allocation2 + $0x98] sm:$0xf]
    %v2745 = vrot.slane %v2741, 4
    %v2746 = vrot.slane %v2742, 4
    %v2747 = vsel %vm2377, %v2745, %v2746
    %2750 = vst.msk [vmem:[%s2738 + $0x8] sm:$0xf0] %vm2383, %v2745
    %2751 = vst.msk [vmem:[%s2738 + $0x10] sm:$0xff] %vm1104, %v2747
    %v2752 = vld [vmem:[#allocation2 + $0xa0] sm:$0xff]
    %v2753 = vld [vmem:[#allocation2 + $0xa8] sm:$0xf]
    %2754 = vst.msk [vmem:[%s2738 + $0x18] sm:$0xff] %vm1104, %v2752
    %2755 = vst.msk [vmem:[%s2738 + $0x20] sm:$0xf] %vm2371, %v2753
    %v2756 = vld [vmem:[#allocation2 + $0xb0] sm:$0xff]
    %v2757 = vld [vmem:[#allocation2 + $0xb8] sm:$0xf]
    %v2760 = vrot.slane %v2756, 4
    %v2761 = vrot.slane %v2757, 4
    %v2762 = vsel %vm2377, %v2760, %v2761
    %2765 = vst.msk [vmem:[%s2738 + $0x20] sm:$0xf0] %vm2383, %v2760
    %2766 = vst.msk [vmem:[%s2738 + $0x28] sm:$0xff] %vm1104, %v2762
    %v2767 = vld [vmem:[#allocation2 + $0xc0] sm:$0xff]
    %v2768 = vld [vmem:[#allocation2 + $0xc8] sm:$0xf]
    %2769 = vst.msk [vmem:[%s2738 + $0x30] sm:$0xff] %vm1104, %v2767
    %2770 = vst.msk [vmem:[%s2738 + $0x38] sm:$0xf] %vm2371, %v2768
    %v2771 = vld [vmem:[#allocation2 + $0xd0] sm:$0xff]
    %v2772 = vld [vmem:[#allocation2 + $0xd8] sm:$0xf]
    %v2775 = vrot.slane %v2771, 4
    %v2776 = vrot.slane %v2772, 4
    %v2777 = vsel %vm2377, %v2775, %v2776
    %2780 = vst.msk [vmem:[%s2738 + $0x38] sm:$0xf0] %vm2383, %v2775
    %2781 = vst.msk [vmem:[%s2738 + $0x40] sm:$0xff] %vm1104, %v2777
    %v2782 = vld [vmem:[#allocation2 + $0x10] sm:$0xfc]
    %v2783 = vld [vmem:[#allocation2 + $0x18] sm:$0x3f]
    %v2786 = vrot.slane %v2782, 2
    %v2787 = vrot.slane %v2783, 2
    %v2788 = vsel %vm2466, %v2786, %v2787
    %s2791 = scalar_lea.vmem [#allocation3], 576
    %2792 = vst.msk [vmem:[%s2791] sm:$0xff] %vm1104, %v2788
    %2793 = vst.msk [vmem:[%s2791 + $0x8] sm:$0xf] %vm2371, %v2787
    %v2794 = vld [vmem:[#allocation2 + $0x20] sm:$0xfc]
    %v2795 = vld [vmem:[#allocation2 + $0x28] sm:$0x3f]
    %v2798 = vrot.slane %v2794, 6
    %v2799 = vrot.slane %v2795, 6
    %v2800 = vsel %vm2479, %v2798, %v2799
    %2803 = vst.msk [vmem:[%s2791 + $0x8] sm:$0xf0] %vm2383, %v2798
    %2804 = vst.msk [vmem:[%s2791 + $0x10] sm:$0xff] %vm1104, %v2800
    %v2805 = vld [vmem:[#allocation2 + $0x30] sm:$0xfc]
    %v2806 = vld [vmem:[#allocation2 + $0x38] sm:$0x3f]
    %v2809 = vrot.slane %v2805, 2
    %v2810 = vrot.slane %v2806, 2
    %v2811 = vsel %vm2466, %v2809, %v2810
    %2814 = vst.msk [vmem:[%s2791 + $0x18] sm:$0xff] %vm1104, %v2811
    %2815 = vst.msk [vmem:[%s2791 + $0x20] sm:$0xf] %vm2371, %v2810
    %v2816 = vld [vmem:[#allocation2 + $0x40] sm:$0xfc]
    %v2817 = vld [vmem:[#allocation2 + $0x48] sm:$0x3f]
    %v2820 = vrot.slane %v2816, 6
    %v2821 = vrot.slane %v2817, 6
    %v2822 = vsel %vm2479, %v2820, %v2821
    %2825 = vst.msk [vmem:[%s2791 + $0x20] sm:$0xf0] %vm2383, %v2820
    %2826 = vst.msk [vmem:[%s2791 + $0x28] sm:$0xff] %vm1104, %v2822
    %v2827 = vld [vmem:[#allocation2 + $0x50] sm:$0xfc]
    %v2828 = vld [vmem:[#allocation2 + $0x58] sm:$0x3f]
    %v2831 = vrot.slane %v2827, 2
    %v2832 = vrot.slane %v2828, 2
    %v2833 = vsel %vm2466, %v2831, %v2832
    %2836 = vst.msk [vmem:[%s2791 + $0x30] sm:$0xff] %vm1104, %v2833
    %2837 = vst.msk [vmem:[%s2791 + $0x38] sm:$0xf] %vm2371, %v2832
    %v2838 = vld [vmem:[#allocation2 + $0x60] sm:$0xfc]
    %v2839 = vld [vmem:[#allocation2 + $0x68] sm:$0x3f]
    %v2842 = vrot.slane %v2838, 6
    %v2843 = vrot.slane %v2839, 6
    %v2844 = vsel %vm2479, %v2842, %v2843
    %2847 = vst.msk [vmem:[%s2791 + $0x38] sm:$0xf0] %vm2383, %v2842
    %2848 = vst.msk [vmem:[%s2791 + $0x40] sm:$0xff] %vm1104, %v2844
    %v2849 = vld [vmem:[#allocation3] sm:$0xff]
    %v2850 = vld [vmem:[#allocation3 + $0x8] sm:$0xff]
    %v2851 = vld [vmem:[#allocation3 + $0x10] sm:$0xff]
    %v2852 = vld [vmem:[#allocation3 + $0x18] sm:$0xff]
    %v2853 = vld [vmem:[#allocation3 + $0x20] sm:$0xff]
    %v2854 = vld [vmem:[#allocation3 + $0x28] sm:$0xff]
    %v2855 = vld [vmem:[#allocation3 + $0x30] sm:$0xff]
    %v2856 = vld [vmem:[#allocation3 + $0x38] sm:$0xff]
    %v2857 = vld [vmem:[#allocation3 + $0x40] sm:$0xff]
    %v2858 = vld [vmem:[%s4] sm:$0xf]
    %v2859 = vld [vmem:[%s4 + $0x4] sm:$0xf]
    %v2860 = vld [vmem:[%s2418] sm:$0xff]
    %v2861 = vld [vmem:[%s2418 + $0x8] sm:$0xff]
    %v2862 = vld [vmem:[%s2418 + $0x10] sm:$0xff]
    %v2863 = vld [vmem:[%s2418 + $0x18] sm:$0xff]
    %v2864 = vld [vmem:[%s2418 + $0x20] sm:$0xff]
    %v2865 = vld [vmem:[%s2418 + $0x28] sm:$0xff]
    %v2866 = vld [vmem:[%s2418 + $0x30] sm:$0xff]
    %v2867 = vld [vmem:[%s2418 + $0x38] sm:$0xff]
    %v2868 = vld [vmem:[%s2418 + $0x40] sm:$0xff]
    %s2869 = scalar_lea.vmem %s4, 8
    %v2870 = vld [vmem:[%s2869] sm:$0xf]
    %v2871 = vld [vmem:[%s2869 + $0x4] sm:$0xf]
    %v2874 = vunpack.c.l.b16 %v2870
    %v2875 = vunpack.c.l.b16 %v2871
    %v2876 = vpack.c.b16 %v2875, %v2874
    %v2879 = vsel %vm1104, %v2860, 0
    %v2882 = vsel %vm1104, %v2861, 0
    %v2885 = vsel %vm1104, %v2862, 0
    %v2888 = vsel %vm1104, %v2863, 0
    %v2891 = vsel %vm1104, %v2864, 0
    %v2894 = vsel %vm1104, %v2865, 0
    %v2897 = vsel %vm1104, %v2866, 0
    %v2900 = vsel %vm1104, %v2867, 0
    %v2903 = vsel %vm1104, %v2868, 0
    %2905 = vmatprep.subr.bf16.mxu0 0
    %2906 = vmatpush1.bf16.msra.mxu0 %v2876
    %2907 = vmatprep.subr.bf16.mxu0 0
    %2908 = vmatpush1.bf16.msra.mxu0 0
    %2909 = vmatprep.subr.bf16.mxu0 0
    %2910 = vmatpush1.bf16.msra.mxu0 0
    %2911 = vmatprep.subr.bf16.mxu0 0
    %2912 = vmatpush1.bf16.msra.mxu0 0
    %2913 = vmatprep.subr.bf16.mxu0 0
    %2914 = vmatpush1.bf16.msra.mxu0 0
    %2915 = vmatprep.subr.bf16.mxu0 0
    %2916 = vmatpush1.bf16.msra.mxu0 0
    %2917 = vmatprep.subr.bf16.mxu0 0
    %2918 = vmatpush1.bf16.msra.mxu0 0
    %2919 = vmatprep.subr.bf16.mxu0 0
    %2920 = vmatpush1.bf16.msra.mxu0 0
    %2921 = vmatprep.subr.bf16.mxu0 0
    %2922 = vmatpush1.bf16.msra.mxu0 0
    %2923 = vmatprep.subr.bf16.mxu0 0
    %2924 = vmatpush1.bf16.msra.mxu0 0
    %2925 = vmatprep.subr.bf16.mxu0 0
    %2926 = vmatpush1.bf16.msra.mxu0 0
    %2927 = vmatprep.subr.bf16.mxu0 0
    %2928 = vmatpush1.bf16.msra.mxu0 0
    %2929 = vmatprep.subr.bf16.mxu0 0
    %2930 = vmatpush1.bf16.msra.mxu0 0
    %2931 = vmatprep.subr.bf16.mxu0 0
    %2932 = vmatpush1.bf16.msra.mxu0 0
    %2933 = vmatprep.subr.bf16.mxu0 0
    %2934 = vmatpush1.bf16.msra.mxu0 0
    %2935 = vmatprep.subr.bf16.mxu0 0
    %2936 = vmatpush1.bf16.msra.mxu0 0
    %2937 = vmatprep.mubr.bf16.mxu0 0
    %2938 = vmatmul.mubr.bf16.gmra.mrb[0].mxu0 %v2879
    %v2939 = vpop.f32.mrb[0].mxu0
    %v2940 = vadd.f32 0.0, %v2939
    %v2941 = vpop.f32.mrb[0].mxu0
    %v2942 = vpop.f32.mrb[0].mxu0
    %v2943 = vadd.f32 0.0, %v2942
    %v2944 = vpop.f32.mrb[0].mxu0
    %2945 = vmatprep.mubr.bf16.mxu0 0
    %2946 = vmatmul.mubr.bf16.gmra.mrb[0].mxu0 %v2882
    %v2947 = vpop.f32.mrb[0].mxu0
    %v2948 = vadd.f32 0.0, %v2947
    %v2949 = vpop.f32.mrb[0].mxu0
    %v2950 = vpop.f32.mrb[0].mxu0
    %v2951 = vadd.f32 0.0, %v2950
    %v2952 = vpop.f32.mrb[0].mxu0
    %2953 = vmatprep.mubr.bf16.mxu0 0
    %2954 = vmatmul.mubr.bf16.gmra.mrb[0].mxu0 %v2885
    %v2955 = vpop.f32.mrb[0].mxu0
    %v2956 = vadd.f32 0.0, %v2955
    %v2957 = vpop.f32.mrb[0].mxu0
    %v2958 = vpop.f32.mrb[0].mxu0
    %v2959 = vadd.f32 0.0, %v2958
    %v2960 = vpop.f32.mrb[0].mxu0
    %2961 = vmatprep.mubr.bf16.mxu0 0
    %2962 = vmatmul.mubr.bf16.gmra.mrb[0].mxu0 %v2888
    %v2963 = vpop.f32.mrb[0].mxu0
    %v2964 = vadd.f32 0.0, %v2963
    %v2965 = vpop.f32.mrb[0].mxu0
    %v2966 = vpop.f32.mrb[0].mxu0
    %v2967 = vadd.f32 0.0, %v2966
    %v2968 = vpop.f32.mrb[0].mxu0
    %2969 = vmatprep.mubr.bf16.mxu0 0
    %2970 = vmatmul.mubr.bf16.gmra.mrb[0].mxu0 %v2891
    %v2971 = vpop.f32.mrb[0].mxu0
    %v2972 = vadd.f32 0.0, %v2971
    %v2973 = vpop.f32.mrb[0].mxu0
    %v2974 = vpop.f32.mrb[0].mxu0
    %v2975 = vadd.f32 0.0, %v2974
    %v2976 = vpop.f32.mrb[0].mxu0
    %2977 = vmatprep.mubr.bf16.mxu0 0
    %2978 = vmatmul.mubr.bf16.gmra.mrb[0].mxu0 %v2894
    %v2979 = vpop.f32.mrb[0].mxu0
    %v2980 = vadd.f32 0.0, %v2979
    %v2981 = vpop.f32.mrb[0].mxu0
    %v2982 = vpop.f32.mrb[0].mxu0
    %v2983 = vadd.f32 0.0, %v2982
    %v2984 = vpop.f32.mrb[0].mxu0
    %2985 = vmatprep.mubr.bf16.mxu0 0
    %2986 = vmatmul.mubr.bf16.gmra.mrb[0].mxu0 %v2897
    %v2987 = vpop.f32.mrb[0].mxu0
    %v2988 = vadd.f32 0.0, %v2987
    %v2989 = vpop.f32.mrb[0].mxu0
    %v2990 = vpop.f32.mrb[0].mxu0
    %v2991 = vadd.f32 0.0, %v2990
    %v2992 = vpop.f32.mrb[0].mxu0
    %2993 = vmatprep.mubr.bf16.mxu0 0
    %2994 = vmatmul.mubr.bf16.gmra.mrb[0].mxu0 %v2900
    %v2995 = vpop.f32.mrb[0].mxu0
    %v2996 = vadd.f32 0.0, %v2995
    %v2997 = vpop.f32.mrb[0].mxu0
    %v2998 = vpop.f32.mrb[0].mxu0
    %v2999 = vadd.f32 0.0, %v2998
    %v3000 = vpop.f32.mrb[0].mxu0
    %3001 = vmatprep.mubr.bf16.mxu0 0
    %3002 = vmatmul.mubr.bf16.gmra.mrb[0].mxu0 %v2903
    %v3003 = vpop.f32.mrb[0].mxu0
    %v3004 = vadd.f32 0.0, %v3003
    %v3005 = vpop.f32.mrb[0].mxu0
    %v3006 = vpop.f32.mrb[0].mxu0
    %v3007 = vadd.f32 0.0, %v3006
    %v3008 = vpop.f32.mrb[0].mxu0
    %3009 = vdwg.mxu0
    %v3012 = vunpack.c.l.b16 %v2858
    %v3013 = vunpack.c.l.b16 %v2859
    %v3014 = vpack.c.b16 %v3013, %v3012
    %v3017 = vsel %vm1104, %v2849, 0
    %v3020 = vsel %vm1104, %v2850, 0
    %v3023 = vsel %vm1104, %v2851, 0
    %v3026 = vsel %vm1104, %v2852, 0
    %v3029 = vsel %vm1104, %v2853, 0
    %v3032 = vsel %vm1104, %v2854, 0
    %v3035 = vsel %vm1104, %v2855, 0
    %v3038 = vsel %vm1104, %v2856, 0
    %v3041 = vsel %vm1104, %v2857, 0
    %3043 = vmatprep.subr.bf16.mxu0 0
    %3044 = vmatpush1.bf16.msra.mxu0 %v3014
    %3045 = vmatprep.subr.bf16.mxu0 0
    %3046 = vmatpush1.bf16.msra.mxu0 0
    %3047 = vmatprep.subr.bf16.mxu0 0
    %3048 = vmatpush1.bf16.msra.mxu0 0
    %3049 = vmatprep.subr.bf16.mxu0 0
    %3050 = vmatpush1.bf16.msra.mxu0 0
    %3051 = vmatprep.subr.bf16.mxu0 0
    %3052 = vmatpush1.bf16.msra.mxu0 0
    %3053 = vmatprep.subr.bf16.mxu0 0
    %3054 = vmatpush1.bf16.msra.mxu0 0
    %3055 = vmatprep.subr.bf16.mxu0 0
    %3056 = vmatpush1.bf16.msra.mxu0 0
    %3057 = vmatprep.subr.bf16.mxu0 0
    %3058 = vmatpush1.bf16.msra.mxu0 0
    %3059 = vmatprep.subr.bf16.mxu0 0
    %3060 = vmatpush1.bf16.msra.mxu0 0
    %3061 = vmatprep.subr.bf16.mxu0 0
    %3062 = vmatpush1.bf16.msra.mxu0 0
    %3063 = vmatprep.subr.bf16.mxu0 0
    %3064 = vmatpush1.bf16.msra.mxu0 0
    %3065 = vmatprep.subr.bf16.mxu0 0
    %3066 = vmatpush1.bf16.msra.mxu0 0
    %3067 = vmatprep.subr.bf16.mxu0 0
    %3068 = vmatpush1.bf16.msra.mxu0 0
    %3069 = vmatprep.subr.bf16.mxu0 0
    %3070 = vmatpush1.bf16.msra.mxu0 0
    %3071 = vmatprep.subr.bf16.mxu0 0
    %3072 = vmatpush1.bf16.msra.mxu0 0
    %3073 = vmatprep.subr.bf16.mxu0 0
    %3074 = vmatpush1.bf16.msra.mxu0 0
    %3075 = vmatprep.mubr.bf16.mxu0 0
    %3076 = vmatmul.mubr.bf16.gmra.mrb[0].mxu0 %v3017
    %v3077 = vpop.f32.mrb[0].mxu0
    %v3078 = vadd.f32 %v2940, %v3077
    %v3079 = vpop.f32.mrb[0].mxu0
    %v3080 = vpop.f32.mrb[0].mxu0
    %v3081 = vadd.f32 %v2943, %v3080
    %v3082 = vpop.f32.mrb[0].mxu0
    %3083 = vmatprep.mubr.bf16.mxu0 0
    %3084 = vmatmul.mubr.bf16.gmra.mrb[0].mxu0 %v3020
    %v3085 = vpop.f32.mrb[0].mxu0
    %v3086 = vadd.f32 %v2948, %v3085
    %v3087 = vpop.f32.mrb[0].mxu0
    %v3088 = vpop.f32.mrb[0].mxu0
    %v3089 = vadd.f32 %v2951, %v3088
    %v3090 = vpop.f32.mrb[0].mxu0
    %3091 = vmatprep.mubr.bf16.mxu0 0
    %3092 = vmatmul.mubr.bf16.gmra.mrb[0].mxu0 %v3023
    %v3093 = vpop.f32.mrb[0].mxu0
    %v3094 = vadd.f32 %v2956, %v3093
    %v3095 = vpop.f32.mrb[0].mxu0
    %v3096 = vpop.f32.mrb[0].mxu0
    %v3097 = vadd.f32 %v2959, %v3096
    %v3098 = vpop.f32.mrb[0].mxu0
    %3099 = vmatprep.mubr.bf16.mxu0 0
    %3100 = vmatmul.mubr.bf16.gmra.mrb[0].mxu0 %v3026
    %v3101 = vpop.f32.mrb[0].mxu0
    %v3102 = vadd.f32 %v2964, %v3101
    %v3103 = vpop.f32.mrb[0].mxu0
    %v3104 = vpop.f32.mrb[0].mxu0
    %v3105 = vadd.f32 %v2967, %v3104
    %v3106 = vpop.f32.mrb[0].mxu0
    %3107 = vmatprep.mubr.bf16.mxu0 0
    %3108 = vmatmul.mubr.bf16.gmra.mrb[0].mxu0 %v3029
    %v3109 = vpop.f32.mrb[0].mxu0
    %v3110 = vadd.f32 %v2972, %v3109
    %v3111 = vpop.f32.mrb[0].mxu0
    %v3112 = vpop.f32.mrb[0].mxu0
    %v3113 = vadd.f32 %v2975, %v3112
    %v3114 = vpop.f32.mrb[0].mxu0
    %3115 = vmatprep.mubr.bf16.mxu0 0
    %3116 = vmatmul.mubr.bf16.gmra.mrb[0].mxu0 %v3032
    %v3117 = vpop.f32.mrb[0].mxu0
    %v3118 = vadd.f32 %v2980, %v3117
    %v3119 = vpop.f32.mrb[0].mxu0
    %v3120 = vpop.f32.mrb[0].mxu0
    %v3121 = vadd.f32 %v2983, %v3120
    %v3122 = vpop.f32.mrb[0].mxu0
    %3123 = vmatprep.mubr.bf16.mxu0 0
    %3124 = vmatmul.mubr.bf16.gmra.mrb[0].mxu0 %v3035
    %v3125 = vpop.f32.mrb[0].mxu0
    %v3126 = vadd.f32 %v2988, %v3125
    %v3127 = vpop.f32.mrb[0].mxu0
    %v3128 = vpop.f32.mrb[0].mxu0
    %v3129 = vadd.f32 %v2991, %v3128
    %v3130 = vpop.f32.mrb[0].mxu0
    %3131 = vmatprep.mubr.bf16.mxu0 0
    %3132 = vmatmul.mubr.bf16.gmra.mrb[0].mxu0 %v3038
    %v3133 = vpop.f32.mrb[0].mxu0
    %v3134 = vadd.f32 %v2996, %v3133
    %v3135 = vpop.f32.mrb[0].mxu0
    %v3136 = vpop.f32.mrb[0].mxu0
    %v3137 = vadd.f32 %v2999, %v3136
    %v3138 = vpop.f32.mrb[0].mxu0
    %3139 = vmatprep.mubr.bf16.mxu0 0
    %3140 = vmatmul.mubr.bf16.gmra.mrb[0].mxu0 %v3041
    %v3141 = vpop.f32.mrb[0].mxu0
    %v3142 = vadd.f32 %v3004, %v3141
    %v3143 = vpop.f32.mrb[0].mxu0
    %v3144 = vpop.f32.mrb[0].mxu0
    %v3145 = vadd.f32 %v3007, %v3144
    %v3146 = vpop.f32.mrb[0].mxu0
    %3147 = vdwg.mxu0
    %v3148 = vld [vmem:[%s2472] sm:$0xff]
    %v3149 = vld [vmem:[%s2472 + $0x8] sm:$0xff]
    %v3150 = vld [vmem:[%s2472 + $0x10] sm:$0xff]
    %v3151 = vld [vmem:[%s2472 + $0x18] sm:$0xff]
    %v3152 = vld [vmem:[%s2472 + $0x20] sm:$0xff]
    %v3153 = vld [vmem:[%s2472 + $0x28] sm:$0xff]
    %v3154 = vld [vmem:[%s2472 + $0x30] sm:$0xff]
    %v3155 = vld [vmem:[%s2472 + $0x38] sm:$0xff]
    %v3156 = vld [vmem:[%s2472 + $0x40] sm:$0xff]
    %s3157 = scalar_lea.vmem %s4, 16
    %v3158 = vld [vmem:[%s3157] sm:$0xf]
    %v3159 = vld [vmem:[%s3157 + $0x4] sm:$0xf]
    %v3162 = vunpack.c.l.b16 %v3158
    %v3163 = vunpack.c.l.b16 %v3159
    %v3164 = vpack.c.b16 %v3163, %v3162
    %v3167 = vsel %vm1104, %v3148, 0
    %v3170 = vsel %vm1104, %v3149, 0
    %v3173 = vsel %vm1104, %v3150, 0
    %v3176 = vsel %vm1104, %v3151, 0
    %v3179 = vsel %vm1104, %v3152, 0
    %v3182 = vsel %vm1104, %v3153, 0
    %v3185 = vsel %vm1104, %v3154, 0
    %v3188 = vsel %vm1104, %v3155, 0
    %v3191 = vsel %vm1104, %v3156, 0
    %3193 = vmatprep.subr.bf16.mxu0 0
    %3194 = vmatpush1.bf16.msra.mxu0 %v3164
    %3195 = vmatprep.subr.bf16.mxu0 0
    %3196 = vmatpush1.bf16.msra.mxu0 0
    %3197 = vmatprep.subr.bf16.mxu0 0
    %3198 = vmatpush1.bf16.msra.mxu0 0
    %3199 = vmatprep.subr.bf16.mxu0 0
    %3200 = vmatpush1.bf16.msra.mxu0 0
    %3201 = vmatprep.subr.bf16.mxu0 0
    %3202 = vmatpush1.bf16.msra.mxu0 0
    %3203 = vmatprep.subr.bf16.mxu0 0
    %3204 = vmatpush1.bf16.msra.mxu0 0
    %3205 = vmatprep.subr.bf16.mxu0 0
    %3206 = vmatpush1.bf16.msra.mxu0 0
    %3207 = vmatprep.subr.bf16.mxu0 0
    %3208 = vmatpush1.bf16.msra.mxu0 0
    %3209 = vmatprep.subr.bf16.mxu0 0
    %3210 = vmatpush1.bf16.msra.mxu0 0
    %3211 = vmatprep.subr.bf16.mxu0 0
    %3212 = vmatpush1.bf16.msra.mxu0 0
    %3213 = vmatprep.subr.bf16.mxu0 0
    %3214 = vmatpush1.bf16.msra.mxu0 0
    %3215 = vmatprep.subr.bf16.mxu0 0
    %3216 = vmatpush1.bf16.msra.mxu0 0
    %3217 = vmatprep.subr.bf16.mxu0 0
    %3218 = vmatpush1.bf16.msra.mxu0 0
    %3219 = vmatprep.subr.bf16.mxu0 0
    %3220 = vmatpush1.bf16.msra.mxu0 0
    %3221 = vmatprep.subr.bf16.mxu0 0
    %3222 = vmatpush1.bf16.msra.mxu0 0
    %3223 = vmatprep.subr.bf16.mxu0 0
    %3224 = vmatpush1.bf16.msra.mxu0 0
    %3225 = vmatprep.mubr.bf16.mxu0 0
    %3226 = vmatmul.mubr.bf16.gmra.mrb[0].mxu0 %v3167
    %v3227 = vpop.f32.mrb[0].mxu0
    %v3228 = vadd.f32 0.0, %v3227
    %v3229 = vpop.f32.mrb[0].mxu0
    %v3230 = vpop.f32.mrb[0].mxu0
    %v3231 = vadd.f32 0.0, %v3230
    %v3232 = vpop.f32.mrb[0].mxu0
    %3233 = vmatprep.mubr.bf16.mxu0 0
    %3234 = vmatmul.mubr.bf16.gmra.mrb[0].mxu0 %v3170
    %v3235 = vpop.f32.mrb[0].mxu0
    %v3236 = vadd.f32 0.0, %v3235
    %v3237 = vpop.f32.mrb[0].mxu0
    %v3238 = vpop.f32.mrb[0].mxu0
    %v3239 = vadd.f32 0.0, %v3238
    %v3240 = vpop.f32.mrb[0].mxu0
    %3241 = vmatprep.mubr.bf16.mxu0 0
    %3242 = vmatmul.mubr.bf16.gmra.mrb[0].mxu0 %v3173
    %v3243 = vpop.f32.mrb[0].mxu0
    %v3244 = vadd.f32 0.0, %v3243
    %v3245 = vpop.f32.mrb[0].mxu0
    %v3246 = vpop.f32.mrb[0].mxu0
    %v3247 = vadd.f32 0.0, %v3246
    %v3248 = vpop.f32.mrb[0].mxu0
    %3249 = vmatprep.mubr.bf16.mxu0 0
    %3250 = vmatmul.mubr.bf16.gmra.mrb[0].mxu0 %v3176
    %v3251 = vpop.f32.mrb[0].mxu0
    %v3252 = vadd.f32 0.0, %v3251
    %v3253 = vpop.f32.mrb[0].mxu0
    %v3254 = vpop.f32.mrb[0].mxu0
    %v3255 = vadd.f32 0.0, %v3254
    %v3256 = vpop.f32.mrb[0].mxu0
    %3257 = vmatprep.mubr.bf16.mxu0 0
    %3258 = vmatmul.mubr.bf16.gmra.mrb[0].mxu0 %v3179
    %v3259 = vpop.f32.mrb[0].mxu0
    %v3260 = vadd.f32 0.0, %v3259
    %v3261 = vpop.f32.mrb[0].mxu0
    %v3262 = vpop.f32.mrb[0].mxu0
    %v3263 = vadd.f32 0.0, %v3262
    %v3264 = vpop.f32.mrb[0].mxu0
    %3265 = vmatprep.mubr.bf16.mxu0 0
    %3266 = vmatmul.mubr.bf16.gmra.mrb[0].mxu0 %v3182
    %v3267 = vpop.f32.mrb[0].mxu0
    %v3268 = vadd.f32 0.0, %v3267
    %v3269 = vpop.f32.mrb[0].mxu0
    %v3270 = vpop.f32.mrb[0].mxu0
    %v3271 = vadd.f32 0.0, %v3270
    %v3272 = vpop.f32.mrb[0].mxu0
    %3273 = vmatprep.mubr.bf16.mxu0 0
    %3274 = vmatmul.mubr.bf16.gmra.mrb[0].mxu0 %v3185
    %v3275 = vpop.f32.mrb[0].mxu0
    %v3276 = vadd.f32 0.0, %v3275
    %v3277 = vpop.f32.mrb[0].mxu0
    %v3278 = vpop.f32.mrb[0].mxu0
    %v3279 = vadd.f32 0.0, %v3278
    %v3280 = vpop.f32.mrb[0].mxu0
    %3281 = vmatprep.mubr.bf16.mxu0 0
    %3282 = vmatmul.mubr.bf16.gmra.mrb[0].mxu0 %v3188
    %v3283 = vpop.f32.mrb[0].mxu0
    %v3284 = vadd.f32 0.0, %v3283
    %v3285 = vpop.f32.mrb[0].mxu0
    %v3286 = vpop.f32.mrb[0].mxu0
    %v3287 = vadd.f32 0.0, %v3286
    %v3288 = vpop.f32.mrb[0].mxu0
    %3289 = vmatprep.mubr.bf16.mxu0 0
    %3290 = vmatmul.mubr.bf16.gmra.mrb[0].mxu0 %v3191
    %v3291 = vpop.f32.mrb[0].mxu0
    %v3292 = vadd.f32 0.0, %v3291
    %v3293 = vpop.f32.mrb[0].mxu0
    %v3294 = vpop.f32.mrb[0].mxu0
    %v3295 = vadd.f32 0.0, %v3294
    %v3296 = vpop.f32.mrb[0].mxu0
    %3297 = vdwg.mxu0
    %v3298 = vadd.f32 %v3078, %v3228
    %v3299 = vadd.f32 %v3081, %v3231
    %v3300 = vadd.f32 %v3086, %v3236
    %v3301 = vadd.f32 %v3089, %v3239
    %v3302 = vadd.f32 %v3094, %v3244
    %v3303 = vadd.f32 %v3097, %v3247
    %v3304 = vadd.f32 %v3102, %v3252
    %v3305 = vadd.f32 %v3105, %v3255
    %v3306 = vadd.f32 %v3110, %v3260
    %v3307 = vadd.f32 %v3113, %v3263
    %v3308 = vadd.f32 %v3118, %v3268
    %v3309 = vadd.f32 %v3121, %v3271
    %v3310 = vadd.f32 %v3126, %v3276
    %v3311 = vadd.f32 %v3129, %v3279
    %v3312 = vadd.f32 %v3134, %v3284
    %v3313 = vadd.f32 %v3137, %v3287
    %v3314 = vadd.f32 %v3142, %v3292
    %v3315 = vadd.f32 %v3145, %v3295
    %v3316 = vld [vmem:[%s2533] sm:$0xff]
    %v3317 = vld [vmem:[%s2533 + $0x8] sm:$0xff]
    %v3318 = vld [vmem:[%s2533 + $0x10] sm:$0xff]
    %v3319 = vld [vmem:[%s2533 + $0x18] sm:$0xff]
    %v3320 = vld [vmem:[%s2533 + $0x20] sm:$0xff]
    %v3321 = vld [vmem:[%s2533 + $0x28] sm:$0xff]
    %v3322 = vld [vmem:[%s2533 + $0x30] sm:$0xff]
    %v3323 = vld [vmem:[%s2533 + $0x38] sm:$0xff]
    %v3324 = vld [vmem:[%s2533 + $0x40] sm:$0xff]
    %s3325 = scalar_lea.vmem %s4, 24
    %v3326 = vld [vmem:[%s3325] sm:$0xf]
    %v3327 = vld [vmem:[%s3325 + $0x4] sm:$0xf]
    %v3330 = vunpack.c.l.b16 %v3326
    %v3331 = vunpack.c.l.b16 %v3327
    %v3332 = vpack.c.b16 %v3331, %v3330
    %v3335 = vsel %vm1104, %v3316, 0
    %v3338 = vsel %vm1104, %v3317, 0
    %v3341 = vsel %vm1104, %v3318, 0
    %v3344 = vsel %vm1104, %v3319, 0
    %v3347 = vsel %vm1104, %v3320, 0
    %v3350 = vsel %vm1104, %v3321, 0
    %v3353 = vsel %vm1104, %v3322, 0
    %v3356 = vsel %vm1104, %v3323, 0
    %v3359 = vsel %vm1104, %v3324, 0
    %3361 = vmatprep.subr.bf16.mxu0 0
    %3362 = vmatpush1.bf16.msra.mxu0 %v3332
    %3363 = vmatprep.subr.bf16.mxu0 0
    %3364 = vmatpush1.bf16.msra.mxu0 0
    %3365 = vmatprep.subr.bf16.mxu0 0
    %3366 = vmatpush1.bf16.msra.mxu0 0
    %3367 = vmatprep.subr.bf16.mxu0 0
    %3368 = vmatpush1.bf16.msra.mxu0 0
    %3369 = vmatprep.subr.bf16.mxu0 0
    %3370 = vmatpush1.bf16.msra.mxu0 0
    %3371 = vmatprep.subr.bf16.mxu0 0
    %3372 = vmatpush1.bf16.msra.mxu0 0
    %3373 = vmatprep.subr.bf16.mxu0 0
    %3374 = vmatpush1.bf16.msra.mxu0 0
    %3375 = vmatprep.subr.bf16.mxu0 0
    %3376 = vmatpush1.bf16.msra.mxu0 0
    %3377 = vmatprep.subr.bf16.mxu0 0
    %3378 = vmatpush1.bf16.msra.mxu0 0
    %3379 = vmatprep.subr.bf16.mxu0 0
    %3380 = vmatpush1.bf16.msra.mxu0 0
    %3381 = vmatprep.subr.bf16.mxu0 0
    %3382 = vmatpush1.bf16.msra.mxu0 0
    %3383 = vmatprep.subr.bf16.mxu0 0
    %3384 = vmatpush1.bf16.msra.mxu0 0
    %3385 = vmatprep.subr.bf16.mxu0 0
    %3386 = vmatpush1.bf16.msra.mxu0 0
    %3387 = vmatprep.subr.bf16.mxu0 0
    %3388 = vmatpush1.bf16.msra.mxu0 0
    %3389 = vmatprep.subr.bf16.mxu0 0
    %3390 = vmatpush1.bf16.msra.mxu0 0
    %3391 = vmatprep.subr.bf16.mxu0 0
    %3392 = vmatpush1.bf16.msra.mxu0 0
    %3393 = vmatprep.mubr.bf16.mxu0 0
    %3394 = vmatmul.mubr.bf16.gmra.mrb[0].mxu0 %v3335
    %v3395 = vpop.f32.mrb[0].mxu0
    %v3396 = vadd.f32 0.0, %v3395
    %v3397 = vpop.f32.mrb[0].mxu0
    %v3398 = vpop.f32.mrb[0].mxu0
    %v3399 = vadd.f32 0.0, %v3398
    %v3400 = vpop.f32.mrb[0].mxu0
    %3401 = vmatprep.mubr.bf16.mxu0 0
    %3402 = vmatmul.mubr.bf16.gmra.mrb[0].mxu0 %v3338
    %v3403 = vpop.f32.mrb[0].mxu0
    %v3404 = vadd.f32 0.0, %v3403
    %v3405 = vpop.f32.mrb[0].mxu0
    %v3406 = vpop.f32.mrb[0].mxu0
    %v3407 = vadd.f32 0.0, %v3406
    %v3408 = vpop.f32.mrb[0].mxu0
    %3409 = vmatprep.mubr.bf16.mxu0 0
    %3410 = vmatmul.mubr.bf16.gmra.mrb[0].mxu0 %v3341
    %v3411 = vpop.f32.mrb[0].mxu0
    %v3412 = vadd.f32 0.0, %v3411
    %v3413 = vpop.f32.mrb[0].mxu0
    %v3414 = vpop.f32.mrb[0].mxu0
    %v3415 = vadd.f32 0.0, %v3414
    %v3416 = vpop.f32.mrb[0].mxu0
    %3417 = vmatprep.mubr.bf16.mxu0 0
    %3418 = vmatmul.mubr.bf16.gmra.mrb[0].mxu0 %v3344
    %v3419 = vpop.f32.mrb[0].mxu0
    %v3420 = vadd.f32 0.0, %v3419
    %v3421 = vpop.f32.mrb[0].mxu0
    %v3422 = vpop.f32.mrb[0].mxu0
    %v3423 = vadd.f32 0.0, %v3422
    %v3424 = vpop.f32.mrb[0].mxu0
    %3425 = vmatprep.mubr.bf16.mxu0 0
    %3426 = vmatmul.mubr.bf16.gmra.mrb[0].mxu0 %v3347
    %v3427 = vpop.f32.mrb[0].mxu0
    %v3428 = vadd.f32 0.0, %v3427
    %v3429 = vpop.f32.mrb[0].mxu0
    %v3430 = vpop.f32.mrb[0].mxu0
    %v3431 = vadd.f32 0.0, %v3430
    %v3432 = vpop.f32.mrb[0].mxu0
    %3433 = vmatprep.mubr.bf16.mxu0 0
    %3434 = vmatmul.mubr.bf16.gmra.mrb[0].mxu0 %v3350
    %v3435 = vpop.f32.mrb[0].mxu0
    %v3436 = vadd.f32 0.0, %v3435
    %v3437 = vpop.f32.mrb[0].mxu0
    %v3438 = vpop.f32.mrb[0].mxu0
    %v3439 = vadd.f32 0.0, %v3438
    %v3440 = vpop.f32.mrb[0].mxu0
    %3441 = vmatprep.mubr.bf16.mxu0 0
    %3442 = vmatmul.mubr.bf16.gmra.mrb[0].mxu0 %v3353
    %v3443 = vpop.f32.mrb[0].mxu0
    %v3444 = vadd.f32 0.0, %v3443
    %v3445 = vpop.f32.mrb[0].mxu0
    %v3446 = vpop.f32.mrb[0].mxu0
    %v3447 = vadd.f32 0.0, %v3446
    %v3448 = vpop.f32.mrb[0].mxu0
    %3449 = vmatprep.mubr.bf16.mxu0 0
    %3450 = vmatmul.mubr.bf16.gmra.mrb[0].mxu0 %v3356
    %v3451 = vpop.f32.mrb[0].mxu0
    %v3452 = vadd.f32 0.0, %v3451
    %v3453 = vpop.f32.mrb[0].mxu0
    %v3454 = vpop.f32.mrb[0].mxu0
    %v3455 = vadd.f32 0.0, %v3454
    %v3456 = vpop.f32.mrb[0].mxu0
    %3457 = vmatprep.mubr.bf16.mxu0 0
    %3458 = vmatmul.mubr.bf16.gmra.mrb[0].mxu0 %v3359
    %v3459 = vpop.f32.mrb[0].mxu0
    %v3460 = vadd.f32 0.0, %v3459
    %v3461 = vpop.f32.mrb[0].mxu0
    %v3462 = vpop.f32.mrb[0].mxu0
    %v3463 = vadd.f32 0.0, %v3462
    %v3464 = vpop.f32.mrb[0].mxu0
    %3465 = vdwg.mxu0
    %v3466 = vadd.f32 %v3298, %v3396
    %v3467 = vadd.f32 %v3299, %v3399
    %v3468 = vadd.f32 %v3300, %v3404
    %v3469 = vadd.f32 %v3301, %v3407
    %v3470 = vadd.f32 %v3302, %v3412
    %v3471 = vadd.f32 %v3303, %v3415
    %v3472 = vadd.f32 %v3304, %v3420
    %v3473 = vadd.f32 %v3305, %v3423
    %v3474 = vadd.f32 %v3306, %v3428
    %v3475 = vadd.f32 %v3307, %v3431
    %v3476 = vadd.f32 %v3308, %v3436
    %v3477 = vadd.f32 %v3309, %v3439
    %v3478 = vadd.f32 %v3310, %v3444
    %v3479 = vadd.f32 %v3311, %v3447
    %v3480 = vadd.f32 %v3312, %v3452
    %v3481 = vadd.f32 %v3313, %v3455
    %v3482 = vadd.f32 %v3314, %v3460
    %v3483 = vadd.f32 %v3315, %v3463
    %v3484 = vld [vmem:[%s2579] sm:$0xff]
    %v3485 = vld [vmem:[%s2579 + $0x8] sm:$0xff]
    %v3486 = vld [vmem:[%s2579 + $0x10] sm:$0xff]
    %v3487 = vld [vmem:[%s2579 + $0x18] sm:$0xff]
    %v3488 = vld [vmem:[%s2579 + $0x20] sm:$0xff]
    %v3489 = vld [vmem:[%s2579 + $0x28] sm:$0xff]
    %v3490 = vld [vmem:[%s2579 + $0x30] sm:$0xff]
    %v3491 = vld [vmem:[%s2579 + $0x38] sm:$0xff]
    %v3492 = vld [vmem:[%s2579 + $0x40] sm:$0xff]
    %s3493 = scalar_lea.vmem %s4, 32
    %v3494 = vld [vmem:[%s3493] sm:$0xf]
    %v3495 = vld [vmem:[%s3493 + $0x4] sm:$0xf]
    %v3498 = vunpack.c.l.b16 %v3494
    %v3499 = vunpack.c.l.b16 %v3495
    %v3500 = vpack.c.b16 %v3499, %v3498
    %v3503 = vsel %vm1104, %v3484, 0
    %v3506 = vsel %vm1104, %v3485, 0
    %v3509 = vsel %vm1104, %v3486, 0
    %v3512 = vsel %vm1104, %v3487, 0
    %v3515 = vsel %vm1104, %v3488, 0
    %v3518 = vsel %vm1104, %v3489, 0
    %v3521 = vsel %vm1104, %v3490, 0
    %v3524 = vsel %vm1104, %v3491, 0
    %v3527 = vsel %vm1104, %v3492, 0
    %3529 = vmatprep.subr.bf16.mxu0 0
    %3530 = vmatpush1.bf16.msra.mxu0 %v3500
    %3531 = vmatprep.subr.bf16.mxu0 0
    %3532 = vmatpush1.bf16.msra.mxu0 0
    %3533 = vmatprep.subr.bf16.mxu0 0
    %3534 = vmatpush1.bf16.msra.mxu0 0
    %3535 = vmatprep.subr.bf16.mxu0 0
    %3536 = vmatpush1.bf16.msra.mxu0 0
    %3537 = vmatprep.subr.bf16.mxu0 0
    %3538 = vmatpush1.bf16.msra.mxu0 0
    %3539 = vmatprep.subr.bf16.mxu0 0
    %3540 = vmatpush1.bf16.msra.mxu0 0
    %3541 = vmatprep.subr.bf16.mxu0 0
    %3542 = vmatpush1.bf16.msra.mxu0 0
    %3543 = vmatprep.subr.bf16.mxu0 0
    %3544 = vmatpush1.bf16.msra.mxu0 0
    %3545 = vmatprep.subr.bf16.mxu0 0
    %3546 = vmatpush1.bf16.msra.mxu0 0
    %3547 = vmatprep.subr.bf16.mxu0 0
    %3548 = vmatpush1.bf16.msra.mxu0 0
    %3549 = vmatprep.subr.bf16.mxu0 0
    %3550 = vmatpush1.bf16.msra.mxu0 0
    %3551 = vmatprep.subr.bf16.mxu0 0
    %3552 = vmatpush1.bf16.msra.mxu0 0
    %3553 = vmatprep.subr.bf16.mxu0 0
    %3554 = vmatpush1.bf16.msra.mxu0 0
    %3555 = vmatprep.subr.bf16.mxu0 0
    %3556 = vmatpush1.bf16.msra.mxu0 0
    %3557 = vmatprep.subr.bf16.mxu0 0
    %3558 = vmatpush1.bf16.msra.mxu0 0
    %3559 = vmatprep.subr.bf16.mxu0 0
    %3560 = vmatpush1.bf16.msra.mxu0 0
    %3561 = vmatprep.mubr.bf16.mxu0 0
    %3562 = vmatmul.mubr.bf16.gmra.mrb[0].mxu0 %v3503
    %v3563 = vpop.f32.mrb[0].mxu0
    %v3564 = vadd.f32 0.0, %v3563
    %v3565 = vpop.f32.mrb[0].mxu0
    %v3566 = vpop.f32.mrb[0].mxu0
    %v3567 = vadd.f32 0.0, %v3566
    %v3568 = vpop.f32.mrb[0].mxu0
    %3569 = vmatprep.mubr.bf16.mxu0 0
    %3570 = vmatmul.mubr.bf16.gmra.mrb[0].mxu0 %v3506
    %v3571 = vpop.f32.mrb[0].mxu0
    %v3572 = vadd.f32 0.0, %v3571
    %v3573 = vpop.f32.mrb[0].mxu0
    %v3574 = vpop.f32.mrb[0].mxu0
    %v3575 = vadd.f32 0.0, %v3574
    %v3576 = vpop.f32.mrb[0].mxu0
    %3577 = vmatprep.mubr.bf16.mxu0 0
    %3578 = vmatmul.mubr.bf16.gmra.mrb[0].mxu0 %v3509
    %v3579 = vpop.f32.mrb[0].mxu0
    %v3580 = vadd.f32 0.0, %v3579
    %v3581 = vpop.f32.mrb[0].mxu0
    %v3582 = vpop.f32.mrb[0].mxu0
    %v3583 = vadd.f32 0.0, %v3582
    %v3584 = vpop.f32.mrb[0].mxu0
    %3585 = vmatprep.mubr.bf16.mxu0 0
    %3586 = vmatmul.mubr.bf16.gmra.mrb[0].mxu0 %v3512
    %v3587 = vpop.f32.mrb[0].mxu0
    %v3588 = vadd.f32 0.0, %v3587
    %v3589 = vpop.f32.mrb[0].mxu0
    %v3590 = vpop.f32.mrb[0].mxu0
    %v3591 = vadd.f32 0.0, %v3590
    %v3592 = vpop.f32.mrb[0].mxu0
    %3593 = vmatprep.mubr.bf16.mxu0 0
    %3594 = vmatmul.mubr.bf16.gmra.mrb[0].mxu0 %v3515
    %v3595 = vpop.f32.mrb[0].mxu0
    %v3596 = vadd.f32 0.0, %v3595
    %v3597 = vpop.f32.mrb[0].mxu0
    %v3598 = vpop.f32.mrb[0].mxu0
    %v3599 = vadd.f32 0.0, %v3598
    %v3600 = vpop.f32.mrb[0].mxu0
    %3601 = vmatprep.mubr.bf16.mxu0 0
    %3602 = vmatmul.mubr.bf16.gmra.mrb[0].mxu0 %v3518
    %v3603 = vpop.f32.mrb[0].mxu0
    %v3604 = vadd.f32 0.0, %v3603
    %v3605 = vpop.f32.mrb[0].mxu0
    %v3606 = vpop.f32.mrb[0].mxu0
    %v3607 = vadd.f32 0.0, %v3606
    %v3608 = vpop.f32.mrb[0].mxu0
    %3609 = vmatprep.mubr.bf16.mxu0 0
    %3610 = vmatmul.mubr.bf16.gmra.mrb[0].mxu0 %v3521
    %v3611 = vpop.f32.mrb[0].mxu0
    %v3612 = vadd.f32 0.0, %v3611
    %v3613 = vpop.f32.mrb[0].mxu0
    %v3614 = vpop.f32.mrb[0].mxu0
    %v3615 = vadd.f32 0.0, %v3614
    %v3616 = vpop.f32.mrb[0].mxu0
    %3617 = vmatprep.mubr.bf16.mxu0 0
    %3618 = vmatmul.mubr.bf16.gmra.mrb[0].mxu0 %v3524
    %v3619 = vpop.f32.mrb[0].mxu0
    %v3620 = vadd.f32 0.0, %v3619
    %v3621 = vpop.f32.mrb[0].mxu0
    %v3622 = vpop.f32.mrb[0].mxu0
    %v3623 = vadd.f32 0.0, %v3622
    %v3624 = vpop.f32.mrb[0].mxu0
    %3625 = vmatprep.mubr.bf16.mxu0 0
    %3626 = vmatmul.mubr.bf16.gmra.mrb[0].mxu0 %v3527
    %v3627 = vpop.f32.mrb[0].mxu0
    %v3628 = vadd.f32 0.0, %v3627
    %v3629 = vpop.f32.mrb[0].mxu0
    %v3630 = vpop.f32.mrb[0].mxu0
    %v3631 = vadd.f32 0.0, %v3630
    %v3632 = vpop.f32.mrb[0].mxu0
    %3633 = vdwg.mxu0
    %v3634 = vadd.f32 %v3466, %v3564
    %v3635 = vadd.f32 %v3467, %v3567
    %v3636 = vadd.f32 %v3468, %v3572
    %v3637 = vadd.f32 %v3469, %v3575
    %v3638 = vadd.f32 %v3470, %v3580
    %v3639 = vadd.f32 %v3471, %v3583
    %v3640 = vadd.f32 %v3472, %v3588
    %v3641 = vadd.f32 %v3473, %v3591
    %v3642 = vadd.f32 %v3474, %v3596
    %v3643 = vadd.f32 %v3475, %v3599
    %v3644 = vadd.f32 %v3476, %v3604
    %v3645 = vadd.f32 %v3477, %v3607
    %v3646 = vadd.f32 %v3478, %v3612
    %v3647 = vadd.f32 %v3479, %v3615
    %v3648 = vadd.f32 %v3480, %v3620
    %v3649 = vadd.f32 %v3481, %v3623
    %v3650 = vadd.f32 %v3482, %v3628
    %v3651 = vadd.f32 %v3483, %v3631
    %v3652 = vld [vmem:[%s2632] sm:$0xff]
    %v3653 = vld [vmem:[%s2632 + $0x8] sm:$0xff]
    %v3654 = vld [vmem:[%s2632 + $0x10] sm:$0xff]
    %v3655 = vld [vmem:[%s2632 + $0x18] sm:$0xff]
    %v3656 = vld [vmem:[%s2632 + $0x20] sm:$0xff]
    %v3657 = vld [vmem:[%s2632 + $0x28] sm:$0xff]
    %v3658 = vld [vmem:[%s2632 + $0x30] sm:$0xff]
    %v3659 = vld [vmem:[%s2632 + $0x38] sm:$0xff]
    %v3660 = vld [vmem:[%s2632 + $0x40] sm:$0xff]
    %s3661 = scalar_lea.vmem %s4, 40
    %v3662 = vld [vmem:[%s3661] sm:$0xf]
    %v3663 = vld [vmem:[%s3661 + $0x4] sm:$0xf]
    %v3666 = vunpack.c.l.b16 %v3662
    %v3667 = vunpack.c.l.b16 %v3663
    %v3668 = vpack.c.b16 %v3667, %v3666
    %v3671 = vsel %vm1104, %v3652, 0
    %v3674 = vsel %vm1104, %v3653, 0
    %v3677 = vsel %vm1104, %v3654, 0
    %v3680 = vsel %vm1104, %v3655, 0
    %v3683 = vsel %vm1104, %v3656, 0
    %v3686 = vsel %vm1104, %v3657, 0
    %v3689 = vsel %vm1104, %v3658, 0
    %v3692 = vsel %vm1104, %v3659, 0
    %v3695 = vsel %vm1104, %v3660, 0
    %3697 = vmatprep.subr.bf16.mxu0 0
    %3698 = vmatpush1.bf16.msra.mxu0 %v3668
    %3699 = vmatprep.subr.bf16.mxu0 0
    %3700 = vmatpush1.bf16.msra.mxu0 0
    %3701 = vmatprep.subr.bf16.mxu0 0
    %3702 = vmatpush1.bf16.msra.mxu0 0
    %3703 = vmatprep.subr.bf16.mxu0 0
    %3704 = vmatpush1.bf16.msra.mxu0 0
    %3705 = vmatprep.subr.bf16.mxu0 0
    %3706 = vmatpush1.bf16.msra.mxu0 0
    %3707 = vmatprep.subr.bf16.mxu0 0
    %3708 = vmatpush1.bf16.msra.mxu0 0
    %3709 = vmatprep.subr.bf16.mxu0 0
    %3710 = vmatpush1.bf16.msra.mxu0 0
    %3711 = vmatprep.subr.bf16.mxu0 0
    %3712 = vmatpush1.bf16.msra.mxu0 0
    %3713 = vmatprep.subr.bf16.mxu0 0
    %3714 = vmatpush1.bf16.msra.mxu0 0
    %3715 = vmatprep.subr.bf16.mxu0 0
    %3716 = vmatpush1.bf16.msra.mxu0 0
    %3717 = vmatprep.subr.bf16.mxu0 0
    %3718 = vmatpush1.bf16.msra.mxu0 0
    %3719 = vmatprep.subr.bf16.mxu0 0
    %3720 = vmatpush1.bf16.msra.mxu0 0
    %3721 = vmatprep.subr.bf16.mxu0 0
    %3722 = vmatpush1.bf16.msra.mxu0 0
    %3723 = vmatprep.subr.bf16.mxu0 0
    %3724 = vmatpush1.bf16.msra.mxu0 0
    %3725 = vmatprep.subr.bf16.mxu0 0
    %3726 = vmatpush1.bf16.msra.mxu0 0
    %3727 = vmatprep.subr.bf16.mxu0 0
    %3728 = vmatpush1.bf16.msra.mxu0 0
    %3729 = vmatprep.mubr.bf16.mxu0 0
    %3730 = vmatmul.mubr.bf16.gmra.mrb[0].mxu0 %v3671
    %v3731 = vpop.f32.mrb[0].mxu0
    %v3732 = vadd.f32 0.0, %v3731
    %v3733 = vpop.f32.mrb[0].mxu0
    %v3734 = vpop.f32.mrb[0].mxu0
    %v3735 = vadd.f32 0.0, %v3734
    %v3736 = vpop.f32.mrb[0].mxu0
    %3737 = vmatprep.mubr.bf16.mxu0 0
    %3738 = vmatmul.mubr.bf16.gmra.mrb[0].mxu0 %v3674
    %v3739 = vpop.f32.mrb[0].mxu0
    %v3740 = vadd.f32 0.0, %v3739
    %v3741 = vpop.f32.mrb[0].mxu0
    %v3742 = vpop.f32.mrb[0].mxu0
    %v3743 = vadd.f32 0.0, %v3742
    %v3744 = vpop.f32.mrb[0].mxu0
    %3745 = vmatprep.mubr.bf16.mxu0 0
    %3746 = vmatmul.mubr.bf16.gmra.mrb[0].mxu0 %v3677
    %v3747 = vpop.f32.mrb[0].mxu0
    %v3748 = vadd.f32 0.0, %v3747
    %v3749 = vpop.f32.mrb[0].mxu0
    %v3750 = vpop.f32.mrb[0].mxu0
    %v3751 = vadd.f32 0.0, %v3750
    %v3752 = vpop.f32.mrb[0].mxu0
    %3753 = vmatprep.mubr.bf16.mxu0 0
    %3754 = vmatmul.mubr.bf16.gmra.mrb[0].mxu0 %v3680
    %v3755 = vpop.f32.mrb[0].mxu0
    %v3756 = vadd.f32 0.0, %v3755
    %v3757 = vpop.f32.mrb[0].mxu0
    %v3758 = vpop.f32.mrb[0].mxu0
    %v3759 = vadd.f32 0.0, %v3758
    %v3760 = vpop.f32.mrb[0].mxu0
    %3761 = vmatprep.mubr.bf16.mxu0 0
    %3762 = vmatmul.mubr.bf16.gmra.mrb[0].mxu0 %v3683
    %v3763 = vpop.f32.mrb[0].mxu0
    %v3764 = vadd.f32 0.0, %v3763
    %v3765 = vpop.f32.mrb[0].mxu0
    %v3766 = vpop.f32.mrb[0].mxu0
    %v3767 = vadd.f32 0.0, %v3766
    %v3768 = vpop.f32.mrb[0].mxu0
    %3769 = vmatprep.mubr.bf16.mxu0 0
    %3770 = vmatmul.mubr.bf16.gmra.mrb[0].mxu0 %v3686
    %v3771 = vpop.f32.mrb[0].mxu0
    %v3772 = vadd.f32 0.0, %v3771
    %v3773 = vpop.f32.mrb[0].mxu0
    %v3774 = vpop.f32.mrb[0].mxu0
    %v3775 = vadd.f32 0.0, %v3774
    %v3776 = vpop.f32.mrb[0].mxu0
    %3777 = vmatprep.mubr.bf16.mxu0 0
    %3778 = vmatmul.mubr.bf16.gmra.mrb[0].mxu0 %v3689
    %v3779 = vpop.f32.mrb[0].mxu0
    %v3780 = vadd.f32 0.0, %v3779
    %v3781 = vpop.f32.mrb[0].mxu0
    %v3782 = vpop.f32.mrb[0].mxu0
    %v3783 = vadd.f32 0.0, %v3782
    %v3784 = vpop.f32.mrb[0].mxu0
    %3785 = vmatprep.mubr.bf16.mxu0 0
    %3786 = vmatmul.mubr.bf16.gmra.mrb[0].mxu0 %v3692
    %v3787 = vpop.f32.mrb[0].mxu0
    %v3788 = vadd.f32 0.0, %v3787
    %v3789 = vpop.f32.mrb[0].mxu0
    %v3790 = vpop.f32.mrb[0].mxu0
    %v3791 = vadd.f32 0.0, %v3790
    %v3792 = vpop.f32.mrb[0].mxu0
    %3793 = vmatprep.mubr.bf16.mxu0 0
    %3794 = vmatmul.mubr.bf16.gmra.mrb[0].mxu0 %v3695
    %v3795 = vpop.f32.mrb[0].mxu0
    %v3796 = vadd.f32 0.0, %v3795
    %v3797 = vpop.f32.mrb[0].mxu0
    %v3798 = vpop.f32.mrb[0].mxu0
    %v3799 = vadd.f32 0.0, %v3798
    %v3800 = vpop.f32.mrb[0].mxu0
    %3801 = vdwg.mxu0
    %v3802 = vadd.f32 %v3634, %v3732
    %v3803 = vadd.f32 %v3635, %v3735
    %v3804 = vadd.f32 %v3636, %v3740
    %v3805 = vadd.f32 %v3637, %v3743
    %v3806 = vadd.f32 %v3638, %v3748
    %v3807 = vadd.f32 %v3639, %v3751
    %v3808 = vadd.f32 %v3640, %v3756
    %v3809 = vadd.f32 %v3641, %v3759
    %v3810 = vadd.f32 %v3642, %v3764
    %v3811 = vadd.f32 %v3643, %v3767
    %v3812 = vadd.f32 %v3644, %v3772
    %v3813 = vadd.f32 %v3645, %v3775
    %v3814 = vadd.f32 %v3646, %v3780
    %v3815 = vadd.f32 %v3647, %v3783
    %v3816 = vadd.f32 %v3648, %v3788
    %v3817 = vadd.f32 %v3649, %v3791
    %v3818 = vadd.f32 %v3650, %v3796
    %v3819 = vadd.f32 %v3651, %v3799
    %v3820 = vld [vmem:[%s2692] sm:$0xff]
    %v3821 = vld [vmem:[%s2692 + $0x8] sm:$0xff]
    %v3822 = vld [vmem:[%s2692 + $0x10] sm:$0xff]
    %v3823 = vld [vmem:[%s2692 + $0x18] sm:$0xff]
    %v3824 = vld [vmem:[%s2692 + $0x20] sm:$0xff]
    %v3825 = vld [vmem:[%s2692 + $0x28] sm:$0xff]
    %v3826 = vld [vmem:[%s2692 + $0x30] sm:$0xff]
    %v3827 = vld [vmem:[%s2692 + $0x38] sm:$0xff]
    %v3828 = vld [vmem:[%s2692 + $0x40] sm:$0xff]
    %s3829 = scalar_lea.vmem %s4, 48
    %v3830 = vld [vmem:[%s3829] sm:$0xf]
    %v3831 = vld [vmem:[%s3829 + $0x4] sm:$0xf]
    %v3834 = vunpack.c.l.b16 %v3830
    %v3835 = vunpack.c.l.b16 %v3831
    %v3836 = vpack.c.b16 %v3835, %v3834
    %v3839 = vsel %vm1104, %v3820, 0
    %v3842 = vsel %vm1104, %v3821, 0
    %v3845 = vsel %vm1104, %v3822, 0
    %v3848 = vsel %vm1104, %v3823, 0
    %v3851 = vsel %vm1104, %v3824, 0
    %v3854 = vsel %vm1104, %v3825, 0
    %v3857 = vsel %vm1104, %v3826, 0
    %v3860 = vsel %vm1104, %v3827, 0
    %v3863 = vsel %vm1104, %v3828, 0
    %3865 = vmatprep.subr.bf16.mxu0 0
    %3866 = vmatpush1.bf16.msra.mxu0 %v3836
    %3867 = vmatprep.subr.bf16.mxu0 0
    %3868 = vmatpush1.bf16.msra.mxu0 0
    %3869 = vmatprep.subr.bf16.mxu0 0
    %3870 = vmatpush1.bf16.msra.mxu0 0
    %3871 = vmatprep.subr.bf16.mxu0 0
    %3872 = vmatpush1.bf16.msra.mxu0 0
    %3873 = vmatprep.subr.bf16.mxu0 0
    %3874 = vmatpush1.bf16.msra.mxu0 0
    %3875 = vmatprep.subr.bf16.mxu0 0
    %3876 = vmatpush1.bf16.msra.mxu0 0
    %3877 = vmatprep.subr.bf16.mxu0 0
    %3878 = vmatpush1.bf16.msra.mxu0 0
    %3879 = vmatprep.subr.bf16.mxu0 0
    %3880 = vmatpush1.bf16.msra.mxu0 0
    %3881 = vmatprep.subr.bf16.mxu0 0
    %3882 = vmatpush1.bf16.msra.mxu0 0
    %3883 = vmatprep.subr.bf16.mxu0 0
    %3884 = vmatpush1.bf16.msra.mxu0 0
    %3885 = vmatprep.subr.bf16.mxu0 0
    %3886 = vmatpush1.bf16.msra.mxu0 0
    %3887 = vmatprep.subr.bf16.mxu0 0
    %3888 = vmatpush1.bf16.msra.mxu0 0
    %3889 = vmatprep.subr.bf16.mxu0 0
    %3890 = vmatpush1.bf16.msra.mxu0 0
    %3891 = vmatprep.subr.bf16.mxu0 0
    %3892 = vmatpush1.bf16.msra.mxu0 0
    %3893 = vmatprep.subr.bf16.mxu0 0
    %3894 = vmatpush1.bf16.msra.mxu0 0
    %3895 = vmatprep.subr.bf16.mxu0 0
    %3896 = vmatpush1.bf16.msra.mxu0 0
    %3897 = vmatprep.mubr.bf16.mxu0 0
    %3898 = vmatmul.mubr.bf16.gmra.mrb[0].mxu0 %v3839
    %v3899 = vpop.f32.mrb[0].mxu0
    %v3900 = vadd.f32 0.0, %v3899
    %v3901 = vpop.f32.mrb[0].mxu0
    %v3902 = vpop.f32.mrb[0].mxu0
    %v3903 = vadd.f32 0.0, %v3902
    %v3904 = vpop.f32.mrb[0].mxu0
    %3905 = vmatprep.mubr.bf16.mxu0 0
    %3906 = vmatmul.mubr.bf16.gmra.mrb[0].mxu0 %v3842
    %v3907 = vpop.f32.mrb[0].mxu0
    %v3908 = vadd.f32 0.0, %v3907
    %v3909 = vpop.f32.mrb[0].mxu0
    %v3910 = vpop.f32.mrb[0].mxu0
    %v3911 = vadd.f32 0.0, %v3910
    %v3912 = vpop.f32.mrb[0].mxu0
    %3913 = vmatprep.mubr.bf16.mxu0 0
    %3914 = vmatmul.mubr.bf16.gmra.mrb[0].mxu0 %v3845
    %v3915 = vpop.f32.mrb[0].mxu0
    %v3916 = vadd.f32 0.0, %v3915
    %v3917 = vpop.f32.mrb[0].mxu0
    %v3918 = vpop.f32.mrb[0].mxu0
    %v3919 = vadd.f32 0.0, %v3918
    %v3920 = vpop.f32.mrb[0].mxu0
    %3921 = vmatprep.mubr.bf16.mxu0 0
    %3922 = vmatmul.mubr.bf16.gmra.mrb[0].mxu0 %v3848
    %v3923 = vpop.f32.mrb[0].mxu0
    %v3924 = vadd.f32 0.0, %v3923
    %v3925 = vpop.f32.mrb[0].mxu0
    %v3926 = vpop.f32.mrb[0].mxu0
    %v3927 = vadd.f32 0.0, %v3926
    %v3928 = vpop.f32.mrb[0].mxu0
    %3929 = vmatprep.mubr.bf16.mxu0 0
    %3930 = vmatmul.mubr.bf16.gmra.mrb[0].mxu0 %v3851
    %v3931 = vpop.f32.mrb[0].mxu0
    %v3932 = vadd.f32 0.0, %v3931
    %v3933 = vpop.f32.mrb[0].mxu0
    %v3934 = vpop.f32.mrb[0].mxu0
    %v3935 = vadd.f32 0.0, %v3934
    %v3936 = vpop.f32.mrb[0].mxu0
    %3937 = vmatprep.mubr.bf16.mxu0 0
    %3938 = vmatmul.mubr.bf16.gmra.mrb[0].mxu0 %v3854
    %v3939 = vpop.f32.mrb[0].mxu0
    %v3940 = vadd.f32 0.0, %v3939
    %v3941 = vpop.f32.mrb[0].mxu0
    %v3942 = vpop.f32.mrb[0].mxu0
    %v3943 = vadd.f32 0.0, %v3942
    %v3944 = vpop.f32.mrb[0].mxu0
    %3945 = vmatprep.mubr.bf16.mxu0 0
    %3946 = vmatmul.mubr.bf16.gmra.mrb[0].mxu0 %v3857
    %v3947 = vpop.f32.mrb[0].mxu0
    %v3948 = vadd.f32 0.0, %v3947
    %v3949 = vpop.f32.mrb[0].mxu0
    %v3950 = vpop.f32.mrb[0].mxu0
    %v3951 = vadd.f32 0.0, %v3950
    %v3952 = vpop.f32.mrb[0].mxu0
    %3953 = vmatprep.mubr.bf16.mxu0 0
    %3954 = vmatmul.mubr.bf16.gmra.mrb[0].mxu0 %v3860
    %v3955 = vpop.f32.mrb[0].mxu0
    %v3956 = vadd.f32 0.0, %v3955
    %v3957 = vpop.f32.mrb[0].mxu0
    %v3958 = vpop.f32.mrb[0].mxu0
    %v3959 = vadd.f32 0.0, %v3958
    %v3960 = vpop.f32.mrb[0].mxu0
    %3961 = vmatprep.mubr.bf16.mxu0 0
    %3962 = vmatmul.mubr.bf16.gmra.mrb[0].mxu0 %v3863
    %v3963 = vpop.f32.mrb[0].mxu0
    %v3964 = vadd.f32 0.0, %v3963
    %v3965 = vpop.f32.mrb[0].mxu0
    %v3966 = vpop.f32.mrb[0].mxu0
    %v3967 = vadd.f32 0.0, %v3966
    %v3968 = vpop.f32.mrb[0].mxu0
    %3969 = vdwg.mxu0
    %v3970 = vadd.f32 %v3802, %v3900
    %v3971 = vadd.f32 %v3803, %v3903
    %v3972 = vadd.f32 %v3804, %v3908
    %v3973 = vadd.f32 %v3805, %v3911
    %v3974 = vadd.f32 %v3806, %v3916
    %v3975 = vadd.f32 %v3807, %v3919
    %v3976 = vadd.f32 %v3808, %v3924
    %v3977 = vadd.f32 %v3809, %v3927
    %v3978 = vadd.f32 %v3810, %v3932
    %v3979 = vadd.f32 %v3811, %v3935
    %v3980 = vadd.f32 %v3812, %v3940
    %v3981 = vadd.f32 %v3813, %v3943
    %v3982 = vadd.f32 %v3814, %v3948
    %v3983 = vadd.f32 %v3815, %v3951
    %v3984 = vadd.f32 %v3816, %v3956
    %v3985 = vadd.f32 %v3817, %v3959
    %v3986 = vadd.f32 %v3818, %v3964
    %v3987 = vadd.f32 %v3819, %v3967
    %v3988 = vld [vmem:[%s2738] sm:$0xff]
    %v3989 = vld [vmem:[%s2738 + $0x8] sm:$0xff]
    %v3990 = vld [vmem:[%s2738 + $0x10] sm:$0xff]
    %v3991 = vld [vmem:[%s2738 + $0x18] sm:$0xff]
    %v3992 = vld [vmem:[%s2738 + $0x20] sm:$0xff]
    %v3993 = vld [vmem:[%s2738 + $0x28] sm:$0xff]
    %v3994 = vld [vmem:[%s2738 + $0x30] sm:$0xff]
    %v3995 = vld [vmem:[%s2738 + $0x38] sm:$0xff]
    %v3996 = vld [vmem:[%s2738 + $0x40] sm:$0xff]
    %s3997 = scalar_lea.vmem %s4, 56
    %v3998 = vld [vmem:[%s3997] sm:$0xf]
    %v3999 = vld [vmem:[%s3997 + $0x4] sm:$0xf]
    %v4002 = vunpack.c.l.b16 %v3998
    %v4003 = vunpack.c.l.b16 %v3999
    %v4004 = vpack.c.b16 %v4003, %v4002
    %v4007 = vsel %vm1104, %v3988, 0
    %v4010 = vsel %vm1104, %v3989, 0
    %v4013 = vsel %vm1104, %v3990, 0
    %v4016 = vsel %vm1104, %v3991, 0
    %v4019 = vsel %vm1104, %v3992, 0
    %v4022 = vsel %vm1104, %v3993, 0
    %v4025 = vsel %vm1104, %v3994, 0
    %v4028 = vsel %vm1104, %v3995, 0
    %v4031 = vsel %vm1104, %v3996, 0
    %4033 = vmatprep.subr.bf16.mxu0 0
    %4034 = vmatpush1.bf16.msra.mxu0 %v4004
    %4035 = vmatprep.subr.bf16.mxu0 0
    %4036 = vmatpush1.bf16.msra.mxu0 0
    %4037 = vmatprep.subr.bf16.mxu0 0
    %4038 = vmatpush1.bf16.msra.mxu0 0
    %4039 = vmatprep.subr.bf16.mxu0 0
    %4040 = vmatpush1.bf16.msra.mxu0 0
    %4041 = vmatprep.subr.bf16.mxu0 0
    %4042 = vmatpush1.bf16.msra.mxu0 0
    %4043 = vmatprep.subr.bf16.mxu0 0
    %4044 = vmatpush1.bf16.msra.mxu0 0
    %4045 = vmatprep.subr.bf16.mxu0 0
    %4046 = vmatpush1.bf16.msra.mxu0 0
    %4047 = vmatprep.subr.bf16.mxu0 0
    %4048 = vmatpush1.bf16.msra.mxu0 0
    %4049 = vmatprep.subr.bf16.mxu0 0
    %4050 = vmatpush1.bf16.msra.mxu0 0
    %4051 = vmatprep.subr.bf16.mxu0 0
    %4052 = vmatpush1.bf16.msra.mxu0 0
    %4053 = vmatprep.subr.bf16.mxu0 0
    %4054 = vmatpush1.bf16.msra.mxu0 0
    %4055 = vmatprep.subr.bf16.mxu0 0
    %4056 = vmatpush1.bf16.msra.mxu0 0
    %4057 = vmatprep.subr.bf16.mxu0 0
    %4058 = vmatpush1.bf16.msra.mxu0 0
    %4059 = vmatprep.subr.bf16.mxu0 0
    %4060 = vmatpush1.bf16.msra.mxu0 0
    %4061 = vmatprep.subr.bf16.mxu0 0
    %4062 = vmatpush1.bf16.msra.mxu0 0
    %4063 = vmatprep.subr.bf16.mxu0 0
    %4064 = vmatpush1.bf16.msra.mxu0 0
    %4065 = vmatprep.mubr.bf16.mxu0 0
    %4066 = vmatmul.mubr.bf16.gmra.mrb[0].mxu0 %v4007
    %v4067 = vpop.f32.mrb[0].mxu0
    %v4068 = vadd.f32 0.0, %v4067
    %v4069 = vpop.f32.mrb[0].mxu0
    %v4070 = vpop.f32.mrb[0].mxu0
    %v4071 = vadd.f32 0.0, %v4070
    %v4072 = vpop.f32.mrb[0].mxu0
    %4073 = vmatprep.mubr.bf16.mxu0 0
    %4074 = vmatmul.mubr.bf16.gmra.mrb[0].mxu0 %v4010
    %v4075 = vpop.f32.mrb[0].mxu0
    %v4076 = vadd.f32 0.0, %v4075
    %v4077 = vpop.f32.mrb[0].mxu0
    %v4078 = vpop.f32.mrb[0].mxu0
    %v4079 = vadd.f32 0.0, %v4078
    %v4080 = vpop.f32.mrb[0].mxu0
    %4081 = vmatprep.mubr.bf16.mxu0 0
    %4082 = vmatmul.mubr.bf16.gmra.mrb[0].mxu0 %v4013
    %v4083 = vpop.f32.mrb[0].mxu0
    %v4084 = vadd.f32 0.0, %v4083
    %v4085 = vpop.f32.mrb[0].mxu0
    %v4086 = vpop.f32.mrb[0].mxu0
    %v4087 = vadd.f32 0.0, %v4086
    %v4088 = vpop.f32.mrb[0].mxu0
    %4089 = vmatprep.mubr.bf16.mxu0 0
    %4090 = vmatmul.mubr.bf16.gmra.mrb[0].mxu0 %v4016
    %v4091 = vpop.f32.mrb[0].mxu0
    %v4092 = vadd.f32 0.0, %v4091
    %v4093 = vpop.f32.mrb[0].mxu0
    %v4094 = vpop.f32.mrb[0].mxu0
    %v4095 = vadd.f32 0.0, %v4094
    %v4096 = vpop.f32.mrb[0].mxu0
    %4097 = vmatprep.mubr.bf16.mxu0 0
    %4098 = vmatmul.mubr.bf16.gmra.mrb[0].mxu0 %v4019
    %v4099 = vpop.f32.mrb[0].mxu0
    %v4100 = vadd.f32 0.0, %v4099
    %v4101 = vpop.f32.mrb[0].mxu0
    %v4102 = vpop.f32.mrb[0].mxu0
    %v4103 = vadd.f32 0.0, %v4102
    %v4104 = vpop.f32.mrb[0].mxu0
    %4105 = vmatprep.mubr.bf16.mxu0 0
    %4106 = vmatmul.mubr.bf16.gmra.mrb[0].mxu0 %v4022
    %v4107 = vpop.f32.mrb[0].mxu0
    %v4108 = vadd.f32 0.0, %v4107
    %v4109 = vpop.f32.mrb[0].mxu0
    %v4110 = vpop.f32.mrb[0].mxu0
    %v4111 = vadd.f32 0.0, %v4110
    %v4112 = vpop.f32.mrb[0].mxu0
    %4113 = vmatprep.mubr.bf16.mxu0 0
    %4114 = vmatmul.mubr.bf16.gmra.mrb[0].mxu0 %v4025
    %v4115 = vpop.f32.mrb[0].mxu0
    %v4116 = vadd.f32 0.0, %v4115
    %v4117 = vpop.f32.mrb[0].mxu0
    %v4118 = vpop.f32.mrb[0].mxu0
    %v4119 = vadd.f32 0.0, %v4118
    %v4120 = vpop.f32.mrb[0].mxu0
    %4121 = vmatprep.mubr.bf16.mxu0 0
    %4122 = vmatmul.mubr.bf16.gmra.mrb[0].mxu0 %v4028
    %v4123 = vpop.f32.mrb[0].mxu0
    %v4124 = vadd.f32 0.0, %v4123
    %v4125 = vpop.f32.mrb[0].mxu0
    %v4126 = vpop.f32.mrb[0].mxu0
    %v4127 = vadd.f32 0.0, %v4126
    %v4128 = vpop.f32.mrb[0].mxu0
    %4129 = vmatprep.mubr.bf16.mxu0 0
    %4130 = vmatmul.mubr.bf16.gmra.mrb[0].mxu0 %v4031
    %v4131 = vpop.f32.mrb[0].mxu0
    %v4132 = vadd.f32 0.0, %v4131
    %v4133 = vpop.f32.mrb[0].mxu0
    %v4134 = vpop.f32.mrb[0].mxu0
    %v4135 = vadd.f32 0.0, %v4134
    %v4136 = vpop.f32.mrb[0].mxu0
    %4137 = vdwg.mxu0
    %v4138 = vadd.f32 %v3970, %v4068
    %v4139 = vadd.f32 %v3971, %v4071
    %v4140 = vadd.f32 %v3972, %v4076
    %v4141 = vadd.f32 %v3973, %v4079
    %v4142 = vadd.f32 %v3974, %v4084
    %v4143 = vadd.f32 %v3975, %v4087
    %v4144 = vadd.f32 %v3976, %v4092
    %v4145 = vadd.f32 %v3977, %v4095
    %v4146 = vadd.f32 %v3978, %v4100
    %v4147 = vadd.f32 %v3979, %v4103
    %v4148 = vadd.f32 %v3980, %v4108
    %v4149 = vadd.f32 %v3981, %v4111
    %v4150 = vadd.f32 %v3982, %v4116
    %v4151 = vadd.f32 %v3983, %v4119
    %v4152 = vadd.f32 %v3984, %v4124
    %v4153 = vadd.f32 %v3985, %v4127
    %v4154 = vadd.f32 %v3986, %v4132
    %v4155 = vadd.f32 %v3987, %v4135
    %v4156 = vld [vmem:[%s2791] sm:$0xff]
    %v4157 = vld [vmem:[%s2791 + $0x8] sm:$0xff]
    %v4158 = vld [vmem:[%s2791 + $0x10] sm:$0xff]
    %v4159 = vld [vmem:[%s2791 + $0x18] sm:$0xff]
    %v4160 = vld [vmem:[%s2791 + $0x20] sm:$0xff]
    %v4161 = vld [vmem:[%s2791 + $0x28] sm:$0xff]
    %v4162 = vld [vmem:[%s2791 + $0x30] sm:$0xff]
    %v4163 = vld [vmem:[%s2791 + $0x38] sm:$0xff]
    %v4164 = vld [vmem:[%s2791 + $0x40] sm:$0xff]
    %s4165 = scalar_lea.vmem %s4, 64
    %v4166 = vld [vmem:[%s4165] sm:$0xf]
    %v4167 = vld [vmem:[%s4165 + $0x4] sm:$0xf]
    %v4170 = vunpack.c.l.b16 %v4166
    %v4171 = vunpack.c.l.b16 %v4167
    %v4172 = vpack.c.b16 %v4171, %v4170
    %v4175 = vsel %vm1104, %v4156, 0
    %v4178 = vsel %vm1104, %v4157, 0
    %v4181 = vsel %vm1104, %v4158, 0
    %v4184 = vsel %vm1104, %v4159, 0
    %v4187 = vsel %vm1104, %v4160, 0
    %v4190 = vsel %vm1104, %v4161, 0
    %v4193 = vsel %vm1104, %v4162, 0
    %v4196 = vsel %vm1104, %v4163, 0
    %v4199 = vsel %vm1104, %v4164, 0
    %4201 = vmatprep.subr.bf16.mxu0 0
    %4202 = vmatpush1.bf16.msra.mxu0 %v4172
    %4203 = vmatprep.subr.bf16.mxu0 0
    %4204 = vmatpush1.bf16.msra.mxu0 0
    %4205 = vmatprep.subr.bf16.mxu0 0
    %4206 = vmatpush1.bf16.msra.mxu0 0
    %4207 = vmatprep.subr.bf16.mxu0 0
    %4208 = vmatpush1.bf16.msra.mxu0 0
    %4209 = vmatprep.subr.bf16.mxu0 0
    %4210 = vmatpush1.bf16.msra.mxu0 0
    %4211 = vmatprep.subr.bf16.mxu0 0
    %4212 = vmatpush1.bf16.msra.mxu0 0
    %4213 = vmatprep.subr.bf16.mxu0 0
    %4214 = vmatpush1.bf16.msra.mxu0 0
    %4215 = vmatprep.subr.bf16.mxu0 0
    %4216 = vmatpush1.bf16.msra.mxu0 0
    %4217 = vmatprep.subr.bf16.mxu0 0
    %4218 = vmatpush1.bf16.msra.mxu0 0
    %4219 = vmatprep.subr.bf16.mxu0 0
    %4220 = vmatpush1.bf16.msra.mxu0 0
    %4221 = vmatprep.subr.bf16.mxu0 0
    %4222 = vmatpush1.bf16.msra.mxu0 0
    %4223 = vmatprep.subr.bf16.mxu0 0
    %4224 = vmatpush1.bf16.msra.mxu0 0
    %4225 = vmatprep.subr.bf16.mxu0 0
    %4226 = vmatpush1.bf16.msra.mxu0 0
    %4227 = vmatprep.subr.bf16.mxu0 0
    %4228 = vmatpush1.bf16.msra.mxu0 0
    %4229 = vmatprep.subr.bf16.mxu0 0
    %4230 = vmatpush1.bf16.msra.mxu0 0
    %4231 = vmatprep.subr.bf16.mxu0 0
    %4232 = vmatpush1.bf16.msra.mxu0 0
    %4233 = vmatprep.mubr.bf16.mxu0 0
    %4234 = vmatmul.mubr.bf16.gmra.mrb[0].mxu0 %v4175
    %v4235 = vpop.f32.mrb[0].mxu0
    %v4236 = vadd.f32 0.0, %v4235
    %v4237 = vpop.f32.mrb[0].mxu0
    %v4238 = vpop.f32.mrb[0].mxu0
    %v4239 = vadd.f32 0.0, %v4238
    %v4240 = vpop.f32.mrb[0].mxu0
    %4241 = vmatprep.mubr.bf16.mxu0 0
    %4242 = vmatmul.mubr.bf16.gmra.mrb[0].mxu0 %v4178
    %v4243 = vpop.f32.mrb[0].mxu0
    %v4244 = vadd.f32 0.0, %v4243
    %v4245 = vpop.f32.mrb[0].mxu0
    %v4246 = vpop.f32.mrb[0].mxu0
    %v4247 = vadd.f32 0.0, %v4246
    %v4248 = vpop.f32.mrb[0].mxu0
    %4249 = vmatprep.mubr.bf16.mxu0 0
    %4250 = vmatmul.mubr.bf16.gmra.mrb[0].mxu0 %v4181
    %v4251 = vpop.f32.mrb[0].mxu0
    %v4252 = vadd.f32 0.0, %v4251
    %v4253 = vpop.f32.mrb[0].mxu0
    %v4254 = vpop.f32.mrb[0].mxu0
    %v4255 = vadd.f32 0.0, %v4254
    %v4256 = vpop.f32.mrb[0].mxu0
    %4257 = vmatprep.mubr.bf16.mxu0 0
    %4258 = vmatmul.mubr.bf16.gmra.mrb[0].mxu0 %v4184
    %v4259 = vpop.f32.mrb[0].mxu0
    %v4260 = vadd.f32 0.0, %v4259
    %v4261 = vpop.f32.mrb[0].mxu0
    %v4262 = vpop.f32.mrb[0].mxu0
    %v4263 = vadd.f32 0.0, %v4262
    %v4264 = vpop.f32.mrb[0].mxu0
    %4265 = vmatprep.mubr.bf16.mxu0 0
    %4266 = vmatmul.mubr.bf16.gmra.mrb[0].mxu0 %v4187
    %v4267 = vpop.f32.mrb[0].mxu0
    %v4268 = vadd.f32 0.0, %v4267
    %v4269 = vpop.f32.mrb[0].mxu0
    %v4270 = vpop.f32.mrb[0].mxu0
    %v4271 = vadd.f32 0.0, %v4270
    %v4272 = vpop.f32.mrb[0].mxu0
    %4273 = vmatprep.mubr.bf16.mxu0 0
    %4274 = vmatmul.mubr.bf16.gmra.mrb[0].mxu0 %v4190
    %v4275 = vpop.f32.mrb[0].mxu0
    %v4276 = vadd.f32 0.0, %v4275
    %v4277 = vpop.f32.mrb[0].mxu0
    %v4278 = vpop.f32.mrb[0].mxu0
    %v4279 = vadd.f32 0.0, %v4278
    %v4280 = vpop.f32.mrb[0].mxu0
    %4281 = vmatprep.mubr.bf16.mxu0 0
    %4282 = vmatmul.mubr.bf16.gmra.mrb[0].mxu0 %v4193
    %v4283 = vpop.f32.mrb[0].mxu0
    %v4284 = vadd.f32 0.0, %v4283
    %v4285 = vpop.f32.mrb[0].mxu0
    %v4286 = vpop.f32.mrb[0].mxu0
    %v4287 = vadd.f32 0.0, %v4286
    %v4288 = vpop.f32.mrb[0].mxu0
    %4289 = vmatprep.mubr.bf16.mxu0 0
    %4290 = vmatmul.mubr.bf16.gmra.mrb[0].mxu0 %v4196
    %v4291 = vpop.f32.mrb[0].mxu0
    %v4292 = vadd.f32 0.0, %v4291
    %v4293 = vpop.f32.mrb[0].mxu0
    %v4294 = vpop.f32.mrb[0].mxu0
    %v4295 = vadd.f32 0.0, %v4294
    %v4296 = vpop.f32.mrb[0].mxu0
    %4297 = vmatprep.mubr.bf16.mxu0 0
    %4298 = vmatmul.mubr.bf16.gmra.mrb[0].mxu0 %v4199
    %v4299 = vpop.f32.mrb[0].mxu0
    %v4300 = vadd.f32 0.0, %v4299
    %v4301 = vpop.f32.mrb[0].mxu0
    %v4302 = vpop.f32.mrb[0].mxu0
    %v4303 = vadd.f32 0.0, %v4302
    %v4304 = vpop.f32.mrb[0].mxu0
    %4305 = vdwg.mxu0
    %v4306 = vadd.f32 %v4138, %v4236
    %v4307 = vadd.f32 %v4139, %v4239
    %v4308 = vadd.f32 %v4140, %v4244
    %v4309 = vadd.f32 %v4141, %v4247
    %v4310 = vadd.f32 %v4142, %v4252
    %v4311 = vadd.f32 %v4143, %v4255
    %v4312 = vadd.f32 %v4144, %v4260
    %v4313 = vadd.f32 %v4145, %v4263
    %v4314 = vadd.f32 %v4146, %v4268
    %v4315 = vadd.f32 %v4147, %v4271
    %v4316 = vadd.f32 %v4148, %v4276
    %v4317 = vadd.f32 %v4149, %v4279
    %v4318 = vadd.f32 %v4150, %v4284
    %v4319 = vadd.f32 %v4151, %v4287
    %v4320 = vadd.f32 %v4152, %v4292
    %v4321 = vadd.f32 %v4153, %v4295
    %v4322 = vadd.f32 %v4154, %v4300
    %v4323 = vadd.f32 %v4155, %v4303
    %vm4324 = vcmask 261120
    %v4325 = vsel %vm4324, %v4306, 0.0
    %v4326 = vsel %vm4324, %v4307, 0.0
    %v4327 = vadd.f32 %v4325, %v4326
    %v4328 = vsel %vm4324, %v4308, 0.0
    %v4329 = vadd.f32 %v4327, %v4328
    %v4330 = vsel %vm4324, %v4309, 0.0
    %v4331 = vadd.f32 %v4329, %v4330
    %v4332 = vsel %vm4324, %v4310, 0.0
    %v4333 = vadd.f32 %v4331, %v4332
    %v4334 = vsel %vm4324, %v4311, 0.0
    %v4335 = vadd.f32 %v4333, %v4334
    %v4336 = vsel %vm4324, %v4312, 0.0
    %v4337 = vadd.f32 %v4335, %v4336
    %v4338 = vsel %vm4324, %v4313, 0.0
    %v4339 = vadd.f32 %v4337, %v4338
    %v4340 = vsel %vm4324, %v4314, 0.0
    %v4341 = vadd.f32 %v4339, %v4340
    %v4342 = vsel %vm4324, %v4315, 0.0
    %v4343 = vadd.f32 %v4341, %v4342
    %v4344 = vsel %vm4324, %v4316, 0.0
    %v4345 = vadd.f32 %v4343, %v4344
    %v4346 = vsel %vm4324, %v4317, 0.0
    %v4347 = vadd.f32 %v4345, %v4346
    %v4348 = vsel %vm4324, %v4318, 0.0
    %v4349 = vadd.f32 %v4347, %v4348
    %v4350 = vsel %vm4324, %v4319, 0.0
    %v4351 = vadd.f32 %v4349, %v4350
    %v4352 = vsel %vm4324, %v4320, 0.0
    %v4353 = vadd.f32 %v4351, %v4352
    %v4354 = vsel %vm4324, %v4321, 0.0
    %v4355 = vadd.f32 %v4353, %v4354
    %v4356 = vsel %vm4324, %v4322, 0.0
    %v4357 = vadd.f32 %v4355, %v4356
    %v4358 = vsel %vm4324, %v4323, 0.0
    %v4359 = vadd.f32 %v4357, %v4358
    %v4360 = vrot.slane %v4359, 4
    %v4361 = vadd.f32 %v4359, %v4360
    %v4362 = vrot.slane %v4361, 2
    %v4363 = vadd.f32 %v4361, %v4362
    %v4364 = vrot.slane %v4363, 1
    %v4365 = vadd.f32 %v4363, %v4364
    %v4366 = vmul.f32 %v4365, 0.0069444445
    %v4367 = vmul.f32 %v4306, %v4306
    %v4368 = vmul.f32 %v4307, %v4307
    %v4369 = vmul.f32 %v4308, %v4308
    %v4370 = vmul.f32 %v4309, %v4309
    %v4371 = vmul.f32 %v4310, %v4310
    %v4372 = vmul.f32 %v4311, %v4311
    %v4373 = vmul.f32 %v4312, %v4312
    %v4374 = vmul.f32 %v4313, %v4313
    %v4375 = vmul.f32 %v4314, %v4314
    %v4376 = vmul.f32 %v4315, %v4315
    %v4377 = vmul.f32 %v4316, %v4316
    %v4378 = vmul.f32 %v4317, %v4317
    %v4379 = vmul.f32 %v4318, %v4318
    %v4380 = vmul.f32 %v4319, %v4319
    %v4381 = vmul.f32 %v4320, %v4320
    %v4382 = vmul.f32 %v4321, %v4321
    %v4383 = vmul.f32 %v4322, %v4322
    %v4384 = vmul.f32 %v4323, %v4323
    %v4385 = vsel %vm4324, %v4367, 0.0
    %v4386 = vsel %vm4324, %v4368, 0.0
    %v4387 = vadd.f32 %v4385, %v4386
    %v4388 = vsel %vm4324, %v4369, 0.0
    %v4389 = vadd.f32 %v4387, %v4388
    %v4390 = vsel %vm4324, %v4370, 0.0
    %v4391 = vadd.f32 %v4389, %v4390
    %v4392 = vsel %vm4324, %v4371, 0.0
    %v4393 = vadd.f32 %v4391, %v4392
    %v4394 = vsel %vm4324, %v4372, 0.0
    %v4395 = vadd.f32 %v4393, %v4394
    %v4396 = vsel %vm4324, %v4373, 0.0
    %v4397 = vadd.f32 %v4395, %v4396
    %v4398 = vsel %vm4324, %v4374, 0.0
    %v4399 = vadd.f32 %v4397, %v4398
    %v4400 = vsel %vm4324, %v4375, 0.0
    %v4401 = vadd.f32 %v4399, %v4400
    %v4402 = vsel %vm4324, %v4376, 0.0
    %v4403 = vadd.f32 %v4401, %v4402
    %v4404 = vsel %vm4324, %v4377, 0.0
    %v4405 = vadd.f32 %v4403, %v4404
    %v4406 = vsel %vm4324, %v4378, 0.0
    %v4407 = vadd.f32 %v4405, %v4406
    %v4408 = vsel %vm4324, %v4379, 0.0
    %v4409 = vadd.f32 %v4407, %v4408
    %v4410 = vsel %vm4324, %v4380, 0.0
    %v4411 = vadd.f32 %v4409, %v4410
    %v4412 = vsel %vm4324, %v4381, 0.0
    %v4413 = vadd.f32 %v4411, %v4412
    %v4414 = vsel %vm4324, %v4382, 0.0
    %v4415 = vadd.f32 %v4413, %v4414
    %v4416 = vsel %vm4324, %v4383, 0.0
    %v4417 = vadd.f32 %v4415, %v4416
    %v4418 = vsel %vm4324, %v4384, 0.0
    %v4419 = vadd.f32 %v4417, %v4418
    %v4420 = vrot.slane %v4419, 4
    %v4421 = vadd.f32 %v4419, %v4420
    %v4422 = vrot.slane %v4421, 2
    %v4423 = vadd.f32 %v4421, %v4422
    %v4424 = vrot.slane %v4423, 1
    %v4425 = vadd.f32 %v4423, %v4424
    %v4426 = vmul.f32 %v4425, 0.0069444445
    %v4427 = vmul.f32 %v4366, %v4366
    %v4428 = vsub.f32 %v4426, %v4427
    %v4429 = vmax.f32 %v4428, 0.0
    %v4430 = vld [vmem:[%s5] sm:$0x1]
    %v4431 = vsub.f32 %v4306, %v4366
    %v4432 = vsub.f32 %v4307, %v4366
    %v4433 = vsub.f32 %v4308, %v4366
    %v4434 = vsub.f32 %v4309, %v4366
    %v4435 = vsub.f32 %v4310, %v4366
    %v4436 = vsub.f32 %v4311, %v4366
    %v4437 = vsub.f32 %v4312, %v4366
    %v4438 = vsub.f32 %v4313, %v4366
    %v4439 = vsub.f32 %v4314, %v4366
    %v4440 = vsub.f32 %v4315, %v4366
    %v4441 = vsub.f32 %v4316, %v4366
    %v4442 = vsub.f32 %v4317, %v4366
    %v4443 = vsub.f32 %v4318, %v4366
    %v4444 = vsub.f32 %v4319, %v4366
    %v4445 = vsub.f32 %v4320, %v4366
    %v4446 = vsub.f32 %v4321, %v4366
    %v4447 = vsub.f32 %v4322, %v4366
    %v4448 = vsub.f32 %v4323, %v4366
    %v4450 = vlaneseq
    %v4451 = vshrl.u32 %v4450, 7
    %v4452 = vsub.s32 0, %v4451
    %v4453 = vrot.slane %v4430, %v4452
    %v4455 = vmul.f32 %v4453, %v4431
    %v4456 = vmul.f32 %v4453, %v4432
    %v4457 = vmul.f32 %v4453, %v4433
    %v4458 = vmul.f32 %v4453, %v4434
    %v4459 = vmul.f32 %v4453, %v4435
    %v4460 = vmul.f32 %v4453, %v4436
    %v4461 = vmul.f32 %v4453, %v4437
    %v4462 = vmul.f32 %v4453, %v4438
    %v4463 = vmul.f32 %v4453, %v4439
    %v4464 = vmul.f32 %v4453, %v4440
    %v4465 = vmul.f32 %v4453, %v4441
    %v4466 = vmul.f32 %v4453, %v4442
    %v4467 = vmul.f32 %v4453, %v4443
    %v4468 = vmul.f32 %v4453, %v4444
    %v4469 = vmul.f32 %v4453, %v4445
    %v4470 = vmul.f32 %v4453, %v4446
    %v4471 = vmul.f32 %v4453, %v4447
    %v4472 = vmul.f32 %v4453, %v4448
    %v4473 = vadd.f32 %v4429, 1e-05
    %v4474 = vrsqrt.pop %v4473
    %v4475 = vmul.f32 %v4455, %v4474
    %v4476 = vmul.f32 %v4456, %v4474
    %v4477 = vmul.f32 %v4457, %v4474
    %v4478 = vmul.f32 %v4458, %v4474
    %v4479 = vmul.f32 %v4459, %v4474
    %v4480 = vmul.f32 %v4460, %v4474
    %v4481 = vmul.f32 %v4461, %v4474
    %v4482 = vmul.f32 %v4462, %v4474
    %v4483 = vmul.f32 %v4463, %v4474
    %v4484 = vmul.f32 %v4464, %v4474
    %v4485 = vmul.f32 %v4465, %v4474
    %v4486 = vmul.f32 %v4466, %v4474
    %v4487 = vmul.f32 %v4467, %v4474
    %v4488 = vmul.f32 %v4468, %v4474
    %v4489 = vmul.f32 %v4469, %v4474
    %v4490 = vmul.f32 %v4470, %v4474
    %v4491 = vmul.f32 %v4471, %v4474
    %v4492 = vmul.f32 %v4472, %v4474
    %v4493 = vld [vmem:[%s6] sm:$0x1]
    %v4495 = vlaneseq
    %v4496 = vshrl.u32 %v4495, 7
    %v4497 = vsub.s32 0, %v4496
    %v4498 = vrot.slane %v4493, %v4497
    %v4500 = vadd.f32 %v4475, %v4498
    %v4501 = vadd.f32 %v4476, %v4498
    %v4502 = vadd.f32 %v4477, %v4498
    %v4503 = vadd.f32 %v4478, %v4498
    %v4504 = vadd.f32 %v4479, %v4498
    %v4505 = vadd.f32 %v4480, %v4498
    %v4506 = vadd.f32 %v4481, %v4498
    %v4507 = vadd.f32 %v4482, %v4498
    %v4508 = vadd.f32 %v4483, %v4498
    %v4509 = vadd.f32 %v4484, %v4498
    %v4510 = vadd.f32 %v4485, %v4498
    %v4511 = vadd.f32 %v4486, %v4498
    %v4512 = vadd.f32 %v4487, %v4498
    %v4513 = vadd.f32 %v4488, %v4498
    %v4514 = vadd.f32 %v4489, %v4498
    %v4515 = vadd.f32 %v4490, %v4498
    %v4516 = vadd.f32 %v4491, %v4498
    %v4517 = vadd.f32 %v4492, %v4498
    %v4518 = vmax.f32 %v4500, 0.0
    %v4519 = vmax.f32 %v4501, 0.0
    %v4520 = vmax.f32 %v4502, 0.0
    %v4521 = vmax.f32 %v4503, 0.0
    %v4522 = vmax.f32 %v4504, 0.0
    %v4523 = vmax.f32 %v4505, 0.0
    %v4524 = vmax.f32 %v4506, 0.0
    %v4525 = vmax.f32 %v4507, 0.0
    %v4526 = vmax.f32 %v4508, 0.0
    %v4527 = vmax.f32 %v4509, 0.0
    %v4528 = vmax.f32 %v4510, 0.0
    %v4529 = vmax.f32 %v4511, 0.0
    %v4530 = vmax.f32 %v4512, 0.0
    %v4531 = vmax.f32 %v4513, 0.0
    %v4532 = vmax.f32 %v4514, 0.0
    %v4533 = vmax.f32 %v4515, 0.0
    %v4534 = vmax.f32 %v4516, 0.0
    %v4535 = vmax.f32 %v4517, 0.0
    %v4536 = vpack.c.bf16 %v4519, %v4518
    %v4537 = vpack.c.bf16 %v4521, %v4520
    %v4538 = vpack.c.bf16 %v4523, %v4522
    %v4539 = vpack.c.bf16 %v4525, %v4524
    %v4540 = vpack.c.bf16 %v4527, %v4526
    %v4541 = vpack.c.bf16 %v4529, %v4528
    %v4542 = vpack.c.bf16 %v4531, %v4530
    %v4543 = vpack.c.bf16 %v4533, %v4532
    %v4544 = vpack.c.bf16 %v4535, %v4534
    %4545 = vst.msk [vmem:[#allocation4] sm:$0xff] %vm4324, %v4536
    %4546 = vst.msk [vmem:[#allocation4 + $0x8] sm:$0xff] %vm4324, %v4537
    %4547 = vst.msk [vmem:[#allocation4 + $0x10] sm:$0xff] %vm4324, %v4538
    %4548 = vst.msk [vmem:[#allocation4 + $0x18] sm:$0xff] %vm4324, %v4539
    %4549 = vst.msk [vmem:[#allocation4 + $0x20] sm:$0xff] %vm4324, %v4540
    %4550 = vst.msk [vmem:[#allocation4 + $0x28] sm:$0xff] %vm4324, %v4541
    %4551 = vst.msk [vmem:[#allocation4 + $0x30] sm:$0xff] %vm4324, %v4542
    %4552 = vst.msk [vmem:[#allocation4 + $0x38] sm:$0xff] %vm4324, %v4543
    %4553 = vst.msk [vmem:[#allocation4 + $0x40] sm:$0xff] %vm4324, %v4544
    %v4554 = vld [vmem:[#allocation4] sm:$0x3]
    %v4555 = vld [vmem:[%s7] sm:$0xf]
    %v4556 = vld [vmem:[%s7 + $0x4] sm:$0xf]
    %v4557 = vld [vmem:[%s7 + $0x8] sm:$0xf]
    %v4558 = vld [vmem:[%s7 + $0xc] sm:$0xf]
    %v4559 = vld [vmem:[#allocation4] sm:$0xc]
    %s4560 = scalar_lea.vmem %s7, 16
    %v4561 = vld [vmem:[%s4560] sm:$0xf]
    %v4562 = vld [vmem:[%s4560 + $0x4] sm:$0xf]
    %v4563 = vld [vmem:[%s4560 + $0x8] sm:$0xf]
    %v4564 = vld [vmem:[%s4560 + $0xc] sm:$0xf]
    %v4566 = vrot.slane %v4559, 2
    %v4571 = vunpack.c.l.b16 %v4561
    %v4572 = vunpack.c.l.b16 %v4562
    %v4573 = vunpack.c.l.b16 %v4563
    %v4574 = vunpack.c.l.b16 %v4564
    %v4575 = vpack.c.b16 %v4572, %v4571
    %v4576 = vpack.c.b16 %v4574, %v4573
    %v4580 = vsel %vm4324, %v4566, 0
    %4582 = vmatprep.subr.bf16.mxu0 0
    %4583 = vmatpush1.bf16.msra.mxu0 %v4575
    %4584 = vmatprep.subr.bf16.mxu0 0
    %4585 = vmatpush1.bf16.msra.mxu0 %v4576
    %4586 = vmatprep.subr.bf16.mxu0 0
    %4587 = vmatpush1.bf16.msra.mxu0 0
    %4588 = vmatprep.subr.bf16.mxu0 0
    %4589 = vmatpush1.bf16.msra.mxu0 0
    %4590 = vmatprep.subr.bf16.mxu0 0
    %4591 = vmatpush1.bf16.msra.mxu0 0
    %4592 = vmatprep.subr.bf16.mxu0 0
    %4593 = vmatpush1.bf16.msra.mxu0 0
    %4594 = vmatprep.subr.bf16.mxu0 0
    %4595 = vmatpush1.bf16.msra.mxu0 0
    %4596 = vmatprep.subr.bf16.mxu0 0
    %4597 = vmatpush1.bf16.msra.mxu0 0
    %4598 = vmatprep.subr.bf16.mxu0 0
    %4599 = vmatpush1.bf16.msra.mxu0 0
    %4600 = vmatprep.subr.bf16.mxu0 0
    %4601 = vmatpush1.bf16.msra.mxu0 0
    %4602 = vmatprep.subr.bf16.mxu0 0
    %4603 = vmatpush1.bf16.msra.mxu0 0
    %4604 = vmatprep.subr.bf16.mxu0 0
    %4605 = vmatpush1.bf16.msra.mxu0 0
    %4606 = vmatprep.subr.bf16.mxu0 0
    %4607 = vmatpush1.bf16.msra.mxu0 0
    %4608 = vmatprep.subr.bf16.mxu0 0
    %4609 = vmatpush1.bf16.msra.mxu0 0
    %4610 = vmatprep.subr.bf16.mxu0 0
    %4611 = vmatpush1.bf16.msra.mxu0 0
    %4612 = vmatprep.subr.bf16.mxu0 0
    %4613 = vmatpush1.bf16.msra.mxu0 0
    %4614 = vmatprep.mubr.bf16.mxu0 0
    %4615 = vmatmul.mubr.bf16.gmra.mrb[0].mxu0 %v4580
    %v4616 = vpop.f32.mrb[0].mxu0
    %v4617 = vadd.f32 0.0, %v4616
    %v4618 = vpop.f32.mrb[0].mxu0
    %v4619 = vpop.f32.mrb[0].mxu0
    %v4620 = vpop.f32.mrb[0].mxu0
    %4621 = vdwg.mxu0
    %v4626 = vunpack.c.l.b16 %v4555
    %v4627 = vunpack.c.l.b16 %v4556
    %v4628 = vunpack.c.l.b16 %v4557
    %v4629 = vunpack.c.l.b16 %v4558
    %v4630 = vpack.c.b16 %v4627, %v4626
    %v4631 = vpack.c.b16 %v4629, %v4628
    %v4635 = vsel %vm4324, %v4554, 0
    %4637 = vmatprep.subr.bf16.mxu0 0
    %4638 = vmatpush1.bf16.msra.mxu0 %v4630
    %4639 = vmatprep.subr.bf16.mxu0 0
    %4640 = vmatpush1.bf16.msra.mxu0 %v4631
    %4641 = vmatprep.subr.bf16.mxu0 0
    %4642 = vmatpush1.bf16.msra.mxu0 0
    %4643 = vmatprep.subr.bf16.mxu0 0
    %4644 = vmatpush1.bf16.msra.mxu0 0
    %4645 = vmatprep.subr.bf16.mxu0 0
    %4646 = vmatpush1.bf16.msra.mxu0 0
    %4647 = vmatprep.subr.bf16.mxu0 0
    %4648 = vmatpush1.bf16.msra.mxu0 0
    %4649 = vmatprep.subr.bf16.mxu0 0
    %4650 = vmatpush1.bf16.msra.mxu0 0
    %4651 = vmatprep.subr.bf16.mxu0 0
    %4652 = vmatpush1.bf16.msra.mxu0 0
    %4653 = vmatprep.subr.bf16.mxu0 0
    %4654 = vmatpush1.bf16.msra.mxu0 0
    %4655 = vmatprep.subr.bf16.mxu0 0
    %4656 = vmatpush1.bf16.msra.mxu0 0
    %4657 = vmatprep.subr.bf16.mxu0 0
    %4658 = vmatpush1.bf16.msra.mxu0 0
    %4659 = vmatprep.subr.bf16.mxu0 0
    %4660 = vmatpush1.bf16.msra.mxu0 0
    %4661 = vmatprep.subr.bf16.mxu0 0
    %4662 = vmatpush1.bf16.msra.mxu0 0
    %4663 = vmatprep.subr.bf16.mxu0 0
    %4664 = vmatpush1.bf16.msra.mxu0 0
    %4665 = vmatprep.subr.bf16.mxu0 0
    %4666 = vmatpush1.bf16.msra.mxu0 0
    %4667 = vmatprep.subr.bf16.mxu0 0
    %4668 = vmatpush1.bf16.msra.mxu0 0
    %4669 = vmatprep.mubr.bf16.mxu0 0
    %4670 = vmatmul.mubr.bf16.gmra.mrb[0].mxu0 %v4635
    %v4671 = vpop.f32.mrb[0].mxu0
    %v4672 = vadd.f32 %v4617, %v4671
    %v4673 = vpop.f32.mrb[0].mxu0
    %v4674 = vpop.f32.mrb[0].mxu0
    %v4675 = vpop.f32.mrb[0].mxu0
    %4676 = vdwg.mxu0
    %v4677 = vld [vmem:[#allocation4] sm:$0x30]
    %s4678 = scalar_lea.vmem %s7, 32
    %v4679 = vld [vmem:[%s4678] sm:$0xf]
    %v4680 = vld [vmem:[%s4678 + $0x4] sm:$0xf]
    %v4681 = vld [vmem:[%s4678 + $0x8] sm:$0xf]
    %v4682 = vld [vmem:[%s4678 + $0xc] sm:$0xf]
    %v4684 = vrot.slane %v4677, 4
    %v4689 = vunpack.c.l.b16 %v4679
    %v4690 = vunpack.c.l.b16 %v4680
    %v4691 = vunpack.c.l.b16 %v4681
    %v4692 = vunpack.c.l.b16 %v4682
    %v4693 = vpack.c.b16 %v4690, %v4689
    %v4694 = vpack.c.b16 %v4692, %v4691
    %v4698 = vsel %vm4324, %v4684, 0
    %4700 = vmatprep.subr.bf16.mxu0 0
    %4701 = vmatpush1.bf16.msra.mxu0 %v4693
    %4702 = vmatprep.subr.bf16.mxu0 0
    %4703 = vmatpush1.bf16.msra.mxu0 %v4694
    %4704 = vmatprep.subr.bf16.mxu0 0
    %4705 = vmatpush1.bf16.msra.mxu0 0
    %4706 = vmatprep.subr.bf16.mxu0 0
    %4707 = vmatpush1.bf16.msra.mxu0 0
    %4708 = vmatprep.subr.bf16.mxu0 0
    %4709 = vmatpush1.bf16.msra.mxu0 0
    %4710 = vmatprep.subr.bf16.mxu0 0
    %4711 = vmatpush1.bf16.msra.mxu0 0
    %4712 = vmatprep.subr.bf16.mxu0 0
    %4713 = vmatpush1.bf16.msra.mxu0 0
    %4714 = vmatprep.subr.bf16.mxu0 0
    %4715 = vmatpush1.bf16.msra.mxu0 0
    %4716 = vmatprep.subr.bf16.mxu0 0
    %4717 = vmatpush1.bf16.msra.mxu0 0
    %4718 = vmatprep.subr.bf16.mxu0 0
    %4719 = vmatpush1.bf16.msra.mxu0 0
    %4720 = vmatprep.subr.bf16.mxu0 0
    %4721 = vmatpush1.bf16.msra.mxu0 0
    %4722 = vmatprep.subr.bf16.mxu0 0
    %4723 = vmatpush1.bf16.msra.mxu0 0
    %4724 = vmatprep.subr.bf16.mxu0 0
    %4725 = vmatpush1.bf16.msra.mxu0 0
    %4726 = vmatprep.subr.bf16.mxu0 0
    %4727 = vmatpush1.bf16.msra.mxu0 0
    %4728 = vmatprep.subr.bf16.mxu0 0
    %4729 = vmatpush1.bf16.msra.mxu0 0
    %4730 = vmatprep.subr.bf16.mxu0 0
    %4731 = vmatpush1.bf16.msra.mxu0 0
    %4732 = vmatprep.mubr.bf16.mxu0 0
    %4733 = vmatmul.mubr.bf16.gmra.mrb[0].mxu0 %v4698
    %v4734 = vpop.f32.mrb[0].mxu0
    %v4735 = vadd.f32 0.0, %v4734
    %v4736 = vpop.f32.mrb[0].mxu0
    %v4737 = vpop.f32.mrb[0].mxu0
    %v4738 = vpop.f32.mrb[0].mxu0
    %4739 = vdwg.mxu0
    %v4740 = vadd.f32 %v4672, %v4735
    %v4741 = vld [vmem:[#allocation4] sm:$0xc0]
    %s4742 = scalar_lea.vmem %s7, 48
    %v4743 = vld [vmem:[%s4742] sm:$0xf]
    %v4744 = vld [vmem:[%s4742 + $0x4] sm:$0xf]
    %v4745 = vld [vmem:[%s4742 + $0x8] sm:$0xf]
    %v4746 = vld [vmem:[%s4742 + $0xc] sm:$0xf]
    %v4748 = vrot.slane %v4741, 6
    %v4753 = vunpack.c.l.b16 %v4743
    %v4754 = vunpack.c.l.b16 %v4744
    %v4755 = vunpack.c.l.b16 %v4745
    %v4756 = vunpack.c.l.b16 %v4746
    %v4757 = vpack.c.b16 %v4754, %v4753
    %v4758 = vpack.c.b16 %v4756, %v4755
    %v4762 = vsel %vm4324, %v4748, 0
    %4764 = vmatprep.subr.bf16.mxu0 0
    %4765 = vmatpush1.bf16.msra.mxu0 %v4757
    %4766 = vmatprep.subr.bf16.mxu0 0
    %4767 = vmatpush1.bf16.msra.mxu0 %v4758
    %4768 = vmatprep.subr.bf16.mxu0 0
    %4769 = vmatpush1.bf16.msra.mxu0 0
    %4770 = vmatprep.subr.bf16.mxu0 0
    %4771 = vmatpush1.bf16.msra.mxu0 0
    %4772 = vmatprep.subr.bf16.mxu0 0
    %4773 = vmatpush1.bf16.msra.mxu0 0
    %4774 = vmatprep.subr.bf16.mxu0 0
    %4775 = vmatpush1.bf16.msra.mxu0 0
    %4776 = vmatprep.subr.bf16.mxu0 0
    %4777 = vmatpush1.bf16.msra.mxu0 0
    %4778 = vmatprep.subr.bf16.mxu0 0
    %4779 = vmatpush1.bf16.msra.mxu0 0
    %4780 = vmatprep.subr.bf16.mxu0 0
    %4781 = vmatpush1.bf16.msra.mxu0 0
    %4782 = vmatprep.subr.bf16.mxu0 0
    %4783 = vmatpush1.bf16.msra.mxu0 0
    %4784 = vmatprep.subr.bf16.mxu0 0
    %4785 = vmatpush1.bf16.msra.mxu0 0
    %4786 = vmatprep.subr.bf16.mxu0 0
    %4787 = vmatpush1.bf16.msra.mxu0 0
    %4788 = vmatprep.subr.bf16.mxu0 0
    %4789 = vmatpush1.bf16.msra.mxu0 0
    %4790 = vmatprep.subr.bf16.mxu0 0
    %4791 = vmatpush1.bf16.msra.mxu0 0
    %4792 = vmatprep.subr.bf16.mxu0 0
    %4793 = vmatpush1.bf16.msra.mxu0 0
    %4794 = vmatprep.subr.bf16.mxu0 0
    %4795 = vmatpush1.bf16.msra.mxu0 0
    %4796 = vmatprep.mubr.bf16.mxu0 0
    %4797 = vmatmul.mubr.bf16.gmra.mrb[0].mxu0 %v4762
    %v4798 = vpop.f32.mrb[0].mxu0
    %v4799 = vadd.f32 0.0, %v4798
    %v4800 = vpop.f32.mrb[0].mxu0
    %v4801 = vpop.f32.mrb[0].mxu0
    %v4802 = vpop.f32.mrb[0].mxu0
    %4803 = vdwg.mxu0
    %v4804 = vadd.f32 %v4740, %v4799
    %v4805 = vld [vmem:[#allocation4 + $0x8] sm:$0x3]
    %s4806 = scalar_lea.vmem %s7, 64
    %v4807 = vld [vmem:[%s4806] sm:$0xf]
    %v4808 = vld [vmem:[%s4806 + $0x4] sm:$0xf]
    %v4809 = vld [vmem:[%s4806 + $0x8] sm:$0xf]
    %v4810 = vld [vmem:[%s4806 + $0xc] sm:$0xf]
    %v4815 = vunpack.c.l.b16 %v4807
    %v4816 = vunpack.c.l.b16 %v4808
    %v4817 = vunpack.c.l.b16 %v4809
    %v4818 = vunpack.c.l.b16 %v4810
    %v4819 = vpack.c.b16 %v4816, %v4815
    %v4820 = vpack.c.b16 %v4818, %v4817
    %v4824 = vsel %vm4324, %v4805, 0
    %4826 = vmatprep.subr.bf16.mxu0 0
    %4827 = vmatpush1.bf16.msra.mxu0 %v4819
    %4828 = vmatprep.subr.bf16.mxu0 0
    %4829 = vmatpush1.bf16.msra.mxu0 %v4820
    %4830 = vmatprep.subr.bf16.mxu0 0
    %4831 = vmatpush1.bf16.msra.mxu0 0
    %4832 = vmatprep.subr.bf16.mxu0 0
    %4833 = vmatpush1.bf16.msra.mxu0 0
    %4834 = vmatprep.subr.bf16.mxu0 0
    %4835 = vmatpush1.bf16.msra.mxu0 0
    %4836 = vmatprep.subr.bf16.mxu0 0
    %4837 = vmatpush1.bf16.msra.mxu0 0
    %4838 = vmatprep.subr.bf16.mxu0 0
    %4839 = vmatpush1.bf16.msra.mxu0 0
    %4840 = vmatprep.subr.bf16.mxu0 0
    %4841 = vmatpush1.bf16.msra.mxu0 0
    %4842 = vmatprep.subr.bf16.mxu0 0
    %4843 = vmatpush1.bf16.msra.mxu0 0
    %4844 = vmatprep.subr.bf16.mxu0 0
    %4845 = vmatpush1.bf16.msra.mxu0 0
    %4846 = vmatprep.subr.bf16.mxu0 0
    %4847 = vmatpush1.bf16.msra.mxu0 0
    %4848 = vmatprep.subr.bf16.mxu0 0
    %4849 = vmatpush1.bf16.msra.mxu0 0
    %4850 = vmatprep.subr.bf16.mxu0 0
    %4851 = vmatpush1.bf16.msra.mxu0 0
    %4852 = vmatprep.subr.bf16.mxu0 0
    %4853 = vmatpush1.bf16.msra.mxu0 0
    %4854 = vmatprep.subr.bf16.mxu0 0
    %4855 = vmatpush1.bf16.msra.mxu0 0
    %4856 = vmatprep.subr.bf16.mxu0 0
    %4857 = vmatpush1.bf16.msra.mxu0 0
    %4858 = vmatprep.mubr.bf16.mxu0 0
    %4859 = vmatmul.mubr.bf16.gmra.mrb[0].mxu0 %v4824
    %v4860 = vpop.f32.mrb[0].mxu0
    %v4861 = vadd.f32 0.0, %v4860
    %v4862 = vpop.f32.mrb[0].mxu0
    %v4863 = vpop.f32.mrb[0].mxu0
    %v4864 = vpop.f32.mrb[0].mxu0
    %4865 = vdwg.mxu0
    %v4866 = vadd.f32 %v4804, %v4861
    %v4867 = vld [vmem:[#allocation4 + $0x8] sm:$0xc]
    %s4868 = scalar_lea.vmem %s7, 80
    %v4869 = vld [vmem:[%s4868] sm:$0xf]
    %v4870 = vld [vmem:[%s4868 + $0x4] sm:$0xf]
    %v4871 = vld [vmem:[%s4868 + $0x8] sm:$0xf]
    %v4872 = vld [vmem:[%s4868 + $0xc] sm:$0xf]
    %v4874 = vrot.slane %v4867, 2
    %v4879 = vunpack.c.l.b16 %v4869
    %v4880 = vunpack.c.l.b16 %v4870
    %v4881 = vunpack.c.l.b16 %v4871
    %v4882 = vunpack.c.l.b16 %v4872
    %v4883 = vpack.c.b16 %v4880, %v4879
    %v4884 = vpack.c.b16 %v4882, %v4881
    %v4888 = vsel %vm4324, %v4874, 0
    %4890 = vmatprep.subr.bf16.mxu0 0
    %4891 = vmatpush1.bf16.msra.mxu0 %v4883
    %4892 = vmatprep.subr.bf16.mxu0 0
    %4893 = vmatpush1.bf16.msra.mxu0 %v4884
    %4894 = vmatprep.subr.bf16.mxu0 0
    %4895 = vmatpush1.bf16.msra.mxu0 0
    %4896 = vmatprep.subr.bf16.mxu0 0
    %4897 = vmatpush1.bf16.msra.mxu0 0
    %4898 = vmatprep.subr.bf16.mxu0 0
    %4899 = vmatpush1.bf16.msra.mxu0 0
    %4900 = vmatprep.subr.bf16.mxu0 0
    %4901 = vmatpush1.bf16.msra.mxu0 0
    %4902 = vmatprep.subr.bf16.mxu0 0
    %4903 = vmatpush1.bf16.msra.mxu0 0
    %4904 = vmatprep.subr.bf16.mxu0 0
    %4905 = vmatpush1.bf16.msra.mxu0 0
    %4906 = vmatprep.subr.bf16.mxu0 0
    %4907 = vmatpush1.bf16.msra.mxu0 0
    %4908 = vmatprep.subr.bf16.mxu0 0
    %4909 = vmatpush1.bf16.msra.mxu0 0
    %4910 = vmatprep.subr.bf16.mxu0 0
    %4911 = vmatpush1.bf16.msra.mxu0 0
    %4912 = vmatprep.subr.bf16.mxu0 0
    %4913 = vmatpush1.bf16.msra.mxu0 0
    %4914 = vmatprep.subr.bf16.mxu0 0
    %4915 = vmatpush1.bf16.msra.mxu0 0
    %4916 = vmatprep.subr.bf16.mxu0 0
    %4917 = vmatpush1.bf16.msra.mxu0 0
    %4918 = vmatprep.subr.bf16.mxu0 0
    %4919 = vmatpush1.bf16.msra.mxu0 0
    %4920 = vmatprep.subr.bf16.mxu0 0
    %4921 = vmatpush1.bf16.msra.mxu0 0
    %4922 = vmatprep.mubr.bf16.mxu0 0
    %4923 = vmatmul.mubr.bf16.gmra.mrb[0].mxu0 %v4888
    %v4924 = vpop.f32.mrb[0].mxu0
    %v4925 = vadd.f32 0.0, %v4924
    %v4926 = vpop.f32.mrb[0].mxu0
    %v4927 = vpop.f32.mrb[0].mxu0
    %v4928 = vpop.f32.mrb[0].mxu0
    %4929 = vdwg.mxu0
    %v4930 = vadd.f32 %v4866, %v4925
    %v4931 = vld [vmem:[#allocation4 + $0x8] sm:$0x30]
    %s4932 = scalar_lea.vmem %s7, 96
    %v4933 = vld [vmem:[%s4932] sm:$0xf]
    %v4934 = vld [vmem:[%s4932 + $0x4] sm:$0xf]
    %v4935 = vld [vmem:[%s4932 + $0x8] sm:$0xf]
    %v4936 = vld [vmem:[%s4932 + $0xc] sm:$0xf]
    %v4938 = vrot.slane %v4931, 4
    %v4943 = vunpack.c.l.b16 %v4933
    %v4944 = vunpack.c.l.b16 %v4934
    %v4945 = vunpack.c.l.b16 %v4935
    %v4946 = vunpack.c.l.b16 %v4936
    %v4947 = vpack.c.b16 %v4944, %v4943
    %v4948 = vpack.c.b16 %v4946, %v4945
    %v4952 = vsel %vm4324, %v4938, 0
    %4954 = vmatprep.subr.bf16.mxu0 0
    %4955 = vmatpush1.bf16.msra.mxu0 %v4947
    %4956 = vmatprep.subr.bf16.mxu0 0
    %4957 = vmatpush1.bf16.msra.mxu0 %v4948
    %4958 = vmatprep.subr.bf16.mxu0 0
    %4959 = vmatpush1.bf16.msra.mxu0 0
    %4960 = vmatprep.subr.bf16.mxu0 0
    %4961 = vmatpush1.bf16.msra.mxu0 0
    %4962 = vmatprep.subr.bf16.mxu0 0
    %4963 = vmatpush1.bf16.msra.mxu0 0
    %4964 = vmatprep.subr.bf16.mxu0 0
    %4965 = vmatpush1.bf16.msra.mxu0 0
    %4966 = vmatprep.subr.bf16.mxu0 0
    %4967 = vmatpush1.bf16.msra.mxu0 0
    %4968 = vmatprep.subr.bf16.mxu0 0
    %4969 = vmatpush1.bf16.msra.mxu0 0
    %4970 = vmatprep.subr.bf16.mxu0 0
    %4971 = vmatpush1.bf16.msra.mxu0 0
    %4972 = vmatprep.subr.bf16.mxu0 0
    %4973 = vmatpush1.bf16.msra.mxu0 0
    %4974 = vmatprep.subr.bf16.mxu0 0
    %4975 = vmatpush1.bf16.msra.mxu0 0
    %4976 = vmatprep.subr.bf16.mxu0 0
    %4977 = vmatpush1.bf16.msra.mxu0 0
    %4978 = vmatprep.subr.bf16.mxu0 0
    %4979 = vmatpush1.bf16.msra.mxu0 0
    %4980 = vmatprep.subr.bf16.mxu0 0
    %4981 = vmatpush1.bf16.msra.mxu0 0
    %4982 = vmatprep.subr.bf16.mxu0 0
    %4983 = vmatpush1.bf16.msra.mxu0 0
    %4984 = vmatprep.subr.bf16.mxu0 0
    %4985 = vmatpush1.bf16.msra.mxu0 0
    %4986 = vmatprep.mubr.bf16.mxu0 0
    %4987 = vmatmul.mubr.bf16.gmra.mrb[0].mxu0 %v4952
    %v4988 = vpop.f32.mrb[0].mxu0
    %v4989 = vadd.f32 0.0, %v4988
    %v4990 = vpop.f32.mrb[0].mxu0
    %v4991 = vpop.f32.mrb[0].mxu0
    %v4992 = vpop.f32.mrb[0].mxu0
    %4993 = vdwg.mxu0
    %v4994 = vadd.f32 %v4930, %v4989
    %v4995 = vld [vmem:[#allocation4 + $0x8] sm:$0xc0]
    %s4996 = scalar_lea.vmem %s7, 112
    %v4997 = vld [vmem:[%s4996] sm:$0xf]
    %v4998 = vld [vmem:[%s4996 + $0x4] sm:$0xf]
    %v4999 = vld [vmem:[%s4996 + $0x8] sm:$0xf]
    %v5000 = vld [vmem:[%s4996 + $0xc] sm:$0xf]
    %v5002 = vrot.slane %v4995, 6
    %v5007 = vunpack.c.l.b16 %v4997
    %v5008 = vunpack.c.l.b16 %v4998
    %v5009 = vunpack.c.l.b16 %v4999
    %v5010 = vunpack.c.l.b16 %v5000
    %v5011 = vpack.c.b16 %v5008, %v5007
    %v5012 = vpack.c.b16 %v5010, %v5009
    %v5016 = vsel %vm4324, %v5002, 0
    %5018 = vmatprep.subr.bf16.mxu0 0
    %5019 = vmatpush1.bf16.msra.mxu0 %v5011
    %5020 = vmatprep.subr.bf16.mxu0 0
    %5021 = vmatpush1.bf16.msra.mxu0 %v5012
    %5022 = vmatprep.subr.bf16.mxu0 0
    %5023 = vmatpush1.bf16.msra.mxu0 0
    %5024 = vmatprep.subr.bf16.mxu0 0
    %5025 = vmatpush1.bf16.msra.mxu0 0
    %5026 = vmatprep.subr.bf16.mxu0 0
    %5027 = vmatpush1.bf16.msra.mxu0 0
    %5028 = vmatprep.subr.bf16.mxu0 0
    %5029 = vmatpush1.bf16.msra.mxu0 0
    %5030 = vmatprep.subr.bf16.mxu0 0
    %5031 = vmatpush1.bf16.msra.mxu0 0
    %5032 = vmatprep.subr.bf16.mxu0 0
    %5033 = vmatpush1.bf16.msra.mxu0 0
    %5034 = vmatprep.subr.bf16.mxu0 0
    %5035 = vmatpush1.bf16.msra.mxu0 0
    %5036 = vmatprep.subr.bf16.mxu0 0
    %5037 = vmatpush1.bf16.msra.mxu0 0
    %5038 = vmatprep.subr.bf16.mxu0 0
    %5039 = vmatpush1.bf16.msra.mxu0 0
    %5040 = vmatprep.subr.bf16.mxu0 0
    %5041 = vmatpush1.bf16.msra.mxu0 0
    %5042 = vmatprep.subr.bf16.mxu0 0
    %5043 = vmatpush1.bf16.msra.mxu0 0
    %5044 = vmatprep.subr.bf16.mxu0 0
    %5045 = vmatpush1.bf16.msra.mxu0 0
    %5046 = vmatprep.subr.bf16.mxu0 0
    %5047 = vmatpush1.bf16.msra.mxu0 0
    %5048 = vmatprep.subr.bf16.mxu0 0
    %5049 = vmatpush1.bf16.msra.mxu0 0
    %5050 = vmatprep.mubr.bf16.mxu0 0
    %5051 = vmatmul.mubr.bf16.gmra.mrb[0].mxu0 %v5016
    %v5052 = vpop.f32.mrb[0].mxu0
    %v5053 = vadd.f32 0.0, %v5052
    %v5054 = vpop.f32.mrb[0].mxu0
    %v5055 = vpop.f32.mrb[0].mxu0
    %v5056 = vpop.f32.mrb[0].mxu0
    %5057 = vdwg.mxu0
    %v5058 = vadd.f32 %v4994, %v5053
    %v5059 = vld [vmem:[#allocation4 + $0x10] sm:$0x3]
    %s5060 = scalar_lea.vmem %s7, 128
    %v5061 = vld [vmem:[%s5060] sm:$0xf]
    %v5062 = vld [vmem:[%s5060 + $0x4] sm:$0xf]
    %v5063 = vld [vmem:[%s5060 + $0x8] sm:$0xf]
    %v5064 = vld [vmem:[%s5060 + $0xc] sm:$0xf]
    %v5069 = vunpack.c.l.b16 %v5061
    %v5070 = vunpack.c.l.b16 %v5062
    %v5071 = vunpack.c.l.b16 %v5063
    %v5072 = vunpack.c.l.b16 %v5064
    %v5073 = vpack.c.b16 %v5070, %v5069
    %v5074 = vpack.c.b16 %v5072, %v5071
    %v5078 = vsel %vm4324, %v5059, 0
    %5080 = vmatprep.subr.bf16.mxu0 0
    %5081 = vmatpush1.bf16.msra.mxu0 %v5073
    %5082 = vmatprep.subr.bf16.mxu0 0
    %5083 = vmatpush1.bf16.msra.mxu0 %v5074
    %5084 = vmatprep.subr.bf16.mxu0 0
    %5085 = vmatpush1.bf16.msra.mxu0 0
    %5086 = vmatprep.subr.bf16.mxu0 0
    %5087 = vmatpush1.bf16.msra.mxu0 0
    %5088 = vmatprep.subr.bf16.mxu0 0
    %5089 = vmatpush1.bf16.msra.mxu0 0
    %5090 = vmatprep.subr.bf16.mxu0 0
    %5091 = vmatpush1.bf16.msra.mxu0 0
    %5092 = vmatprep.subr.bf16.mxu0 0
    %5093 = vmatpush1.bf16.msra.mxu0 0
    %5094 = vmatprep.subr.bf16.mxu0 0
    %5095 = vmatpush1.bf16.msra.mxu0 0
    %5096 = vmatprep.subr.bf16.mxu0 0
    %5097 = vmatpush1.bf16.msra.mxu0 0
    %5098 = vmatprep.subr.bf16.mxu0 0
    %5099 = vmatpush1.bf16.msra.mxu0 0
    %5100 = vmatprep.subr.bf16.mxu0 0
    %5101 = vmatpush1.bf16.msra.mxu0 0
    %5102 = vmatprep.subr.bf16.mxu0 0
    %5103 = vmatpush1.bf16.msra.mxu0 0
    %5104 = vmatprep.subr.bf16.mxu0 0
    %5105 = vmatpush1.bf16.msra.mxu0 0
    %5106 = vmatprep.subr.bf16.mxu0 0
    %5107 = vmatpush1.bf16.msra.mxu0 0
    %5108 = vmatprep.subr.bf16.mxu0 0
    %5109 = vmatpush1.bf16.msra.mxu0 0
    %5110 = vmatprep.subr.bf16.mxu0 0
    %5111 = vmatpush1.bf16.msra.mxu0 0
    %5112 = vmatprep.mubr.bf16.mxu0 0
    %5113 = vmatmul.mubr.bf16.gmra.mrb[0].mxu0 %v5078
    %v5114 = vpop.f32.mrb[0].mxu0
    %v5115 = vadd.f32 0.0, %v5114
    %v5116 = vpop.f32.mrb[0].mxu0
    %v5117 = vpop.f32.mrb[0].mxu0
    %v5118 = vpop.f32.mrb[0].mxu0
    %5119 = vdwg.mxu0
    %v5120 = vadd.f32 %v5058, %v5115
    %v5121 = vld [vmem:[#allocation4 + $0x10] sm:$0xc]
    %s5122 = scalar_lea.vmem %s7, 144
    %v5123 = vld [vmem:[%s5122] sm:$0xf]
    %v5124 = vld [vmem:[%s5122 + $0x4] sm:$0xf]
    %v5125 = vld [vmem:[%s5122 + $0x8] sm:$0xf]
    %v5126 = vld [vmem:[%s5122 + $0xc] sm:$0xf]
    %v5128 = vrot.slane %v5121, 2
    %v5133 = vunpack.c.l.b16 %v5123
    %v5134 = vunpack.c.l.b16 %v5124
    %v5135 = vunpack.c.l.b16 %v5125
    %v5136 = vunpack.c.l.b16 %v5126
    %v5137 = vpack.c.b16 %v5134, %v5133
    %v5138 = vpack.c.b16 %v5136, %v5135
    %v5142 = vsel %vm4324, %v5128, 0
    %5144 = vmatprep.subr.bf16.mxu0 0
    %5145 = vmatpush1.bf16.msra.mxu0 %v5137
    %5146 = vmatprep.subr.bf16.mxu0 0
    %5147 = vmatpush1.bf16.msra.mxu0 %v5138
    %5148 = vmatprep.subr.bf16.mxu0 0
    %5149 = vmatpush1.bf16.msra.mxu0 0
    %5150 = vmatprep.subr.bf16.mxu0 0
    %5151 = vmatpush1.bf16.msra.mxu0 0
    %5152 = vmatprep.subr.bf16.mxu0 0
    %5153 = vmatpush1.bf16.msra.mxu0 0
    %5154 = vmatprep.subr.bf16.mxu0 0
    %5155 = vmatpush1.bf16.msra.mxu0 0
    %5156 = vmatprep.subr.bf16.mxu0 0
    %5157 = vmatpush1.bf16.msra.mxu0 0
    %5158 = vmatprep.subr.bf16.mxu0 0
    %5159 = vmatpush1.bf16.msra.mxu0 0
    %5160 = vmatprep.subr.bf16.mxu0 0
    %5161 = vmatpush1.bf16.msra.mxu0 0
    %5162 = vmatprep.subr.bf16.mxu0 0
    %5163 = vmatpush1.bf16.msra.mxu0 0
    %5164 = vmatprep.subr.bf16.mxu0 0
    %5165 = vmatpush1.bf16.msra.mxu0 0
    %5166 = vmatprep.subr.bf16.mxu0 0
    %5167 = vmatpush1.bf16.msra.mxu0 0
    %5168 = vmatprep.subr.bf16.mxu0 0
    %5169 = vmatpush1.bf16.msra.mxu0 0
    %5170 = vmatprep.subr.bf16.mxu0 0
    %5171 = vmatpush1.bf16.msra.mxu0 0
    %5172 = vmatprep.subr.bf16.mxu0 0
    %5173 = vmatpush1.bf16.msra.mxu0 0
    %5174 = vmatprep.subr.bf16.mxu0 0
    %5175 = vmatpush1.bf16.msra.mxu0 0
    %5176 = vmatprep.mubr.bf16.mxu0 0
    %5177 = vmatmul.mubr.bf16.gmra.mrb[0].mxu0 %v5142
    %v5178 = vpop.f32.mrb[0].mxu0
    %v5179 = vadd.f32 0.0, %v5178
    %v5180 = vpop.f32.mrb[0].mxu0
    %v5181 = vpop.f32.mrb[0].mxu0
    %v5182 = vpop.f32.mrb[0].mxu0
    %5183 = vdwg.mxu0
    %v5184 = vadd.f32 %v5120, %v5179
    %v5185 = vld [vmem:[#allocation4 + $0x10] sm:$0x30]
    %s5186 = scalar_lea.vmem %s7, 160
    %v5187 = vld [vmem:[%s5186] sm:$0xf]
    %v5188 = vld [vmem:[%s5186 + $0x4] sm:$0xf]
    %v5189 = vld [vmem:[%s5186 + $0x8] sm:$0xf]
    %v5190 = vld [vmem:[%s5186 + $0xc] sm:$0xf]
    %v5192 = vrot.slane %v5185, 4
    %v5197 = vunpack.c.l.b16 %v5187
    %v5198 = vunpack.c.l.b16 %v5188
    %v5199 = vunpack.c.l.b16 %v5189
    %v5200 = vunpack.c.l.b16 %v5190
    %v5201 = vpack.c.b16 %v5198, %v5197
    %v5202 = vpack.c.b16 %v5200, %v5199
    %v5206 = vsel %vm4324, %v5192, 0
    %5208 = vmatprep.subr.bf16.mxu0 0
    %5209 = vmatpush1.bf16.msra.mxu0 %v5201
    %5210 = vmatprep.subr.bf16.mxu0 0
    %5211 = vmatpush1.bf16.msra.mxu0 %v5202
    %5212 = vmatprep.subr.bf16.mxu0 0
    %5213 = vmatpush1.bf16.msra.mxu0 0
    %5214 = vmatprep.subr.bf16.mxu0 0
    %5215 = vmatpush1.bf16.msra.mxu0 0
    %5216 = vmatprep.subr.bf16.mxu0 0
    %5217 = vmatpush1.bf16.msra.mxu0 0
    %5218 = vmatprep.subr.bf16.mxu0 0
    %5219 = vmatpush1.bf16.msra.mxu0 0
    %5220 = vmatprep.subr.bf16.mxu0 0
    %5221 = vmatpush1.bf16.msra.mxu0 0
    %5222 = vmatprep.subr.bf16.mxu0 0
    %5223 = vmatpush1.bf16.msra.mxu0 0
    %5224 = vmatprep.subr.bf16.mxu0 0
    %5225 = vmatpush1.bf16.msra.mxu0 0
    %5226 = vmatprep.subr.bf16.mxu0 0
    %5227 = vmatpush1.bf16.msra.mxu0 0
    %5228 = vmatprep.subr.bf16.mxu0 0
    %5229 = vmatpush1.bf16.msra.mxu0 0
    %5230 = vmatprep.subr.bf16.mxu0 0
    %5231 = vmatpush1.bf16.msra.mxu0 0
    %5232 = vmatprep.subr.bf16.mxu0 0
    %5233 = vmatpush1.bf16.msra.mxu0 0
    %5234 = vmatprep.subr.bf16.mxu0 0
    %5235 = vmatpush1.bf16.msra.mxu0 0
    %5236 = vmatprep.subr.bf16.mxu0 0
    %5237 = vmatpush1.bf16.msra.mxu0 0
    %5238 = vmatprep.subr.bf16.mxu0 0
    %5239 = vmatpush1.bf16.msra.mxu0 0
    %5240 = vmatprep.mubr.bf16.mxu0 0
    %5241 = vmatmul.mubr.bf16.gmra.mrb[0].mxu0 %v5206
    %v5242 = vpop.f32.mrb[0].mxu0
    %v5243 = vadd.f32 0.0, %v5242
    %v5244 = vpop.f32.mrb[0].mxu0
    %v5245 = vpop.f32.mrb[0].mxu0
    %v5246 = vpop.f32.mrb[0].mxu0
    %5247 = vdwg.mxu0
    %v5248 = vadd.f32 %v5184, %v5243
    %v5249 = vld [vmem:[#allocation4 + $0x10] sm:$0xc0]
    %s5250 = scalar_lea.vmem %s7, 176
    %v5251 = vld [vmem:[%s5250] sm:$0xf]
    %v5252 = vld [vmem:[%s5250 + $0x4] sm:$0xf]
    %v5253 = vld [vmem:[%s5250 + $0x8] sm:$0xf]
    %v5254 = vld [vmem:[%s5250 + $0xc] sm:$0xf]
    %v5256 = vrot.slane %v5249, 6
    %v5261 = vunpack.c.l.b16 %v5251
    %v5262 = vunpack.c.l.b16 %v5252
    %v5263 = vunpack.c.l.b16 %v5253
    %v5264 = vunpack.c.l.b16 %v5254
    %v5265 = vpack.c.b16 %v5262, %v5261
    %v5266 = vpack.c.b16 %v5264, %v5263
    %v5270 = vsel %vm4324, %v5256, 0
    %5272 = vmatprep.subr.bf16.mxu0 0
    %5273 = vmatpush1.bf16.msra.mxu0 %v5265
    %5274 = vmatprep.subr.bf16.mxu0 0
    %5275 = vmatpush1.bf16.msra.mxu0 %v5266
    %5276 = vmatprep.subr.bf16.mxu0 0
    %5277 = vmatpush1.bf16.msra.mxu0 0
    %5278 = vmatprep.subr.bf16.mxu0 0
    %5279 = vmatpush1.bf16.msra.mxu0 0
    %5280 = vmatprep.subr.bf16.mxu0 0
    %5281 = vmatpush1.bf16.msra.mxu0 0
    %5282 = vmatprep.subr.bf16.mxu0 0
    %5283 = vmatpush1.bf16.msra.mxu0 0
    %5284 = vmatprep.subr.bf16.mxu0 0
    %5285 = vmatpush1.bf16.msra.mxu0 0
    %5286 = vmatprep.subr.bf16.mxu0 0
    %5287 = vmatpush1.bf16.msra.mxu0 0
    %5288 = vmatprep.subr.bf16.mxu0 0
    %5289 = vmatpush1.bf16.msra.mxu0 0
    %5290 = vmatprep.subr.bf16.mxu0 0
    %5291 = vmatpush1.bf16.msra.mxu0 0
    %5292 = vmatprep.subr.bf16.mxu0 0
    %5293 = vmatpush1.bf16.msra.mxu0 0
    %5294 = vmatprep.subr.bf16.mxu0 0
    %5295 = vmatpush1.bf16.msra.mxu0 0
    %5296 = vmatprep.subr.bf16.mxu0 0
    %5297 = vmatpush1.bf16.msra.mxu0 0
    %5298 = vmatprep.subr.bf16.mxu0 0
    %5299 = vmatpush1.bf16.msra.mxu0 0
    %5300 = vmatprep.subr.bf16.mxu0 0
    %5301 = vmatpush1.bf16.msra.mxu0 0
    %5302 = vmatprep.subr.bf16.mxu0 0
    %5303 = vmatpush1.bf16.msra.mxu0 0
    %5304 = vmatprep.mubr.bf16.mxu0 0
    %5305 = vmatmul.mubr.bf16.gmra.mrb[0].mxu0 %v5270
    %v5306 = vpop.f32.mrb[0].mxu0
    %v5307 = vadd.f32 0.0, %v5306
    %v5308 = vpop.f32.mrb[0].mxu0
    %v5309 = vpop.f32.mrb[0].mxu0
    %v5310 = vpop.f32.mrb[0].mxu0
    %5311 = vdwg.mxu0
    %v5312 = vadd.f32 %v5248, %v5307
    %v5313 = vld [vmem:[#allocation4 + $0x18] sm:$0x3]
    %s5314 = scalar_lea.vmem %s7, 192
    %v5315 = vld [vmem:[%s5314] sm:$0xf]
    %v5316 = vld [vmem:[%s5314 + $0x4] sm:$0xf]
    %v5317 = vld [vmem:[%s5314 + $0x8] sm:$0xf]
    %v5318 = vld [vmem:[%s5314 + $0xc] sm:$0xf]
    %v5323 = vunpack.c.l.b16 %v5315
    %v5324 = vunpack.c.l.b16 %v5316
    %v5325 = vunpack.c.l.b16 %v5317
    %v5326 = vunpack.c.l.b16 %v5318
    %v5327 = vpack.c.b16 %v5324, %v5323
    %v5328 = vpack.c.b16 %v5326, %v5325
    %v5332 = vsel %vm4324, %v5313, 0
    %5334 = vmatprep.subr.bf16.mxu0 0
    %5335 = vmatpush1.bf16.msra.mxu0 %v5327
    %5336 = vmatprep.subr.bf16.mxu0 0
    %5337 = vmatpush1.bf16.msra.mxu0 %v5328
    %5338 = vmatprep.subr.bf16.mxu0 0
    %5339 = vmatpush1.bf16.msra.mxu0 0
    %5340 = vmatprep.subr.bf16.mxu0 0
    %5341 = vmatpush1.bf16.msra.mxu0 0
    %5342 = vmatprep.subr.bf16.mxu0 0
    %5343 = vmatpush1.bf16.msra.mxu0 0
    %5344 = vmatprep.subr.bf16.mxu0 0
    %5345 = vmatpush1.bf16.msra.mxu0 0
    %5346 = vmatprep.subr.bf16.mxu0 0
    %5347 = vmatpush1.bf16.msra.mxu0 0
    %5348 = vmatprep.subr.bf16.mxu0 0
    %5349 = vmatpush1.bf16.msra.mxu0 0
    %5350 = vmatprep.subr.bf16.mxu0 0
    %5351 = vmatpush1.bf16.msra.mxu0 0
    %5352 = vmatprep.subr.bf16.mxu0 0
    %5353 = vmatpush1.bf16.msra.mxu0 0
    %5354 = vmatprep.subr.bf16.mxu0 0
    %5355 = vmatpush1.bf16.msra.mxu0 0
    %5356 = vmatprep.subr.bf16.mxu0 0
    %5357 = vmatpush1.bf16.msra.mxu0 0
    %5358 = vmatprep.subr.bf16.mxu0 0
    %5359 = vmatpush1.bf16.msra.mxu0 0
    %5360 = vmatprep.subr.bf16.mxu0 0
    %5361 = vmatpush1.bf16.msra.mxu0 0
    %5362 = vmatprep.subr.bf16.mxu0 0
    %5363 = vmatpush1.bf16.msra.mxu0 0
    %5364 = vmatprep.subr.bf16.mxu0 0
    %5365 = vmatpush1.bf16.msra.mxu0 0
    %5366 = vmatprep.mubr.bf16.mxu0 0
    %5367 = vmatmul.mubr.bf16.gmra.mrb[0].mxu0 %v5332
    %v5368 = vpop.f32.mrb[0].mxu0
    %v5369 = vadd.f32 0.0, %v5368
    %v5370 = vpop.f32.mrb[0].mxu0
    %v5371 = vpop.f32.mrb[0].mxu0
    %v5372 = vpop.f32.mrb[0].mxu0
    %5373 = vdwg.mxu0
    %v5374 = vadd.f32 %v5312, %v5369
    %v5375 = vld [vmem:[#allocation4 + $0x18] sm:$0xc]
    %s5376 = scalar_lea.vmem %s7, 208
    %v5377 = vld [vmem:[%s5376] sm:$0xf]
    %v5378 = vld [vmem:[%s5376 + $0x4] sm:$0xf]
    %v5379 = vld [vmem:[%s5376 + $0x8] sm:$0xf]
    %v5380 = vld [vmem:[%s5376 + $0xc] sm:$0xf]
    %v5382 = vrot.slane %v5375, 2
    %v5387 = vunpack.c.l.b16 %v5377
    %v5388 = vunpack.c.l.b16 %v5378
    %v5389 = vunpack.c.l.b16 %v5379
    %v5390 = vunpack.c.l.b16 %v5380
    %v5391 = vpack.c.b16 %v5388, %v5387
    %v5392 = vpack.c.b16 %v5390, %v5389
    %v5396 = vsel %vm4324, %v5382, 0
    %5398 = vmatprep.subr.bf16.mxu0 0
    %5399 = vmatpush1.bf16.msra.mxu0 %v5391
    %5400 = vmatprep.subr.bf16.mxu0 0
    %5401 = vmatpush1.bf16.msra.mxu0 %v5392
    %5402 = vmatprep.subr.bf16.mxu0 0
    %5403 = vmatpush1.bf16.msra.mxu0 0
    %5404 = vmatprep.subr.bf16.mxu0 0
    %5405 = vmatpush1.bf16.msra.mxu0 0
    %5406 = vmatprep.subr.bf16.mxu0 0
    %5407 = vmatpush1.bf16.msra.mxu0 0
    %5408 = vmatprep.subr.bf16.mxu0 0
    %5409 = vmatpush1.bf16.msra.mxu0 0
    %5410 = vmatprep.subr.bf16.mxu0 0
    %5411 = vmatpush1.bf16.msra.mxu0 0
    %5412 = vmatprep.subr.bf16.mxu0 0
    %5413 = vmatpush1.bf16.msra.mxu0 0
    %5414 = vmatprep.subr.bf16.mxu0 0
    %5415 = vmatpush1.bf16.msra.mxu0 0
    %5416 = vmatprep.subr.bf16.mxu0 0
    %5417 = vmatpush1.bf16.msra.mxu0 0
    %5418 = vmatprep.subr.bf16.mxu0 0
    %5419 = vmatpush1.bf16.msra.mxu0 0
    %5420 = vmatprep.subr.bf16.mxu0 0
    %5421 = vmatpush1.bf16.msra.mxu0 0
    %5422 = vmatprep.subr.bf16.mxu0 0
    %5423 = vmatpush1.bf16.msra.mxu0 0
    %5424 = vmatprep.subr.bf16.mxu0 0
    %5425 = vmatpush1.bf16.msra.mxu0 0
    %5426 = vmatprep.subr.bf16.mxu0 0
    %5427 = vmatpush1.bf16.msra.mxu0 0
    %5428 = vmatprep.subr.bf16.mxu0 0
    %5429 = vmatpush1.bf16.msra.mxu0 0
    %5430 = vmatprep.mubr.bf16.mxu0 0
    %5431 = vmatmul.mubr.bf16.gmra.mrb[0].mxu0 %v5396
    %v5432 = vpop.f32.mrb[0].mxu0
    %v5433 = vadd.f32 0.0, %v5432
    %v5434 = vpop.f32.mrb[0].mxu0
    %v5435 = vpop.f32.mrb[0].mxu0
    %v5436 = vpop.f32.mrb[0].mxu0
    %5437 = vdwg.mxu0
    %v5438 = vadd.f32 %v5374, %v5433
    %v5439 = vld [vmem:[#allocation4 + $0x18] sm:$0x30]
    %s5440 = scalar_lea.vmem %s7, 224
    %v5441 = vld [vmem:[%s5440] sm:$0xf]
    %v5442 = vld [vmem:[%s5440 + $0x4] sm:$0xf]
    %v5443 = vld [vmem:[%s5440 + $0x8] sm:$0xf]
    %v5444 = vld [vmem:[%s5440 + $0xc] sm:$0xf]
    %v5446 = vrot.slane %v5439, 4
    %v5451 = vunpack.c.l.b16 %v5441
    %v5452 = vunpack.c.l.b16 %v5442
    %v5453 = vunpack.c.l.b16 %v5443
    %v5454 = vunpack.c.l.b16 %v5444
    %v5455 = vpack.c.b16 %v5452, %v5451
    %v5456 = vpack.c.b16 %v5454, %v5453
    %v5460 = vsel %vm4324, %v5446, 0
    %5462 = vmatprep.subr.bf16.mxu0 0
    %5463 = vmatpush1.bf16.msra.mxu0 %v5455
    %5464 = vmatprep.subr.bf16.mxu0 0
    %5465 = vmatpush1.bf16.msra.mxu0 %v5456
    %5466 = vmatprep.subr.bf16.mxu0 0
    %5467 = vmatpush1.bf16.msra.mxu0 0
    %5468 = vmatprep.subr.bf16.mxu0 0
    %5469 = vmatpush1.bf16.msra.mxu0 0
    %5470 = vmatprep.subr.bf16.mxu0 0
    %5471 = vmatpush1.bf16.msra.mxu0 0
    %5472 = vmatprep.subr.bf16.mxu0 0
    %5473 = vmatpush1.bf16.msra.mxu0 0
    %5474 = vmatprep.subr.bf16.mxu0 0
    %5475 = vmatpush1.bf16.msra.mxu0 0
    %5476 = vmatprep.subr.bf16.mxu0 0
    %5477 = vmatpush1.bf16.msra.mxu0 0
    %5478 = vmatprep.subr.bf16.mxu0 0
    %5479 = vmatpush1.bf16.msra.mxu0 0
    %5480 = vmatprep.subr.bf16.mxu0 0
    %5481 = vmatpush1.bf16.msra.mxu0 0
    %5482 = vmatprep.subr.bf16.mxu0 0
    %5483 = vmatpush1.bf16.msra.mxu0 0
    %5484 = vmatprep.subr.bf16.mxu0 0
    %5485 = vmatpush1.bf16.msra.mxu0 0
    %5486 = vmatprep.subr.bf16.mxu0 0
    %5487 = vmatpush1.bf16.msra.mxu0 0
    %5488 = vmatprep.subr.bf16.mxu0 0
    %5489 = vmatpush1.bf16.msra.mxu0 0
    %5490 = vmatprep.subr.bf16.mxu0 0
    %5491 = vmatpush1.bf16.msra.mxu0 0
    %5492 = vmatprep.subr.bf16.mxu0 0
    %5493 = vmatpush1.bf16.msra.mxu0 0
    %5494 = vmatprep.mubr.bf16.mxu0 0
    %5495 = vmatmul.mubr.bf16.gmra.mrb[0].mxu0 %v5460
    %v5496 = vpop.f32.mrb[0].mxu0
    %v5497 = vadd.f32 0.0, %v5496
    %v5498 = vpop.f32.mrb[0].mxu0
    %v5499 = vpop.f32.mrb[0].mxu0
    %v5500 = vpop.f32.mrb[0].mxu0
    %5501 = vdwg.mxu0
    %v5502 = vadd.f32 %v5438, %v5497
    %v5503 = vld [vmem:[#allocation4 + $0x18] sm:$0xc0]
    %s5504 = scalar_lea.vmem %s7, 240
    %v5505 = vld [vmem:[%s5504] sm:$0xf]
    %v5506 = vld [vmem:[%s5504 + $0x4] sm:$0xf]
    %v5507 = vld [vmem:[%s5504 + $0x8] sm:$0xf]
    %v5508 = vld [vmem:[%s5504 + $0xc] sm:$0xf]
    %v5510 = vrot.slane %v5503, 6
    %v5515 = vunpack.c.l.b16 %v5505
    %v5516 = vunpack.c.l.b16 %v5506
    %v5517 = vunpack.c.l.b16 %v5507
    %v5518 = vunpack.c.l.b16 %v5508
    %v5519 = vpack.c.b16 %v5516, %v5515
    %v5520 = vpack.c.b16 %v5518, %v5517
    %v5524 = vsel %vm4324, %v5510, 0
    %5526 = vmatprep.subr.bf16.mxu0 0
    %5527 = vmatpush1.bf16.msra.mxu0 %v5519
    %5528 = vmatprep.subr.bf16.mxu0 0
    %5529 = vmatpush1.bf16.msra.mxu0 %v5520
    %5530 = vmatprep.subr.bf16.mxu0 0
    %5531 = vmatpush1.bf16.msra.mxu0 0
    %5532 = vmatprep.subr.bf16.mxu0 0
    %5533 = vmatpush1.bf16.msra.mxu0 0
    %5534 = vmatprep.subr.bf16.mxu0 0
    %5535 = vmatpush1.bf16.msra.mxu0 0
    %5536 = vmatprep.subr.bf16.mxu0 0
    %5537 = vmatpush1.bf16.msra.mxu0 0
    %5538 = vmatprep.subr.bf16.mxu0 0
    %5539 = vmatpush1.bf16.msra.mxu0 0
    %5540 = vmatprep.subr.bf16.mxu0 0
    %5541 = vmatpush1.bf16.msra.mxu0 0
    %5542 = vmatprep.subr.bf16.mxu0 0
    %5543 = vmatpush1.bf16.msra.mxu0 0
    %5544 = vmatprep.subr.bf16.mxu0 0
    %5545 = vmatpush1.bf16.msra.mxu0 0
    %5546 = vmatprep.subr.bf16.mxu0 0
    %5547 = vmatpush1.bf16.msra.mxu0 0
    %5548 = vmatprep.subr.bf16.mxu0 0
    %5549 = vmatpush1.bf16.msra.mxu0 0
    %5550 = vmatprep.subr.bf16.mxu0 0
    %5551 = vmatpush1.bf16.msra.mxu0 0
    %5552 = vmatprep.subr.bf16.mxu0 0
    %5553 = vmatpush1.bf16.msra.mxu0 0
    %5554 = vmatprep.subr.bf16.mxu0 0
    %5555 = vmatpush1.bf16.msra.mxu0 0
    %5556 = vmatprep.subr.bf16.mxu0 0
    %5557 = vmatpush1.bf16.msra.mxu0 0
    %5558 = vmatprep.mubr.bf16.mxu0 0
    %5559 = vmatmul.mubr.bf16.gmra.mrb[0].mxu0 %v5524
    %v5560 = vpop.f32.mrb[0].mxu0
    %v5561 = vadd.f32 0.0, %v5560
    %v5562 = vpop.f32.mrb[0].mxu0
    %v5563 = vpop.f32.mrb[0].mxu0
    %v5564 = vpop.f32.mrb[0].mxu0
    %5565 = vdwg.mxu0
    %v5566 = vadd.f32 %v5502, %v5561
    %v5567 = vld [vmem:[#allocation4 + $0x20] sm:$0x3]
    %s5568 = scalar_lea.vmem %s7, 256
    %v5569 = vld [vmem:[%s5568] sm:$0xf]
    %v5570 = vld [vmem:[%s5568 + $0x4] sm:$0xf]
    %v5571 = vld [vmem:[%s5568 + $0x8] sm:$0xf]
    %v5572 = vld [vmem:[%s5568 + $0xc] sm:$0xf]
    %v5577 = vunpack.c.l.b16 %v5569
    %v5578 = vunpack.c.l.b16 %v5570
    %v5579 = vunpack.c.l.b16 %v5571
    %v5580 = vunpack.c.l.b16 %v5572
    %v5581 = vpack.c.b16 %v5578, %v5577
    %v5582 = vpack.c.b16 %v5580, %v5579
    %v5586 = vsel %vm4324, %v5567, 0
    %5588 = vmatprep.subr.bf16.mxu0 0
    %5589 = vmatpush1.bf16.msra.mxu0 %v5581
    %5590 = vmatprep.subr.bf16.mxu0 0
    %5591 = vmatpush1.bf16.msra.mxu0 %v5582
    %5592 = vmatprep.subr.bf16.mxu0 0
    %5593 = vmatpush1.bf16.msra.mxu0 0
    %5594 = vmatprep.subr.bf16.mxu0 0
    %5595 = vmatpush1.bf16.msra.mxu0 0
    %5596 = vmatprep.subr.bf16.mxu0 0
    %5597 = vmatpush1.bf16.msra.mxu0 0
    %5598 = vmatprep.subr.bf16.mxu0 0
    %5599 = vmatpush1.bf16.msra.mxu0 0
    %5600 = vmatprep.subr.bf16.mxu0 0
    %5601 = vmatpush1.bf16.msra.mxu0 0
    %5602 = vmatprep.subr.bf16.mxu0 0
    %5603 = vmatpush1.bf16.msra.mxu0 0
    %5604 = vmatprep.subr.bf16.mxu0 0
    %5605 = vmatpush1.bf16.msra.mxu0 0
    %5606 = vmatprep.subr.bf16.mxu0 0
    %5607 = vmatpush1.bf16.msra.mxu0 0
    %5608 = vmatprep.subr.bf16.mxu0 0
    %5609 = vmatpush1.bf16.msra.mxu0 0
    %5610 = vmatprep.subr.bf16.mxu0 0
    %5611 = vmatpush1.bf16.msra.mxu0 0
    %5612 = vmatprep.subr.bf16.mxu0 0
    %5613 = vmatpush1.bf16.msra.mxu0 0
    %5614 = vmatprep.subr.bf16.mxu0 0
    %5615 = vmatpush1.bf16.msra.mxu0 0
    %5616 = vmatprep.subr.bf16.mxu0 0
    %5617 = vmatpush1.bf16.msra.mxu0 0
    %5618 = vmatprep.subr.bf16.mxu0 0
    %5619 = vmatpush1.bf16.msra.mxu0 0
    %5620 = vmatprep.mubr.bf16.mxu0 0
    %5621 = vmatmul.mubr.bf16.gmra.mrb[0].mxu0 %v5586
    %v5622 = vpop.f32.mrb[0].mxu0
    %v5623 = vadd.f32 0.0, %v5622
    %v5624 = vpop.f32.mrb[0].mxu0
    %v5625 = vpop.f32.mrb[0].mxu0
    %v5626 = vpop.f32.mrb[0].mxu0
    %5627 = vdwg.mxu0
    %v5628 = vadd.f32 %v5566, %v5623
    %v5629 = vld [vmem:[#allocation4 + $0x20] sm:$0xc]
    %s5630 = scalar_lea.vmem %s7, 272
    %v5631 = vld [vmem:[%s5630] sm:$0xf]
    %v5632 = vld [vmem:[%s5630 + $0x4] sm:$0xf]
    %v5633 = vld [vmem:[%s5630 + $0x8] sm:$0xf]
    %v5634 = vld [vmem:[%s5630 + $0xc] sm:$0xf]
    %v5636 = vrot.slane %v5629, 2
    %v5641 = vunpack.c.l.b16 %v5631
    %v5642 = vunpack.c.l.b16 %v5632
    %v5643 = vunpack.c.l.b16 %v5633
    %v5644 = vunpack.c.l.b16 %v5634
    %v5645 = vpack.c.b16 %v5642, %v5641
    %v5646 = vpack.c.b16 %v5644, %v5643
    %v5650 = vsel %vm4324, %v5636, 0
    %5652 = vmatprep.subr.bf16.mxu0 0
    %5653 = vmatpush1.bf16.msra.mxu0 %v5645
    %5654 = vmatprep.subr.bf16.mxu0 0
    %5655 = vmatpush1.bf16.msra.mxu0 %v5646
    %5656 = vmatprep.subr.bf16.mxu0 0
    %5657 = vmatpush1.bf16.msra.mxu0 0
    %5658 = vmatprep.subr.bf16.mxu0 0
    %5659 = vmatpush1.bf16.msra.mxu0 0
    %5660 = vmatprep.subr.bf16.mxu0 0
    %5661 = vmatpush1.bf16.msra.mxu0 0
    %5662 = vmatprep.subr.bf16.mxu0 0
    %5663 = vmatpush1.bf16.msra.mxu0 0
    %5664 = vmatprep.subr.bf16.mxu0 0
    %5665 = vmatpush1.bf16.msra.mxu0 0
    %5666 = vmatprep.subr.bf16.mxu0 0
    %5667 = vmatpush1.bf16.msra.mxu0 0
    %5668 = vmatprep.subr.bf16.mxu0 0
    %5669 = vmatpush1.bf16.msra.mxu0 0
    %5670 = vmatprep.subr.bf16.mxu0 0
    %5671 = vmatpush1.bf16.msra.mxu0 0
    %5672 = vmatprep.subr.bf16.mxu0 0
    %5673 = vmatpush1.bf16.msra.mxu0 0
    %5674 = vmatprep.subr.bf16.mxu0 0
    %5675 = vmatpush1.bf16.msra.mxu0 0
    %5676 = vmatprep.subr.bf16.mxu0 0
    %5677 = vmatpush1.bf16.msra.mxu0 0
    %5678 = vmatprep.subr.bf16.mxu0 0
    %5679 = vmatpush1.bf16.msra.mxu0 0
    %5680 = vmatprep.subr.bf16.mxu0 0
    %5681 = vmatpush1.bf16.msra.mxu0 0
    %5682 = vmatprep.subr.bf16.mxu0 0
    %5683 = vmatpush1.bf16.msra.mxu0 0
    %5684 = vmatprep.mubr.bf16.mxu0 0
    %5685 = vmatmul.mubr.bf16.gmra.mrb[0].mxu0 %v5650
    %v5686 = vpop.f32.mrb[0].mxu0
    %v5687 = vadd.f32 0.0, %v5686
    %v5688 = vpop.f32.mrb[0].mxu0
    %v5689 = vpop.f32.mrb[0].mxu0
    %v5690 = vpop.f32.mrb[0].mxu0
    %5691 = vdwg.mxu0
    %v5692 = vadd.f32 %v5628, %v5687
    %v5693 = vld [vmem:[#allocation4 + $0x20] sm:$0x30]
    %s5694 = scalar_lea.vmem %s7, 288
    %v5695 = vld [vmem:[%s5694] sm:$0xf]
    %v5696 = vld [vmem:[%s5694 + $0x4] sm:$0xf]
    %v5697 = vld [vmem:[%s5694 + $0x8] sm:$0xf]
    %v5698 = vld [vmem:[%s5694 + $0xc] sm:$0xf]
    %v5700 = vrot.slane %v5693, 4
    %v5705 = vunpack.c.l.b16 %v5695
    %v5706 = vunpack.c.l.b16 %v5696
    %v5707 = vunpack.c.l.b16 %v5697
    %v5708 = vunpack.c.l.b16 %v5698
    %v5709 = vpack.c.b16 %v5706, %v5705
    %v5710 = vpack.c.b16 %v5708, %v5707
    %v5714 = vsel %vm4324, %v5700, 0
    %5716 = vmatprep.subr.bf16.mxu0 0
    %5717 = vmatpush1.bf16.msra.mxu0 %v5709
    %5718 = vmatprep.subr.bf16.mxu0 0
    %5719 = vmatpush1.bf16.msra.mxu0 %v5710
    %5720 = vmatprep.subr.bf16.mxu0 0
    %5721 = vmatpush1.bf16.msra.mxu0 0
    %5722 = vmatprep.subr.bf16.mxu0 0
    %5723 = vmatpush1.bf16.msra.mxu0 0
    %5724 = vmatprep.subr.bf16.mxu0 0
    %5725 = vmatpush1.bf16.msra.mxu0 0
    %5726 = vmatprep.subr.bf16.mxu0 0
    %5727 = vmatpush1.bf16.msra.mxu0 0
    %5728 = vmatprep.subr.bf16.mxu0 0
    %5729 = vmatpush1.bf16.msra.mxu0 0
    %5730 = vmatprep.subr.bf16.mxu0 0
    %5731 = vmatpush1.bf16.msra.mxu0 0
    %5732 = vmatprep.subr.bf16.mxu0 0
    %5733 = vmatpush1.bf16.msra.mxu0 0
    %5734 = vmatprep.subr.bf16.mxu0 0
    %5735 = vmatpush1.bf16.msra.mxu0 0
    %5736 = vmatprep.subr.bf16.mxu0 0
    %5737 = vmatpush1.bf16.msra.mxu0 0
    %5738 = vmatprep.subr.bf16.mxu0 0
    %5739 = vmatpush1.bf16.msra.mxu0 0
    %5740 = vmatprep.subr.bf16.mxu0 0
    %5741 = vmatpush1.bf16.msra.mxu0 0
    %5742 = vmatprep.subr.bf16.mxu0 0
    %5743 = vmatpush1.bf16.msra.mxu0 0
    %5744 = vmatprep.subr.bf16.mxu0 0
    %5745 = vmatpush1.bf16.msra.mxu0 0
    %5746 = vmatprep.subr.bf16.mxu0 0
    %5747 = vmatpush1.bf16.msra.mxu0 0
    %5748 = vmatprep.mubr.bf16.mxu0 0
    %5749 = vmatmul.mubr.bf16.gmra.mrb[0].mxu0 %v5714
    %v5750 = vpop.f32.mrb[0].mxu0
    %v5751 = vadd.f32 0.0, %v5750
    %v5752 = vpop.f32.mrb[0].mxu0
    %v5753 = vpop.f32.mrb[0].mxu0
    %v5754 = vpop.f32.mrb[0].mxu0
    %5755 = vdwg.mxu0
    %v5756 = vadd.f32 %v5692, %v5751
    %v5757 = vld [vmem:[#allocation4 + $0x20] sm:$0xc0]
    %s5758 = scalar_lea.vmem %s7, 304
    %v5759 = vld [vmem:[%s5758] sm:$0xf]
    %v5760 = vld [vmem:[%s5758 + $0x4] sm:$0xf]
    %v5761 = vld [vmem:[%s5758 + $0x8] sm:$0xf]
    %v5762 = vld [vmem:[%s5758 + $0xc] sm:$0xf]
    %v5764 = vrot.slane %v5757, 6
    %v5769 = vunpack.c.l.b16 %v5759
    %v5770 = vunpack.c.l.b16 %v5760
    %v5771 = vunpack.c.l.b16 %v5761
    %v5772 = vunpack.c.l.b16 %v5762
    %v5773 = vpack.c.b16 %v5770, %v5769
    %v5774 = vpack.c.b16 %v5772, %v5771
    %v5778 = vsel %vm4324, %v5764, 0
    %5780 = vmatprep.subr.bf16.mxu0 0
    %5781 = vmatpush1.bf16.msra.mxu0 %v5773
    %5782 = vmatprep.subr.bf16.mxu0 0
    %5783 = vmatpush1.bf16.msra.mxu0 %v5774
    %5784 = vmatprep.subr.bf16.mxu0 0
    %5785 = vmatpush1.bf16.msra.mxu0 0
    %5786 = vmatprep.subr.bf16.mxu0 0
    %5787 = vmatpush1.bf16.msra.mxu0 0
    %5788 = vmatprep.subr.bf16.mxu0 0
    %5789 = vmatpush1.bf16.msra.mxu0 0
    %5790 = vmatprep.subr.bf16.mxu0 0
    %5791 = vmatpush1.bf16.msra.mxu0 0
    %5792 = vmatprep.subr.bf16.mxu0 0
    %5793 = vmatpush1.bf16.msra.mxu0 0
    %5794 = vmatprep.subr.bf16.mxu0 0
    %5795 = vmatpush1.bf16.msra.mxu0 0
    %5796 = vmatprep.subr.bf16.mxu0 0
    %5797 = vmatpush1.bf16.msra.mxu0 0
    %5798 = vmatprep.subr.bf16.mxu0 0
    %5799 = vmatpush1.bf16.msra.mxu0 0
    %5800 = vmatprep.subr.bf16.mxu0 0
    %5801 = vmatpush1.bf16.msra.mxu0 0
    %5802 = vmatprep.subr.bf16.mxu0 0
    %5803 = vmatpush1.bf16.msra.mxu0 0
    %5804 = vmatprep.subr.bf16.mxu0 0
    %5805 = vmatpush1.bf16.msra.mxu0 0
    %5806 = vmatprep.subr.bf16.mxu0 0
    %5807 = vmatpush1.bf16.msra.mxu0 0
    %5808 = vmatprep.subr.bf16.mxu0 0
    %5809 = vmatpush1.bf16.msra.mxu0 0
    %5810 = vmatprep.subr.bf16.mxu0 0
    %5811 = vmatpush1.bf16.msra.mxu0 0
    %5812 = vmatprep.mubr.bf16.mxu0 0
    %5813 = vmatmul.mubr.bf16.gmra.mrb[0].mxu0 %v5778
    %v5814 = vpop.f32.mrb[0].mxu0
    %v5815 = vadd.f32 0.0, %v5814
    %v5816 = vpop.f32.mrb[0].mxu0
    %v5817 = vpop.f32.mrb[0].mxu0
    %v5818 = vpop.f32.mrb[0].mxu0
    %5819 = vdwg.mxu0
    %v5820 = vadd.f32 %v5756, %v5815
    %v5821 = vld [vmem:[#allocation4 + $0x28] sm:$0x3]
    %s5822 = scalar_lea.vmem %s7, 320
    %v5823 = vld [vmem:[%s5822] sm:$0xf]
    %v5824 = vld [vmem:[%s5822 + $0x4] sm:$0xf]
    %v5825 = vld [vmem:[%s5822 + $0x8] sm:$0xf]
    %v5826 = vld [vmem:[%s5822 + $0xc] sm:$0xf]
    %v5831 = vunpack.c.l.b16 %v5823
    %v5832 = vunpack.c.l.b16 %v5824
    %v5833 = vunpack.c.l.b16 %v5825
    %v5834 = vunpack.c.l.b16 %v5826
    %v5835 = vpack.c.b16 %v5832, %v5831
    %v5836 = vpack.c.b16 %v5834, %v5833
    %v5840 = vsel %vm4324, %v5821, 0
    %5842 = vmatprep.subr.bf16.mxu0 0
    %5843 = vmatpush1.bf16.msra.mxu0 %v5835
    %5844 = vmatprep.subr.bf16.mxu0 0
    %5845 = vmatpush1.bf16.msra.mxu0 %v5836
    %5846 = vmatprep.subr.bf16.mxu0 0
    %5847 = vmatpush1.bf16.msra.mxu0 0
    %5848 = vmatprep.subr.bf16.mxu0 0
    %5849 = vmatpush1.bf16.msra.mxu0 0
    %5850 = vmatprep.subr.bf16.mxu0 0
    %5851 = vmatpush1.bf16.msra.mxu0 0
    %5852 = vmatprep.subr.bf16.mxu0 0
    %5853 = vmatpush1.bf16.msra.mxu0 0
    %5854 = vmatprep.subr.bf16.mxu0 0
    %5855 = vmatpush1.bf16.msra.mxu0 0
    %5856 = vmatprep.subr.bf16.mxu0 0
    %5857 = vmatpush1.bf16.msra.mxu0 0
    %5858 = vmatprep.subr.bf16.mxu0 0
    %5859 = vmatpush1.bf16.msra.mxu0 0
    %5860 = vmatprep.subr.bf16.mxu0 0
    %5861 = vmatpush1.bf16.msra.mxu0 0
    %5862 = vmatprep.subr.bf16.mxu0 0
    %5863 = vmatpush1.bf16.msra.mxu0 0
    %5864 = vmatprep.subr.bf16.mxu0 0
    %5865 = vmatpush1.bf16.msra.mxu0 0
    %5866 = vmatprep.subr.bf16.mxu0 0
    %5867 = vmatpush1.bf16.msra.mxu0 0
    %5868 = vmatprep.subr.bf16.mxu0 0
    %5869 = vmatpush1.bf16.msra.mxu0 0
    %5870 = vmatprep.subr.bf16.mxu0 0
    %5871 = vmatpush1.bf16.msra.mxu0 0
    %5872 = vmatprep.subr.bf16.mxu0 0
    %5873 = vmatpush1.bf16.msra.mxu0 0
    %5874 = vmatprep.mubr.bf16.mxu0 0
    %5875 = vmatmul.mubr.bf16.gmra.mrb[0].mxu0 %v5840
    %v5876 = vpop.f32.mrb[0].mxu0
    %v5877 = vadd.f32 0.0, %v5876
    %v5878 = vpop.f32.mrb[0].mxu0
    %v5879 = vpop.f32.mrb[0].mxu0
    %v5880 = vpop.f32.mrb[0].mxu0
    %5881 = vdwg.mxu0
    %v5882 = vadd.f32 %v5820, %v5877
    %v5883 = vld [vmem:[#allocation4 + $0x28] sm:$0xc]
    %s5884 = scalar_lea.vmem %s7, 336
    %v5885 = vld [vmem:[%s5884] sm:$0xf]
    %v5886 = vld [vmem:[%s5884 + $0x4] sm:$0xf]
    %v5887 = vld [vmem:[%s5884 + $0x8] sm:$0xf]
    %v5888 = vld [vmem:[%s5884 + $0xc] sm:$0xf]
    %v5890 = vrot.slane %v5883, 2
    %v5895 = vunpack.c.l.b16 %v5885
    %v5896 = vunpack.c.l.b16 %v5886
    %v5897 = vunpack.c.l.b16 %v5887
    %v5898 = vunpack.c.l.b16 %v5888
    %v5899 = vpack.c.b16 %v5896, %v5895
    %v5900 = vpack.c.b16 %v5898, %v5897
    %v5904 = vsel %vm4324, %v5890, 0
    %5906 = vmatprep.subr.bf16.mxu0 0
    %5907 = vmatpush1.bf16.msra.mxu0 %v5899
    %5908 = vmatprep.subr.bf16.mxu0 0
    %5909 = vmatpush1.bf16.msra.mxu0 %v5900
    %5910 = vmatprep.subr.bf16.mxu0 0
    %5911 = vmatpush1.bf16.msra.mxu0 0
    %5912 = vmatprep.subr.bf16.mxu0 0
    %5913 = vmatpush1.bf16.msra.mxu0 0
    %5914 = vmatprep.subr.bf16.mxu0 0
    %5915 = vmatpush1.bf16.msra.mxu0 0
    %5916 = vmatprep.subr.bf16.mxu0 0
    %5917 = vmatpush1.bf16.msra.mxu0 0
    %5918 = vmatprep.subr.bf16.mxu0 0
    %5919 = vmatpush1.bf16.msra.mxu0 0
    %5920 = vmatprep.subr.bf16.mxu0 0
    %5921 = vmatpush1.bf16.msra.mxu0 0
    %5922 = vmatprep.subr.bf16.mxu0 0
    %5923 = vmatpush1.bf16.msra.mxu0 0
    %5924 = vmatprep.subr.bf16.mxu0 0
    %5925 = vmatpush1.bf16.msra.mxu0 0
    %5926 = vmatprep.subr.bf16.mxu0 0
    %5927 = vmatpush1.bf16.msra.mxu0 0
    %5928 = vmatprep.subr.bf16.mxu0 0
    %5929 = vmatpush1.bf16.msra.mxu0 0
    %5930 = vmatprep.subr.bf16.mxu0 0
    %5931 = vmatpush1.bf16.msra.mxu0 0
    %5932 = vmatprep.subr.bf16.mxu0 0
    %5933 = vmatpush1.bf16.msra.mxu0 0
    %5934 = vmatprep.subr.bf16.mxu0 0
    %5935 = vmatpush1.bf16.msra.mxu0 0
    %5936 = vmatprep.subr.bf16.mxu0 0
    %5937 = vmatpush1.bf16.msra.mxu0 0
    %5938 = vmatprep.mubr.bf16.mxu0 0
    %5939 = vmatmul.mubr.bf16.gmra.mrb[0].mxu0 %v5904
    %v5940 = vpop.f32.mrb[0].mxu0
    %v5941 = vadd.f32 0.0, %v5940
    %v5942 = vpop.f32.mrb[0].mxu0
    %v5943 = vpop.f32.mrb[0].mxu0
    %v5944 = vpop.f32.mrb[0].mxu0
    %5945 = vdwg.mxu0
    %v5946 = vadd.f32 %v5882, %v5941
    %v5947 = vld [vmem:[#allocation4 + $0x28] sm:$0x30]
    %s5948 = scalar_lea.vmem %s7, 352
    %v5949 = vld [vmem:[%s5948] sm:$0xf]
    %v5950 = vld [vmem:[%s5948 + $0x4] sm:$0xf]
    %v5951 = vld [vmem:[%s5948 + $0x8] sm:$0xf]
    %v5952 = vld [vmem:[%s5948 + $0xc] sm:$0xf]
    %v5954 = vrot.slane %v5947, 4
    %v5959 = vunpack.c.l.b16 %v5949
    %v5960 = vunpack.c.l.b16 %v5950
    %v5961 = vunpack.c.l.b16 %v5951
    %v5962 = vunpack.c.l.b16 %v5952
    %v5963 = vpack.c.b16 %v5960, %v5959
    %v5964 = vpack.c.b16 %v5962, %v5961
    %v5968 = vsel %vm4324, %v5954, 0
    %5970 = vmatprep.subr.bf16.mxu0 0
    %5971 = vmatpush1.bf16.msra.mxu0 %v5963
    %5972 = vmatprep.subr.bf16.mxu0 0
    %5973 = vmatpush1.bf16.msra.mxu0 %v5964
    %5974 = vmatprep.subr.bf16.mxu0 0
    %5975 = vmatpush1.bf16.msra.mxu0 0
    %5976 = vmatprep.subr.bf16.mxu0 0
    %5977 = vmatpush1.bf16.msra.mxu0 0
    %5978 = vmatprep.subr.bf16.mxu0 0
    %5979 = vmatpush1.bf16.msra.mxu0 0
    %5980 = vmatprep.subr.bf16.mxu0 0
    %5981 = vmatpush1.bf16.msra.mxu0 0
    %5982 = vmatprep.subr.bf16.mxu0 0
    %5983 = vmatpush1.bf16.msra.mxu0 0
    %5984 = vmatprep.subr.bf16.mxu0 0
    %5985 = vmatpush1.bf16.msra.mxu0 0
    %5986 = vmatprep.subr.bf16.mxu0 0
    %5987 = vmatpush1.bf16.msra.mxu0 0
    %5988 = vmatprep.subr.bf16.mxu0 0
    %5989 = vmatpush1.bf16.msra.mxu0 0
    %5990 = vmatprep.subr.bf16.mxu0 0
    %5991 = vmatpush1.bf16.msra.mxu0 0
    %5992 = vmatprep.subr.bf16.mxu0 0
    %5993 = vmatpush1.bf16.msra.mxu0 0
    %5994 = vmatprep.subr.bf16.mxu0 0
    %5995 = vmatpush1.bf16.msra.mxu0 0
    %5996 = vmatprep.subr.bf16.mxu0 0
    %5997 = vmatpush1.bf16.msra.mxu0 0
    %5998 = vmatprep.subr.bf16.mxu0 0
    %5999 = vmatpush1.bf16.msra.mxu0 0
    %6000 = vmatprep.subr.bf16.mxu0 0
    %6001 = vmatpush1.bf16.msra.mxu0 0
    %6002 = vmatprep.mubr.bf16.mxu0 0
    %6003 = vmatmul.mubr.bf16.gmra.mrb[0].mxu0 %v5968
    %v6004 = vpop.f32.mrb[0].mxu0
    %v6005 = vadd.f32 0.0, %v6004
    %v6006 = vpop.f32.mrb[0].mxu0
    %v6007 = vpop.f32.mrb[0].mxu0
    %v6008 = vpop.f32.mrb[0].mxu0
    %6009 = vdwg.mxu0
    %v6010 = vadd.f32 %v5946, %v6005
    %v6011 = vld [vmem:[#allocation4 + $0x28] sm:$0xc0]
    %s6012 = scalar_lea.vmem %s7, 368
    %v6013 = vld [vmem:[%s6012] sm:$0xf]
    %v6014 = vld [vmem:[%s6012 + $0x4] sm:$0xf]
    %v6015 = vld [vmem:[%s6012 + $0x8] sm:$0xf]
    %v6016 = vld [vmem:[%s6012 + $0xc] sm:$0xf]
    %v6018 = vrot.slane %v6011, 6
    %v6023 = vunpack.c.l.b16 %v6013
    %v6024 = vunpack.c.l.b16 %v6014
    %v6025 = vunpack.c.l.b16 %v6015
    %v6026 = vunpack.c.l.b16 %v6016
    %v6027 = vpack.c.b16 %v6024, %v6023
    %v6028 = vpack.c.b16 %v6026, %v6025
    %v6032 = vsel %vm4324, %v6018, 0
    %6034 = vmatprep.subr.bf16.mxu0 0
    %6035 = vmatpush1.bf16.msra.mxu0 %v6027
    %6036 = vmatprep.subr.bf16.mxu0 0
    %6037 = vmatpush1.bf16.msra.mxu0 %v6028
    %6038 = vmatprep.subr.bf16.mxu0 0
    %6039 = vmatpush1.bf16.msra.mxu0 0
    %6040 = vmatprep.subr.bf16.mxu0 0
    %6041 = vmatpush1.bf16.msra.mxu0 0
    %6042 = vmatprep.subr.bf16.mxu0 0
    %6043 = vmatpush1.bf16.msra.mxu0 0
    %6044 = vmatprep.subr.bf16.mxu0 0
    %6045 = vmatpush1.bf16.msra.mxu0 0
    %6046 = vmatprep.subr.bf16.mxu0 0
    %6047 = vmatpush1.bf16.msra.mxu0 0
    %6048 = vmatprep.subr.bf16.mxu0 0
    %6049 = vmatpush1.bf16.msra.mxu0 0
    %6050 = vmatprep.subr.bf16.mxu0 0
    %6051 = vmatpush1.bf16.msra.mxu0 0
    %6052 = vmatprep.subr.bf16.mxu0 0
    %6053 = vmatpush1.bf16.msra.mxu0 0
    %6054 = vmatprep.subr.bf16.mxu0 0
    %6055 = vmatpush1.bf16.msra.mxu0 0
    %6056 = vmatprep.subr.bf16.mxu0 0
    %6057 = vmatpush1.bf16.msra.mxu0 0
    %6058 = vmatprep.subr.bf16.mxu0 0
    %6059 = vmatpush1.bf16.msra.mxu0 0
    %6060 = vmatprep.subr.bf16.mxu0 0
    %6061 = vmatpush1.bf16.msra.mxu0 0
    %6062 = vmatprep.subr.bf16.mxu0 0
    %6063 = vmatpush1.bf16.msra.mxu0 0
    %6064 = vmatprep.subr.bf16.mxu0 0
    %6065 = vmatpush1.bf16.msra.mxu0 0
    %6066 = vmatprep.mubr.bf16.mxu0 0
    %6067 = vmatmul.mubr.bf16.gmra.mrb[0].mxu0 %v6032
    %v6068 = vpop.f32.mrb[0].mxu0
    %v6069 = vadd.f32 0.0, %v6068
    %v6070 = vpop.f32.mrb[0].mxu0
    %v6071 = vpop.f32.mrb[0].mxu0
    %v6072 = vpop.f32.mrb[0].mxu0
    %6073 = vdwg.mxu0
    %v6074 = vadd.f32 %v6010, %v6069
    %v6075 = vld [vmem:[#allocation4 + $0x30] sm:$0x3]
    %s6076 = scalar_lea.vmem %s7, 384
    %v6077 = vld [vmem:[%s6076] sm:$0xf]
    %v6078 = vld [vmem:[%s6076 + $0x4] sm:$0xf]
    %v6079 = vld [vmem:[%s6076 + $0x8] sm:$0xf]
    %v6080 = vld [vmem:[%s6076 + $0xc] sm:$0xf]
    %v6085 = vunpack.c.l.b16 %v6077
    %v6086 = vunpack.c.l.b16 %v6078
    %v6087 = vunpack.c.l.b16 %v6079
    %v6088 = vunpack.c.l.b16 %v6080
    %v6089 = vpack.c.b16 %v6086, %v6085
    %v6090 = vpack.c.b16 %v6088, %v6087
    %v6094 = vsel %vm4324, %v6075, 0
    %6096 = vmatprep.subr.bf16.mxu0 0
    %6097 = vmatpush1.bf16.msra.mxu0 %v6089
    %6098 = vmatprep.subr.bf16.mxu0 0
    %6099 = vmatpush1.bf16.msra.mxu0 %v6090
    %6100 = vmatprep.subr.bf16.mxu0 0
    %6101 = vmatpush1.bf16.msra.mxu0 0
    %6102 = vmatprep.subr.bf16.mxu0 0
    %6103 = vmatpush1.bf16.msra.mxu0 0
    %6104 = vmatprep.subr.bf16.mxu0 0
    %6105 = vmatpush1.bf16.msra.mxu0 0
    %6106 = vmatprep.subr.bf16.mxu0 0
    %6107 = vmatpush1.bf16.msra.mxu0 0
    %6108 = vmatprep.subr.bf16.mxu0 0
    %6109 = vmatpush1.bf16.msra.mxu0 0
    %6110 = vmatprep.subr.bf16.mxu0 0
    %6111 = vmatpush1.bf16.msra.mxu0 0
    %6112 = vmatprep.subr.bf16.mxu0 0
    %6113 = vmatpush1.bf16.msra.mxu0 0
    %6114 = vmatprep.subr.bf16.mxu0 0
    %6115 = vmatpush1.bf16.msra.mxu0 0
    %6116 = vmatprep.subr.bf16.mxu0 0
    %6117 = vmatpush1.bf16.msra.mxu0 0
    %6118 = vmatprep.subr.bf16.mxu0 0
    %6119 = vmatpush1.bf16.msra.mxu0 0
    %6120 = vmatprep.subr.bf16.mxu0 0
    %6121 = vmatpush1.bf16.msra.mxu0 0
    %6122 = vmatprep.subr.bf16.mxu0 0
    %6123 = vmatpush1.bf16.msra.mxu0 0
    %6124 = vmatprep.subr.bf16.mxu0 0
    %6125 = vmatpush1.bf16.msra.mxu0 0
    %6126 = vmatprep.subr.bf16.mxu0 0
    %6127 = vmatpush1.bf16.msra.mxu0 0
    %6128 = vmatprep.mubr.bf16.mxu0 0
    %6129 = vmatmul.mubr.bf16.gmra.mrb[0].mxu0 %v6094
    %v6130 = vpop.f32.mrb[0].mxu0
    %v6131 = vadd.f32 0.0, %v6130
    %v6132 = vpop.f32.mrb[0].mxu0
    %v6133 = vpop.f32.mrb[0].mxu0
    %v6134 = vpop.f32.mrb[0].mxu0
    %6135 = vdwg.mxu0
    %v6136 = vadd.f32 %v6074, %v6131
    %v6137 = vld [vmem:[#allocation4 + $0x30] sm:$0xc]
    %s6138 = scalar_lea.vmem %s7, 400
    %v6139 = vld [vmem:[%s6138] sm:$0xf]
    %v6140 = vld [vmem:[%s6138 + $0x4] sm:$0xf]
    %v6141 = vld [vmem:[%s6138 + $0x8] sm:$0xf]
    %v6142 = vld [vmem:[%s6138 + $0xc] sm:$0xf]
    %v6144 = vrot.slane %v6137, 2
    %v6149 = vunpack.c.l.b16 %v6139
    %v6150 = vunpack.c.l.b16 %v6140
    %v6151 = vunpack.c.l.b16 %v6141
    %v6152 = vunpack.c.l.b16 %v6142
    %v6153 = vpack.c.b16 %v6150, %v6149
    %v6154 = vpack.c.b16 %v6152, %v6151
    %v6158 = vsel %vm4324, %v6144, 0
    %6160 = vmatprep.subr.bf16.mxu0 0
    %6161 = vmatpush1.bf16.msra.mxu0 %v6153
    %6162 = vmatprep.subr.bf16.mxu0 0
    %6163 = vmatpush1.bf16.msra.mxu0 %v6154
    %6164 = vmatprep.subr.bf16.mxu0 0
    %6165 = vmatpush1.bf16.msra.mxu0 0
    %6166 = vmatprep.subr.bf16.mxu0 0
    %6167 = vmatpush1.bf16.msra.mxu0 0
    %6168 = vmatprep.subr.bf16.mxu0 0
    %6169 = vmatpush1.bf16.msra.mxu0 0
    %6170 = vmatprep.subr.bf16.mxu0 0
    %6171 = vmatpush1.bf16.msra.mxu0 0
    %6172 = vmatprep.subr.bf16.mxu0 0
    %6173 = vmatpush1.bf16.msra.mxu0 0
    %6174 = vmatprep.subr.bf16.mxu0 0
    %6175 = vmatpush1.bf16.msra.mxu0 0
    %6176 = vmatprep.subr.bf16.mxu0 0
    %6177 = vmatpush1.bf16.msra.mxu0 0
    %6178 = vmatprep.subr.bf16.mxu0 0
    %6179 = vmatpush1.bf16.msra.mxu0 0
    %6180 = vmatprep.subr.bf16.mxu0 0
    %6181 = vmatpush1.bf16.msra.mxu0 0
    %6182 = vmatprep.subr.bf16.mxu0 0
    %6183 = vmatpush1.bf16.msra.mxu0 0
    %6184 = vmatprep.subr.bf16.mxu0 0
    %6185 = vmatpush1.bf16.msra.mxu0 0
    %6186 = vmatprep.subr.bf16.mxu0 0
    %6187 = vmatpush1.bf16.msra.mxu0 0
    %6188 = vmatprep.subr.bf16.mxu0 0
    %6189 = vmatpush1.bf16.msra.mxu0 0
    %6190 = vmatprep.subr.bf16.mxu0 0
    %6191 = vmatpush1.bf16.msra.mxu0 0
    %6192 = vmatprep.mubr.bf16.mxu0 0
    %6193 = vmatmul.mubr.bf16.gmra.mrb[0].mxu0 %v6158
    %v6194 = vpop.f32.mrb[0].mxu0
    %v6195 = vadd.f32 0.0, %v6194
    %v6196 = vpop.f32.mrb[0].mxu0
    %v6197 = vpop.f32.mrb[0].mxu0
    %v6198 = vpop.f32.mrb[0].mxu0
    %6199 = vdwg.mxu0
    %v6200 = vadd.f32 %v6136, %v6195
    %v6201 = vld [vmem:[#allocation4 + $0x30] sm:$0x30]
    %s6202 = scalar_lea.vmem %s7, 416
    %v6203 = vld [vmem:[%s6202] sm:$0xf]
    %v6204 = vld [vmem:[%s6202 + $0x4] sm:$0xf]
    %v6205 = vld [vmem:[%s6202 + $0x8] sm:$0xf]
    %v6206 = vld [vmem:[%s6202 + $0xc] sm:$0xf]
    %v6208 = vrot.slane %v6201, 4
    %v6213 = vunpack.c.l.b16 %v6203
    %v6214 = vunpack.c.l.b16 %v6204
    %v6215 = vunpack.c.l.b16 %v6205
    %v6216 = vunpack.c.l.b16 %v6206
    %v6217 = vpack.c.b16 %v6214, %v6213
    %v6218 = vpack.c.b16 %v6216, %v6215
    %v6222 = vsel %vm4324, %v6208, 0
    %6224 = vmatprep.subr.bf16.mxu0 0
    %6225 = vmatpush1.bf16.msra.mxu0 %v6217
    %6226 = vmatprep.subr.bf16.mxu0 0
    %6227 = vmatpush1.bf16.msra.mxu0 %v6218
    %6228 = vmatprep.subr.bf16.mxu0 0
    %6229 = vmatpush1.bf16.msra.mxu0 0
    %6230 = vmatprep.subr.bf16.mxu0 0
    %6231 = vmatpush1.bf16.msra.mxu0 0
    %6232 = vmatprep.subr.bf16.mxu0 0
    %6233 = vmatpush1.bf16.msra.mxu0 0
    %6234 = vmatprep.subr.bf16.mxu0 0
    %6235 = vmatpush1.bf16.msra.mxu0 0
    %6236 = vmatprep.subr.bf16.mxu0 0
    %6237 = vmatpush1.bf16.msra.mxu0 0
    %6238 = vmatprep.subr.bf16.mxu0 0
    %6239 = vmatpush1.bf16.msra.mxu0 0
    %6240 = vmatprep.subr.bf16.mxu0 0
    %6241 = vmatpush1.bf16.msra.mxu0 0
    %6242 = vmatprep.subr.bf16.mxu0 0
    %6243 = vmatpush1.bf16.msra.mxu0 0
    %6244 = vmatprep.subr.bf16.mxu0 0
    %6245 = vmatpush1.bf16.msra.mxu0 0
    %6246 = vmatprep.subr.bf16.mxu0 0
    %6247 = vmatpush1.bf16.msra.mxu0 0
    %6248 = vmatprep.subr.bf16.mxu0 0
    %6249 = vmatpush1.bf16.msra.mxu0 0
    %6250 = vmatprep.subr.bf16.mxu0 0
    %6251 = vmatpush1.bf16.msra.mxu0 0
    %6252 = vmatprep.subr.bf16.mxu0 0
    %6253 = vmatpush1.bf16.msra.mxu0 0
    %6254 = vmatprep.subr.bf16.mxu0 0
    %6255 = vmatpush1.bf16.msra.mxu0 0
    %6256 = vmatprep.mubr.bf16.mxu0 0
    %6257 = vmatmul.mubr.bf16.gmra.mrb[0].mxu0 %v6222
    %v6258 = vpop.f32.mrb[0].mxu0
    %v6259 = vadd.f32 0.0, %v6258
    %v6260 = vpop.f32.mrb[0].mxu0
    %v6261 = vpop.f32.mrb[0].mxu0
    %v6262 = vpop.f32.mrb[0].mxu0
    %6263 = vdwg.mxu0
    %v6264 = vadd.f32 %v6200, %v6259
    %v6265 = vld [vmem:[#allocation4 + $0x30] sm:$0xc0]
    %s6266 = scalar_lea.vmem %s7, 432
    %v6267 = vld [vmem:[%s6266] sm:$0xf]
    %v6268 = vld [vmem:[%s6266 + $0x4] sm:$0xf]
    %v6269 = vld [vmem:[%s6266 + $0x8] sm:$0xf]
    %v6270 = vld [vmem:[%s6266 + $0xc] sm:$0xf]
    %v6272 = vrot.slane %v6265, 6
    %v6277 = vunpack.c.l.b16 %v6267
    %v6278 = vunpack.c.l.b16 %v6268
    %v6279 = vunpack.c.l.b16 %v6269
    %v6280 = vunpack.c.l.b16 %v6270
    %v6281 = vpack.c.b16 %v6278, %v6277
    %v6282 = vpack.c.b16 %v6280, %v6279
    %v6286 = vsel %vm4324, %v6272, 0
    %6288 = vmatprep.subr.bf16.mxu0 0
    %6289 = vmatpush1.bf16.msra.mxu0 %v6281
    %6290 = vmatprep.subr.bf16.mxu0 0
    %6291 = vmatpush1.bf16.msra.mxu0 %v6282
    %6292 = vmatprep.subr.bf16.mxu0 0
    %6293 = vmatpush1.bf16.msra.mxu0 0
    %6294 = vmatprep.subr.bf16.mxu0 0
    %6295 = vmatpush1.bf16.msra.mxu0 0
    %6296 = vmatprep.subr.bf16.mxu0 0
    %6297 = vmatpush1.bf16.msra.mxu0 0
    %6298 = vmatprep.subr.bf16.mxu0 0
    %6299 = vmatpush1.bf16.msra.mxu0 0
    %6300 = vmatprep.subr.bf16.mxu0 0
    %6301 = vmatpush1.bf16.msra.mxu0 0
    %6302 = vmatprep.subr.bf16.mxu0 0
    %6303 = vmatpush1.bf16.msra.mxu0 0
    %6304 = vmatprep.subr.bf16.mxu0 0
    %6305 = vmatpush1.bf16.msra.mxu0 0
    %6306 = vmatprep.subr.bf16.mxu0 0
    %6307 = vmatpush1.bf16.msra.mxu0 0
    %6308 = vmatprep.subr.bf16.mxu0 0
    %6309 = vmatpush1.bf16.msra.mxu0 0
    %6310 = vmatprep.subr.bf16.mxu0 0
    %6311 = vmatpush1.bf16.msra.mxu0 0
    %6312 = vmatprep.subr.bf16.mxu0 0
    %6313 = vmatpush1.bf16.msra.mxu0 0
    %6314 = vmatprep.subr.bf16.mxu0 0
    %6315 = vmatpush1.bf16.msra.mxu0 0
    %6316 = vmatprep.subr.bf16.mxu0 0
    %6317 = vmatpush1.bf16.msra.mxu0 0
    %6318 = vmatprep.subr.bf16.mxu0 0
    %6319 = vmatpush1.bf16.msra.mxu0 0
    %6320 = vmatprep.mubr.bf16.mxu0 0
    %6321 = vmatmul.mubr.bf16.gmra.mrb[0].mxu0 %v6286
    %v6322 = vpop.f32.mrb[0].mxu0
    %v6323 = vadd.f32 0.0, %v6322
    %v6324 = vpop.f32.mrb[0].mxu0
    %v6325 = vpop.f32.mrb[0].mxu0
    %v6326 = vpop.f32.mrb[0].mxu0
    %6327 = vdwg.mxu0
    %v6328 = vadd.f32 %v6264, %v6323
    %v6329 = vld [vmem:[#allocation4 + $0x38] sm:$0x3]
    %s6330 = scalar_lea.vmem %s7, 448
    %v6331 = vld [vmem:[%s6330] sm:$0xf]
    %v6332 = vld [vmem:[%s6330 + $0x4] sm:$0xf]
    %v6333 = vld [vmem:[%s6330 + $0x8] sm:$0xf]
    %v6334 = vld [vmem:[%s6330 + $0xc] sm:$0xf]
    %v6339 = vunpack.c.l.b16 %v6331
    %v6340 = vunpack.c.l.b16 %v6332
    %v6341 = vunpack.c.l.b16 %v6333
    %v6342 = vunpack.c.l.b16 %v6334
    %v6343 = vpack.c.b16 %v6340, %v6339
    %v6344 = vpack.c.b16 %v6342, %v6341
    %v6348 = vsel %vm4324, %v6329, 0
    %6350 = vmatprep.subr.bf16.mxu0 0
    %6351 = vmatpush1.bf16.msra.mxu0 %v6343
    %6352 = vmatprep.subr.bf16.mxu0 0
    %6353 = vmatpush1.bf16.msra.mxu0 %v6344
    %6354 = vmatprep.subr.bf16.mxu0 0
    %6355 = vmatpush1.bf16.msra.mxu0 0
    %6356 = vmatprep.subr.bf16.mxu0 0
    %6357 = vmatpush1.bf16.msra.mxu0 0
    %6358 = vmatprep.subr.bf16.mxu0 0
    %6359 = vmatpush1.bf16.msra.mxu0 0
    %6360 = vmatprep.subr.bf16.mxu0 0
    %6361 = vmatpush1.bf16.msra.mxu0 0
    %6362 = vmatprep.subr.bf16.mxu0 0
    %6363 = vmatpush1.bf16.msra.mxu0 0
    %6364 = vmatprep.subr.bf16.mxu0 0
    %6365 = vmatpush1.bf16.msra.mxu0 0
    %6366 = vmatprep.subr.bf16.mxu0 0
    %6367 = vmatpush1.bf16.msra.mxu0 0
    %6368 = vmatprep.subr.bf16.mxu0 0
    %6369 = vmatpush1.bf16.msra.mxu0 0
    %6370 = vmatprep.subr.bf16.mxu0 0
    %6371 = vmatpush1.bf16.msra.mxu0 0
    %6372 = vmatprep.subr.bf16.mxu0 0
    %6373 = vmatpush1.bf16.msra.mxu0 0
    %6374 = vmatprep.subr.bf16.mxu0 0
    %6375 = vmatpush1.bf16.msra.mxu0 0
    %6376 = vmatprep.subr.bf16.mxu0 0
    %6377 = vmatpush1.bf16.msra.mxu0 0
    %6378 = vmatprep.subr.bf16.mxu0 0
    %6379 = vmatpush1.bf16.msra.mxu0 0
    %6380 = vmatprep.subr.bf16.mxu0 0
    %6381 = vmatpush1.bf16.msra.mxu0 0
    %6382 = vmatprep.mubr.bf16.mxu0 0
    %6383 = vmatmul.mubr.bf16.gmra.mrb[0].mxu0 %v6348
    %v6384 = vpop.f32.mrb[0].mxu0
    %v6385 = vadd.f32 0.0, %v6384
    %v6386 = vpop.f32.mrb[0].mxu0
    %v6387 = vpop.f32.mrb[0].mxu0
    %v6388 = vpop.f32.mrb[0].mxu0
    %6389 = vdwg.mxu0
    %v6390 = vadd.f32 %v6328, %v6385
    %v6391 = vld [vmem:[#allocation4 + $0x38] sm:$0xc]
    %s6392 = scalar_lea.vmem %s7, 464
    %v6393 = vld [vmem:[%s6392] sm:$0xf]
    %v6394 = vld [vmem:[%s6392 + $0x4] sm:$0xf]
    %v6395 = vld [vmem:[%s6392 + $0x8] sm:$0xf]
    %v6396 = vld [vmem:[%s6392 + $0xc] sm:$0xf]
    %v6398 = vrot.slane %v6391, 2
    %v6403 = vunpack.c.l.b16 %v6393
    %v6404 = vunpack.c.l.b16 %v6394
    %v6405 = vunpack.c.l.b16 %v6395
    %v6406 = vunpack.c.l.b16 %v6396
    %v6407 = vpack.c.b16 %v6404, %v6403
    %v6408 = vpack.c.b16 %v6406, %v6405
    %v6412 = vsel %vm4324, %v6398, 0
    %6414 = vmatprep.subr.bf16.mxu0 0
    %6415 = vmatpush1.bf16.msra.mxu0 %v6407
    %6416 = vmatprep.subr.bf16.mxu0 0
    %6417 = vmatpush1.bf16.msra.mxu0 %v6408
    %6418 = vmatprep.subr.bf16.mxu0 0
    %6419 = vmatpush1.bf16.msra.mxu0 0
    %6420 = vmatprep.subr.bf16.mxu0 0
    %6421 = vmatpush1.bf16.msra.mxu0 0
    %6422 = vmatprep.subr.bf16.mxu0 0
    %6423 = vmatpush1.bf16.msra.mxu0 0
    %6424 = vmatprep.subr.bf16.mxu0 0
    %6425 = vmatpush1.bf16.msra.mxu0 0
    %6426 = vmatprep.subr.bf16.mxu0 0
    %6427 = vmatpush1.bf16.msra.mxu0 0
    %6428 = vmatprep.subr.bf16.mxu0 0
    %6429 = vmatpush1.bf16.msra.mxu0 0
    %6430 = vmatprep.subr.bf16.mxu0 0
    %6431 = vmatpush1.bf16.msra.mxu0 0
    %6432 = vmatprep.subr.bf16.mxu0 0
    %6433 = vmatpush1.bf16.msra.mxu0 0
    %6434 = vmatprep.subr.bf16.mxu0 0
    %6435 = vmatpush1.bf16.msra.mxu0 0
    %6436 = vmatprep.subr.bf16.mxu0 0
    %6437 = vmatpush1.bf16.msra.mxu0 0
    %6438 = vmatprep.subr.bf16.mxu0 0
    %6439 = vmatpush1.bf16.msra.mxu0 0
    %6440 = vmatprep.subr.bf16.mxu0 0
    %6441 = vmatpush1.bf16.msra.mxu0 0
    %6442 = vmatprep.subr.bf16.mxu0 0
    %6443 = vmatpush1.bf16.msra.mxu0 0
    %6444 = vmatprep.subr.bf16.mxu0 0
    %6445 = vmatpush1.bf16.msra.mxu0 0
    %6446 = vmatprep.mubr.bf16.mxu0 0
    %6447 = vmatmul.mubr.bf16.gmra.mrb[0].mxu0 %v6412
    %v6448 = vpop.f32.mrb[0].mxu0
    %v6449 = vadd.f32 0.0, %v6448
    %v6450 = vpop.f32.mrb[0].mxu0
    %v6451 = vpop.f32.mrb[0].mxu0
    %v6452 = vpop.f32.mrb[0].mxu0
    %6453 = vdwg.mxu0
    %v6454 = vadd.f32 %v6390, %v6449
    %v6455 = vld [vmem:[#allocation4 + $0x38] sm:$0x30]
    %s6456 = scalar_lea.vmem %s7, 480
    %v6457 = vld [vmem:[%s6456] sm:$0xf]
    %v6458 = vld [vmem:[%s6456 + $0x4] sm:$0xf]
    %v6459 = vld [vmem:[%s6456 + $0x8] sm:$0xf]
    %v6460 = vld [vmem:[%s6456 + $0xc] sm:$0xf]
    %v6462 = vrot.slane %v6455, 4
    %v6467 = vunpack.c.l.b16 %v6457
    %v6468 = vunpack.c.l.b16 %v6458
    %v6469 = vunpack.c.l.b16 %v6459
    %v6470 = vunpack.c.l.b16 %v6460
    %v6471 = vpack.c.b16 %v6468, %v6467
    %v6472 = vpack.c.b16 %v6470, %v6469
    %v6476 = vsel %vm4324, %v6462, 0
    %6478 = vmatprep.subr.bf16.mxu0 0
    %6479 = vmatpush1.bf16.msra.mxu0 %v6471
    %6480 = vmatprep.subr.bf16.mxu0 0
    %6481 = vmatpush1.bf16.msra.mxu0 %v6472
    %6482 = vmatprep.subr.bf16.mxu0 0
    %6483 = vmatpush1.bf16.msra.mxu0 0
    %6484 = vmatprep.subr.bf16.mxu0 0
    %6485 = vmatpush1.bf16.msra.mxu0 0
    %6486 = vmatprep.subr.bf16.mxu0 0
    %6487 = vmatpush1.bf16.msra.mxu0 0
    %6488 = vmatprep.subr.bf16.mxu0 0
    %6489 = vmatpush1.bf16.msra.mxu0 0
    %6490 = vmatprep.subr.bf16.mxu0 0
    %6491 = vmatpush1.bf16.msra.mxu0 0
    %6492 = vmatprep.subr.bf16.mxu0 0
    %6493 = vmatpush1.bf16.msra.mxu0 0
    %6494 = vmatprep.subr.bf16.mxu0 0
    %6495 = vmatpush1.bf16.msra.mxu0 0
    %6496 = vmatprep.subr.bf16.mxu0 0
    %6497 = vmatpush1.bf16.msra.mxu0 0
    %6498 = vmatprep.subr.bf16.mxu0 0
    %6499 = vmatpush1.bf16.msra.mxu0 0
    %6500 = vmatprep.subr.bf16.mxu0 0
    %6501 = vmatpush1.bf16.msra.mxu0 0
    %6502 = vmatprep.subr.bf16.mxu0 0
    %6503 = vmatpush1.bf16.msra.mxu0 0
    %6504 = vmatprep.subr.bf16.mxu0 0
    %6505 = vmatpush1.bf16.msra.mxu0 0
    %6506 = vmatprep.subr.bf16.mxu0 0
    %6507 = vmatpush1.bf16.msra.mxu0 0
    %6508 = vmatprep.subr.bf16.mxu0 0
    %6509 = vmatpush1.bf16.msra.mxu0 0
    %6510 = vmatprep.mubr.bf16.mxu0 0
    %6511 = vmatmul.mubr.bf16.gmra.mrb[0].mxu0 %v6476
    %v6512 = vpop.f32.mrb[0].mxu0
    %v6513 = vadd.f32 0.0, %v6512
    %v6514 = vpop.f32.mrb[0].mxu0
    %v6515 = vpop.f32.mrb[0].mxu0
    %v6516 = vpop.f32.mrb[0].mxu0
    %6517 = vdwg.mxu0
    %v6518 = vadd.f32 %v6454, %v6513
    %v6519 = vld [vmem:[#allocation4 + $0x38] sm:$0xc0]
    %s6520 = scalar_lea.vmem %s7, 496
    %v6521 = vld [vmem:[%s6520] sm:$0xf]
    %v6522 = vld [vmem:[%s6520 + $0x4] sm:$0xf]
    %v6523 = vld [vmem:[%s6520 + $0x8] sm:$0xf]
    %v6524 = vld [vmem:[%s6520 + $0xc] sm:$0xf]
    %v6526 = vrot.slane %v6519, 6
    %v6531 = vunpack.c.l.b16 %v6521
    %v6532 = vunpack.c.l.b16 %v6522
    %v6533 = vunpack.c.l.b16 %v6523
    %v6534 = vunpack.c.l.b16 %v6524
    %v6535 = vpack.c.b16 %v6532, %v6531
    %v6536 = vpack.c.b16 %v6534, %v6533
    %v6540 = vsel %vm4324, %v6526, 0
    %6542 = vmatprep.subr.bf16.mxu0 0
    %6543 = vmatpush1.bf16.msra.mxu0 %v6535
    %6544 = vmatprep.subr.bf16.mxu0 0
    %6545 = vmatpush1.bf16.msra.mxu0 %v6536
    %6546 = vmatprep.subr.bf16.mxu0 0
    %6547 = vmatpush1.bf16.msra.mxu0 0
    %6548 = vmatprep.subr.bf16.mxu0 0
    %6549 = vmatpush1.bf16.msra.mxu0 0
    %6550 = vmatprep.subr.bf16.mxu0 0
    %6551 = vmatpush1.bf16.msra.mxu0 0
    %6552 = vmatprep.subr.bf16.mxu0 0
    %6553 = vmatpush1.bf16.msra.mxu0 0
    %6554 = vmatprep.subr.bf16.mxu0 0
    %6555 = vmatpush1.bf16.msra.mxu0 0
    %6556 = vmatprep.subr.bf16.mxu0 0
    %6557 = vmatpush1.bf16.msra.mxu0 0
    %6558 = vmatprep.subr.bf16.mxu0 0
    %6559 = vmatpush1.bf16.msra.mxu0 0
    %6560 = vmatprep.subr.bf16.mxu0 0
    %6561 = vmatpush1.bf16.msra.mxu0 0
    %6562 = vmatprep.subr.bf16.mxu0 0
    %6563 = vmatpush1.bf16.msra.mxu0 0
    %6564 = vmatprep.subr.bf16.mxu0 0
    %6565 = vmatpush1.bf16.msra.mxu0 0
    %6566 = vmatprep.subr.bf16.mxu0 0
    %6567 = vmatpush1.bf16.msra.mxu0 0
    %6568 = vmatprep.subr.bf16.mxu0 0
    %6569 = vmatpush1.bf16.msra.mxu0 0
    %6570 = vmatprep.subr.bf16.mxu0 0
    %6571 = vmatpush1.bf16.msra.mxu0 0
    %6572 = vmatprep.subr.bf16.mxu0 0
    %6573 = vmatpush1.bf16.msra.mxu0 0
    %6574 = vmatprep.mubr.bf16.mxu0 0
    %6575 = vmatmul.mubr.bf16.gmra.mrb[0].mxu0 %v6540
    %v6576 = vpop.f32.mrb[0].mxu0
    %v6577 = vadd.f32 0.0, %v6576
    %v6578 = vpop.f32.mrb[0].mxu0
    %v6579 = vpop.f32.mrb[0].mxu0
    %v6580 = vpop.f32.mrb[0].mxu0
    %6581 = vdwg.mxu0
    %v6582 = vadd.f32 %v6518, %v6577
    %v6583 = vld [vmem:[#allocation4 + $0x40] sm:$0x3]
    %s6584 = scalar_lea.vmem %s7, 512
    %v6585 = vld [vmem:[%s6584] sm:$0xf]
    %v6586 = vld [vmem:[%s6584 + $0x4] sm:$0xf]
    %v6587 = vld [vmem:[%s6584 + $0x8] sm:$0xf]
    %v6588 = vld [vmem:[%s6584 + $0xc] sm:$0xf]
    %v6593 = vunpack.c.l.b16 %v6585
    %v6594 = vunpack.c.l.b16 %v6586
    %v6595 = vunpack.c.l.b16 %v6587
    %v6596 = vunpack.c.l.b16 %v6588
    %v6597 = vpack.c.b16 %v6594, %v6593
    %v6598 = vpack.c.b16 %v6596, %v6595
    %v6602 = vsel %vm4324, %v6583, 0
    %6604 = vmatprep.subr.bf16.mxu0 0
    %6605 = vmatpush1.bf16.msra.mxu0 %v6597
    %6606 = vmatprep.subr.bf16.mxu0 0
    %6607 = vmatpush1.bf16.msra.mxu0 %v6598
    %6608 = vmatprep.subr.bf16.mxu0 0
    %6609 = vmatpush1.bf16.msra.mxu0 0
    %6610 = vmatprep.subr.bf16.mxu0 0
    %6611 = vmatpush1.bf16.msra.mxu0 0
    %6612 = vmatprep.subr.bf16.mxu0 0
    %6613 = vmatpush1.bf16.msra.mxu0 0
    %6614 = vmatprep.subr.bf16.mxu0 0
    %6615 = vmatpush1.bf16.msra.mxu0 0
    %6616 = vmatprep.subr.bf16.mxu0 0
    %6617 = vmatpush1.bf16.msra.mxu0 0
    %6618 = vmatprep.subr.bf16.mxu0 0
    %6619 = vmatpush1.bf16.msra.mxu0 0
    %6620 = vmatprep.subr.bf16.mxu0 0
    %6621 = vmatpush1.bf16.msra.mxu0 0
    %6622 = vmatprep.subr.bf16.mxu0 0
    %6623 = vmatpush1.bf16.msra.mxu0 0
    %6624 = vmatprep.subr.bf16.mxu0 0
    %6625 = vmatpush1.bf16.msra.mxu0 0
    %6626 = vmatprep.subr.bf16.mxu0 0
    %6627 = vmatpush1.bf16.msra.mxu0 0
    %6628 = vmatprep.subr.bf16.mxu0 0
    %6629 = vmatpush1.bf16.msra.mxu0 0
    %6630 = vmatprep.subr.bf16.mxu0 0
    %6631 = vmatpush1.bf16.msra.mxu0 0
    %6632 = vmatprep.subr.bf16.mxu0 0
    %6633 = vmatpush1.bf16.msra.mxu0 0
    %6634 = vmatprep.subr.bf16.mxu0 0
    %6635 = vmatpush1.bf16.msra.mxu0 0
    %6636 = vmatprep.mubr.bf16.mxu0 0
    %6637 = vmatmul.mubr.bf16.gmra.mrb[0].mxu0 %v6602
    %v6638 = vpop.f32.mrb[0].mxu0
    %v6639 = vadd.f32 0.0, %v6638
    %v6640 = vpop.f32.mrb[0].mxu0
    %v6641 = vpop.f32.mrb[0].mxu0
    %v6642 = vpop.f32.mrb[0].mxu0
    %6643 = vdwg.mxu0
    %v6644 = vadd.f32 %v6582, %v6639
    %v6645 = vld [vmem:[#allocation4 + $0x40] sm:$0xc]
    %s6646 = scalar_lea.vmem %s7, 528
    %v6647 = vld [vmem:[%s6646] sm:$0xf]
    %v6648 = vld [vmem:[%s6646 + $0x4] sm:$0xf]
    %v6649 = vld [vmem:[%s6646 + $0x8] sm:$0xf]
    %v6650 = vld [vmem:[%s6646 + $0xc] sm:$0xf]
    %v6652 = vrot.slane %v6645, 2
    %v6657 = vunpack.c.l.b16 %v6647
    %v6658 = vunpack.c.l.b16 %v6648
    %v6659 = vunpack.c.l.b16 %v6649
    %v6660 = vunpack.c.l.b16 %v6650
    %v6661 = vpack.c.b16 %v6658, %v6657
    %v6662 = vpack.c.b16 %v6660, %v6659
    %v6666 = vsel %vm4324, %v6652, 0
    %6668 = vmatprep.subr.bf16.mxu0 0
    %6669 = vmatpush1.bf16.msra.mxu0 %v6661
    %6670 = vmatprep.subr.bf16.mxu0 0
    %6671 = vmatpush1.bf16.msra.mxu0 %v6662
    %6672 = vmatprep.subr.bf16.mxu0 0
    %6673 = vmatpush1.bf16.msra.mxu0 0
    %6674 = vmatprep.subr.bf16.mxu0 0
    %6675 = vmatpush1.bf16.msra.mxu0 0
    %6676 = vmatprep.subr.bf16.mxu0 0
    %6677 = vmatpush1.bf16.msra.mxu0 0
    %6678 = vmatprep.subr.bf16.mxu0 0
    %6679 = vmatpush1.bf16.msra.mxu0 0
    %6680 = vmatprep.subr.bf16.mxu0 0
    %6681 = vmatpush1.bf16.msra.mxu0 0
    %6682 = vmatprep.subr.bf16.mxu0 0
    %6683 = vmatpush1.bf16.msra.mxu0 0
    %6684 = vmatprep.subr.bf16.mxu0 0
    %6685 = vmatpush1.bf16.msra.mxu0 0
    %6686 = vmatprep.subr.bf16.mxu0 0
    %6687 = vmatpush1.bf16.msra.mxu0 0
    %6688 = vmatprep.subr.bf16.mxu0 0
    %6689 = vmatpush1.bf16.msra.mxu0 0
    %6690 = vmatprep.subr.bf16.mxu0 0
    %6691 = vmatpush1.bf16.msra.mxu0 0
    %6692 = vmatprep.subr.bf16.mxu0 0
    %6693 = vmatpush1.bf16.msra.mxu0 0
    %6694 = vmatprep.subr.bf16.mxu0 0
    %6695 = vmatpush1.bf16.msra.mxu0 0
    %6696 = vmatprep.subr.bf16.mxu0 0
    %6697 = vmatpush1.bf16.msra.mxu0 0
    %6698 = vmatprep.subr.bf16.mxu0 0
    %6699 = vmatpush1.bf16.msra.mxu0 0
    %6700 = vmatprep.mubr.bf16.mxu0 0
    %6701 = vmatmul.mubr.bf16.gmra.mrb[0].mxu0 %v6666
    %v6702 = vpop.f32.mrb[0].mxu0
    %v6703 = vadd.f32 0.0, %v6702
    %v6704 = vpop.f32.mrb[0].mxu0
    %v6705 = vpop.f32.mrb[0].mxu0
    %v6706 = vpop.f32.mrb[0].mxu0
    %6707 = vdwg.mxu0
    %v6708 = vadd.f32 %v6644, %v6703
    %v6709 = vld [vmem:[#allocation4 + $0x40] sm:$0x30]
    %s6710 = scalar_lea.vmem %s7, 544
    %v6711 = vld [vmem:[%s6710] sm:$0xf]
    %v6712 = vld [vmem:[%s6710 + $0x4] sm:$0xf]
    %v6713 = vld [vmem:[%s6710 + $0x8] sm:$0xf]
    %v6714 = vld [vmem:[%s6710 + $0xc] sm:$0xf]
    %v6716 = vrot.slane %v6709, 4
    %v6721 = vunpack.c.l.b16 %v6711
    %v6722 = vunpack.c.l.b16 %v6712
    %v6723 = vunpack.c.l.b16 %v6713
    %v6724 = vunpack.c.l.b16 %v6714
    %v6725 = vpack.c.b16 %v6722, %v6721
    %v6726 = vpack.c.b16 %v6724, %v6723
    %v6730 = vsel %vm4324, %v6716, 0
    %6732 = vmatprep.subr.bf16.mxu0 0
    %6733 = vmatpush1.bf16.msra.mxu0 %v6725
    %6734 = vmatprep.subr.bf16.mxu0 0
    %6735 = vmatpush1.bf16.msra.mxu0 %v6726
    %6736 = vmatprep.subr.bf16.mxu0 0
    %6737 = vmatpush1.bf16.msra.mxu0 0
    %6738 = vmatprep.subr.bf16.mxu0 0
    %6739 = vmatpush1.bf16.msra.mxu0 0
    %6740 = vmatprep.subr.bf16.mxu0 0
    %6741 = vmatpush1.bf16.msra.mxu0 0
    %6742 = vmatprep.subr.bf16.mxu0 0
    %6743 = vmatpush1.bf16.msra.mxu0 0
    %6744 = vmatprep.subr.bf16.mxu0 0
    %6745 = vmatpush1.bf16.msra.mxu0 0
    %6746 = vmatprep.subr.bf16.mxu0 0
    %6747 = vmatpush1.bf16.msra.mxu0 0
    %6748 = vmatprep.subr.bf16.mxu0 0
    %6749 = vmatpush1.bf16.msra.mxu0 0
    %6750 = vmatprep.subr.bf16.mxu0 0
    %6751 = vmatpush1.bf16.msra.mxu0 0
    %6752 = vmatprep.subr.bf16.mxu0 0
    %6753 = vmatpush1.bf16.msra.mxu0 0
    %6754 = vmatprep.subr.bf16.mxu0 0
    %6755 = vmatpush1.bf16.msra.mxu0 0
    %6756 = vmatprep.subr.bf16.mxu0 0
    %6757 = vmatpush1.bf16.msra.mxu0 0
    %6758 = vmatprep.subr.bf16.mxu0 0
    %6759 = vmatpush1.bf16.msra.mxu0 0
    %6760 = vmatprep.subr.bf16.mxu0 0
    %6761 = vmatpush1.bf16.msra.mxu0 0
    %6762 = vmatprep.subr.bf16.mxu0 0
    %6763 = vmatpush1.bf16.msra.mxu0 0
    %6764 = vmatprep.mubr.bf16.mxu0 0
    %6765 = vmatmul.mubr.bf16.gmra.mrb[0].mxu0 %v6730
    %v6766 = vpop.f32.mrb[0].mxu0
    %v6767 = vadd.f32 0.0, %v6766
    %v6768 = vpop.f32.mrb[0].mxu0
    %v6769 = vpop.f32.mrb[0].mxu0
    %v6770 = vpop.f32.mrb[0].mxu0
    %6771 = vdwg.mxu0
    %v6772 = vadd.f32 %v6708, %v6767
    %v6773 = vld [vmem:[#allocation4 + $0x40] sm:$0xc0]
    %s6774 = scalar_lea.vmem %s7, 560
    %v6775 = vld [vmem:[%s6774] sm:$0xf]
    %v6776 = vld [vmem:[%s6774 + $0x4] sm:$0xf]
    %v6777 = vld [vmem:[%s6774 + $0x8] sm:$0xf]
    %v6778 = vld [vmem:[%s6774 + $0xc] sm:$0xf]
    %v6780 = vrot.slane %v6773, 6
    %v6785 = vunpack.c.l.b16 %v6775
    %v6786 = vunpack.c.l.b16 %v6776
    %v6787 = vunpack.c.l.b16 %v6777
    %v6788 = vunpack.c.l.b16 %v6778
    %v6789 = vpack.c.b16 %v6786, %v6785
    %v6790 = vpack.c.b16 %v6788, %v6787
    %v6794 = vsel %vm4324, %v6780, 0
    %6796 = vmatprep.subr.bf16.mxu0 0
    %6797 = vmatpush1.bf16.msra.mxu0 %v6789
    %6798 = vmatprep.subr.bf16.mxu0 0
    %6799 = vmatpush1.bf16.msra.mxu0 %v6790
    %6800 = vmatprep.subr.bf16.mxu0 0
    %6801 = vmatpush1.bf16.msra.mxu0 0
    %6802 = vmatprep.subr.bf16.mxu0 0
    %6803 = vmatpush1.bf16.msra.mxu0 0
    %6804 = vmatprep.subr.bf16.mxu0 0
    %6805 = vmatpush1.bf16.msra.mxu0 0
    %6806 = vmatprep.subr.bf16.mxu0 0
    %6807 = vmatpush1.bf16.msra.mxu0 0
    %6808 = vmatprep.subr.bf16.mxu0 0
    %6809 = vmatpush1.bf16.msra.mxu0 0
    %6810 = vmatprep.subr.bf16.mxu0 0
    %6811 = vmatpush1.bf16.msra.mxu0 0
    %6812 = vmatprep.subr.bf16.mxu0 0
    %6813 = vmatpush1.bf16.msra.mxu0 0
    %6814 = vmatprep.subr.bf16.mxu0 0
    %6815 = vmatpush1.bf16.msra.mxu0 0
    %6816 = vmatprep.subr.bf16.mxu0 0
    %6817 = vmatpush1.bf16.msra.mxu0 0
    %6818 = vmatprep.subr.bf16.mxu0 0
    %6819 = vmatpush1.bf16.msra.mxu0 0
    %6820 = vmatprep.subr.bf16.mxu0 0
    %6821 = vmatpush1.bf16.msra.mxu0 0
    %6822 = vmatprep.subr.bf16.mxu0 0
    %6823 = vmatpush1.bf16.msra.mxu0 0
    %6824 = vmatprep.subr.bf16.mxu0 0
    %6825 = vmatpush1.bf16.msra.mxu0 0
    %6826 = vmatprep.subr.bf16.mxu0 0
    %6827 = vmatpush1.bf16.msra.mxu0 0
    %6828 = vmatprep.mubr.bf16.mxu0 0
    %6829 = vmatmul.mubr.bf16.gmra.mrb[0].mxu0 %v6794
    %v6830 = vpop.f32.mrb[0].mxu0
    %v6831 = vadd.f32 0.0, %v6830
    %v6832 = vpop.f32.mrb[0].mxu0
    %v6833 = vpop.f32.mrb[0].mxu0
    %v6834 = vpop.f32.mrb[0].mxu0
    %6835 = vdwg.mxu0
    %v6836 = vadd.f32 %v6772, %v6831
    %v6837 = vld [vmem:[%s8] sm:$0x1]
    %v6839 = vlaneseq
    %v6840 = vshrl.u32 %v6839, 7
    %v6841 = vsub.s32 0, %v6840
    %v6842 = vrot.slane %v6837, %v6841
    %v6844 = vadd.f32 %v6836, %v6842
    %v6845 = vmul.f32 %v6844, 0.5
    %v6846 = vmul.f32 %v6844, 0.044715
    %v6847 = vmul.f32 %v6846, %v6844
    %v6848 = vmul.f32 %v6847, %v6844
    %v6849 = vadd.f32 %v6844, %v6848
    %v6850 = vmul.f32 %v6849, 0.7978845
    %v6851 = vtanh.pop %v6850
    %v6852 = vadd.f32 %v6851, 1.0
    %v6853 = vmul.f32 %v6845, %v6852
    %v6854 = vpack.c.bf16 %v6853, %v6853
    %v6855 = vld [vmem:[%s9] sm:$0xf]
    %v6856 = vld [vmem:[%s9 + $0x4] sm:$0xf]
    %v6857 = vld [vmem:[%s9 + $0x8] sm:$0xf]
    %v6858 = vld [vmem:[%s9 + $0xc] sm:$0xf]
    %v6859 = vld [vmem:[%s9 + $0x10] sm:$0xf]
    %v6860 = vld [vmem:[%s9 + $0x14] sm:$0xf]
    %v6861 = vld [vmem:[%s9 + $0x18] sm:$0xf]
    %v6862 = vld [vmem:[%s9 + $0x1c] sm:$0xf]
    %v6863 = vld [vmem:[%s9 + $0x20] sm:$0xf]
    %v6864 = vld [vmem:[%s9 + $0x24] sm:$0xf]
    %v6865 = vld [vmem:[%s9 + $0x28] sm:$0xf]
    %v6866 = vld [vmem:[%s9 + $0x2c] sm:$0xf]
    %v6867 = vld [vmem:[%s9 + $0x30] sm:$0xf]
    %v6868 = vld [vmem:[%s9 + $0x34] sm:$0xf]
    %v6869 = vld [vmem:[%s9 + $0x38] sm:$0xf]
    %v6870 = vld [vmem:[%s9 + $0x3c] sm:$0xf]
    %v6871 = vld [vmem:[%s10] sm:$0x1]
    %v6873 = vlaneseq
    %v6874 = vshrl.u32 %v6873, 7
    %v6875 = vsub.s32 0, %v6874
    %v6876 = vrot.slane %v6871, %v6875
    %v6894 = vunpack.c.l.b16 %v6855
    %v6895 = vunpack.c.l.b16 %v6856
    %v6896 = vunpack.c.l.b16 %v6857
    %v6897 = vunpack.c.l.b16 %v6858
    %v6898 = vunpack.c.l.b16 %v6859
    %v6899 = vunpack.c.l.b16 %v6860
    %v6900 = vunpack.c.l.b16 %v6861
    %v6901 = vunpack.c.l.b16 %v6862
    %v6902 = vunpack.c.l.b16 %v6863
    %v6903 = vunpack.c.l.b16 %v6864
    %v6904 = vunpack.c.l.b16 %v6865
    %v6905 = vunpack.c.l.b16 %v6866
    %v6906 = vunpack.c.l.b16 %v6867
    %v6907 = vunpack.c.l.b16 %v6868
    %v6908 = vunpack.c.l.b16 %v6869
    %v6909 = vunpack.c.l.b16 %v6870
    %v6910 = vpack.c.b16 %v6895, %v6894
    %v6911 = vpack.c.b16 %v6897, %v6896
    %v6912 = vpack.c.b16 %v6899, %v6898
    %v6913 = vpack.c.b16 %v6901, %v6900
    %v6914 = vpack.c.b16 %v6903, %v6902
    %v6915 = vpack.c.b16 %v6905, %v6904
    %v6916 = vpack.c.b16 %v6907, %v6906
    %v6917 = vpack.c.b16 %v6909, %v6908
    %6926 = vmatprep.subr.bf16.mxu0 0
    %6927 = vmatpush1.bf16.msra.mxu0 %v6910
    %6928 = vmatprep.subr.bf16.mxu0 0
    %6929 = vmatpush1.bf16.msra.mxu0 %v6911
    %6930 = vmatprep.subr.bf16.mxu0 0
    %6931 = vmatpush1.bf16.msra.mxu0 %v6912
    %6932 = vmatprep.subr.bf16.mxu0 0
    %6933 = vmatpush1.bf16.msra.mxu0 %v6913
    %6934 = vmatprep.subr.bf16.mxu0 0
    %6935 = vmatpush1.bf16.msra.mxu0 %v6914
    %6936 = vmatprep.subr.bf16.mxu0 0
    %6937 = vmatpush1.bf16.msra.mxu0 %v6915
    %6938 = vmatprep.subr.bf16.mxu0 0
    %6939 = vmatpush1.bf16.msra.mxu0 %v6916
    %6940 = vmatprep.subr.bf16.mxu0 0
    %6941 = vmatpush1.bf16.msra.mxu0 %v6917
    %6942 = vmatprep.subr.bf16.mxu0 0
    %6943 = vmatpush1.bf16.msra.mxu0 0
    %6944 = vmatprep.subr.bf16.mxu0 0
    %6945 = vmatpush1.bf16.msra.mxu0 0
    %6946 = vmatprep.subr.bf16.mxu0 0
    %6947 = vmatpush1.bf16.msra.mxu0 0
    %6948 = vmatprep.subr.bf16.mxu0 0
    %6949 = vmatpush1.bf16.msra.mxu0 0
    %6950 = vmatprep.subr.bf16.mxu0 0
    %6951 = vmatpush1.bf16.msra.mxu0 0
    %6952 = vmatprep.subr.bf16.mxu0 0
    %6953 = vmatpush1.bf16.msra.mxu0 0
    %6954 = vmatprep.subr.bf16.mxu0 0
    %6955 = vmatpush1.bf16.msra.mxu0 0
    %6956 = vmatprep.subr.bf16.mxu0 0
    %6957 = vmatpush1.bf16.msra.mxu0 0
    %6958 = vmatprep.mubr.bf16.mxu0 0
    %6959 = vmatmul.mubr.bf16.gmra.mrb[0].mxu0 %v6854
    %v6960 = vpop.f32.mrb[0].mxu0
    %v6961 = vadd.f32 %v6876, %v6960
    %v6962 = vpop.f32.mrb[0].mxu0
    %v6963 = vpop.f32.mrb[0].mxu0
    %v6964 = vpop.f32.mrb[0].mxu0
    %6965 = vdwg.mxu0
    %vm6966 = vcmask 60416
    %6967 = vst.msk [vmem:[#allocation5] sm:$0xf] %vm6966, %v6961
    // Predicated region
    $region46: #{mlp_forward.1} parent=1 // pred_check
      _
    $region47: #{mlp_forward.1} parent=1 // pred_check_branch
      %6969 = sbr.rel (0) target = $region49
    $region48: #{mlp_forward.1} parent=1 // pred_region
      %s6971 = ssub.s32 64, 64
      %6972 = vsyncadd [#allocation6], %s6971
      %s6974 = sshll.u32 [#allocation5], 4
      %s6975 = int_to_ptr.vmem [resolvable:$true] %s6974
      %6977 = dma.vmem_to_hbm [thread:$0]  %s6975, 64, %s11, [#allocation6]
    $region49: #{mlp_forward.1} parent=1 // pred_fallthru
      _
    // Predicated region
    $region50: #{mlp_forward.1} parent=1 // pred_check
      _
    $region51: #{mlp_forward.1} parent=1 // pred_check_branch
      %6979 = sbr.rel (0) target = $region53
    $region52: #{mlp_forward.1} parent=1 // pred_region
      %6980 = dma.done [#allocation6], 64
    $region53: #{mlp_forward.1} parent=1 // pred_fallthru
      _
    %6981 = vsyncpa [#allocation6], 1

</llo_original>
